<compile_context>
chip_gen: v7x
topology: tpu7x:2x2x1
jax: 0.10.0
libtpu: 0.0.40
codegen_flags: <defaults>
</compile_context>

<pallas_src>
import math
import functools

import jax
import jax.numpy as jnp
from jax.experimental import pallas as pl
from jax.experimental.pallas import tpu as pltpu

HIDDEN = 1024
LANE = 128


def _round_up(x, m):
    return (x + m - 1) // m * m


def _default_vmem_limit_bytes():
    """~3/4 of physical VMEM: 48 MiB on v7x, 96 MiB on v5e/v6e."""
    try:
        cap = int(pltpu.get_tpu_info().vmem_capacity_bytes)
    except Exception:
        cap = 64 << 20  # assume the smallest generation if the query fails
    return min((cap * 3) // 4, 96 << 20)


def _encoder_kernel(x_ref,
                    w1_ref, b1_ref,
                    w2_ref, b2_ref,
                    w3_ref, b3_ref,
                    w4_ref, b4_ref,
                    o_ref):
    """Fused 4-layer MLP forward for one batch tile (bf16 MXU, f32 accumulate)."""

    def lrelu(h):
        # LeakyReLU(0.2): identical to where(h>0, h, 0.2h) since 0 < slope < 1.
        return jnp.maximum(h, 0.2 * h)

    h = x_ref[...]  # already bf16 (cast + lane-padded in the wrapper)

    h = jnp.dot(h, w1_ref[...], preferred_element_type=jnp.float32) + b1_ref[...]
    h = lrelu(h).astype(jnp.bfloat16)

    h = jnp.dot(h, w2_ref[...], preferred_element_type=jnp.float32) + b2_ref[...]
    h = lrelu(h).astype(jnp.bfloat16)

    h = jnp.dot(h, w3_ref[...], preferred_element_type=jnp.float32) + b3_ref[...]
    h = lrelu(h).astype(jnp.bfloat16)

    h = jnp.dot(h, w4_ref[...], preferred_element_type=jnp.float32) + b4_ref[...]
    o_ref[...] = lrelu(h).astype(o_ref.dtype)


@functools.partial(jax.jit, static_argnames=("w_dim", "common_dim", "batch_tile"))
def encoder_forward(x, params, *, w_dim, common_dim, batch_tile=512):
    """x: [B, input_dim] float32. Returns (y[B, w_dim], y[:, :common_dim]), f32."""
    B, in_dim = x.shape
    in_pad = params["w1"].shape[0]           # lane-padded input dim (mult. of 128)
    out_pad = params["w4"].shape[1]          # lane-padded output dim (mult. of 128)

    # --- batch tile: multiple of 8, <= padded batch, and <= ~half the padded
    # batch so medium batches still give >= 2 grid steps (v7x dual-core). ---
    bt = max(8, (int(batch_tile) // 8) * 8)
    B_pad8 = _round_up(B, 8)
    half = _round_up((B_pad8 + 1) // 2, 8)
    bt = min(bt, max(8, half), B_pad8)
    B_pad = _round_up(B, bt)

    # --- cast to bf16 and zero-pad batch rows / input lanes in the wrapper ---
    x_bf = x.astype(jnp.bfloat16)
    pad_rows = B_pad - B
    pad_cols = in_pad - in_dim
    if pad_rows or pad_cols:
        x_bf = jnp.pad(x_bf, ((0, pad_rows), (0, pad_cols)))

    def rep(shape):
        # Grid-invariant operand: constant block index (DMA'd once) and
        # single-buffered (no pointless double-buffer for a resident weight).
        return pl.BlockSpec(shape, lambda i: (0, 0), pipeline_mode=pl.Buffered(1))

    grid = (B_pad // bt,)

    out = pl.pallas_call(
        _encoder_kernel,
        out_shape=jax.ShapeDtypeStruct((B_pad, out_pad), jnp.float32),
        grid_spec=pltpu.PrefetchScalarGridSpec(
            num_scalar_prefetch=0,
            grid=grid,
            in_specs=[
                pl.BlockSpec((bt, in_pad), lambda i: (i, 0)),        # x tile (bf16)
                rep((in_pad, HIDDEN)), rep((1, HIDDEN)),             # layer 1
                rep((HIDDEN, HIDDEN)), rep((1, HIDDEN)),             # layer 2
                rep((HIDDEN, HIDDEN)), rep((1, HIDDEN)),             # layer 3
                rep((HIDDEN, out_pad)), rep((1, out_pad)),           # layer 4 (padded)
            ],
            out_specs=pl.BlockSpec((bt, out_pad), lambda i: (i, 0)),
        ),
        compiler_params=pltpu.CompilerParams(
            dimension_semantics=("parallel",),
            vmem_limit_bytes=_default_vmem_limit_bytes(),
        ),
    )(x_bf,
      params["w1"], params["b1"],
      params["w2"], params["b2"],
      params["w3"], params["b3"],
      params["w4"], params["b4"])

    y = out[:B, :w_dim]
    return y, y[:, :common_dim]


def init_encoder_params(key, input_dim, w_dim):
    """Xavier-normal weights ([in,out] layout, f32 init then cast to bf16),
    zero biases (kept f32), matching torch.nn.init.xavier_normal_ + bias.zero_().
    Layer-1 rows are zero-padded to a lane-dense input_dim; layer-4 columns are
    zero-padded to a lane-dense w_dim (both multiples of 128)."""
    in_pad = _round_up(input_dim, LANE)
    out_pad = _round_up(w_dim, LANE)
    dims = [(input_dim, HIDDEN), (HIDDEN, HIDDEN), (HIDDEN, HIDDEN), (HIDDEN, w_dim)]
    params = {}
    keys = jax.random.split(key, len(dims))
    for idx, ((fan_in, fan_out), k) in enumerate(zip(dims, keys), start=1):
        std = math.sqrt(2.0 / (fan_in + fan_out))  # xavier normal, gain=1
        w = std * jax.random.normal(k, (fan_in, fan_out), jnp.float32)
        b = jnp.zeros((1, fan_out), jnp.float32)
        if idx == 1 and fan_in != in_pad:
            w = jnp.pad(w, ((0, in_pad - fan_in), (0, 0)))
        if idx == 4 and fan_out != out_pad:
            w = jnp.pad(w, ((0, 0), (0, out_pad - fan_out)))
            b = jnp.pad(b, ((0, 0), (0, out_pad - fan_out)))
        params[f"w{idx}"] = w.astype(jnp.bfloat16)   # bf16 weights (MXU fast path)
        params[f"b{idx}"] = b                        # f32 bias (added post-accum)
    return params


def _reference_forward(x, params, w_dim, common_dim):
    """Pure-JAX reference mimicking the kernel's bf16-operand / f32-accum math."""
    in_pad = params["w1"].shape[0]
    B, in_dim = x.shape
    h = x.astype(jnp.bfloat16)
    if in_pad != in_dim:
        h = jnp.pad(h, ((0, 0), (0, in_pad - in_dim)))
    for i in range(1, 5):
        h = jnp.dot(h, params[f"w{i}"], preferred_element_type=jnp.float32) \
            + params[f"b{i}"]
        h = jnp.maximum(h, 0.2 * h)
        if i < 4:
            h = h.astype(jnp.bfloat16)
    h = h[:, :w_dim]
    return h, h[:, :common_dim]


if __name__ == "__main__":
    key = jax.random.PRNGKey(0)
    k_param, k_x = jax.random.split(key)

    input_dim, w_dim, common_dim = 64, 48, 16
    batch = 60                       # exercises batch padding; grid=(2,) after clamp

    params = init_encoder_params(k_param, input_dim, w_dim)
    x = jax.random.normal(k_x, (batch, input_dim), jnp.float32)

    y, y_common = encoder_forward(x, params, w_dim=w_dim, common_dim=common_dim)
    y, y_common = jax.block_until_ready((y, y_common))

    ref_y, ref_common = _reference_forward(x, params, w_dim, common_dim)
    assert y.shape == (batch, w_dim)
    assert y_common.shape == (batch, common_dim)
    assert jnp.allclose(y, ref_y, atol=1e-3, rtol=1e-3), "full output mismatch"
    assert jnp.allclose(y_common, ref_common, atol=1e-3, rtol=1e-3), "common slice mismatch"

    print("KERNEL_OK")
</pallas_src>

<mosaic_0001>
module attributes {stable_mosaic.version = 11 : i64} {
  func.func @_encoder_kernel(%arg0: i32, %arg1: memref<32x128xbf16, #tpu.memory_space<vmem>>, %arg2: memref<128x1024xbf16, #tpu.memory_space<vmem>>, %arg3: memref<1x1024xf32, #tpu.memory_space<vmem>>, %arg4: memref<1024x1024xbf16, #tpu.memory_space<vmem>>, %arg5: memref<1x1024xf32, #tpu.memory_space<vmem>>, %arg6: memref<1024x1024xbf16, #tpu.memory_space<vmem>>, %arg7: memref<1x1024xf32, #tpu.memory_space<vmem>>, %arg8: memref<1024x128xbf16, #tpu.memory_space<vmem>>, %arg9: memref<1x128xf32, #tpu.memory_space<vmem>>, %arg10: memref<32x128xf32, #tpu.memory_space<vmem>>) attributes {dimension_semantics = [#tpu.dimension_semantics<parallel>], iteration_bounds = array<i64: 2>, scalar_prefetch = 0 : i64, scratch_operands = 0 : i64, tpu.core_type = #tpu.core_type<tc>, window_params = [{transform_indices = @transform_0, window_bounds = array<i64: 32, 128>}, {pipeline_mode = #tpu.pipeline_mode<synchronous>, transform_indices = @transform_1, window_bounds = array<i64: 128, 1024>}, {pipeline_mode = #tpu.pipeline_mode<synchronous>, transform_indices = @transform_2, window_bounds = array<i64: 1, 1024>}, {pipeline_mode = #tpu.pipeline_mode<synchronous>, transform_indices = @transform_3, window_bounds = array<i64: 1024, 1024>}, {pipeline_mode = #tpu.pipeline_mode<synchronous>, transform_indices = @transform_4, window_bounds = array<i64: 1, 1024>}, {pipeline_mode = #tpu.pipeline_mode<synchronous>, transform_indices = @transform_5, window_bounds = array<i64: 1024, 1024>}, {pipeline_mode = #tpu.pipeline_mode<synchronous>, transform_indices = @transform_6, window_bounds = array<i64: 1, 1024>}, {pipeline_mode = #tpu.pipeline_mode<synchronous>, transform_indices = @transform_7, window_bounds = array<i64: 1024, 128>}, {pipeline_mode = #tpu.pipeline_mode<synchronous>, transform_indices = @transform_8, window_bounds = array<i64: 1, 128>}, {transform_indices = @transform_9, window_bounds = array<i64: 32, 128>}]} {
    %c0 = arith.constant 0 : index
    %c0_0 = arith.constant 0 : index
    %0 = vector.load %arg1[%c0, %c0_0] : memref<32x128xbf16, #tpu.memory_space<vmem>>, vector<32x128xbf16>
    %c0_1 = arith.constant 0 : index
    %c0_2 = arith.constant 0 : index
    %1 = vector.load %arg2[%c0_1, %c0_2] : memref<128x1024xbf16, #tpu.memory_space<vmem>>, vector<128x1024xbf16>
    %cst = arith.constant dense<0.000000e+00> : vector<32x1024xf32>
    %2 = tpu.matmul %0, %1, %cst {dimension_numbers = #tpu.dot_dimension_numbers<[1], [0], [0], [1], [0, 0, 1, 1], [], []>} : vector<32x128xbf16>, vector<128x1024xbf16>, vector<32x1024xf32> -> vector<32x1024xf32>
    %c0_3 = arith.constant 0 : index
    %c0_4 = arith.constant 0 : index
    %3 = vector.load %arg3[%c0_3, %c0_4] : memref<1x1024xf32, #tpu.memory_space<vmem>>, vector<1x1024xf32>
    %4 = vector.broadcast %3 : vector<1x1024xf32> to vector<32x1024xf32>
    %5 = arith.addf %2, %4 : vector<32x1024xf32>
    %cst_5 = arith.constant 2.000000e-01 : f32
    %6 = vector.broadcast %cst_5 : f32 to vector<32x1024xf32>
    %7 = arith.mulf %6, %5 : vector<32x1024xf32>
    %8 = arith.maximumf %5, %7 : vector<32x1024xf32>
    %9 = arith.truncf %8 : vector<32x1024xf32> to vector<32x1024xbf16>
    %c0_6 = arith.constant 0 : index
    %c0_7 = arith.constant 0 : index
    %10 = vector.load %arg4[%c0_6, %c0_7] : memref<1024x1024xbf16, #tpu.memory_space<vmem>>, vector<1024x1024xbf16>
    %cst_8 = arith.constant dense<0.000000e+00> : vector<32x1024xf32>
    %11 = tpu.matmul %9, %10, %cst_8 {dimension_numbers = #tpu.dot_dimension_numbers<[1], [0], [0], [1], [0, 0, 1, 1], [], []>} : vector<32x1024xbf16>, vector<1024x1024xbf16>, vector<32x1024xf32> -> vector<32x1024xf32>
    %c0_9 = arith.constant 0 : index
    %c0_10 = arith.constant 0 : index
    %12 = vector.load %arg5[%c0_9, %c0_10] : memref<1x1024xf32, #tpu.memory_space<vmem>>, vector<1x1024xf32>
    %13 = vector.broadcast %12 : vector<1x1024xf32> to vector<32x1024xf32>
    %14 = arith.addf %11, %13 : vector<32x1024xf32>
    %cst_11 = arith.constant 2.000000e-01 : f32
    %15 = vector.broadcast %cst_11 : f32 to vector<32x1024xf32>
    %16 = arith.mulf %15, %14 : vector<32x1024xf32>
    %17 = arith.maximumf %14, %16 : vector<32x1024xf32>
    %18 = arith.truncf %17 : vector<32x1024xf32> to vector<32x1024xbf16>
    %c0_12 = arith.constant 0 : index
    %c0_13 = arith.constant 0 : index
    %19 = vector.load %arg6[%c0_12, %c0_13] : memref<1024x1024xbf16, #tpu.memory_space<vmem>>, vector<1024x1024xbf16>
    %cst_14 = arith.constant dense<0.000000e+00> : vector<32x1024xf32>
    %20 = tpu.matmul %18, %19, %cst_14 {dimension_numbers = #tpu.dot_dimension_numbers<[1], [0], [0], [1], [0, 0, 1, 1], [], []>} : vector<32x1024xbf16>, vector<1024x1024xbf16>, vector<32x1024xf32> -> vector<32x1024xf32>
    %c0_15 = arith.constant 0 : index
    %c0_16 = arith.constant 0 : index
    %21 = vector.load %arg7[%c0_15, %c0_16] : memref<1x1024xf32, #tpu.memory_space<vmem>>, vector<1x1024xf32>
    %22 = vector.broadcast %21 : vector<1x1024xf32> to vector<32x1024xf32>
    %23 = arith.addf %20, %22 : vector<32x1024xf32>
    %cst_17 = arith.constant 2.000000e-01 : f32
    %24 = vector.broadcast %cst_17 : f32 to vector<32x1024xf32>
    %25 = arith.mulf %24, %23 : vector<32x1024xf32>
    %26 = arith.maximumf %23, %25 : vector<32x1024xf32>
    %27 = arith.truncf %26 : vector<32x1024xf32> to vector<32x1024xbf16>
    %c0_18 = arith.constant 0 : index
    %c0_19 = arith.constant 0 : index
    %28 = vector.load %arg8[%c0_18, %c0_19] : memref<1024x128xbf16, #tpu.memory_space<vmem>>, vector<1024x128xbf16>
    %cst_20 = arith.constant dense<0.000000e+00> : vector<32x128xf32>
    %29 = tpu.matmul %27, %28, %cst_20 {dimension_numbers = #tpu.dot_dimension_numbers<[1], [0], [0], [1], [0, 0, 1, 1], [], []>} : vector<32x1024xbf16>, vector<1024x128xbf16>, vector<32x128xf32> -> vector<32x128xf32>
    %c0_21 = arith.constant 0 : index
    %c0_22 = arith.constant 0 : index
    %30 = vector.load %arg9[%c0_21, %c0_22] : memref<1x128xf32, #tpu.memory_space<vmem>>, vector<1x128xf32>
    %31 = vector.broadcast %30 : vector<1x128xf32> to vector<32x128xf32>
    %32 = arith.addf %29, %31 : vector<32x128xf32>
    %cst_23 = arith.constant 2.000000e-01 : f32
    %33 = vector.broadcast %cst_23 : f32 to vector<32x128xf32>
    %34 = arith.mulf %33, %32 : vector<32x128xf32>
    %35 = arith.maximumf %32, %34 : vector<32x128xf32>
    %c0_24 = arith.constant 0 : index
    %c0_25 = arith.constant 0 : index
    %36 = vector.load %arg10[%c0_24, %c0_25] : memref<32x128xf32, #tpu.memory_space<vmem>>, vector<32x128xf32>
    tpu.vector_store %arg10[%c0_24, %c0_25], %35 {strides = array<i32>} : memref<32x128xf32, #tpu.memory_space<vmem>>, vector<32x128xf32>,
    return
  }
  func.func @transform_0(%arg0: i32) -> (i32, i32) {
    %c0_i32 = arith.constant 0 : i32
    %c0_i32_0 = arith.constant 0 : i32
    return %arg0, %c0_i32 : i32, i32
  }
  func.func @transform_1(%arg0: i32) -> (i32, i32) {
    %c0_i32 = arith.constant 0 : i32
    %c0_i32_0 = arith.constant 0 : i32
    %c0_i32_1 = arith.constant 0 : i32
    return %c0_i32, %c0_i32_0 : i32, i32
  }
  func.func @transform_2(%arg0: i32) -> (i32, i32) {
    %c0_i32 = arith.constant 0 : i32
    %c0_i32_0 = arith.constant 0 : i32
    %c0_i32_1 = arith.constant 0 : i32
    return %c0_i32, %c0_i32_0 : i32, i32
  }
  func.func @transform_3(%arg0: i32) -> (i32, i32) {
    %c0_i32 = arith.constant 0 : i32
    %c0_i32_0 = arith.constant 0 : i32
    %c0_i32_1 = arith.constant 0 : i32
    return %c0_i32, %c0_i32_0 : i32, i32
  }
  func.func @transform_4(%arg0: i32) -> (i32, i32) {
    %c0_i32 = arith.constant 0 : i32
    %c0_i32_0 = arith.constant 0 : i32
    %c0_i32_1 = arith.constant 0 : i32
    return %c0_i32, %c0_i32_0 : i32, i32
  }
  func.func @transform_5(%arg0: i32) -> (i32, i32) {
    %c0_i32 = arith.constant 0 : i32
    %c0_i32_0 = arith.constant 0 : i32
    %c0_i32_1 = arith.constant 0 : i32
    return %c0_i32, %c0_i32_0 : i32, i32
  }
  func.func @transform_6(%arg0: i32) -> (i32, i32) {
    %c0_i32 = arith.constant 0 : i32
    %c0_i32_0 = arith.constant 0 : i32
    %c0_i32_1 = arith.constant 0 : i32
    return %c0_i32, %c0_i32_0 : i32, i32
  }
  func.func @transform_7(%arg0: i32) -> (i32, i32) {
    %c0_i32 = arith.constant 0 : i32
    %c0_i32_0 = arith.constant 0 : i32
    %c0_i32_1 = arith.constant 0 : i32
    return %c0_i32, %c0_i32_0 : i32, i32
  }
  func.func @transform_8(%arg0: i32) -> (i32, i32) {
    %c0_i32 = arith.constant 0 : i32
    %c0_i32_0 = arith.constant 0 : i32
    %c0_i32_1 = arith.constant 0 : i32
    return %c0_i32, %c0_i32_0 : i32, i32
  }
  func.func @transform_9(%arg0: i32) -> (i32, i32) {
    %c0_i32 = arith.constant 0 : i32
    %c0_i32_0 = arith.constant 0 : i32
    return %arg0, %c0_i32 : i32, i32
  }
}

</mosaic_0001>

<llo_original>
// kernel: encoder_forward.1
$region0: #{encoder_forward.1}
  #allocation0 [shape = 'u32[]', space=smem, size = 0x4, offset = 0x4, fixed_abs, tag = 'smem constant byte address 0x4 - core index']
  #allocation1 [shape = 'u32[144,128]{1,0:T(1,128)}', space=vmem, size = 0x12000, scoped, tag = 'internal scratch']
  %s0 = inlined_call_operand.vmem [shape: bf16[64,128], index: 0, kind: input, shape index: {}]
  %s1 = inlined_call_operand.hbm [shape: bf16[128,1024], index: 1, kind: input, shape index: {}]
  %s2 = inlined_call_operand.hbm [shape: f32[1,1024], index: 2, kind: input, shape index: {}]
  %s3 = inlined_call_operand.hbm [shape: bf16[1024,1024], index: 3, kind: input, shape index: {}]
  %s4 = inlined_call_operand.hbm [shape: f32[1,1024], index: 4, kind: input, shape index: {}]
  %s5 = inlined_call_operand.hbm [shape: bf16[1024,1024], index: 5, kind: input, shape index: {}]
  %s6 = inlined_call_operand.hbm [shape: f32[1,1024], index: 6, kind: input, shape index: {}]
  %s7 = inlined_call_operand.hbm [shape: bf16[1024,128], index: 7, kind: input, shape index: {}]
  %s8 = inlined_call_operand.hbm [shape: f32[1,128], index: 8, kind: input, shape index: {}]
  %s9 = inlined_call_operand.vmem [shape: f32[64,128], index: 9, kind: output, shape index: {}]
  %s10 = sld [smem:[#allocation0]]
  $region101: #{encoder_forward.1} parent=0
    _
  %s12 = ssub.s32 1, %s10
  %s13 = scalar_select 0, %s12, %s10
  $region1: #{encoder_forward.1} parent=0
    #allocation2 [shape = 'u8[262144]{0}', space=vmem, size = 0x40000, scoped, tag = 'input window, operand 1, single buffered']
    #allocation3 [shape = 's32[2]{0}', space=sflag, size = 0x8, scoped, tag = 'scoped memory for encoder_forward.1']
    #allocation4 [shape = 'u8[4096]{0}', space=vmem, size = 0x1000, scoped, tag = 'input window, operand 2, single buffered']
    #allocation5 [shape = 's32[1]{0}', space=sflag, size = 0x4, scoped, tag = 'scoped memory for encoder_forward.1']
    #allocation6 [shape = 'u8[2097152]{0}', space=vmem, size = 0x200000, scoped, tag = 'input window, operand 3, single buffered']
    #allocation7 [shape = 'u8[4096]{0}', space=vmem, size = 0x1000, scoped, tag = 'input window, operand 4, single buffered']
    #allocation8 [shape = 's32[1]{0}', space=sflag, size = 0x4, scoped, tag = 'scoped memory for encoder_forward.1']
    #allocation9 [shape = 'u8[2097152]{0}', space=vmem, size = 0x200000, scoped, tag = 'input window, operand 5, single buffered']
    #allocation10 [shape = 'u8[4096]{0}', space=vmem, size = 0x1000, scoped, tag = 'input window, operand 6, single buffered']
    #allocation11 [shape = 's32[1]{0}', space=sflag, size = 0x4, scoped, tag = 'scoped memory for encoder_forward.1']
    #allocation12 [shape = 'u8[262144]{0}', space=vmem, size = 0x40000, scoped, tag = 'input window, operand 7, single buffered']
    #allocation13 [shape = 'u8[512]{0}', space=vmem, size = 0x400, scoped, tag = 'input window, operand 8, single buffered']
    #allocation14 [shape = 's32[1]{0}', space=sflag, size = 0x4, scoped, tag = 'scoped memory for encoder_forward.1']
    %14 = vsyncpa [#allocation3], 0
    %15 = vsyncpa [#allocation5], 0
    %16 = vsyncpa [#allocation8], 0
    %17 = vsyncpa [#allocation11], 0
    %18 = vsyncpa [#allocation14], 0
    loop: start=0, step=1, limit=4
    $region2: #{encoder_forward.1} parent=1 // loop_pre_header
      _
    $region3: #{encoder_forward.1} parent=1 // loop_header
      %s20 = sphi 0, %s24
      %p21 = scmp.ge.s32.totalorder %s20, 4
      %s30 = sphi 0, %s32
      %s33 = sphi 0, %s30
      %s34 = sphi 0, %s33
      %s50 = sphi 0, %s34
      %s54 = sphi 0, %s54
      %s56 = sphi 0, %s54
      %s57 = sphi 0, %s56
      %s71 = sphi 0, %s57
      %s75 = sphi 0, %s75
      %s77 = sphi 0, %s75
      %s78 = sphi 0, %s77
      %s92 = sphi 0, %s78
      %s96 = sphi 0, %s96
      %s98 = sphi 0, %s96
      %s99 = sphi 0, %s98
      %s113 = sphi 0, %s99
      %s117 = sphi 0, %s117
      %s119 = sphi 0, %s117
      %s120 = sphi 0, %s119
      %s134 = sphi 0, %s120
      %s138 = sphi 0, %s138
      %s140 = sphi 0, %s138
      %s141 = sphi 0, %s140
      %s155 = sphi 0, %s141
      %s159 = sphi 0, %s159
      %s161 = sphi 0, %s159
      %s162 = sphi 0, %s161
      %s176 = sphi 0, %s162
      %s180 = sphi 0, %s180
      %s182 = sphi 0, %s180
      %s183 = sphi 0, %s182
      %s197 = sphi 0, %s183
      %s201 = sphi 0, %s201
      %s203 = sphi 0, %s201
      %s204 = sphi 0, %s203
      %s218 = sphi 0, %s204
      %s224 = sphi 0, %s226
      %s227 = sphi 0, %s224
      %s228 = sphi 0, %s227
      %s244 = sphi 0, %s228
    $region4: #{encoder_forward.1} parent=1 // loop_header_branch
      %23 = sbr.rel (%p21) target = $region8
    $region5: #{encoder_forward.1} parent=1 // loop_body
      %s25 = ssub.s32 %s20, 1
      %s26 = ssub.s32 %s20, 2
      %s27 = sadd.s32 %s20, 1
      %s28 = ssub.s32 %s20, %s27
      %p29 = scmp.eq.s32.totalorder %s28, 0
      %s31 = sadd.s32 %s30, 1
      %s32 = scalar_select %p29, %s30, %s31
      %p35 = pneg %p29
      %p36 = scmp.eq.s32.totalorder %s20, 1
      %p37 = por %p35, %p36
      %p38 = scmp.ne.s32.totalorder %s30, %s33
      %p39 = scmp.eq.s32.totalorder %s20, 0
      %p40 = por %p38, %p39
      %p41 = scmp.ne.s32.totalorder %s30, %s33
      %p42 = scmp.eq.s32.totalorder %s25, 1
      %p43 = por %p41, %p42
      %p44 = scmp.ne.s32.totalorder %s33, %s34
      %p45 = scmp.eq.s32.totalorder %s25, 0
      %p46 = por %p44, %p45
      %p47 = scmp.ne.s32.totalorder %s33, %s34
      %p48 = scmp.eq.s32.totalorder %s26, 1
      %p49 = por %p47, %p48
      %p51 = scmp.ne.s32.totalorder %s34, %s50
      %p52 = scmp.eq.s32.totalorder %s26, 0
      %p53 = por %p51, %p52
      %s55 = sadd.s32 %s54, 1
      %p58 = scmp.eq.s32.totalorder %s20, 1
      %p59 = scmp.ne.s32.totalorder %s54, %s56
      %p60 = scmp.eq.s32.totalorder %s20, 0
      %p61 = por %p59, %p60
      %p62 = scmp.ne.s32.totalorder %s54, %s56
      %p63 = scmp.eq.s32.totalorder %s25, 1
      %p64 = por %p62, %p63
      %p65 = scmp.ne.s32.totalorder %s56, %s57
      %p66 = scmp.eq.s32.totalorder %s25, 0
      %p67 = por %p65, %p66
      %p68 = scmp.ne.s32.totalorder %s56, %s57
      %p69 = scmp.eq.s32.totalorder %s26, 1
      %p70 = por %p68, %p69
      %p72 = scmp.ne.s32.totalorder %s57, %s71
      %p73 = scmp.eq.s32.totalorder %s26, 0
      %p74 = por %p72, %p73
      %s76 = sadd.s32 %s75, 1
      %p79 = scmp.eq.s32.totalorder %s20, 1
      %p80 = scmp.ne.s32.totalorder %s75, %s77
      %p81 = scmp.eq.s32.totalorder %s20, 0
      %p82 = por %p80, %p81
      %p83 = scmp.ne.s32.totalorder %s75, %s77
      %p84 = scmp.eq.s32.totalorder %s25, 1
      %p85 = por %p83, %p84
      %p86 = scmp.ne.s32.totalorder %s77, %s78
      %p87 = scmp.eq.s32.totalorder %s25, 0
      %p88 = por %p86, %p87
      %p89 = scmp.ne.s32.totalorder %s77, %s78
      %p90 = scmp.eq.s32.totalorder %s26, 1
      %p91 = por %p89, %p90
      %p93 = scmp.ne.s32.totalorder %s78, %s92
      %p94 = scmp.eq.s32.totalorder %s26, 0
      %p95 = por %p93, %p94
      %s97 = sadd.s32 %s96, 1
      %p100 = scmp.eq.s32.totalorder %s20, 1
      %p101 = scmp.ne.s32.totalorder %s96, %s98
      %p102 = scmp.eq.s32.totalorder %s20, 0
      %p103 = por %p101, %p102
      %p104 = scmp.ne.s32.totalorder %s96, %s98
      %p105 = scmp.eq.s32.totalorder %s25, 1
      %p106 = por %p104, %p105
      %p107 = scmp.ne.s32.totalorder %s98, %s99
      %p108 = scmp.eq.s32.totalorder %s25, 0
      %p109 = por %p107, %p108
      %p110 = scmp.ne.s32.totalorder %s98, %s99
      %p111 = scmp.eq.s32.totalorder %s26, 1
      %p112 = por %p110, %p111
      %p114 = scmp.ne.s32.totalorder %s99, %s113
      %p115 = scmp.eq.s32.totalorder %s26, 0
      %p116 = por %p114, %p115
      %s118 = sadd.s32 %s117, 1
      %p121 = scmp.eq.s32.totalorder %s20, 1
      %p122 = scmp.ne.s32.totalorder %s117, %s119
      %p123 = scmp.eq.s32.totalorder %s20, 0
      %p124 = por %p122, %p123
      %p125 = scmp.ne.s32.totalorder %s117, %s119
      %p126 = scmp.eq.s32.totalorder %s25, 1
      %p127 = por %p125, %p126
      %p128 = scmp.ne.s32.totalorder %s119, %s120
      %p129 = scmp.eq.s32.totalorder %s25, 0
      %p130 = por %p128, %p129
      %p131 = scmp.ne.s32.totalorder %s119, %s120
      %p132 = scmp.eq.s32.totalorder %s26, 1
      %p133 = por %p131, %p132
      %p135 = scmp.ne.s32.totalorder %s120, %s134
      %p136 = scmp.eq.s32.totalorder %s26, 0
      %p137 = por %p135, %p136
      %s139 = sadd.s32 %s138, 1
      %p142 = scmp.eq.s32.totalorder %s20, 1
      %p143 = scmp.ne.s32.totalorder %s138, %s140
      %p144 = scmp.eq.s32.totalorder %s20, 0
      %p145 = por %p143, %p144
      %p146 = scmp.ne.s32.totalorder %s138, %s140
      %p147 = scmp.eq.s32.totalorder %s25, 1
      %p148 = por %p146, %p147
      %p149 = scmp.ne.s32.totalorder %s140, %s141
      %p150 = scmp.eq.s32.totalorder %s25, 0
      %p151 = por %p149, %p150
      %p152 = scmp.ne.s32.totalorder %s140, %s141
      %p153 = scmp.eq.s32.totalorder %s26, 1
      %p154 = por %p152, %p153
      %p156 = scmp.ne.s32.totalorder %s141, %s155
      %p157 = scmp.eq.s32.totalorder %s26, 0
      %p158 = por %p156, %p157
      %s160 = sadd.s32 %s159, 1
      %p163 = scmp.eq.s32.totalorder %s20, 1
      %p164 = scmp.ne.s32.totalorder %s159, %s161
      %p165 = scmp.eq.s32.totalorder %s20, 0
      %p166 = por %p164, %p165
      %p167 = scmp.ne.s32.totalorder %s159, %s161
      %p168 = scmp.eq.s32.totalorder %s25, 1
      %p169 = por %p167, %p168
      %p170 = scmp.ne.s32.totalorder %s161, %s162
      %p171 = scmp.eq.s32.totalorder %s25, 0
      %p172 = por %p170, %p171
      %p173 = scmp.ne.s32.totalorder %s161, %s162
      %p174 = scmp.eq.s32.totalorder %s26, 1
      %p175 = por %p173, %p174
      %p177 = scmp.ne.s32.totalorder %s162, %s176
      %p178 = scmp.eq.s32.totalorder %s26, 0
      %p179 = por %p177, %p178
      %s181 = sadd.s32 %s180, 1
      %p184 = scmp.eq.s32.totalorder %s20, 1
      %p185 = scmp.ne.s32.totalorder %s180, %s182
      %p186 = scmp.eq.s32.totalorder %s20, 0
      %p187 = por %p185, %p186
      %p188 = scmp.ne.s32.totalorder %s180, %s182
      %p189 = scmp.eq.s32.totalorder %s25, 1
      %p190 = por %p188, %p189
      %p191 = scmp.ne.s32.totalorder %s182, %s183
      %p192 = scmp.eq.s32.totalorder %s25, 0
      %p193 = por %p191, %p192
      %p194 = scmp.ne.s32.totalorder %s182, %s183
      %p195 = scmp.eq.s32.totalorder %s26, 1
      %p196 = por %p194, %p195
      %p198 = scmp.ne.s32.totalorder %s183, %s197
      %p199 = scmp.eq.s32.totalorder %s26, 0
      %p200 = por %p198, %p199
      %s202 = sadd.s32 %s201, 1
      %p205 = scmp.eq.s32.totalorder %s20, 1
      %p206 = scmp.ne.s32.totalorder %s201, %s203
      %p207 = scmp.eq.s32.totalorder %s20, 0
      %p208 = por %p206, %p207
      %p209 = scmp.ne.s32.totalorder %s201, %s203
      %p210 = scmp.eq.s32.totalorder %s25, 1
      %p211 = por %p209, %p210
      %p212 = scmp.ne.s32.totalorder %s203, %s204
      %p213 = scmp.eq.s32.totalorder %s25, 0
      %p214 = por %p212, %p213
      %p215 = scmp.ne.s32.totalorder %s203, %s204
      %p216 = scmp.eq.s32.totalorder %s26, 1
      %p217 = por %p215, %p216
      %p219 = scmp.ne.s32.totalorder %s204, %s218
      %p220 = scmp.eq.s32.totalorder %s26, 0
      %p221 = por %p219, %p220
      %s222 = ssub.s32 %s20, %s27
      %p223 = scmp.eq.s32.totalorder %s222, 0
      %s225 = sadd.s32 %s224, 1
      %s226 = scalar_select %p223, %s224, %s225
      %p229 = pneg %p223
      %p230 = scmp.eq.s32.totalorder %s20, 1
      %p231 = por %p229, %p230
      %p232 = scmp.ne.s32.totalorder %s224, %s227
      %p233 = scmp.eq.s32.totalorder %s20, 0
      %p234 = por %p232, %p233
      %p235 = scmp.ne.s32.totalorder %s224, %s227
      %p236 = scmp.eq.s32.totalorder %s25, 1
      %p237 = por %p235, %p236
      %p238 = scmp.ne.s32.totalorder %s227, %s228
      %p239 = scmp.eq.s32.totalorder %s25, 0
      %p240 = por %p238, %p239
      %p241 = scmp.ne.s32.totalorder %s227, %s228
      %p242 = scmp.eq.s32.totalorder %s26, 1
      %p243 = por %p241, %p242
      %p245 = scmp.ne.s32.totalorder %s228, %s244
      %p246 = scmp.eq.s32.totalorder %s26, 0
      %p247 = por %p245, %p246
      %p248 = scmp.le.s32.totalorder 1, %s20
      %p249 = scmp.lt.s32.totalorder %s20, 3
      %p250 = pnand %p248, %p249
      %p251 = pneg %p250
      // Predicated region
      $region9: #{encoder_forward.1} parent=5 // pred_check
        _
      $region10: #{encoder_forward.1} parent=5 // pred_check_branch
        %253 = sbr.rel (%p250) target = $region12
      $region11: #{encoder_forward.1} parent=5 // pred_region
        %s254 = ssub.s32 %s20, 1
        // Predicated region
        $region13: #{encoder_forward.1} parent=11 // pred_check
          %p255 = pneg %p67
        $region14: #{encoder_forward.1} parent=11 // pred_check_branch
          %257 = sbr.rel (%p255) target = $region16
        $region15: #{encoder_forward.1} parent=11 // pred_region
          %s259 = ssub.s32 8192, 8192
          %260 = vsyncadd [#allocation3], %s259
          %s261 = sshll.u32 [#allocation2], 4
          %s262 = int_to_ptr.vmem [resolvable:$true] %s261
          %267 = dma.hbm_to_vmem [thread:$0]  %s1, 8192, %s262, [#allocation3], 512, 512, 32
        $region16: #{encoder_forward.1} parent=11 // pred_fallthru
          _
        // Predicated region
        $region17: #{encoder_forward.1} parent=11 // pred_check
          %p268 = pneg %p88
        $region18: #{encoder_forward.1} parent=11 // pred_check_branch
          %270 = sbr.rel (%p268) target = $region20
        $region19: #{encoder_forward.1} parent=11 // pred_region
          %s272 = ssub.s32 128, 128
          %273 = vsyncadd [#allocation5], %s272
          %s275 = sshll.u32 [#allocation4], 4
          %s276 = int_to_ptr.vmem [resolvable:$true] %s275
          %278 = dma.hbm_to_vmem [thread:$0]  %s2, 128, %s276, [#allocation5]
        $region20: #{encoder_forward.1} parent=11 // pred_fallthru
          _
        // Predicated region
        $region21: #{encoder_forward.1} parent=11 // pred_check
          %p279 = pneg %p109
        $region22: #{encoder_forward.1} parent=11 // pred_check_branch
          %281 = sbr.rel (%p279) target = $region24
        $region23: #{encoder_forward.1} parent=11 // pred_region
          %s283 = ssub.s32 65536, 65536
          %284 = vsyncadd [#allocation5], %s283
          %s285 = sshll.u32 [#allocation6], 4
          %s286 = int_to_ptr.vmem [resolvable:$true] %s285
          %291 = dma.hbm_to_vmem [thread:$0]  %s3, 65536, %s286, [#allocation5], 512, 512, 32
        $region24: #{encoder_forward.1} parent=11 // pred_fallthru
          _
        // Predicated region
        $region25: #{encoder_forward.1} parent=11 // pred_check
          %p292 = pneg %p130
        $region26: #{encoder_forward.1} parent=11 // pred_check_branch
          %294 = sbr.rel (%p292) target = $region28
        $region27: #{encoder_forward.1} parent=11 // pred_region
          %s296 = ssub.s32 128, 128
          %297 = vsyncadd [#allocation8], %s296
          %s299 = sshll.u32 [#allocation7], 4
          %s300 = int_to_ptr.vmem [resolvable:$true] %s299
          %302 = dma.hbm_to_vmem [thread:$0]  %s4, 128, %s300, [#allocation8]
        $region28: #{encoder_forward.1} parent=11 // pred_fallthru
          _
        // Predicated region
        $region29: #{encoder_forward.1} parent=11 // pred_check
          %p303 = pneg %p151
        $region30: #{encoder_forward.1} parent=11 // pred_check_branch
          %305 = sbr.rel (%p303) target = $region32
        $region31: #{encoder_forward.1} parent=11 // pred_region
          %s307 = ssub.s32 65536, 65536
          %308 = vsyncadd [#allocation8], %s307
          %s309 = sshll.u32 [#allocation9], 4
          %s310 = int_to_ptr.vmem [resolvable:$true] %s309
          %315 = dma.hbm_to_vmem [thread:$0]  %s5, 65536, %s310, [#allocation8], 512, 512, 32
        $region32: #{encoder_forward.1} parent=11 // pred_fallthru
          _
        // Predicated region
        $region33: #{encoder_forward.1} parent=11 // pred_check
          %p316 = pneg %p172
        $region34: #{encoder_forward.1} parent=11 // pred_check_branch
          %318 = sbr.rel (%p316) target = $region36
        $region35: #{encoder_forward.1} parent=11 // pred_region
          %s320 = ssub.s32 128, 128
          %321 = vsyncadd [#allocation11], %s320
          %s323 = sshll.u32 [#allocation10], 4
          %s324 = int_to_ptr.vmem [resolvable:$true] %s323
          %326 = dma.hbm_to_vmem [thread:$0]  %s6, 128, %s324, [#allocation11]
        $region36: #{encoder_forward.1} parent=11 // pred_fallthru
          _
        // Predicated region
        $region37: #{encoder_forward.1} parent=11 // pred_check
          %p327 = pneg %p193
        $region38: #{encoder_forward.1} parent=11 // pred_check_branch
          %329 = sbr.rel (%p327) target = $region40
        $region39: #{encoder_forward.1} parent=11 // pred_region
          %s331 = ssub.s32 8192, 8192
          %332 = vsyncadd [#allocation11], %s331
          %s333 = sshll.u32 [#allocation12], 4
          %s334 = int_to_ptr.vmem [resolvable:$true] %s333
          %339 = dma.hbm_to_vmem [thread:$0]  %s7, 8192, %s334, [#allocation11], 64, 64, 4
        $region40: #{encoder_forward.1} parent=11 // pred_fallthru
          _
        // Predicated region
        $region41: #{encoder_forward.1} parent=11 // pred_check
          %p340 = pneg %p214
        $region42: #{encoder_forward.1} parent=11 // pred_check_branch
          %342 = sbr.rel (%p340) target = $region44
        $region43: #{encoder_forward.1} parent=11 // pred_region
          %s344 = ssub.s32 16, 16
          %345 = vsyncadd [#allocation14], %s344
          %s347 = sshll.u32 [#allocation13], 4
          %s348 = int_to_ptr.vmem [resolvable:$true] %s347
          %350 = dma.hbm_to_vmem [thread:$0]  %s8, 16, %s348, [#allocation14]
        $region44: #{encoder_forward.1} parent=11 // pred_fallthru
          _
      $region12: #{encoder_forward.1} parent=5 // pred_fallthru
        _
      %p351 = scmp.lt.s32.totalorder %s20, 2
      // Predicated region
      $region45: #{encoder_forward.1} parent=5 // pred_check
        %p352 = pneg %p351
      $region46: #{encoder_forward.1} parent=5 // pred_check_branch
        %354 = sbr.rel (%p352) target = $region48
      $region47: #{encoder_forward.1} parent=5 // pred_region
        // Predicated region
        $region49: #{encoder_forward.1} parent=47 // pred_check
          %p355 = pneg %p40
        $region50: #{encoder_forward.1} parent=47 // pred_check_branch
          %357 = sbr.rel (%p355) target = $region52
        $region51: #{encoder_forward.1} parent=47 // pred_region
          %s358 = smul.u32 4, %s20
          %p359 = scmp.lt.s32.totalorder %s358, 7
          %s360 = scalar_select %p359, %s358, 7
          %s361 = smul.addr %s360, 4
          %s362 = scalar_lea.vmem %s0, %s361
          %s363 = smul.u32 4, %s20
        $region52: #{encoder_forward.1} parent=47 // pred_fallthru
          _
      $region48: #{encoder_forward.1} parent=5 // pred_fallthru
        _
      %p364 = scmp.le.s32.totalorder 1, %s20
      %p365 = scmp.lt.s32.totalorder %s20, 3
      %p366 = pnand %p364, %p365
      %p367 = pneg %p366
      // Predicated region
      $region53: #{encoder_forward.1} parent=5 // pred_check
        _
      $region54: #{encoder_forward.1} parent=5 // pred_check_branch
        %369 = sbr.rel (%p366) target = $region56
      $region55: #{encoder_forward.1} parent=5 // pred_region
        %s370 = ssub.s32 %s20, 1
        // Predicated region
        $region57: #{encoder_forward.1} parent=55 // pred_check
          %p371 = pneg %p67
        $region58: #{encoder_forward.1} parent=55 // pred_check_branch
          %373 = sbr.rel (%p371) target = $region60
        $region59: #{encoder_forward.1} parent=55 // pred_region
          %374 = dma.done [#allocation3], 8192
        $region60: #{encoder_forward.1} parent=55 // pred_fallthru
          _
        // Predicated region
        $region61: #{encoder_forward.1} parent=55 // pred_check
          %p375 = pneg %p88
        $region62: #{encoder_forward.1} parent=55 // pred_check_branch
          %377 = sbr.rel (%p375) target = $region64
        $region63: #{encoder_forward.1} parent=55 // pred_region
          %378 = dma.done [#allocation5], 128
        $region64: #{encoder_forward.1} parent=55 // pred_fallthru
          _
        // Predicated region
        $region65: #{encoder_forward.1} parent=55 // pred_check
          %p379 = pneg %p109
        $region66: #{encoder_forward.1} parent=55 // pred_check_branch
          %381 = sbr.rel (%p379) target = $region68
        $region67: #{encoder_forward.1} parent=55 // pred_region
          %382 = dma.done [#allocation5], 65536
        $region68: #{encoder_forward.1} parent=55 // pred_fallthru
          _
        // Predicated region
        $region69: #{encoder_forward.1} parent=55 // pred_check
          %p383 = pneg %p130
        $region70: #{encoder_forward.1} parent=55 // pred_check_branch
          %385 = sbr.rel (%p383) target = $region72
        $region71: #{encoder_forward.1} parent=55 // pred_region
          %386 = dma.done [#allocation8], 128
        $region72: #{encoder_forward.1} parent=55 // pred_fallthru
          _
        // Predicated region
        $region73: #{encoder_forward.1} parent=55 // pred_check
          %p387 = pneg %p151
        $region74: #{encoder_forward.1} parent=55 // pred_check_branch
          %389 = sbr.rel (%p387) target = $region76
        $region75: #{encoder_forward.1} parent=55 // pred_region
          %390 = dma.done [#allocation8], 65536
        $region76: #{encoder_forward.1} parent=55 // pred_fallthru
          _
        // Predicated region
        $region77: #{encoder_forward.1} parent=55 // pred_check
          %p391 = pneg %p172
        $region78: #{encoder_forward.1} parent=55 // pred_check_branch
          %393 = sbr.rel (%p391) target = $region80
        $region79: #{encoder_forward.1} parent=55 // pred_region
          %394 = dma.done [#allocation11], 128
        $region80: #{encoder_forward.1} parent=55 // pred_fallthru
          _
        // Predicated region
        $region81: #{encoder_forward.1} parent=55 // pred_check
          %p395 = pneg %p193
        $region82: #{encoder_forward.1} parent=55 // pred_check_branch
          %397 = sbr.rel (%p395) target = $region84
        $region83: #{encoder_forward.1} parent=55 // pred_region
          %398 = dma.done [#allocation11], 8192
        $region84: #{encoder_forward.1} parent=55 // pred_fallthru
          _
        // Predicated region
        $region85: #{encoder_forward.1} parent=55 // pred_check
          %p399 = pneg %p214
        $region86: #{encoder_forward.1} parent=55 // pred_check_branch
          %401 = sbr.rel (%p399) target = $region88
        $region87: #{encoder_forward.1} parent=55 // pred_region
          %402 = dma.done [#allocation14], 16
        $region88: #{encoder_forward.1} parent=55 // pred_fallthru
          _
        %s403 = smul.u32 4, %s25
        %p404 = scmp.lt.s32.totalorder %s403, 7
        %s405 = scalar_select %p404, %s403, 7
        %s406 = smul.addr %s405, 4
        %s407 = scalar_lea.vmem %s0, %s406
        %p408 = pneg %p46
        %p409 = pneg %p43
        %p410 = pneg %p67
        %p411 = pneg %p64
        %p412 = pneg %p88
        %p413 = pneg %p85
        %p414 = pneg %p109
        %p415 = pneg %p106
        %p416 = pneg %p130
        %p417 = pneg %p127
        %p418 = pneg %p151
        %p419 = pneg %p148
        %p420 = pneg %p172
        %p421 = pneg %p169
        %p422 = pneg %p193
        %p423 = pneg %p190
        %p424 = pneg %p214
        %p425 = pneg %p211
        %p426 = pneg %p240
        %p427 = pneg %p237
        %s428 = smul.u32 4, %s25
        %p429 = scmp.lt.s32.totalorder %s428, 7
        %s430 = scalar_select %p429, %s428, 7
        %s431 = smul.addr %s430, 8
        %s432 = scalar_lea.vmem %s9, %s431
        %s433 = smul.u32 4, %s25
        %p434 = scmp.lt.s32.totalorder %s433, 7
        %s435 = scalar_select %p434, %s433, 7
        %s436 = smul.addr %s435, 4
        %s437 = scalar_lea.vmem %s0, %s436
        %s438 = smul.u32 4, %s25
        %s439 = smul.u32 4, %s25
        %p440 = scmp.lt.s32.totalorder %s439, 7
        %s441 = scalar_select %p440, %s439, 7
        %s442 = smul.addr %s441, 8
        %s443 = scalar_lea.vmem %s9, %s442
        %s444 = smul.u32 4, %s25
        %v446 = vld [vmem:[%s437] sm:$0xf]
        %v447 = vld [vmem:[%s437 + $0x4] sm:$0xf]
        %v448 = vld [vmem:[%s437 + $0x8] sm:$0xf]
        %v449 = vld [vmem:[%s437 + $0xc] sm:$0xf]
        %v450 = vld [vmem:[#allocation2] sm:$0xff]
        %v451 = vld [vmem:[#allocation2 + $0x8] sm:$0xff]
        %v452 = vld [vmem:[#allocation2 + $0x10] sm:$0xff]
        %v453 = vld [vmem:[#allocation2 + $0x18] sm:$0xff]
        %v454 = vld [vmem:[#allocation2 + $0x20] sm:$0xff]
        %v455 = vld [vmem:[#allocation2 + $0x28] sm:$0xff]
        %v456 = vld [vmem:[#allocation2 + $0x30] sm:$0xff]
        %v457 = vld [vmem:[#allocation2 + $0x38] sm:$0xff]
        %v458 = vld [vmem:[#allocation2 + $0x40] sm:$0xff]
        %v459 = vld [vmem:[#allocation2 + $0x48] sm:$0xff]
        %v460 = vld [vmem:[#allocation2 + $0x50] sm:$0xff]
        %v461 = vld [vmem:[#allocation2 + $0x58] sm:$0xff]
        %v462 = vld [vmem:[#allocation2 + $0x60] sm:$0xff]
        %v463 = vld [vmem:[#allocation2 + $0x68] sm:$0xff]
        %v464 = vld [vmem:[#allocation2 + $0x70] sm:$0xff]
        %v465 = vld [vmem:[#allocation2 + $0x78] sm:$0xff]
        %v466 = vld [vmem:[#allocation2 + $0x80] sm:$0xff]
        %v467 = vld [vmem:[#allocation2 + $0x88] sm:$0xff]
        %v468 = vld [vmem:[#allocation2 + $0x90] sm:$0xff]
        %v469 = vld [vmem:[#allocation2 + $0x98] sm:$0xff]
        %v470 = vld [vmem:[#allocation2 + $0xa0] sm:$0xff]
        %v471 = vld [vmem:[#allocation2 + $0xa8] sm:$0xff]
        %v472 = vld [vmem:[#allocation2 + $0xb0] sm:$0xff]
        %v473 = vld [vmem:[#allocation2 + $0xb8] sm:$0xff]
        %v474 = vld [vmem:[#allocation2 + $0xc0] sm:$0xff]
        %v475 = vld [vmem:[#allocation2 + $0xc8] sm:$0xff]
        %v476 = vld [vmem:[#allocation2 + $0xd0] sm:$0xff]
        %v477 = vld [vmem:[#allocation2 + $0xd8] sm:$0xff]
        %v478 = vld [vmem:[#allocation2 + $0xe0] sm:$0xff]
        %v479 = vld [vmem:[#allocation2 + $0xe8] sm:$0xff]
        %v480 = vld [vmem:[#allocation2 + $0xf0] sm:$0xff]
        %v481 = vld [vmem:[#allocation2 + $0xf8] sm:$0xff]
        %v482 = vld [vmem:[#allocation2 + $0x100] sm:$0xff]
        %v483 = vld [vmem:[#allocation2 + $0x108] sm:$0xff]
        %v484 = vld [vmem:[#allocation2 + $0x110] sm:$0xff]
        %v485 = vld [vmem:[#allocation2 + $0x118] sm:$0xff]
        %v486 = vld [vmem:[#allocation2 + $0x120] sm:$0xff]
        %v487 = vld [vmem:[#allocation2 + $0x128] sm:$0xff]
        %v488 = vld [vmem:[#allocation2 + $0x130] sm:$0xff]
        %v489 = vld [vmem:[#allocation2 + $0x138] sm:$0xff]
        %v490 = vld [vmem:[#allocation2 + $0x140] sm:$0xff]
        %v491 = vld [vmem:[#allocation2 + $0x148] sm:$0xff]
        %v492 = vld [vmem:[#allocation2 + $0x150] sm:$0xff]
        %v493 = vld [vmem:[#allocation2 + $0x158] sm:$0xff]
        %v494 = vld [vmem:[#allocation2 + $0x160] sm:$0xff]
        %v495 = vld [vmem:[#allocation2 + $0x168] sm:$0xff]
        %v496 = vld [vmem:[#allocation2 + $0x170] sm:$0xff]
        %v497 = vld [vmem:[#allocation2 + $0x178] sm:$0xff]
        %v498 = vld [vmem:[#allocation2 + $0x180] sm:$0xff]
        %v499 = vld [vmem:[#allocation2 + $0x188] sm:$0xff]
        %v500 = vld [vmem:[#allocation2 + $0x190] sm:$0xff]
        %v501 = vld [vmem:[#allocation2 + $0x198] sm:$0xff]
        %v502 = vld [vmem:[#allocation2 + $0x1a0] sm:$0xff]
        %v503 = vld [vmem:[#allocation2 + $0x1a8] sm:$0xff]
        %v504 = vld [vmem:[#allocation2 + $0x1b0] sm:$0xff]
        %v505 = vld [vmem:[#allocation2 + $0x1b8] sm:$0xff]
        %v506 = vld [vmem:[#allocation2 + $0x1c0] sm:$0xff]
        %v507 = vld [vmem:[#allocation2 + $0x1c8] sm:$0xff]
        %v508 = vld [vmem:[#allocation2 + $0x1d0] sm:$0xff]
        %v509 = vld [vmem:[#allocation2 + $0x1d8] sm:$0xff]
        %v510 = vld [vmem:[#allocation2 + $0x1e0] sm:$0xff]
        %v511 = vld [vmem:[#allocation2 + $0x1e8] sm:$0xff]
        %v512 = vld [vmem:[#allocation2 + $0x1f0] sm:$0xff]
        %v513 = vld [vmem:[#allocation2 + $0x1f8] sm:$0xff]
        %v514 = vld [vmem:[#allocation4] sm:$0xff]
        %v516 = vlaneseq
        %v517 = vshrl.u32 %v516, 7
        %v518 = vsub.s32 0, %v517
        %v519 = vrot.slane %v514, %v518
        %v520 = vlaneseq
        %v521 = vshrl.u32 %v520, 7
        %v522 = vsub.s32 1, %v521
        %v523 = vrot.slane %v514, %v522
        %v524 = vlaneseq
        %v525 = vshrl.u32 %v524, 7
        %v526 = vsub.s32 2, %v525
        %v527 = vrot.slane %v514, %v526
        %v528 = vlaneseq
        %v529 = vshrl.u32 %v528, 7
        %v530 = vsub.s32 3, %v529
        %v531 = vrot.slane %v514, %v530
        %v532 = vlaneseq
        %v533 = vshrl.u32 %v532, 7
        %v534 = vsub.s32 4, %v533
        %v535 = vrot.slane %v514, %v534
        %v536 = vlaneseq
        %v537 = vshrl.u32 %v536, 7
        %v538 = vsub.s32 5, %v537
        %v539 = vrot.slane %v514, %v538
        %v540 = vlaneseq
        %v541 = vshrl.u32 %v540, 7
        %v542 = vsub.s32 6, %v541
        %v543 = vrot.slane %v514, %v542
        %v544 = vlaneseq
        %v545 = vshrl.u32 %v544, 7
        %v546 = vsub.s32 7, %v545
        %v547 = vrot.slane %v514, %v546
        %v560 = vunpack.c.l.b16 %v446
        %v561 = vunpack.c.l.b16 %v447
        %v562 = vunpack.c.l.b16 %v448
        %v563 = vunpack.c.l.b16 %v449
        %v564 = vpack.c.b16 %v561, %v560
        %v565 = vpack.c.b16 %v563, %v562
        %v632 = vunpack.c.l.b16 %v450
        %v633 = vunpack.c.h.b16 %v450
        %v634 = vunpack.c.l.b16 %v451
        %v635 = vunpack.c.h.b16 %v451
        %v636 = vunpack.c.l.b16 %v452
        %v637 = vunpack.c.h.b16 %v452
        %v638 = vunpack.c.l.b16 %v453
        %v639 = vunpack.c.h.b16 %v453
        %v640 = vunpack.c.l.b16 %v454
        %v641 = vunpack.c.h.b16 %v454
        %v642 = vunpack.c.l.b16 %v455
        %v643 = vunpack.c.h.b16 %v455
        %v644 = vunpack.c.l.b16 %v456
        %v645 = vunpack.c.h.b16 %v456
        %v646 = vunpack.c.l.b16 %v457
        %v647 = vunpack.c.h.b16 %v457
        %v648 = vunpack.c.l.b16 %v458
        %v649 = vunpack.c.h.b16 %v458
        %v650 = vunpack.c.l.b16 %v459
        %v651 = vunpack.c.h.b16 %v459
        %v652 = vunpack.c.l.b16 %v460
        %v653 = vunpack.c.h.b16 %v460
        %v654 = vunpack.c.l.b16 %v461
        %v655 = vunpack.c.h.b16 %v461
        %v656 = vunpack.c.l.b16 %v462
        %v657 = vunpack.c.h.b16 %v462
        %v658 = vunpack.c.l.b16 %v463
        %v659 = vunpack.c.h.b16 %v463
        %v660 = vunpack.c.l.b16 %v464
        %v661 = vunpack.c.h.b16 %v464
        %v662 = vunpack.c.l.b16 %v465
        %v663 = vunpack.c.h.b16 %v465
        %v664 = vunpack.c.l.b16 %v466
        %v665 = vunpack.c.h.b16 %v466
        %v666 = vunpack.c.l.b16 %v467
        %v667 = vunpack.c.h.b16 %v467
        %v668 = vunpack.c.l.b16 %v468
        %v669 = vunpack.c.h.b16 %v468
        %v670 = vunpack.c.l.b16 %v469
        %v671 = vunpack.c.h.b16 %v469
        %v672 = vunpack.c.l.b16 %v470
        %v673 = vunpack.c.h.b16 %v470
        %v674 = vunpack.c.l.b16 %v471
        %v675 = vunpack.c.h.b16 %v471
        %v676 = vunpack.c.l.b16 %v472
        %v677 = vunpack.c.h.b16 %v472
        %v678 = vunpack.c.l.b16 %v473
        %v679 = vunpack.c.h.b16 %v473
        %v680 = vunpack.c.l.b16 %v474
        %v681 = vunpack.c.h.b16 %v474
        %v682 = vunpack.c.l.b16 %v475
        %v683 = vunpack.c.h.b16 %v475
        %v684 = vunpack.c.l.b16 %v476
        %v685 = vunpack.c.h.b16 %v476
        %v686 = vunpack.c.l.b16 %v477
        %v687 = vunpack.c.h.b16 %v477
        %v688 = vunpack.c.l.b16 %v478
        %v689 = vunpack.c.h.b16 %v478
        %v690 = vunpack.c.l.b16 %v479
        %v691 = vunpack.c.h.b16 %v479
        %v692 = vunpack.c.l.b16 %v480
        %v693 = vunpack.c.h.b16 %v480
        %v694 = vunpack.c.l.b16 %v481
        %v695 = vunpack.c.h.b16 %v481
        %v696 = vunpack.c.l.b16 %v482
        %v697 = vunpack.c.h.b16 %v482
        %v698 = vunpack.c.l.b16 %v483
        %v699 = vunpack.c.h.b16 %v483
        %v700 = vunpack.c.l.b16 %v484
        %v701 = vunpack.c.h.b16 %v484
        %v702 = vunpack.c.l.b16 %v485
        %v703 = vunpack.c.h.b16 %v485
        %v704 = vunpack.c.l.b16 %v486
        %v705 = vunpack.c.h.b16 %v486
        %v706 = vunpack.c.l.b16 %v487
        %v707 = vunpack.c.h.b16 %v487
        %v708 = vunpack.c.l.b16 %v488
        %v709 = vunpack.c.h.b16 %v488
        %v710 = vunpack.c.l.b16 %v489
        %v711 = vunpack.c.h.b16 %v489
        %v712 = vunpack.c.l.b16 %v490
        %v713 = vunpack.c.h.b16 %v490
        %v714 = vunpack.c.l.b16 %v491
        %v715 = vunpack.c.h.b16 %v491
        %v716 = vunpack.c.l.b16 %v492
        %v717 = vunpack.c.h.b16 %v492
        %v718 = vunpack.c.l.b16 %v493
        %v719 = vunpack.c.h.b16 %v493
        %v720 = vunpack.c.l.b16 %v494
        %v721 = vunpack.c.h.b16 %v494
        %v722 = vunpack.c.l.b16 %v495
        %v723 = vunpack.c.h.b16 %v495
        %v724 = vunpack.c.l.b16 %v496
        %v725 = vunpack.c.h.b16 %v496
        %v726 = vunpack.c.l.b16 %v497
        %v727 = vunpack.c.h.b16 %v497
        %v728 = vunpack.c.l.b16 %v498
        %v729 = vunpack.c.h.b16 %v498
        %v730 = vunpack.c.l.b16 %v499
        %v731 = vunpack.c.h.b16 %v499
        %v732 = vunpack.c.l.b16 %v500
        %v733 = vunpack.c.h.b16 %v500
        %v734 = vunpack.c.l.b16 %v501
        %v735 = vunpack.c.h.b16 %v501
        %v736 = vunpack.c.l.b16 %v502
        %v737 = vunpack.c.h.b16 %v502
        %v738 = vunpack.c.l.b16 %v503
        %v739 = vunpack.c.h.b16 %v503
        %v740 = vunpack.c.l.b16 %v504
        %v741 = vunpack.c.h.b16 %v504
        %v742 = vunpack.c.l.b16 %v505
        %v743 = vunpack.c.h.b16 %v505
        %v744 = vunpack.c.l.b16 %v506
        %v745 = vunpack.c.h.b16 %v506
        %v746 = vunpack.c.l.b16 %v507
        %v747 = vunpack.c.h.b16 %v507
        %v748 = vunpack.c.l.b16 %v508
        %v749 = vunpack.c.h.b16 %v508
        %v750 = vunpack.c.l.b16 %v509
        %v751 = vunpack.c.h.b16 %v509
        %v752 = vunpack.c.l.b16 %v510
        %v753 = vunpack.c.h.b16 %v510
        %v754 = vunpack.c.l.b16 %v511
        %v755 = vunpack.c.h.b16 %v511
        %v756 = vunpack.c.l.b16 %v512
        %v757 = vunpack.c.h.b16 %v512
        %v758 = vunpack.c.l.b16 %v513
        %v759 = vunpack.c.h.b16 %v513
        %v760 = vpack.c.b16 %v640, %v632
        %v761 = vpack.c.b16 %v641, %v633
        %v762 = vpack.c.b16 %v642, %v634
        %v763 = vpack.c.b16 %v643, %v635
        %v764 = vpack.c.b16 %v644, %v636
        %v765 = vpack.c.b16 %v645, %v637
        %v766 = vpack.c.b16 %v646, %v638
        %v767 = vpack.c.b16 %v647, %v639
        %v768 = vpack.c.b16 %v656, %v648
        %v769 = vpack.c.b16 %v657, %v649
        %v770 = vpack.c.b16 %v658, %v650
        %v771 = vpack.c.b16 %v659, %v651
        %v772 = vpack.c.b16 %v660, %v652
        %v773 = vpack.c.b16 %v661, %v653
        %v774 = vpack.c.b16 %v662, %v654
        %v775 = vpack.c.b16 %v663, %v655
        %v776 = vpack.c.b16 %v672, %v664
        %v777 = vpack.c.b16 %v673, %v665
        %v778 = vpack.c.b16 %v674, %v666
        %v779 = vpack.c.b16 %v675, %v667
        %v780 = vpack.c.b16 %v676, %v668
        %v781 = vpack.c.b16 %v677, %v669
        %v782 = vpack.c.b16 %v678, %v670
        %v783 = vpack.c.b16 %v679, %v671
        %v784 = vpack.c.b16 %v688, %v680
        %v785 = vpack.c.b16 %v689, %v681
        %v786 = vpack.c.b16 %v690, %v682
        %v787 = vpack.c.b16 %v691, %v683
        %v788 = vpack.c.b16 %v692, %v684
        %v789 = vpack.c.b16 %v693, %v685
        %v790 = vpack.c.b16 %v694, %v686
        %v791 = vpack.c.b16 %v695, %v687
        %v792 = vpack.c.b16 %v704, %v696
        %v793 = vpack.c.b16 %v705, %v697
        %v794 = vpack.c.b16 %v706, %v698
        %v795 = vpack.c.b16 %v707, %v699
        %v796 = vpack.c.b16 %v708, %v700
        %v797 = vpack.c.b16 %v709, %v701
        %v798 = vpack.c.b16 %v710, %v702
        %v799 = vpack.c.b16 %v711, %v703
        %v800 = vpack.c.b16 %v720, %v712
        %v801 = vpack.c.b16 %v721, %v713
        %v802 = vpack.c.b16 %v722, %v714
        %v803 = vpack.c.b16 %v723, %v715
        %v804 = vpack.c.b16 %v724, %v716
        %v805 = vpack.c.b16 %v725, %v717
        %v806 = vpack.c.b16 %v726, %v718
        %v807 = vpack.c.b16 %v727, %v719
        %v808 = vpack.c.b16 %v736, %v728
        %v809 = vpack.c.b16 %v737, %v729
        %v810 = vpack.c.b16 %v738, %v730
        %v811 = vpack.c.b16 %v739, %v731
        %v812 = vpack.c.b16 %v740, %v732
        %v813 = vpack.c.b16 %v741, %v733
        %v814 = vpack.c.b16 %v742, %v734
        %v815 = vpack.c.b16 %v743, %v735
        %v816 = vpack.c.b16 %v752, %v744
        %v817 = vpack.c.b16 %v753, %v745
        %v818 = vpack.c.b16 %v754, %v746
        %v819 = vpack.c.b16 %v755, %v747
        %v820 = vpack.c.b16 %v756, %v748
        %v821 = vpack.c.b16 %v757, %v749
        %v822 = vpack.c.b16 %v758, %v750
        %v823 = vpack.c.b16 %v759, %v751
        %888 = vmatprep.subr.bf16.mxu0 %v761
        %889 = vmatpush1.bf16.msra.mxu0 %v760
        %890 = vmatprep.subr.bf16.mxu0 %v769
        %891 = vmatpush1.bf16.msra.mxu0 %v768
        %892 = vmatprep.subr.bf16.mxu0 %v777
        %893 = vmatpush1.bf16.msra.mxu0 %v776
        %894 = vmatprep.subr.bf16.mxu0 %v785
        %895 = vmatpush1.bf16.msra.mxu0 %v784
        %896 = vmatprep.subr.bf16.mxu0 %v793
        %897 = vmatpush1.bf16.msra.mxu0 %v792
        %898 = vmatprep.subr.bf16.mxu0 %v801
        %899 = vmatpush1.bf16.msra.mxu0 %v800
        %900 = vmatprep.subr.bf16.mxu0 %v809
        %901 = vmatpush1.bf16.msra.mxu0 %v808
        %902 = vmatprep.subr.bf16.mxu0 %v817
        %903 = vmatpush1.bf16.msra.mxu0 %v816
        %904 = vmatprep.subr.bf16.mxu0 0
        %905 = vmatpush1.bf16.msra.mxu0 0
        %906 = vmatprep.subr.bf16.mxu0 0
        %907 = vmatpush1.bf16.msra.mxu0 0
        %908 = vmatprep.subr.bf16.mxu0 0
        %909 = vmatpush1.bf16.msra.mxu0 0
        %910 = vmatprep.subr.bf16.mxu0 0
        %911 = vmatpush1.bf16.msra.mxu0 0
        %912 = vmatprep.subr.bf16.mxu0 0
        %913 = vmatpush1.bf16.msra.mxu0 0
        %914 = vmatprep.subr.bf16.mxu0 0
        %915 = vmatpush1.bf16.msra.mxu0 0
        %916 = vmatprep.subr.bf16.mxu0 0
        %917 = vmatpush1.bf16.msra.mxu0 0
        %918 = vmatprep.subr.bf16.mxu0 0
        %919 = vmatpush1.bf16.msra.mxu0 0
        %920 = vmatprep.mubr.bf16.mxu0 0
        %921 = vmatmul.mubr.bf16.gmra.mrb[0].mxu0 %v564
        %v922 = vpop.f32.mrb[0].mxu0
        %v923 = vadd.f32 %v519, %v922
        %v924 = vpop.f32.mrb[0].mxu0
        %v925 = vadd.f32 %v523, %v924
        %v926 = vpop.f32.mrb[0].mxu0
        %v927 = vadd.f32 %v519, %v926
        %v928 = vpop.f32.mrb[0].mxu0
        %v929 = vadd.f32 %v523, %v928
        %930 = vmatprep.mubr.bf16.mxu0 0
        %931 = vmatmul.mubr.bf16.gmra.mrb[0].mxu0 %v565
        %v932 = vpop.f32.mrb[0].mxu0
        %v933 = vadd.f32 %v519, %v932
        %v934 = vpop.f32.mrb[0].mxu0
        %v935 = vadd.f32 %v523, %v934
        %v936 = vpop.f32.mrb[0].mxu0
        %v937 = vadd.f32 %v519, %v936
        %v938 = vpop.f32.mrb[0].mxu0
        %v939 = vadd.f32 %v523, %v938
        %940 = vdwg.mxu0
        %941 = vmatprep.subr.bf16.mxu0 %v763
        %942 = vmatpush1.bf16.msra.mxu0 %v762
        %943 = vmatprep.subr.bf16.mxu0 %v771
        %944 = vmatpush1.bf16.msra.mxu0 %v770
        %945 = vmatprep.subr.bf16.mxu0 %v779
        %946 = vmatpush1.bf16.msra.mxu0 %v778
        %947 = vmatprep.subr.bf16.mxu0 %v787
        %948 = vmatpush1.bf16.msra.mxu0 %v786
        %949 = vmatprep.subr.bf16.mxu0 %v795
        %950 = vmatpush1.bf16.msra.mxu0 %v794
        %951 = vmatprep.subr.bf16.mxu0 %v803
        %952 = vmatpush1.bf16.msra.mxu0 %v802
        %953 = vmatprep.subr.bf16.mxu0 %v811
        %954 = vmatpush1.bf16.msra.mxu0 %v810
        %955 = vmatprep.subr.bf16.mxu0 %v819
        %956 = vmatpush1.bf16.msra.mxu0 %v818
        %957 = vmatprep.subr.bf16.mxu0 0
        %958 = vmatpush1.bf16.msra.mxu0 0
        %959 = vmatprep.subr.bf16.mxu0 0
        %960 = vmatpush1.bf16.msra.mxu0 0
        %961 = vmatprep.subr.bf16.mxu0 0
        %962 = vmatpush1.bf16.msra.mxu0 0
        %963 = vmatprep.subr.bf16.mxu0 0
        %964 = vmatpush1.bf16.msra.mxu0 0
        %965 = vmatprep.subr.bf16.mxu0 0
        %966 = vmatpush1.bf16.msra.mxu0 0
        %967 = vmatprep.subr.bf16.mxu0 0
        %968 = vmatpush1.bf16.msra.mxu0 0
        %969 = vmatprep.subr.bf16.mxu0 0
        %970 = vmatpush1.bf16.msra.mxu0 0
        %971 = vmatprep.subr.bf16.mxu0 0
        %972 = vmatpush1.bf16.msra.mxu0 0
        %973 = vmatprep.mubr.bf16.mxu0 0
        %974 = vmatmul.mubr.bf16.gmra.mrb[0].mxu0 %v564
        %v975 = vpop.f32.mrb[0].mxu0
        %v976 = vadd.f32 %v527, %v975
        %v977 = vpop.f32.mrb[0].mxu0
        %v978 = vadd.f32 %v531, %v977
        %v979 = vpop.f32.mrb[0].mxu0
        %v980 = vadd.f32 %v527, %v979
        %v981 = vpop.f32.mrb[0].mxu0
        %v982 = vadd.f32 %v531, %v981
        %983 = vmatprep.mubr.bf16.mxu0 0
        %984 = vmatmul.mubr.bf16.gmra.mrb[0].mxu0 %v565
        %v985 = vpop.f32.mrb[0].mxu0
        %v986 = vadd.f32 %v527, %v985
        %v987 = vpop.f32.mrb[0].mxu0
        %v988 = vadd.f32 %v531, %v987
        %v989 = vpop.f32.mrb[0].mxu0
        %v990 = vadd.f32 %v527, %v989
        %v991 = vpop.f32.mrb[0].mxu0
        %v992 = vadd.f32 %v531, %v991
        %993 = vdwg.mxu0
        %994 = vmatprep.subr.bf16.mxu0 %v765
        %995 = vmatpush1.bf16.msra.mxu0 %v764
        %996 = vmatprep.subr.bf16.mxu0 %v773
        %997 = vmatpush1.bf16.msra.mxu0 %v772
        %998 = vmatprep.subr.bf16.mxu0 %v781
        %999 = vmatpush1.bf16.msra.mxu0 %v780
        %1000 = vmatprep.subr.bf16.mxu0 %v789
        %1001 = vmatpush1.bf16.msra.mxu0 %v788
        %1002 = vmatprep.subr.bf16.mxu0 %v797
        %1003 = vmatpush1.bf16.msra.mxu0 %v796
        %1004 = vmatprep.subr.bf16.mxu0 %v805
        %1005 = vmatpush1.bf16.msra.mxu0 %v804
        %1006 = vmatprep.subr.bf16.mxu0 %v813
        %1007 = vmatpush1.bf16.msra.mxu0 %v812
        %1008 = vmatprep.subr.bf16.mxu0 %v821
        %1009 = vmatpush1.bf16.msra.mxu0 %v820
        %1010 = vmatprep.subr.bf16.mxu0 0
        %1011 = vmatpush1.bf16.msra.mxu0 0
        %1012 = vmatprep.subr.bf16.mxu0 0
        %1013 = vmatpush1.bf16.msra.mxu0 0
        %1014 = vmatprep.subr.bf16.mxu0 0
        %1015 = vmatpush1.bf16.msra.mxu0 0
        %1016 = vmatprep.subr.bf16.mxu0 0
        %1017 = vmatpush1.bf16.msra.mxu0 0
        %1018 = vmatprep.subr.bf16.mxu0 0
        %1019 = vmatpush1.bf16.msra.mxu0 0
        %1020 = vmatprep.subr.bf16.mxu0 0
        %1021 = vmatpush1.bf16.msra.mxu0 0
        %1022 = vmatprep.subr.bf16.mxu0 0
        %1023 = vmatpush1.bf16.msra.mxu0 0
        %1024 = vmatprep.subr.bf16.mxu0 0
        %1025 = vmatpush1.bf16.msra.mxu0 0
        %1026 = vmatprep.mubr.bf16.mxu0 0
        %1027 = vmatmul.mubr.bf16.gmra.mrb[0].mxu0 %v564
        %v1028 = vpop.f32.mrb[0].mxu0
        %v1029 = vadd.f32 %v535, %v1028
        %v1030 = vpop.f32.mrb[0].mxu0
        %v1031 = vadd.f32 %v539, %v1030
        %v1032 = vpop.f32.mrb[0].mxu0
        %v1033 = vadd.f32 %v535, %v1032
        %v1034 = vpop.f32.mrb[0].mxu0
        %v1035 = vadd.f32 %v539, %v1034
        %1036 = vmatprep.mubr.bf16.mxu0 0
        %1037 = vmatmul.mubr.bf16.gmra.mrb[0].mxu0 %v565
        %v1038 = vpop.f32.mrb[0].mxu0
        %v1039 = vadd.f32 %v535, %v1038
        %v1040 = vpop.f32.mrb[0].mxu0
        %v1041 = vadd.f32 %v539, %v1040
        %v1042 = vpop.f32.mrb[0].mxu0
        %v1043 = vadd.f32 %v535, %v1042
        %v1044 = vpop.f32.mrb[0].mxu0
        %v1045 = vadd.f32 %v539, %v1044
        %1046 = vdwg.mxu0
        %1047 = vmatprep.subr.bf16.mxu0 %v767
        %1048 = vmatpush1.bf16.msra.mxu0 %v766
        %1049 = vmatprep.subr.bf16.mxu0 %v775
        %1050 = vmatpush1.bf16.msra.mxu0 %v774
        %1051 = vmatprep.subr.bf16.mxu0 %v783
        %1052 = vmatpush1.bf16.msra.mxu0 %v782
        %1053 = vmatprep.subr.bf16.mxu0 %v791
        %1054 = vmatpush1.bf16.msra.mxu0 %v790
        %1055 = vmatprep.subr.bf16.mxu0 %v799
        %1056 = vmatpush1.bf16.msra.mxu0 %v798
        %1057 = vmatprep.subr.bf16.mxu0 %v807
        %1058 = vmatpush1.bf16.msra.mxu0 %v806
        %1059 = vmatprep.subr.bf16.mxu0 %v815
        %1060 = vmatpush1.bf16.msra.mxu0 %v814
        %1061 = vmatprep.subr.bf16.mxu0 %v823
        %1062 = vmatpush1.bf16.msra.mxu0 %v822
        %1063 = vmatprep.subr.bf16.mxu0 0
        %1064 = vmatpush1.bf16.msra.mxu0 0
        %1065 = vmatprep.subr.bf16.mxu0 0
        %1066 = vmatpush1.bf16.msra.mxu0 0
        %1067 = vmatprep.subr.bf16.mxu0 0
        %1068 = vmatpush1.bf16.msra.mxu0 0
        %1069 = vmatprep.subr.bf16.mxu0 0
        %1070 = vmatpush1.bf16.msra.mxu0 0
        %1071 = vmatprep.subr.bf16.mxu0 0
        %1072 = vmatpush1.bf16.msra.mxu0 0
        %1073 = vmatprep.subr.bf16.mxu0 0
        %1074 = vmatpush1.bf16.msra.mxu0 0
        %1075 = vmatprep.subr.bf16.mxu0 0
        %1076 = vmatpush1.bf16.msra.mxu0 0
        %1077 = vmatprep.subr.bf16.mxu0 0
        %1078 = vmatpush1.bf16.msra.mxu0 0
        %1079 = vmatprep.mubr.bf16.mxu0 0
        %1080 = vmatmul.mubr.bf16.gmra.mrb[0].mxu0 %v564
        %v1081 = vpop.f32.mrb[0].mxu0
        %v1082 = vadd.f32 %v543, %v1081
        %v1083 = vpop.f32.mrb[0].mxu0
        %v1084 = vadd.f32 %v547, %v1083
        %v1085 = vpop.f32.mrb[0].mxu0
        %v1086 = vadd.f32 %v543, %v1085
        %v1087 = vpop.f32.mrb[0].mxu0
        %v1088 = vadd.f32 %v547, %v1087
        %1089 = vmatprep.mubr.bf16.mxu0 0
        %1090 = vmatmul.mubr.bf16.gmra.mrb[0].mxu0 %v565
        %v1091 = vpop.f32.mrb[0].mxu0
        %v1092 = vadd.f32 %v543, %v1091
        %v1093 = vpop.f32.mrb[0].mxu0
        %v1094 = vadd.f32 %v547, %v1093
        %v1095 = vpop.f32.mrb[0].mxu0
        %v1096 = vadd.f32 %v543, %v1095
        %v1097 = vpop.f32.mrb[0].mxu0
        %v1098 = vadd.f32 %v547, %v1097
        %1099 = vdwg.mxu0
        %v1100 = vmul.f32 %v923, 0.2
        %v1101 = vmul.f32 %v925, 0.2
        %v1102 = vmul.f32 %v976, 0.2
        %v1103 = vmul.f32 %v978, 0.2
        %v1104 = vmul.f32 %v1029, 0.2
        %v1105 = vmul.f32 %v1031, 0.2
        %v1106 = vmul.f32 %v1082, 0.2
        %v1107 = vmul.f32 %v1084, 0.2
        %v1108 = vmul.f32 %v927, 0.2
        %v1109 = vmul.f32 %v929, 0.2
        %v1110 = vmul.f32 %v980, 0.2
        %v1111 = vmul.f32 %v982, 0.2
        %v1112 = vmul.f32 %v1033, 0.2
        %v1113 = vmul.f32 %v1035, 0.2
        %v1114 = vmul.f32 %v1086, 0.2
        %v1115 = vmul.f32 %v1088, 0.2
        %v1116 = vmul.f32 %v933, 0.2
        %v1117 = vmul.f32 %v935, 0.2
        %v1118 = vmul.f32 %v986, 0.2
        %v1119 = vmul.f32 %v988, 0.2
        %v1120 = vmul.f32 %v1039, 0.2
        %v1121 = vmul.f32 %v1041, 0.2
        %v1122 = vmul.f32 %v1092, 0.2
        %v1123 = vmul.f32 %v1094, 0.2
        %v1124 = vmul.f32 %v937, 0.2
        %v1125 = vmul.f32 %v939, 0.2
        %v1126 = vmul.f32 %v990, 0.2
        %v1127 = vmul.f32 %v992, 0.2
        %v1128 = vmul.f32 %v1043, 0.2
        %v1129 = vmul.f32 %v1045, 0.2
        %v1130 = vmul.f32 %v1096, 0.2
        %v1131 = vmul.f32 %v1098, 0.2
        %v1132 = vmax.f32 %v923, %v1100
        %v1133 = vmax.f32 %v925, %v1101
        %v1134 = vmax.f32 %v976, %v1102
        %v1135 = vmax.f32 %v978, %v1103
        %v1136 = vmax.f32 %v1029, %v1104
        %v1137 = vmax.f32 %v1031, %v1105
        %v1138 = vmax.f32 %v1082, %v1106
        %v1139 = vmax.f32 %v1084, %v1107
        %v1140 = vmax.f32 %v927, %v1108
        %v1141 = vmax.f32 %v929, %v1109
        %v1142 = vmax.f32 %v980, %v1110
        %v1143 = vmax.f32 %v982, %v1111
        %v1144 = vmax.f32 %v1033, %v1112
        %v1145 = vmax.f32 %v1035, %v1113
        %v1146 = vmax.f32 %v1086, %v1114
        %v1147 = vmax.f32 %v1088, %v1115
        %v1148 = vmax.f32 %v933, %v1116
        %v1149 = vmax.f32 %v935, %v1117
        %v1150 = vmax.f32 %v986, %v1118
        %v1151 = vmax.f32 %v988, %v1119
        %v1152 = vmax.f32 %v1039, %v1120
        %v1153 = vmax.f32 %v1041, %v1121
        %v1154 = vmax.f32 %v1092, %v1122
        %v1155 = vmax.f32 %v1094, %v1123
        %v1156 = vmax.f32 %v937, %v1124
        %v1157 = vmax.f32 %v939, %v1125
        %v1158 = vmax.f32 %v990, %v1126
        %v1159 = vmax.f32 %v992, %v1127
        %v1160 = vmax.f32 %v1043, %v1128
        %v1161 = vmax.f32 %v1045, %v1129
        %v1162 = vmax.f32 %v1096, %v1130
        %v1163 = vmax.f32 %v1098, %v1131
        %v1164 = vpack.c.bf16 %v1140, %v1132
        %v1165 = vpack.c.bf16 %v1141, %v1133
        %v1166 = vpack.c.bf16 %v1142, %v1134
        %v1167 = vpack.c.bf16 %v1143, %v1135
        %v1168 = vpack.c.bf16 %v1144, %v1136
        %v1169 = vpack.c.bf16 %v1145, %v1137
        %v1170 = vpack.c.bf16 %v1146, %v1138
        %v1171 = vpack.c.bf16 %v1147, %v1139
        %v1172 = vpack.c.bf16 %v1156, %v1148
        %v1173 = vpack.c.bf16 %v1157, %v1149
        %v1174 = vpack.c.bf16 %v1158, %v1150
        %v1175 = vpack.c.bf16 %v1159, %v1151
        %v1176 = vpack.c.bf16 %v1160, %v1152
        %v1177 = vpack.c.bf16 %v1161, %v1153
        %v1178 = vpack.c.bf16 %v1162, %v1154
        %v1179 = vpack.c.bf16 %v1163, %v1155
        %v1180 = vld [vmem:[#allocation6] sm:$0xff]
        %v1181 = vld [vmem:[#allocation6 + $0x8] sm:$0xff]
        %v1182 = vld [vmem:[#allocation6 + $0x10] sm:$0xff]
        %v1183 = vld [vmem:[#allocation6 + $0x18] sm:$0xff]
        %v1184 = vld [vmem:[#allocation6 + $0x20] sm:$0xff]
        %v1185 = vld [vmem:[#allocation6 + $0x28] sm:$0xff]
        %v1186 = vld [vmem:[#allocation6 + $0x30] sm:$0xff]
        %v1187 = vld [vmem:[#allocation6 + $0x38] sm:$0xff]
        %v1188 = vld [vmem:[#allocation6 + $0x40] sm:$0xff]
        %v1189 = vld [vmem:[#allocation6 + $0x48] sm:$0xff]
        %v1190 = vld [vmem:[#allocation6 + $0x50] sm:$0xff]
        %v1191 = vld [vmem:[#allocation6 + $0x58] sm:$0xff]
        %v1192 = vld [vmem:[#allocation6 + $0x60] sm:$0xff]
        %v1193 = vld [vmem:[#allocation6 + $0x68] sm:$0xff]
        %v1194 = vld [vmem:[#allocation6 + $0x70] sm:$0xff]
        %v1195 = vld [vmem:[#allocation6 + $0x78] sm:$0xff]
        %v1196 = vld [vmem:[#allocation6 + $0x80] sm:$0xff]
        %v1197 = vld [vmem:[#allocation6 + $0x88] sm:$0xff]
        %v1198 = vld [vmem:[#allocation6 + $0x90] sm:$0xff]
        %v1199 = vld [vmem:[#allocation6 + $0x98] sm:$0xff]
        %v1200 = vld [vmem:[#allocation6 + $0xa0] sm:$0xff]
        %v1201 = vld [vmem:[#allocation6 + $0xa8] sm:$0xff]
        %v1202 = vld [vmem:[#allocation6 + $0xb0] sm:$0xff]
        %v1203 = vld [vmem:[#allocation6 + $0xb8] sm:$0xff]
        %v1204 = vld [vmem:[#allocation6 + $0xc0] sm:$0xff]
        %v1205 = vld [vmem:[#allocation6 + $0xc8] sm:$0xff]
        %v1206 = vld [vmem:[#allocation6 + $0xd0] sm:$0xff]
        %v1207 = vld [vmem:[#allocation6 + $0xd8] sm:$0xff]
        %v1208 = vld [vmem:[#allocation6 + $0xe0] sm:$0xff]
        %v1209 = vld [vmem:[#allocation6 + $0xe8] sm:$0xff]
        %v1210 = vld [vmem:[#allocation6 + $0xf0] sm:$0xff]
        %v1211 = vld [vmem:[#allocation6 + $0xf8] sm:$0xff]
        %v1212 = vld [vmem:[#allocation6 + $0x100] sm:$0xff]
        %v1213 = vld [vmem:[#allocation6 + $0x108] sm:$0xff]
        %v1214 = vld [vmem:[#allocation6 + $0x110] sm:$0xff]
        %v1215 = vld [vmem:[#allocation6 + $0x118] sm:$0xff]
        %v1216 = vld [vmem:[#allocation6 + $0x120] sm:$0xff]
        %v1217 = vld [vmem:[#allocation6 + $0x128] sm:$0xff]
        %v1218 = vld [vmem:[#allocation6 + $0x130] sm:$0xff]
        %v1219 = vld [vmem:[#allocation6 + $0x138] sm:$0xff]
        %v1220 = vld [vmem:[#allocation6 + $0x140] sm:$0xff]
        %v1221 = vld [vmem:[#allocation6 + $0x148] sm:$0xff]
        %v1222 = vld [vmem:[#allocation6 + $0x150] sm:$0xff]
        %v1223 = vld [vmem:[#allocation6 + $0x158] sm:$0xff]
        %v1224 = vld [vmem:[#allocation6 + $0x160] sm:$0xff]
        %v1225 = vld [vmem:[#allocation6 + $0x168] sm:$0xff]
        %v1226 = vld [vmem:[#allocation6 + $0x170] sm:$0xff]
        %v1227 = vld [vmem:[#allocation6 + $0x178] sm:$0xff]
        %v1228 = vld [vmem:[#allocation6 + $0x180] sm:$0xff]
        %v1229 = vld [vmem:[#allocation6 + $0x188] sm:$0xff]
        %v1230 = vld [vmem:[#allocation6 + $0x190] sm:$0xff]
        %v1231 = vld [vmem:[#allocation6 + $0x198] sm:$0xff]
        %v1232 = vld [vmem:[#allocation6 + $0x1a0] sm:$0xff]
        %v1233 = vld [vmem:[#allocation6 + $0x1a8] sm:$0xff]
        %v1234 = vld [vmem:[#allocation6 + $0x1b0] sm:$0xff]
        %v1235 = vld [vmem:[#allocation6 + $0x1b8] sm:$0xff]
        %v1236 = vld [vmem:[#allocation6 + $0x1c0] sm:$0xff]
        %v1237 = vld [vmem:[#allocation6 + $0x1c8] sm:$0xff]
        %v1238 = vld [vmem:[#allocation6 + $0x1d0] sm:$0xff]
        %v1239 = vld [vmem:[#allocation6 + $0x1d8] sm:$0xff]
        %v1240 = vld [vmem:[#allocation6 + $0x1e0] sm:$0xff]
        %v1241 = vld [vmem:[#allocation6 + $0x1e8] sm:$0xff]
        %v1242 = vld [vmem:[#allocation6 + $0x1f0] sm:$0xff]
        %v1243 = vld [vmem:[#allocation6 + $0x1f8] sm:$0xff]
        %v1244 = vld [vmem:[#allocation6 + $0x200] sm:$0xff]
        %v1245 = vld [vmem:[#allocation6 + $0x208] sm:$0xff]
        %v1246 = vld [vmem:[#allocation6 + $0x210] sm:$0xff]
        %v1247 = vld [vmem:[#allocation6 + $0x218] sm:$0xff]
        %v1248 = vld [vmem:[#allocation6 + $0x220] sm:$0xff]
        %v1249 = vld [vmem:[#allocation6 + $0x228] sm:$0xff]
        %v1250 = vld [vmem:[#allocation6 + $0x230] sm:$0xff]
        %v1251 = vld [vmem:[#allocation6 + $0x238] sm:$0xff]
        %v1252 = vld [vmem:[#allocation6 + $0x240] sm:$0xff]
        %v1253 = vld [vmem:[#allocation6 + $0x248] sm:$0xff]
        %v1254 = vld [vmem:[#allocation6 + $0x250] sm:$0xff]
        %v1255 = vld [vmem:[#allocation6 + $0x258] sm:$0xff]
        %v1256 = vld [vmem:[#allocation6 + $0x260] sm:$0xff]
        %v1257 = vld [vmem:[#allocation6 + $0x268] sm:$0xff]
        %v1258 = vld [vmem:[#allocation6 + $0x270] sm:$0xff]
        %v1259 = vld [vmem:[#allocation6 + $0x278] sm:$0xff]
        %v1260 = vld [vmem:[#allocation6 + $0x280] sm:$0xff]
        %v1261 = vld [vmem:[#allocation6 + $0x288] sm:$0xff]
        %v1262 = vld [vmem:[#allocation6 + $0x290] sm:$0xff]
        %v1263 = vld [vmem:[#allocation6 + $0x298] sm:$0xff]
        %v1264 = vld [vmem:[#allocation6 + $0x2a0] sm:$0xff]
        %v1265 = vld [vmem:[#allocation6 + $0x2a8] sm:$0xff]
        %v1266 = vld [vmem:[#allocation6 + $0x2b0] sm:$0xff]
        %v1267 = vld [vmem:[#allocation6 + $0x2b8] sm:$0xff]
        %v1268 = vld [vmem:[#allocation6 + $0x2c0] sm:$0xff]
        %v1269 = vld [vmem:[#allocation6 + $0x2c8] sm:$0xff]
        %v1270 = vld [vmem:[#allocation6 + $0x2d0] sm:$0xff]
        %v1271 = vld [vmem:[#allocation6 + $0x2d8] sm:$0xff]
        %v1272 = vld [vmem:[#allocation6 + $0x2e0] sm:$0xff]
        %v1273 = vld [vmem:[#allocation6 + $0x2e8] sm:$0xff]
        %v1274 = vld [vmem:[#allocation6 + $0x2f0] sm:$0xff]
        %v1275 = vld [vmem:[#allocation6 + $0x2f8] sm:$0xff]
        %v1276 = vld [vmem:[#allocation6 + $0x300] sm:$0xff]
        %v1277 = vld [vmem:[#allocation6 + $0x308] sm:$0xff]
        %v1278 = vld [vmem:[#allocation6 + $0x310] sm:$0xff]
        %v1279 = vld [vmem:[#allocation6 + $0x318] sm:$0xff]
        %v1280 = vld [vmem:[#allocation6 + $0x320] sm:$0xff]
        %v1281 = vld [vmem:[#allocation6 + $0x328] sm:$0xff]
        %v1282 = vld [vmem:[#allocation6 + $0x330] sm:$0xff]
        %v1283 = vld [vmem:[#allocation6 + $0x338] sm:$0xff]
        %v1284 = vld [vmem:[#allocation6 + $0x340] sm:$0xff]
        %v1285 = vld [vmem:[#allocation6 + $0x348] sm:$0xff]
        %v1286 = vld [vmem:[#allocation6 + $0x350] sm:$0xff]
        %v1287 = vld [vmem:[#allocation6 + $0x358] sm:$0xff]
        %v1288 = vld [vmem:[#allocation6 + $0x360] sm:$0xff]
        %v1289 = vld [vmem:[#allocation6 + $0x368] sm:$0xff]
        %v1290 = vld [vmem:[#allocation6 + $0x370] sm:$0xff]
        %v1291 = vld [vmem:[#allocation6 + $0x378] sm:$0xff]
        %v1292 = vld [vmem:[#allocation6 + $0x380] sm:$0xff]
        %v1293 = vld [vmem:[#allocation6 + $0x388] sm:$0xff]
        %v1294 = vld [vmem:[#allocation6 + $0x390] sm:$0xff]
        %v1295 = vld [vmem:[#allocation6 + $0x398] sm:$0xff]
        %v1296 = vld [vmem:[#allocation6 + $0x3a0] sm:$0xff]
        %v1297 = vld [vmem:[#allocation6 + $0x3a8] sm:$0xff]
        %v1298 = vld [vmem:[#allocation6 + $0x3b0] sm:$0xff]
        %v1299 = vld [vmem:[#allocation6 + $0x3b8] sm:$0xff]
        %v1300 = vld [vmem:[#allocation6 + $0x3c0] sm:$0xff]
        %v1301 = vld [vmem:[#allocation6 + $0x3c8] sm:$0xff]
        %v1302 = vld [vmem:[#allocation6 + $0x3d0] sm:$0xff]
        %v1303 = vld [vmem:[#allocation6 + $0x3d8] sm:$0xff]
        %v1304 = vld [vmem:[#allocation6 + $0x3e0] sm:$0xff]
        %v1305 = vld [vmem:[#allocation6 + $0x3e8] sm:$0xff]
        %v1306 = vld [vmem:[#allocation6 + $0x3f0] sm:$0xff]
        %v1307 = vld [vmem:[#allocation6 + $0x3f8] sm:$0xff]
        %v1308 = vld [vmem:[#allocation6 + $0x400] sm:$0xff]
        %v1309 = vld [vmem:[#allocation6 + $0x408] sm:$0xff]
        %v1310 = vld [vmem:[#allocation6 + $0x410] sm:$0xff]
        %v1311 = vld [vmem:[#allocation6 + $0x418] sm:$0xff]
        %v1312 = vld [vmem:[#allocation6 + $0x420] sm:$0xff]
        %v1313 = vld [vmem:[#allocation6 + $0x428] sm:$0xff]
        %v1314 = vld [vmem:[#allocation6 + $0x430] sm:$0xff]
        %v1315 = vld [vmem:[#allocation6 + $0x438] sm:$0xff]
        %v1316 = vld [vmem:[#allocation6 + $0x440] sm:$0xff]
        %v1317 = vld [vmem:[#allocation6 + $0x448] sm:$0xff]
        %v1318 = vld [vmem:[#allocation6 + $0x450] sm:$0xff]
        %v1319 = vld [vmem:[#allocation6 + $0x458] sm:$0xff]
        %v1320 = vld [vmem:[#allocation6 + $0x460] sm:$0xff]
        %v1321 = vld [vmem:[#allocation6 + $0x468] sm:$0xff]
        %v1322 = vld [vmem:[#allocation6 + $0x470] sm:$0xff]
        %v1323 = vld [vmem:[#allocation6 + $0x478] sm:$0xff]
        %v1324 = vld [vmem:[#allocation6 + $0x480] sm:$0xff]
        %v1325 = vld [vmem:[#allocation6 + $0x488] sm:$0xff]
        %v1326 = vld [vmem:[#allocation6 + $0x490] sm:$0xff]
        %v1327 = vld [vmem:[#allocation6 + $0x498] sm:$0xff]
        %v1328 = vld [vmem:[#allocation6 + $0x4a0] sm:$0xff]
        %v1329 = vld [vmem:[#allocation6 + $0x4a8] sm:$0xff]
        %v1330 = vld [vmem:[#allocation6 + $0x4b0] sm:$0xff]
        %v1331 = vld [vmem:[#allocation6 + $0x4b8] sm:$0xff]
        %v1332 = vld [vmem:[#allocation6 + $0x4c0] sm:$0xff]
        %v1333 = vld [vmem:[#allocation6 + $0x4c8] sm:$0xff]
        %v1334 = vld [vmem:[#allocation6 + $0x4d0] sm:$0xff]
        %v1335 = vld [vmem:[#allocation6 + $0x4d8] sm:$0xff]
        %v1336 = vld [vmem:[#allocation6 + $0x4e0] sm:$0xff]
        %v1337 = vld [vmem:[#allocation6 + $0x4e8] sm:$0xff]
        %v1338 = vld [vmem:[#allocation6 + $0x4f0] sm:$0xff]
        %v1339 = vld [vmem:[#allocation6 + $0x4f8] sm:$0xff]
        %v1340 = vld [vmem:[#allocation6 + $0x500] sm:$0xff]
        %v1341 = vld [vmem:[#allocation6 + $0x508] sm:$0xff]
        %v1342 = vld [vmem:[#allocation6 + $0x510] sm:$0xff]
        %v1343 = vld [vmem:[#allocation6 + $0x518] sm:$0xff]
        %v1344 = vld [vmem:[#allocation6 + $0x520] sm:$0xff]
        %v1345 = vld [vmem:[#allocation6 + $0x528] sm:$0xff]
        %v1346 = vld [vmem:[#allocation6 + $0x530] sm:$0xff]
        %v1347 = vld [vmem:[#allocation6 + $0x538] sm:$0xff]
        %v1348 = vld [vmem:[#allocation6 + $0x540] sm:$0xff]
        %v1349 = vld [vmem:[#allocation6 + $0x548] sm:$0xff]
        %v1350 = vld [vmem:[#allocation6 + $0x550] sm:$0xff]
        %v1351 = vld [vmem:[#allocation6 + $0x558] sm:$0xff]
        %v1352 = vld [vmem:[#allocation6 + $0x560] sm:$0xff]
        %v1353 = vld [vmem:[#allocation6 + $0x568] sm:$0xff]
        %v1354 = vld [vmem:[#allocation6 + $0x570] sm:$0xff]
        %v1355 = vld [vmem:[#allocation6 + $0x578] sm:$0xff]
        %v1356 = vld [vmem:[#allocation6 + $0x580] sm:$0xff]
        %v1357 = vld [vmem:[#allocation6 + $0x588] sm:$0xff]
        %v1358 = vld [vmem:[#allocation6 + $0x590] sm:$0xff]
        %v1359 = vld [vmem:[#allocation6 + $0x598] sm:$0xff]
        %v1360 = vld [vmem:[#allocation6 + $0x5a0] sm:$0xff]
        %v1361 = vld [vmem:[#allocation6 + $0x5a8] sm:$0xff]
        %v1362 = vld [vmem:[#allocation6 + $0x5b0] sm:$0xff]
        %v1363 = vld [vmem:[#allocation6 + $0x5b8] sm:$0xff]
        %v1364 = vld [vmem:[#allocation6 + $0x5c0] sm:$0xff]
        %v1365 = vld [vmem:[#allocation6 + $0x5c8] sm:$0xff]
        %v1366 = vld [vmem:[#allocation6 + $0x5d0] sm:$0xff]
        %v1367 = vld [vmem:[#allocation6 + $0x5d8] sm:$0xff]
        %v1368 = vld [vmem:[#allocation6 + $0x5e0] sm:$0xff]
        %v1369 = vld [vmem:[#allocation6 + $0x5e8] sm:$0xff]
        %v1370 = vld [vmem:[#allocation6 + $0x5f0] sm:$0xff]
        %v1371 = vld [vmem:[#allocation6 + $0x5f8] sm:$0xff]
        %v1372 = vld [vmem:[#allocation6 + $0x600] sm:$0xff]
        %v1373 = vld [vmem:[#allocation6 + $0x608] sm:$0xff]
        %v1374 = vld [vmem:[#allocation6 + $0x610] sm:$0xff]
        %v1375 = vld [vmem:[#allocation6 + $0x618] sm:$0xff]
        %v1376 = vld [vmem:[#allocation6 + $0x620] sm:$0xff]
        %v1377 = vld [vmem:[#allocation6 + $0x628] sm:$0xff]
        %v1378 = vld [vmem:[#allocation6 + $0x630] sm:$0xff]
        %v1379 = vld [vmem:[#allocation6 + $0x638] sm:$0xff]
        %v1380 = vld [vmem:[#allocation6 + $0x640] sm:$0xff]
        %v1381 = vld [vmem:[#allocation6 + $0x648] sm:$0xff]
        %v1382 = vld [vmem:[#allocation6 + $0x650] sm:$0xff]
        %v1383 = vld [vmem:[#allocation6 + $0x658] sm:$0xff]
        %v1384 = vld [vmem:[#allocation6 + $0x660] sm:$0xff]
        %v1385 = vld [vmem:[#allocation6 + $0x668] sm:$0xff]
        %v1386 = vld [vmem:[#allocation6 + $0x670] sm:$0xff]
        %v1387 = vld [vmem:[#allocation6 + $0x678] sm:$0xff]
        %v1388 = vld [vmem:[#allocation6 + $0x680] sm:$0xff]
        %v1389 = vld [vmem:[#allocation6 + $0x688] sm:$0xff]
        %v1390 = vld [vmem:[#allocation6 + $0x690] sm:$0xff]
        %v1391 = vld [vmem:[#allocation6 + $0x698] sm:$0xff]
        %v1392 = vld [vmem:[#allocation6 + $0x6a0] sm:$0xff]
        %v1393 = vld [vmem:[#allocation6 + $0x6a8] sm:$0xff]
        %v1394 = vld [vmem:[#allocation6 + $0x6b0] sm:$0xff]
        %v1395 = vld [vmem:[#allocation6 + $0x6b8] sm:$0xff]
        %v1396 = vld [vmem:[#allocation6 + $0x6c0] sm:$0xff]
        %v1397 = vld [vmem:[#allocation6 + $0x6c8] sm:$0xff]
        %v1398 = vld [vmem:[#allocation6 + $0x6d0] sm:$0xff]
        %v1399 = vld [vmem:[#allocation6 + $0x6d8] sm:$0xff]
        %v1400 = vld [vmem:[#allocation6 + $0x6e0] sm:$0xff]
        %v1401 = vld [vmem:[#allocation6 + $0x6e8] sm:$0xff]
        %v1402 = vld [vmem:[#allocation6 + $0x6f0] sm:$0xff]
        %v1403 = vld [vmem:[#allocation6 + $0x6f8] sm:$0xff]
        %v1404 = vld [vmem:[#allocation6 + $0x700] sm:$0xff]
        %v1405 = vld [vmem:[#allocation6 + $0x708] sm:$0xff]
        %v1406 = vld [vmem:[#allocation6 + $0x710] sm:$0xff]
        %v1407 = vld [vmem:[#allocation6 + $0x718] sm:$0xff]
        %v1408 = vld [vmem:[#allocation6 + $0x720] sm:$0xff]
        %v1409 = vld [vmem:[#allocation6 + $0x728] sm:$0xff]
        %v1410 = vld [vmem:[#allocation6 + $0x730] sm:$0xff]
        %v1411 = vld [vmem:[#allocation6 + $0x738] sm:$0xff]
        %v1412 = vld [vmem:[#allocation6 + $0x740] sm:$0xff]
        %v1413 = vld [vmem:[#allocation6 + $0x748] sm:$0xff]
        %v1414 = vld [vmem:[#allocation6 + $0x750] sm:$0xff]
        %v1415 = vld [vmem:[#allocation6 + $0x758] sm:$0xff]
        %v1416 = vld [vmem:[#allocation6 + $0x760] sm:$0xff]
        %v1417 = vld [vmem:[#allocation6 + $0x768] sm:$0xff]
        %v1418 = vld [vmem:[#allocation6 + $0x770] sm:$0xff]
        %v1419 = vld [vmem:[#allocation6 + $0x778] sm:$0xff]
        %v1420 = vld [vmem:[#allocation6 + $0x780] sm:$0xff]
        %v1421 = vld [vmem:[#allocation6 + $0x788] sm:$0xff]
        %v1422 = vld [vmem:[#allocation6 + $0x790] sm:$0xff]
        %v1423 = vld [vmem:[#allocation6 + $0x798] sm:$0xff]
        %v1424 = vld [vmem:[#allocation6 + $0x7a0] sm:$0xff]
        %v1425 = vld [vmem:[#allocation6 + $0x7a8] sm:$0xff]
        %v1426 = vld [vmem:[#allocation6 + $0x7b0] sm:$0xff]
        %v1427 = vld [vmem:[#allocation6 + $0x7b8] sm:$0xff]
        %v1428 = vld [vmem:[#allocation6 + $0x7c0] sm:$0xff]
        %v1429 = vld [vmem:[#allocation6 + $0x7c8] sm:$0xff]
        %v1430 = vld [vmem:[#allocation6 + $0x7d0] sm:$0xff]
        %v1431 = vld [vmem:[#allocation6 + $0x7d8] sm:$0xff]
        %v1432 = vld [vmem:[#allocation6 + $0x7e0] sm:$0xff]
        %v1433 = vld [vmem:[#allocation6 + $0x7e8] sm:$0xff]
        %v1434 = vld [vmem:[#allocation6 + $0x7f0] sm:$0xff]
        %v1435 = vld [vmem:[#allocation6 + $0x7f8] sm:$0xff]
        %v1436 = vld [vmem:[#allocation6 + $0x800] sm:$0xff]
        %v1437 = vld [vmem:[#allocation6 + $0x808] sm:$0xff]
        %v1438 = vld [vmem:[#allocation6 + $0x810] sm:$0xff]
        %v1439 = vld [vmem:[#allocation6 + $0x818] sm:$0xff]
        %v1440 = vld [vmem:[#allocation6 + $0x820] sm:$0xff]
        %v1441 = vld [vmem:[#allocation6 + $0x828] sm:$0xff]
        %v1442 = vld [vmem:[#allocation6 + $0x830] sm:$0xff]
        %v1443 = vld [vmem:[#allocation6 + $0x838] sm:$0xff]
        %v1444 = vld [vmem:[#allocation6 + $0x840] sm:$0xff]
        %v1445 = vld [vmem:[#allocation6 + $0x848] sm:$0xff]
        %v1446 = vld [vmem:[#allocation6 + $0x850] sm:$0xff]
        %v1447 = vld [vmem:[#allocation6 + $0x858] sm:$0xff]
        %v1448 = vld [vmem:[#allocation6 + $0x860] sm:$0xff]
        %v1449 = vld [vmem:[#allocation6 + $0x868] sm:$0xff]
        %v1450 = vld [vmem:[#allocation6 + $0x870] sm:$0xff]
        %v1451 = vld [vmem:[#allocation6 + $0x878] sm:$0xff]
        %v1452 = vld [vmem:[#allocation6 + $0x880] sm:$0xff]
        %v1453 = vld [vmem:[#allocation6 + $0x888] sm:$0xff]
        %v1454 = vld [vmem:[#allocation6 + $0x890] sm:$0xff]
        %v1455 = vld [vmem:[#allocation6 + $0x898] sm:$0xff]
        %v1456 = vld [vmem:[#allocation6 + $0x8a0] sm:$0xff]
        %v1457 = vld [vmem:[#allocation6 + $0x8a8] sm:$0xff]
        %v1458 = vld [vmem:[#allocation6 + $0x8b0] sm:$0xff]
        %v1459 = vld [vmem:[#allocation6 + $0x8b8] sm:$0xff]
        %v1460 = vld [vmem:[#allocation6 + $0x8c0] sm:$0xff]
        %v1461 = vld [vmem:[#allocation6 + $0x8c8] sm:$0xff]
        %v1462 = vld [vmem:[#allocation6 + $0x8d0] sm:$0xff]
        %v1463 = vld [vmem:[#allocation6 + $0x8d8] sm:$0xff]
        %v1464 = vld [vmem:[#allocation6 + $0x8e0] sm:$0xff]
        %v1465 = vld [vmem:[#allocation6 + $0x8e8] sm:$0xff]
        %v1466 = vld [vmem:[#allocation6 + $0x8f0] sm:$0xff]
        %v1467 = vld [vmem:[#allocation6 + $0x8f8] sm:$0xff]
        %v1468 = vld [vmem:[#allocation6 + $0x900] sm:$0xff]
        %v1469 = vld [vmem:[#allocation6 + $0x908] sm:$0xff]
        %v1470 = vld [vmem:[#allocation6 + $0x910] sm:$0xff]
        %v1471 = vld [vmem:[#allocation6 + $0x918] sm:$0xff]
        %v1472 = vld [vmem:[#allocation6 + $0x920] sm:$0xff]
        %v1473 = vld [vmem:[#allocation6 + $0x928] sm:$0xff]
        %v1474 = vld [vmem:[#allocation6 + $0x930] sm:$0xff]
        %v1475 = vld [vmem:[#allocation6 + $0x938] sm:$0xff]
        %v1476 = vld [vmem:[#allocation6 + $0x940] sm:$0xff]
        %v1477 = vld [vmem:[#allocation6 + $0x948] sm:$0xff]
        %v1478 = vld [vmem:[#allocation6 + $0x950] sm:$0xff]
        %v1479 = vld [vmem:[#allocation6 + $0x958] sm:$0xff]
        %v1480 = vld [vmem:[#allocation6 + $0x960] sm:$0xff]
        %v1481 = vld [vmem:[#allocation6 + $0x968] sm:$0xff]
        %v1482 = vld [vmem:[#allocation6 + $0x970] sm:$0xff]
        %v1483 = vld [vmem:[#allocation6 + $0x978] sm:$0xff]
        %v1484 = vld [vmem:[#allocation6 + $0x980] sm:$0xff]
        %v1485 = vld [vmem:[#allocation6 + $0x988] sm:$0xff]
        %v1486 = vld [vmem:[#allocation6 + $0x990] sm:$0xff]
        %v1487 = vld [vmem:[#allocation6 + $0x998] sm:$0xff]
        %v1488 = vld [vmem:[#allocation6 + $0x9a0] sm:$0xff]
        %v1489 = vld [vmem:[#allocation6 + $0x9a8] sm:$0xff]
        %v1490 = vld [vmem:[#allocation6 + $0x9b0] sm:$0xff]
        %v1491 = vld [vmem:[#allocation6 + $0x9b8] sm:$0xff]
        %v1492 = vld [vmem:[#allocation6 + $0x9c0] sm:$0xff]
        %v1493 = vld [vmem:[#allocation6 + $0x9c8] sm:$0xff]
        %v1494 = vld [vmem:[#allocation6 + $0x9d0] sm:$0xff]
        %v1495 = vld [vmem:[#allocation6 + $0x9d8] sm:$0xff]
        %v1496 = vld [vmem:[#allocation6 + $0x9e0] sm:$0xff]
        %v1497 = vld [vmem:[#allocation6 + $0x9e8] sm:$0xff]
        %v1498 = vld [vmem:[#allocation6 + $0x9f0] sm:$0xff]
        %v1499 = vld [vmem:[#allocation6 + $0x9f8] sm:$0xff]
        %v1500 = vld [vmem:[#allocation6 + $0xa00] sm:$0xff]
        %v1501 = vld [vmem:[#allocation6 + $0xa08] sm:$0xff]
        %v1502 = vld [vmem:[#allocation6 + $0xa10] sm:$0xff]
        %v1503 = vld [vmem:[#allocation6 + $0xa18] sm:$0xff]
        %v1504 = vld [vmem:[#allocation6 + $0xa20] sm:$0xff]
        %v1505 = vld [vmem:[#allocation6 + $0xa28] sm:$0xff]
        %v1506 = vld [vmem:[#allocation6 + $0xa30] sm:$0xff]
        %v1507 = vld [vmem:[#allocation6 + $0xa38] sm:$0xff]
        %v1508 = vld [vmem:[#allocation6 + $0xa40] sm:$0xff]
        %v1509 = vld [vmem:[#allocation6 + $0xa48] sm:$0xff]
        %v1510 = vld [vmem:[#allocation6 + $0xa50] sm:$0xff]
        %v1511 = vld [vmem:[#allocation6 + $0xa58] sm:$0xff]
        %v1512 = vld [vmem:[#allocation6 + $0xa60] sm:$0xff]
        %v1513 = vld [vmem:[#allocation6 + $0xa68] sm:$0xff]
        %v1514 = vld [vmem:[#allocation6 + $0xa70] sm:$0xff]
        %v1515 = vld [vmem:[#allocation6 + $0xa78] sm:$0xff]
        %v1516 = vld [vmem:[#allocation6 + $0xa80] sm:$0xff]
        %v1517 = vld [vmem:[#allocation6 + $0xa88] sm:$0xff]
        %v1518 = vld [vmem:[#allocation6 + $0xa90] sm:$0xff]
        %v1519 = vld [vmem:[#allocation6 + $0xa98] sm:$0xff]
        %v1520 = vld [vmem:[#allocation6 + $0xaa0] sm:$0xff]
        %v1521 = vld [vmem:[#allocation6 + $0xaa8] sm:$0xff]
        %v1522 = vld [vmem:[#allocation6 + $0xab0] sm:$0xff]
        %v1523 = vld [vmem:[#allocation6 + $0xab8] sm:$0xff]
        %v1524 = vld [vmem:[#allocation6 + $0xac0] sm:$0xff]
        %v1525 = vld [vmem:[#allocation6 + $0xac8] sm:$0xff]
        %v1526 = vld [vmem:[#allocation6 + $0xad0] sm:$0xff]
        %v1527 = vld [vmem:[#allocation6 + $0xad8] sm:$0xff]
        %v1528 = vld [vmem:[#allocation6 + $0xae0] sm:$0xff]
        %v1529 = vld [vmem:[#allocation6 + $0xae8] sm:$0xff]
        %v1530 = vld [vmem:[#allocation6 + $0xaf0] sm:$0xff]
        %v1531 = vld [vmem:[#allocation6 + $0xaf8] sm:$0xff]
        %v1532 = vld [vmem:[#allocation6 + $0xb00] sm:$0xff]
        %v1533 = vld [vmem:[#allocation6 + $0xb08] sm:$0xff]
        %v1534 = vld [vmem:[#allocation6 + $0xb10] sm:$0xff]
        %v1535 = vld [vmem:[#allocation6 + $0xb18] sm:$0xff]
        %v1536 = vld [vmem:[#allocation6 + $0xb20] sm:$0xff]
        %v1537 = vld [vmem:[#allocation6 + $0xb28] sm:$0xff]
        %v1538 = vld [vmem:[#allocation6 + $0xb30] sm:$0xff]
        %v1539 = vld [vmem:[#allocation6 + $0xb38] sm:$0xff]
        %v1540 = vld [vmem:[#allocation6 + $0xb40] sm:$0xff]
        %v1541 = vld [vmem:[#allocation6 + $0xb48] sm:$0xff]
        %v1542 = vld [vmem:[#allocation6 + $0xb50] sm:$0xff]
        %v1543 = vld [vmem:[#allocation6 + $0xb58] sm:$0xff]
        %v1544 = vld [vmem:[#allocation6 + $0xb60] sm:$0xff]
        %v1545 = vld [vmem:[#allocation6 + $0xb68] sm:$0xff]
        %v1546 = vld [vmem:[#allocation6 + $0xb70] sm:$0xff]
        %v1547 = vld [vmem:[#allocation6 + $0xb78] sm:$0xff]
        %v1548 = vld [vmem:[#allocation6 + $0xb80] sm:$0xff]
        %v1549 = vld [vmem:[#allocation6 + $0xb88] sm:$0xff]
        %v1550 = vld [vmem:[#allocation6 + $0xb90] sm:$0xff]
        %v1551 = vld [vmem:[#allocation6 + $0xb98] sm:$0xff]
        %v1552 = vld [vmem:[#allocation6 + $0xba0] sm:$0xff]
        %v1553 = vld [vmem:[#allocation6 + $0xba8] sm:$0xff]
        %v1554 = vld [vmem:[#allocation6 + $0xbb0] sm:$0xff]
        %v1555 = vld [vmem:[#allocation6 + $0xbb8] sm:$0xff]
        %v1556 = vld [vmem:[#allocation6 + $0xbc0] sm:$0xff]
        %v1557 = vld [vmem:[#allocation6 + $0xbc8] sm:$0xff]
        %v1558 = vld [vmem:[#allocation6 + $0xbd0] sm:$0xff]
        %v1559 = vld [vmem:[#allocation6 + $0xbd8] sm:$0xff]
        %v1560 = vld [vmem:[#allocation6 + $0xbe0] sm:$0xff]
        %v1561 = vld [vmem:[#allocation6 + $0xbe8] sm:$0xff]
        %v1562 = vld [vmem:[#allocation6 + $0xbf0] sm:$0xff]
        %v1563 = vld [vmem:[#allocation6 + $0xbf8] sm:$0xff]
        %v1564 = vld [vmem:[#allocation6 + $0xc00] sm:$0xff]
        %v1565 = vld [vmem:[#allocation6 + $0xc08] sm:$0xff]
        %v1566 = vld [vmem:[#allocation6 + $0xc10] sm:$0xff]
        %v1567 = vld [vmem:[#allocation6 + $0xc18] sm:$0xff]
        %v1568 = vld [vmem:[#allocation6 + $0xc20] sm:$0xff]
        %v1569 = vld [vmem:[#allocation6 + $0xc28] sm:$0xff]
        %v1570 = vld [vmem:[#allocation6 + $0xc30] sm:$0xff]
        %v1571 = vld [vmem:[#allocation6 + $0xc38] sm:$0xff]
        %v1572 = vld [vmem:[#allocation6 + $0xc40] sm:$0xff]
        %v1573 = vld [vmem:[#allocation6 + $0xc48] sm:$0xff]
        %v1574 = vld [vmem:[#allocation6 + $0xc50] sm:$0xff]
        %v1575 = vld [vmem:[#allocation6 + $0xc58] sm:$0xff]
        %v1576 = vld [vmem:[#allocation6 + $0xc60] sm:$0xff]
        %v1577 = vld [vmem:[#allocation6 + $0xc68] sm:$0xff]
        %v1578 = vld [vmem:[#allocation6 + $0xc70] sm:$0xff]
        %v1579 = vld [vmem:[#allocation6 + $0xc78] sm:$0xff]
        %v1580 = vld [vmem:[#allocation6 + $0xc80] sm:$0xff]
        %v1581 = vld [vmem:[#allocation6 + $0xc88] sm:$0xff]
        %v1582 = vld [vmem:[#allocation6 + $0xc90] sm:$0xff]
        %v1583 = vld [vmem:[#allocation6 + $0xc98] sm:$0xff]
        %v1584 = vld [vmem:[#allocation6 + $0xca0] sm:$0xff]
        %v1585 = vld [vmem:[#allocation6 + $0xca8] sm:$0xff]
        %v1586 = vld [vmem:[#allocation6 + $0xcb0] sm:$0xff]
        %v1587 = vld [vmem:[#allocation6 + $0xcb8] sm:$0xff]
        %v1588 = vld [vmem:[#allocation6 + $0xcc0] sm:$0xff]
        %v1589 = vld [vmem:[#allocation6 + $0xcc8] sm:$0xff]
        %v1590 = vld [vmem:[#allocation6 + $0xcd0] sm:$0xff]
        %v1591 = vld [vmem:[#allocation6 + $0xcd8] sm:$0xff]
        %v1592 = vld [vmem:[#allocation6 + $0xce0] sm:$0xff]
        %v1593 = vld [vmem:[#allocation6 + $0xce8] sm:$0xff]
        %v1594 = vld [vmem:[#allocation6 + $0xcf0] sm:$0xff]
        %v1595 = vld [vmem:[#allocation6 + $0xcf8] sm:$0xff]
        %v1596 = vld [vmem:[#allocation6 + $0xd00] sm:$0xff]
        %v1597 = vld [vmem:[#allocation6 + $0xd08] sm:$0xff]
        %v1598 = vld [vmem:[#allocation6 + $0xd10] sm:$0xff]
        %v1599 = vld [vmem:[#allocation6 + $0xd18] sm:$0xff]
        %v1600 = vld [vmem:[#allocation6 + $0xd20] sm:$0xff]
        %v1601 = vld [vmem:[#allocation6 + $0xd28] sm:$0xff]
        %v1602 = vld [vmem:[#allocation6 + $0xd30] sm:$0xff]
        %v1603 = vld [vmem:[#allocation6 + $0xd38] sm:$0xff]
        %v1604 = vld [vmem:[#allocation6 + $0xd40] sm:$0xff]
        %v1605 = vld [vmem:[#allocation6 + $0xd48] sm:$0xff]
        %v1606 = vld [vmem:[#allocation6 + $0xd50] sm:$0xff]
        %v1607 = vld [vmem:[#allocation6 + $0xd58] sm:$0xff]
        %v1608 = vld [vmem:[#allocation6 + $0xd60] sm:$0xff]
        %v1609 = vld [vmem:[#allocation6 + $0xd68] sm:$0xff]
        %v1610 = vld [vmem:[#allocation6 + $0xd70] sm:$0xff]
        %v1611 = vld [vmem:[#allocation6 + $0xd78] sm:$0xff]
        %v1612 = vld [vmem:[#allocation6 + $0xd80] sm:$0xff]
        %v1613 = vld [vmem:[#allocation6 + $0xd88] sm:$0xff]
        %v1614 = vld [vmem:[#allocation6 + $0xd90] sm:$0xff]
        %v1615 = vld [vmem:[#allocation6 + $0xd98] sm:$0xff]
        %v1616 = vld [vmem:[#allocation6 + $0xda0] sm:$0xff]
        %v1617 = vld [vmem:[#allocation6 + $0xda8] sm:$0xff]
        %v1618 = vld [vmem:[#allocation6 + $0xdb0] sm:$0xff]
        %v1619 = vld [vmem:[#allocation6 + $0xdb8] sm:$0xff]
        %v1620 = vld [vmem:[#allocation6 + $0xdc0] sm:$0xff]
        %v1621 = vld [vmem:[#allocation6 + $0xdc8] sm:$0xff]
        %v1622 = vld [vmem:[#allocation6 + $0xdd0] sm:$0xff]
        %v1623 = vld [vmem:[#allocation6 + $0xdd8] sm:$0xff]
        %v1624 = vld [vmem:[#allocation6 + $0xde0] sm:$0xff]
        %v1625 = vld [vmem:[#allocation6 + $0xde8] sm:$0xff]
        %v1626 = vld [vmem:[#allocation6 + $0xdf0] sm:$0xff]
        %v1627 = vld [vmem:[#allocation6 + $0xdf8] sm:$0xff]
        %v1628 = vld [vmem:[#allocation6 + $0xe00] sm:$0xff]
        %v1629 = vld [vmem:[#allocation6 + $0xe08] sm:$0xff]
        %v1630 = vld [vmem:[#allocation6 + $0xe10] sm:$0xff]
        %v1631 = vld [vmem:[#allocation6 + $0xe18] sm:$0xff]
        %v1632 = vld [vmem:[#allocation6 + $0xe20] sm:$0xff]
        %v1633 = vld [vmem:[#allocation6 + $0xe28] sm:$0xff]
        %v1634 = vld [vmem:[#allocation6 + $0xe30] sm:$0xff]
        %v1635 = vld [vmem:[#allocation6 + $0xe38] sm:$0xff]
        %v1636 = vld [vmem:[#allocation6 + $0xe40] sm:$0xff]
        %v1637 = vld [vmem:[#allocation6 + $0xe48] sm:$0xff]
        %v1638 = vld [vmem:[#allocation6 + $0xe50] sm:$0xff]
        %v1639 = vld [vmem:[#allocation6 + $0xe58] sm:$0xff]
        %v1640 = vld [vmem:[#allocation6 + $0xe60] sm:$0xff]
        %v1641 = vld [vmem:[#allocation6 + $0xe68] sm:$0xff]
        %v1642 = vld [vmem:[#allocation6 + $0xe70] sm:$0xff]
        %v1643 = vld [vmem:[#allocation6 + $0xe78] sm:$0xff]
        %v1644 = vld [vmem:[#allocation6 + $0xe80] sm:$0xff]
        %v1645 = vld [vmem:[#allocation6 + $0xe88] sm:$0xff]
        %v1646 = vld [vmem:[#allocation6 + $0xe90] sm:$0xff]
        %v1647 = vld [vmem:[#allocation6 + $0xe98] sm:$0xff]
        %v1648 = vld [vmem:[#allocation6 + $0xea0] sm:$0xff]
        %v1649 = vld [vmem:[#allocation6 + $0xea8] sm:$0xff]
        %v1650 = vld [vmem:[#allocation6 + $0xeb0] sm:$0xff]
        %v1651 = vld [vmem:[#allocation6 + $0xeb8] sm:$0xff]
        %v1652 = vld [vmem:[#allocation6 + $0xec0] sm:$0xff]
        %v1653 = vld [vmem:[#allocation6 + $0xec8] sm:$0xff]
        %v1654 = vld [vmem:[#allocation6 + $0xed0] sm:$0xff]
        %v1655 = vld [vmem:[#allocation6 + $0xed8] sm:$0xff]
        %v1656 = vld [vmem:[#allocation6 + $0xee0] sm:$0xff]
        %v1657 = vld [vmem:[#allocation6 + $0xee8] sm:$0xff]
        %v1658 = vld [vmem:[#allocation6 + $0xef0] sm:$0xff]
        %v1659 = vld [vmem:[#allocation6 + $0xef8] sm:$0xff]
        %v1660 = vld [vmem:[#allocation6 + $0xf00] sm:$0xff]
        %v1661 = vld [vmem:[#allocation6 + $0xf08] sm:$0xff]
        %v1662 = vld [vmem:[#allocation6 + $0xf10] sm:$0xff]
        %v1663 = vld [vmem:[#allocation6 + $0xf18] sm:$0xff]
        %v1664 = vld [vmem:[#allocation6 + $0xf20] sm:$0xff]
        %v1665 = vld [vmem:[#allocation6 + $0xf28] sm:$0xff]
        %v1666 = vld [vmem:[#allocation6 + $0xf30] sm:$0xff]
        %v1667 = vld [vmem:[#allocation6 + $0xf38] sm:$0xff]
        %v1668 = vld [vmem:[#allocation6 + $0xf40] sm:$0xff]
        %v1669 = vld [vmem:[#allocation6 + $0xf48] sm:$0xff]
        %v1670 = vld [vmem:[#allocation6 + $0xf50] sm:$0xff]
        %v1671 = vld [vmem:[#allocation6 + $0xf58] sm:$0xff]
        %v1672 = vld [vmem:[#allocation6 + $0xf60] sm:$0xff]
        %v1673 = vld [vmem:[#allocation6 + $0xf68] sm:$0xff]
        %v1674 = vld [vmem:[#allocation6 + $0xf70] sm:$0xff]
        %v1675 = vld [vmem:[#allocation6 + $0xf78] sm:$0xff]
        %v1676 = vld [vmem:[#allocation6 + $0xf80] sm:$0xff]
        %v1677 = vld [vmem:[#allocation6 + $0xf88] sm:$0xff]
        %v1678 = vld [vmem:[#allocation6 + $0xf90] sm:$0xff]
        %v1679 = vld [vmem:[#allocation6 + $0xf98] sm:$0xff]
        %v1680 = vld [vmem:[#allocation6 + $0xfa0] sm:$0xff]
        %v1681 = vld [vmem:[#allocation6 + $0xfa8] sm:$0xff]
        %v1682 = vld [vmem:[#allocation6 + $0xfb0] sm:$0xff]
        %v1683 = vld [vmem:[#allocation6 + $0xfb8] sm:$0xff]
        %v1684 = vld [vmem:[#allocation6 + $0xfc0] sm:$0xff]
        %v1685 = vld [vmem:[#allocation6 + $0xfc8] sm:$0xff]
        %v1686 = vld [vmem:[#allocation6 + $0xfd0] sm:$0xff]
        %v1687 = vld [vmem:[#allocation6 + $0xfd8] sm:$0xff]
        %v1688 = vld [vmem:[#allocation6 + $0xfe0] sm:$0xff]
        %v1689 = vld [vmem:[#allocation6 + $0xfe8] sm:$0xff]
        %v1690 = vld [vmem:[#allocation6 + $0xff0] sm:$0xff]
        %v1691 = vld [vmem:[#allocation6 + $0xff8] sm:$0xff]
        %v1692 = vld [vmem:[#allocation7] sm:$0xff]
        %v1694 = vlaneseq
        %v1695 = vshrl.u32 %v1694, 7
        %v1696 = vsub.s32 0, %v1695
        %v1697 = vrot.slane %v1692, %v1696
        %v1698 = vlaneseq
        %v1699 = vshrl.u32 %v1698, 7
        %v1700 = vsub.s32 1, %v1699
        %v1701 = vrot.slane %v1692, %v1700
        %v1702 = vlaneseq
        %v1703 = vshrl.u32 %v1702, 7
        %v1704 = vsub.s32 2, %v1703
        %v1705 = vrot.slane %v1692, %v1704
        %v1706 = vlaneseq
        %v1707 = vshrl.u32 %v1706, 7
        %v1708 = vsub.s32 3, %v1707
        %v1709 = vrot.slane %v1692, %v1708
        %v1710 = vlaneseq
        %v1711 = vshrl.u32 %v1710, 7
        %v1712 = vsub.s32 4, %v1711
        %v1713 = vrot.slane %v1692, %v1712
        %v1714 = vlaneseq
        %v1715 = vshrl.u32 %v1714, 7
        %v1716 = vsub.s32 5, %v1715
        %v1717 = vrot.slane %v1692, %v1716
        %v1718 = vlaneseq
        %v1719 = vshrl.u32 %v1718, 7
        %v1720 = vsub.s32 6, %v1719
        %v1721 = vrot.slane %v1692, %v1720
        %v1722 = vlaneseq
        %v1723 = vshrl.u32 %v1722, 7
        %v1724 = vsub.s32 7, %v1723
        %v1725 = vrot.slane %v1692, %v1724
        %v2246 = vunpack.c.l.b16 %v1180
        %v2247 = vunpack.c.h.b16 %v1180
        %v2248 = vunpack.c.l.b16 %v1181
        %v2249 = vunpack.c.h.b16 %v1181
        %v2250 = vunpack.c.l.b16 %v1182
        %v2251 = vunpack.c.h.b16 %v1182
        %v2252 = vunpack.c.l.b16 %v1183
        %v2253 = vunpack.c.h.b16 %v1183
        %v2254 = vunpack.c.l.b16 %v1184
        %v2255 = vunpack.c.h.b16 %v1184
        %v2256 = vunpack.c.l.b16 %v1185
        %v2257 = vunpack.c.h.b16 %v1185
        %v2258 = vunpack.c.l.b16 %v1186
        %v2259 = vunpack.c.h.b16 %v1186
        %v2260 = vunpack.c.l.b16 %v1187
        %v2261 = vunpack.c.h.b16 %v1187
        %v2262 = vunpack.c.l.b16 %v1188
        %v2263 = vunpack.c.h.b16 %v1188
        %v2264 = vunpack.c.l.b16 %v1189
        %v2265 = vunpack.c.h.b16 %v1189
        %v2266 = vunpack.c.l.b16 %v1190
        %v2267 = vunpack.c.h.b16 %v1190
        %v2268 = vunpack.c.l.b16 %v1191
        %v2269 = vunpack.c.h.b16 %v1191
        %v2270 = vunpack.c.l.b16 %v1192
        %v2271 = vunpack.c.h.b16 %v1192
        %v2272 = vunpack.c.l.b16 %v1193
        %v2273 = vunpack.c.h.b16 %v1193
        %v2274 = vunpack.c.l.b16 %v1194
        %v2275 = vunpack.c.h.b16 %v1194
        %v2276 = vunpack.c.l.b16 %v1195
        %v2277 = vunpack.c.h.b16 %v1195
        %v2278 = vunpack.c.l.b16 %v1196
        %v2279 = vunpack.c.h.b16 %v1196
        %v2280 = vunpack.c.l.b16 %v1197
        %v2281 = vunpack.c.h.b16 %v1197
        %v2282 = vunpack.c.l.b16 %v1198
        %v2283 = vunpack.c.h.b16 %v1198
        %v2284 = vunpack.c.l.b16 %v1199
        %v2285 = vunpack.c.h.b16 %v1199
        %v2286 = vunpack.c.l.b16 %v1200
        %v2287 = vunpack.c.h.b16 %v1200
        %v2288 = vunpack.c.l.b16 %v1201
        %v2289 = vunpack.c.h.b16 %v1201
        %v2290 = vunpack.c.l.b16 %v1202
        %v2291 = vunpack.c.h.b16 %v1202
        %v2292 = vunpack.c.l.b16 %v1203
        %v2293 = vunpack.c.h.b16 %v1203
        %v2294 = vunpack.c.l.b16 %v1204
        %v2295 = vunpack.c.h.b16 %v1204
        %v2296 = vunpack.c.l.b16 %v1205
        %v2297 = vunpack.c.h.b16 %v1205
        %v2298 = vunpack.c.l.b16 %v1206
        %v2299 = vunpack.c.h.b16 %v1206
        %v2300 = vunpack.c.l.b16 %v1207
        %v2301 = vunpack.c.h.b16 %v1207
        %v2302 = vunpack.c.l.b16 %v1208
        %v2303 = vunpack.c.h.b16 %v1208
        %v2304 = vunpack.c.l.b16 %v1209
        %v2305 = vunpack.c.h.b16 %v1209
        %v2306 = vunpack.c.l.b16 %v1210
        %v2307 = vunpack.c.h.b16 %v1210
        %v2308 = vunpack.c.l.b16 %v1211
        %v2309 = vunpack.c.h.b16 %v1211
        %v2310 = vunpack.c.l.b16 %v1212
        %v2311 = vunpack.c.h.b16 %v1212
        %v2312 = vunpack.c.l.b16 %v1213
        %v2313 = vunpack.c.h.b16 %v1213
        %v2314 = vunpack.c.l.b16 %v1214
        %v2315 = vunpack.c.h.b16 %v1214
        %v2316 = vunpack.c.l.b16 %v1215
        %v2317 = vunpack.c.h.b16 %v1215
        %v2318 = vunpack.c.l.b16 %v1216
        %v2319 = vunpack.c.h.b16 %v1216
        %v2320 = vunpack.c.l.b16 %v1217
        %v2321 = vunpack.c.h.b16 %v1217
        %v2322 = vunpack.c.l.b16 %v1218
        %v2323 = vunpack.c.h.b16 %v1218
        %v2324 = vunpack.c.l.b16 %v1219
        %v2325 = vunpack.c.h.b16 %v1219
        %v2326 = vunpack.c.l.b16 %v1220
        %v2327 = vunpack.c.h.b16 %v1220
        %v2328 = vunpack.c.l.b16 %v1221
        %v2329 = vunpack.c.h.b16 %v1221
        %v2330 = vunpack.c.l.b16 %v1222
        %v2331 = vunpack.c.h.b16 %v1222
        %v2332 = vunpack.c.l.b16 %v1223
        %v2333 = vunpack.c.h.b16 %v1223
        %v2334 = vunpack.c.l.b16 %v1224
        %v2335 = vunpack.c.h.b16 %v1224
        %v2336 = vunpack.c.l.b16 %v1225
        %v2337 = vunpack.c.h.b16 %v1225
        %v2338 = vunpack.c.l.b16 %v1226
        %v2339 = vunpack.c.h.b16 %v1226
        %v2340 = vunpack.c.l.b16 %v1227
        %v2341 = vunpack.c.h.b16 %v1227
        %v2342 = vunpack.c.l.b16 %v1228
        %v2343 = vunpack.c.h.b16 %v1228
        %v2344 = vunpack.c.l.b16 %v1229
        %v2345 = vunpack.c.h.b16 %v1229
        %v2346 = vunpack.c.l.b16 %v1230
        %v2347 = vunpack.c.h.b16 %v1230
        %v2348 = vunpack.c.l.b16 %v1231
        %v2349 = vunpack.c.h.b16 %v1231
        %v2350 = vunpack.c.l.b16 %v1232
        %v2351 = vunpack.c.h.b16 %v1232
        %v2352 = vunpack.c.l.b16 %v1233
        %v2353 = vunpack.c.h.b16 %v1233
        %v2354 = vunpack.c.l.b16 %v1234
        %v2355 = vunpack.c.h.b16 %v1234
        %v2356 = vunpack.c.l.b16 %v1235
        %v2357 = vunpack.c.h.b16 %v1235
        %v2358 = vunpack.c.l.b16 %v1236
        %v2359 = vunpack.c.h.b16 %v1236
        %v2360 = vunpack.c.l.b16 %v1237
        %v2361 = vunpack.c.h.b16 %v1237
        %v2362 = vunpack.c.l.b16 %v1238
        %v2363 = vunpack.c.h.b16 %v1238
        %v2364 = vunpack.c.l.b16 %v1239
        %v2365 = vunpack.c.h.b16 %v1239
        %v2366 = vunpack.c.l.b16 %v1240
        %v2367 = vunpack.c.h.b16 %v1240
        %v2368 = vunpack.c.l.b16 %v1241
        %v2369 = vunpack.c.h.b16 %v1241
        %v2370 = vunpack.c.l.b16 %v1242
        %v2371 = vunpack.c.h.b16 %v1242
        %v2372 = vunpack.c.l.b16 %v1243
        %v2373 = vunpack.c.h.b16 %v1243
        %v2374 = vunpack.c.l.b16 %v1244
        %v2375 = vunpack.c.h.b16 %v1244
        %v2376 = vunpack.c.l.b16 %v1245
        %v2377 = vunpack.c.h.b16 %v1245
        %v2378 = vunpack.c.l.b16 %v1246
        %v2379 = vunpack.c.h.b16 %v1246
        %v2380 = vunpack.c.l.b16 %v1247
        %v2381 = vunpack.c.h.b16 %v1247
        %v2382 = vunpack.c.l.b16 %v1248
        %v2383 = vunpack.c.h.b16 %v1248
        %v2384 = vunpack.c.l.b16 %v1249
        %v2385 = vunpack.c.h.b16 %v1249
        %v2386 = vunpack.c.l.b16 %v1250
        %v2387 = vunpack.c.h.b16 %v1250
        %v2388 = vunpack.c.l.b16 %v1251
        %v2389 = vunpack.c.h.b16 %v1251
        %v2390 = vunpack.c.l.b16 %v1252
        %v2391 = vunpack.c.h.b16 %v1252
        %v2392 = vunpack.c.l.b16 %v1253
        %v2393 = vunpack.c.h.b16 %v1253
        %v2394 = vunpack.c.l.b16 %v1254
        %v2395 = vunpack.c.h.b16 %v1254
        %v2396 = vunpack.c.l.b16 %v1255
        %v2397 = vunpack.c.h.b16 %v1255
        %v2398 = vunpack.c.l.b16 %v1256
        %v2399 = vunpack.c.h.b16 %v1256
        %v2400 = vunpack.c.l.b16 %v1257
        %v2401 = vunpack.c.h.b16 %v1257
        %v2402 = vunpack.c.l.b16 %v1258
        %v2403 = vunpack.c.h.b16 %v1258
        %v2404 = vunpack.c.l.b16 %v1259
        %v2405 = vunpack.c.h.b16 %v1259
        %v2406 = vunpack.c.l.b16 %v1260
        %v2407 = vunpack.c.h.b16 %v1260
        %v2408 = vunpack.c.l.b16 %v1261
        %v2409 = vunpack.c.h.b16 %v1261
        %v2410 = vunpack.c.l.b16 %v1262
        %v2411 = vunpack.c.h.b16 %v1262
        %v2412 = vunpack.c.l.b16 %v1263
        %v2413 = vunpack.c.h.b16 %v1263
        %v2414 = vunpack.c.l.b16 %v1264
        %v2415 = vunpack.c.h.b16 %v1264
        %v2416 = vunpack.c.l.b16 %v1265
        %v2417 = vunpack.c.h.b16 %v1265
        %v2418 = vunpack.c.l.b16 %v1266
        %v2419 = vunpack.c.h.b16 %v1266
        %v2420 = vunpack.c.l.b16 %v1267
        %v2421 = vunpack.c.h.b16 %v1267
        %v2422 = vunpack.c.l.b16 %v1268
        %v2423 = vunpack.c.h.b16 %v1268
        %v2424 = vunpack.c.l.b16 %v1269
        %v2425 = vunpack.c.h.b16 %v1269
        %v2426 = vunpack.c.l.b16 %v1270
        %v2427 = vunpack.c.h.b16 %v1270
        %v2428 = vunpack.c.l.b16 %v1271
        %v2429 = vunpack.c.h.b16 %v1271
        %v2430 = vunpack.c.l.b16 %v1272
        %v2431 = vunpack.c.h.b16 %v1272
        %v2432 = vunpack.c.l.b16 %v1273
        %v2433 = vunpack.c.h.b16 %v1273
        %v2434 = vunpack.c.l.b16 %v1274
        %v2435 = vunpack.c.h.b16 %v1274
        %v2436 = vunpack.c.l.b16 %v1275
        %v2437 = vunpack.c.h.b16 %v1275
        %v2438 = vunpack.c.l.b16 %v1276
        %v2439 = vunpack.c.h.b16 %v1276
        %v2440 = vunpack.c.l.b16 %v1277
        %v2441 = vunpack.c.h.b16 %v1277
        %v2442 = vunpack.c.l.b16 %v1278
        %v2443 = vunpack.c.h.b16 %v1278
        %v2444 = vunpack.c.l.b16 %v1279
        %v2445 = vunpack.c.h.b16 %v1279
        %v2446 = vunpack.c.l.b16 %v1280
        %v2447 = vunpack.c.h.b16 %v1280
        %v2448 = vunpack.c.l.b16 %v1281
        %v2449 = vunpack.c.h.b16 %v1281
        %v2450 = vunpack.c.l.b16 %v1282
        %v2451 = vunpack.c.h.b16 %v1282
        %v2452 = vunpack.c.l.b16 %v1283
        %v2453 = vunpack.c.h.b16 %v1283
        %v2454 = vunpack.c.l.b16 %v1284
        %v2455 = vunpack.c.h.b16 %v1284
        %v2456 = vunpack.c.l.b16 %v1285
        %v2457 = vunpack.c.h.b16 %v1285
        %v2458 = vunpack.c.l.b16 %v1286
        %v2459 = vunpack.c.h.b16 %v1286
        %v2460 = vunpack.c.l.b16 %v1287
        %v2461 = vunpack.c.h.b16 %v1287
        %v2462 = vunpack.c.l.b16 %v1288
        %v2463 = vunpack.c.h.b16 %v1288
        %v2464 = vunpack.c.l.b16 %v1289
        %v2465 = vunpack.c.h.b16 %v1289
        %v2466 = vunpack.c.l.b16 %v1290
        %v2467 = vunpack.c.h.b16 %v1290
        %v2468 = vunpack.c.l.b16 %v1291
        %v2469 = vunpack.c.h.b16 %v1291
        %v2470 = vunpack.c.l.b16 %v1292
        %v2471 = vunpack.c.h.b16 %v1292
        %v2472 = vunpack.c.l.b16 %v1293
        %v2473 = vunpack.c.h.b16 %v1293
        %v2474 = vunpack.c.l.b16 %v1294
        %v2475 = vunpack.c.h.b16 %v1294
        %v2476 = vunpack.c.l.b16 %v1295
        %v2477 = vunpack.c.h.b16 %v1295
        %v2478 = vunpack.c.l.b16 %v1296
        %v2479 = vunpack.c.h.b16 %v1296
        %v2480 = vunpack.c.l.b16 %v1297
        %v2481 = vunpack.c.h.b16 %v1297
        %v2482 = vunpack.c.l.b16 %v1298
        %v2483 = vunpack.c.h.b16 %v1298
        %v2484 = vunpack.c.l.b16 %v1299
        %v2485 = vunpack.c.h.b16 %v1299
        %v2486 = vunpack.c.l.b16 %v1300
        %v2487 = vunpack.c.h.b16 %v1300
        %v2488 = vunpack.c.l.b16 %v1301
        %v2489 = vunpack.c.h.b16 %v1301
        %v2490 = vunpack.c.l.b16 %v1302
        %v2491 = vunpack.c.h.b16 %v1302
        %v2492 = vunpack.c.l.b16 %v1303
        %v2493 = vunpack.c.h.b16 %v1303
        %v2494 = vunpack.c.l.b16 %v1304
        %v2495 = vunpack.c.h.b16 %v1304
        %v2496 = vunpack.c.l.b16 %v1305
        %v2497 = vunpack.c.h.b16 %v1305
        %v2498 = vunpack.c.l.b16 %v1306
        %v2499 = vunpack.c.h.b16 %v1306
        %v2500 = vunpack.c.l.b16 %v1307
        %v2501 = vunpack.c.h.b16 %v1307
        %v2502 = vunpack.c.l.b16 %v1308
        %v2503 = vunpack.c.h.b16 %v1308
        %v2504 = vunpack.c.l.b16 %v1309
        %v2505 = vunpack.c.h.b16 %v1309
        %v2506 = vunpack.c.l.b16 %v1310
        %v2507 = vunpack.c.h.b16 %v1310
        %v2508 = vunpack.c.l.b16 %v1311
        %v2509 = vunpack.c.h.b16 %v1311
        %v2510 = vunpack.c.l.b16 %v1312
        %v2511 = vunpack.c.h.b16 %v1312
        %v2512 = vunpack.c.l.b16 %v1313
        %v2513 = vunpack.c.h.b16 %v1313
        %v2514 = vunpack.c.l.b16 %v1314
        %v2515 = vunpack.c.h.b16 %v1314
        %v2516 = vunpack.c.l.b16 %v1315
        %v2517 = vunpack.c.h.b16 %v1315
        %v2518 = vunpack.c.l.b16 %v1316
        %v2519 = vunpack.c.h.b16 %v1316
        %v2520 = vunpack.c.l.b16 %v1317
        %v2521 = vunpack.c.h.b16 %v1317
        %v2522 = vunpack.c.l.b16 %v1318
        %v2523 = vunpack.c.h.b16 %v1318
        %v2524 = vunpack.c.l.b16 %v1319
        %v2525 = vunpack.c.h.b16 %v1319
        %v2526 = vunpack.c.l.b16 %v1320
        %v2527 = vunpack.c.h.b16 %v1320
        %v2528 = vunpack.c.l.b16 %v1321
        %v2529 = vunpack.c.h.b16 %v1321
        %v2530 = vunpack.c.l.b16 %v1322
        %v2531 = vunpack.c.h.b16 %v1322
        %v2532 = vunpack.c.l.b16 %v1323
        %v2533 = vunpack.c.h.b16 %v1323
        %v2534 = vunpack.c.l.b16 %v1324
        %v2535 = vunpack.c.h.b16 %v1324
        %v2536 = vunpack.c.l.b16 %v1325
        %v2537 = vunpack.c.h.b16 %v1325
        %v2538 = vunpack.c.l.b16 %v1326
        %v2539 = vunpack.c.h.b16 %v1326
        %v2540 = vunpack.c.l.b16 %v1327
        %v2541 = vunpack.c.h.b16 %v1327
        %v2542 = vunpack.c.l.b16 %v1328
        %v2543 = vunpack.c.h.b16 %v1328
        %v2544 = vunpack.c.l.b16 %v1329
        %v2545 = vunpack.c.h.b16 %v1329
        %v2546 = vunpack.c.l.b16 %v1330
        %v2547 = vunpack.c.h.b16 %v1330
        %v2548 = vunpack.c.l.b16 %v1331
        %v2549 = vunpack.c.h.b16 %v1331
        %v2550 = vunpack.c.l.b16 %v1332
        %v2551 = vunpack.c.h.b16 %v1332
        %v2552 = vunpack.c.l.b16 %v1333
        %v2553 = vunpack.c.h.b16 %v1333
        %v2554 = vunpack.c.l.b16 %v1334
        %v2555 = vunpack.c.h.b16 %v1334
        %v2556 = vunpack.c.l.b16 %v1335
        %v2557 = vunpack.c.h.b16 %v1335
        %v2558 = vunpack.c.l.b16 %v1336
        %v2559 = vunpack.c.h.b16 %v1336
        %v2560 = vunpack.c.l.b16 %v1337
        %v2561 = vunpack.c.h.b16 %v1337
        %v2562 = vunpack.c.l.b16 %v1338
        %v2563 = vunpack.c.h.b16 %v1338
        %v2564 = vunpack.c.l.b16 %v1339
        %v2565 = vunpack.c.h.b16 %v1339
        %v2566 = vunpack.c.l.b16 %v1340
        %v2567 = vunpack.c.h.b16 %v1340
        %v2568 = vunpack.c.l.b16 %v1341
        %v2569 = vunpack.c.h.b16 %v1341
        %v2570 = vunpack.c.l.b16 %v1342
        %v2571 = vunpack.c.h.b16 %v1342
        %v2572 = vunpack.c.l.b16 %v1343
        %v2573 = vunpack.c.h.b16 %v1343
        %v2574 = vunpack.c.l.b16 %v1344
        %v2575 = vunpack.c.h.b16 %v1344
        %v2576 = vunpack.c.l.b16 %v1345
        %v2577 = vunpack.c.h.b16 %v1345
        %v2578 = vunpack.c.l.b16 %v1346
        %v2579 = vunpack.c.h.b16 %v1346
        %v2580 = vunpack.c.l.b16 %v1347
        %v2581 = vunpack.c.h.b16 %v1347
        %v2582 = vunpack.c.l.b16 %v1348
        %v2583 = vunpack.c.h.b16 %v1348
        %v2584 = vunpack.c.l.b16 %v1349
        %v2585 = vunpack.c.h.b16 %v1349
        %v2586 = vunpack.c.l.b16 %v1350
        %v2587 = vunpack.c.h.b16 %v1350
        %v2588 = vunpack.c.l.b16 %v1351
        %v2589 = vunpack.c.h.b16 %v1351
        %v2590 = vunpack.c.l.b16 %v1352
        %v2591 = vunpack.c.h.b16 %v1352
        %v2592 = vunpack.c.l.b16 %v1353
        %v2593 = vunpack.c.h.b16 %v1353
        %v2594 = vunpack.c.l.b16 %v1354
        %v2595 = vunpack.c.h.b16 %v1354
        %v2596 = vunpack.c.l.b16 %v1355
        %v2597 = vunpack.c.h.b16 %v1355
        %v2598 = vunpack.c.l.b16 %v1356
        %v2599 = vunpack.c.h.b16 %v1356
        %v2600 = vunpack.c.l.b16 %v1357
        %v2601 = vunpack.c.h.b16 %v1357
        %v2602 = vunpack.c.l.b16 %v1358
        %v2603 = vunpack.c.h.b16 %v1358
        %v2604 = vunpack.c.l.b16 %v1359
        %v2605 = vunpack.c.h.b16 %v1359
        %v2606 = vunpack.c.l.b16 %v1360
        %v2607 = vunpack.c.h.b16 %v1360
        %v2608 = vunpack.c.l.b16 %v1361
        %v2609 = vunpack.c.h.b16 %v1361
        %v2610 = vunpack.c.l.b16 %v1362
        %v2611 = vunpack.c.h.b16 %v1362
        %v2612 = vunpack.c.l.b16 %v1363
        %v2613 = vunpack.c.h.b16 %v1363
        %v2614 = vunpack.c.l.b16 %v1364
        %v2615 = vunpack.c.h.b16 %v1364
        %v2616 = vunpack.c.l.b16 %v1365
        %v2617 = vunpack.c.h.b16 %v1365
        %v2618 = vunpack.c.l.b16 %v1366
        %v2619 = vunpack.c.h.b16 %v1366
        %v2620 = vunpack.c.l.b16 %v1367
        %v2621 = vunpack.c.h.b16 %v1367
        %v2622 = vunpack.c.l.b16 %v1368
        %v2623 = vunpack.c.h.b16 %v1368
        %v2624 = vunpack.c.l.b16 %v1369
        %v2625 = vunpack.c.h.b16 %v1369
        %v2626 = vunpack.c.l.b16 %v1370
        %v2627 = vunpack.c.h.b16 %v1370
        %v2628 = vunpack.c.l.b16 %v1371
        %v2629 = vunpack.c.h.b16 %v1371
        %v2630 = vunpack.c.l.b16 %v1372
        %v2631 = vunpack.c.h.b16 %v1372
        %v2632 = vunpack.c.l.b16 %v1373
        %v2633 = vunpack.c.h.b16 %v1373
        %v2634 = vunpack.c.l.b16 %v1374
        %v2635 = vunpack.c.h.b16 %v1374
        %v2636 = vunpack.c.l.b16 %v1375
        %v2637 = vunpack.c.h.b16 %v1375
        %v2638 = vunpack.c.l.b16 %v1376
        %v2639 = vunpack.c.h.b16 %v1376
        %v2640 = vunpack.c.l.b16 %v1377
        %v2641 = vunpack.c.h.b16 %v1377
        %v2642 = vunpack.c.l.b16 %v1378
        %v2643 = vunpack.c.h.b16 %v1378
        %v2644 = vunpack.c.l.b16 %v1379
        %v2645 = vunpack.c.h.b16 %v1379
        %v2646 = vunpack.c.l.b16 %v1380
        %v2647 = vunpack.c.h.b16 %v1380
        %v2648 = vunpack.c.l.b16 %v1381
        %v2649 = vunpack.c.h.b16 %v1381
        %v2650 = vunpack.c.l.b16 %v1382
        %v2651 = vunpack.c.h.b16 %v1382
        %v2652 = vunpack.c.l.b16 %v1383
        %v2653 = vunpack.c.h.b16 %v1383
        %v2654 = vunpack.c.l.b16 %v1384
        %v2655 = vunpack.c.h.b16 %v1384
        %v2656 = vunpack.c.l.b16 %v1385
        %v2657 = vunpack.c.h.b16 %v1385
        %v2658 = vunpack.c.l.b16 %v1386
        %v2659 = vunpack.c.h.b16 %v1386
        %v2660 = vunpack.c.l.b16 %v1387
        %v2661 = vunpack.c.h.b16 %v1387
        %v2662 = vunpack.c.l.b16 %v1388
        %v2663 = vunpack.c.h.b16 %v1388
        %v2664 = vunpack.c.l.b16 %v1389
        %v2665 = vunpack.c.h.b16 %v1389
        %v2666 = vunpack.c.l.b16 %v1390
        %v2667 = vunpack.c.h.b16 %v1390
        %v2668 = vunpack.c.l.b16 %v1391
        %v2669 = vunpack.c.h.b16 %v1391
        %v2670 = vunpack.c.l.b16 %v1392
        %v2671 = vunpack.c.h.b16 %v1392
        %v2672 = vunpack.c.l.b16 %v1393
        %v2673 = vunpack.c.h.b16 %v1393
        %v2674 = vunpack.c.l.b16 %v1394
        %v2675 = vunpack.c.h.b16 %v1394
        %v2676 = vunpack.c.l.b16 %v1395
        %v2677 = vunpack.c.h.b16 %v1395
        %v2678 = vunpack.c.l.b16 %v1396
        %v2679 = vunpack.c.h.b16 %v1396
        %v2680 = vunpack.c.l.b16 %v1397
        %v2681 = vunpack.c.h.b16 %v1397
        %v2682 = vunpack.c.l.b16 %v1398
        %v2683 = vunpack.c.h.b16 %v1398
        %v2684 = vunpack.c.l.b16 %v1399
        %v2685 = vunpack.c.h.b16 %v1399
        %v2686 = vunpack.c.l.b16 %v1400
        %v2687 = vunpack.c.h.b16 %v1400
        %v2688 = vunpack.c.l.b16 %v1401
        %v2689 = vunpack.c.h.b16 %v1401
        %v2690 = vunpack.c.l.b16 %v1402
        %v2691 = vunpack.c.h.b16 %v1402
        %v2692 = vunpack.c.l.b16 %v1403
        %v2693 = vunpack.c.h.b16 %v1403
        %v2694 = vunpack.c.l.b16 %v1404
        %v2695 = vunpack.c.h.b16 %v1404
        %v2696 = vunpack.c.l.b16 %v1405
        %v2697 = vunpack.c.h.b16 %v1405
        %v2698 = vunpack.c.l.b16 %v1406
        %v2699 = vunpack.c.h.b16 %v1406
        %v2700 = vunpack.c.l.b16 %v1407
        %v2701 = vunpack.c.h.b16 %v1407
        %v2702 = vunpack.c.l.b16 %v1408
        %v2703 = vunpack.c.h.b16 %v1408
        %v2704 = vunpack.c.l.b16 %v1409
        %v2705 = vunpack.c.h.b16 %v1409
        %v2706 = vunpack.c.l.b16 %v1410
        %v2707 = vunpack.c.h.b16 %v1410
        %v2708 = vunpack.c.l.b16 %v1411
        %v2709 = vunpack.c.h.b16 %v1411
        %v2710 = vunpack.c.l.b16 %v1412
        %v2711 = vunpack.c.h.b16 %v1412
        %v2712 = vunpack.c.l.b16 %v1413
        %v2713 = vunpack.c.h.b16 %v1413
        %v2714 = vunpack.c.l.b16 %v1414
        %v2715 = vunpack.c.h.b16 %v1414
        %v2716 = vunpack.c.l.b16 %v1415
        %v2717 = vunpack.c.h.b16 %v1415
        %v2718 = vunpack.c.l.b16 %v1416
        %v2719 = vunpack.c.h.b16 %v1416
        %v2720 = vunpack.c.l.b16 %v1417
        %v2721 = vunpack.c.h.b16 %v1417
        %v2722 = vunpack.c.l.b16 %v1418
        %v2723 = vunpack.c.h.b16 %v1418
        %v2724 = vunpack.c.l.b16 %v1419
        %v2725 = vunpack.c.h.b16 %v1419
        %v2726 = vunpack.c.l.b16 %v1420
        %v2727 = vunpack.c.h.b16 %v1420
        %v2728 = vunpack.c.l.b16 %v1421
        %v2729 = vunpack.c.h.b16 %v1421
        %v2730 = vunpack.c.l.b16 %v1422
        %v2731 = vunpack.c.h.b16 %v1422
        %v2732 = vunpack.c.l.b16 %v1423
        %v2733 = vunpack.c.h.b16 %v1423
        %v2734 = vunpack.c.l.b16 %v1424
        %v2735 = vunpack.c.h.b16 %v1424
        %v2736 = vunpack.c.l.b16 %v1425
        %v2737 = vunpack.c.h.b16 %v1425
        %v2738 = vunpack.c.l.b16 %v1426
        %v2739 = vunpack.c.h.b16 %v1426
        %v2740 = vunpack.c.l.b16 %v1427
        %v2741 = vunpack.c.h.b16 %v1427
        %v2742 = vunpack.c.l.b16 %v1428
        %v2743 = vunpack.c.h.b16 %v1428
        %v2744 = vunpack.c.l.b16 %v1429
        %v2745 = vunpack.c.h.b16 %v1429
        %v2746 = vunpack.c.l.b16 %v1430
        %v2747 = vunpack.c.h.b16 %v1430
        %v2748 = vunpack.c.l.b16 %v1431
        %v2749 = vunpack.c.h.b16 %v1431
        %v2750 = vunpack.c.l.b16 %v1432
        %v2751 = vunpack.c.h.b16 %v1432
        %v2752 = vunpack.c.l.b16 %v1433
        %v2753 = vunpack.c.h.b16 %v1433
        %v2754 = vunpack.c.l.b16 %v1434
        %v2755 = vunpack.c.h.b16 %v1434
        %v2756 = vunpack.c.l.b16 %v1435
        %v2757 = vunpack.c.h.b16 %v1435
        %v2758 = vunpack.c.l.b16 %v1436
        %v2759 = vunpack.c.h.b16 %v1436
        %v2760 = vunpack.c.l.b16 %v1437
        %v2761 = vunpack.c.h.b16 %v1437
        %v2762 = vunpack.c.l.b16 %v1438
        %v2763 = vunpack.c.h.b16 %v1438
        %v2764 = vunpack.c.l.b16 %v1439
        %v2765 = vunpack.c.h.b16 %v1439
        %v2766 = vunpack.c.l.b16 %v1440
        %v2767 = vunpack.c.h.b16 %v1440
        %v2768 = vunpack.c.l.b16 %v1441
        %v2769 = vunpack.c.h.b16 %v1441
        %v2770 = vunpack.c.l.b16 %v1442
        %v2771 = vunpack.c.h.b16 %v1442
        %v2772 = vunpack.c.l.b16 %v1443
        %v2773 = vunpack.c.h.b16 %v1443
        %v2774 = vunpack.c.l.b16 %v1444
        %v2775 = vunpack.c.h.b16 %v1444
        %v2776 = vunpack.c.l.b16 %v1445
        %v2777 = vunpack.c.h.b16 %v1445
        %v2778 = vunpack.c.l.b16 %v1446
        %v2779 = vunpack.c.h.b16 %v1446
        %v2780 = vunpack.c.l.b16 %v1447
        %v2781 = vunpack.c.h.b16 %v1447
        %v2782 = vunpack.c.l.b16 %v1448
        %v2783 = vunpack.c.h.b16 %v1448
        %v2784 = vunpack.c.l.b16 %v1449
        %v2785 = vunpack.c.h.b16 %v1449
        %v2786 = vunpack.c.l.b16 %v1450
        %v2787 = vunpack.c.h.b16 %v1450
        %v2788 = vunpack.c.l.b16 %v1451
        %v2789 = vunpack.c.h.b16 %v1451
        %v2790 = vunpack.c.l.b16 %v1452
        %v2791 = vunpack.c.h.b16 %v1452
        %v2792 = vunpack.c.l.b16 %v1453
        %v2793 = vunpack.c.h.b16 %v1453
        %v2794 = vunpack.c.l.b16 %v1454
        %v2795 = vunpack.c.h.b16 %v1454
        %v2796 = vunpack.c.l.b16 %v1455
        %v2797 = vunpack.c.h.b16 %v1455
        %v2798 = vunpack.c.l.b16 %v1456
        %v2799 = vunpack.c.h.b16 %v1456
        %v2800 = vunpack.c.l.b16 %v1457
        %v2801 = vunpack.c.h.b16 %v1457
        %v2802 = vunpack.c.l.b16 %v1458
        %v2803 = vunpack.c.h.b16 %v1458
        %v2804 = vunpack.c.l.b16 %v1459
        %v2805 = vunpack.c.h.b16 %v1459
        %v2806 = vunpack.c.l.b16 %v1460
        %v2807 = vunpack.c.h.b16 %v1460
        %v2808 = vunpack.c.l.b16 %v1461
        %v2809 = vunpack.c.h.b16 %v1461
        %v2810 = vunpack.c.l.b16 %v1462
        %v2811 = vunpack.c.h.b16 %v1462
        %v2812 = vunpack.c.l.b16 %v1463
        %v2813 = vunpack.c.h.b16 %v1463
        %v2814 = vunpack.c.l.b16 %v1464
        %v2815 = vunpack.c.h.b16 %v1464
        %v2816 = vunpack.c.l.b16 %v1465
        %v2817 = vunpack.c.h.b16 %v1465
        %v2818 = vunpack.c.l.b16 %v1466
        %v2819 = vunpack.c.h.b16 %v1466
        %v2820 = vunpack.c.l.b16 %v1467
        %v2821 = vunpack.c.h.b16 %v1467
        %v2822 = vunpack.c.l.b16 %v1468
        %v2823 = vunpack.c.h.b16 %v1468
        %v2824 = vunpack.c.l.b16 %v1469
        %v2825 = vunpack.c.h.b16 %v1469
        %v2826 = vunpack.c.l.b16 %v1470
        %v2827 = vunpack.c.h.b16 %v1470
        %v2828 = vunpack.c.l.b16 %v1471
        %v2829 = vunpack.c.h.b16 %v1471
        %v2830 = vunpack.c.l.b16 %v1472
        %v2831 = vunpack.c.h.b16 %v1472
        %v2832 = vunpack.c.l.b16 %v1473
        %v2833 = vunpack.c.h.b16 %v1473
        %v2834 = vunpack.c.l.b16 %v1474
        %v2835 = vunpack.c.h.b16 %v1474
        %v2836 = vunpack.c.l.b16 %v1475
        %v2837 = vunpack.c.h.b16 %v1475
        %v2838 = vunpack.c.l.b16 %v1476
        %v2839 = vunpack.c.h.b16 %v1476
        %v2840 = vunpack.c.l.b16 %v1477
        %v2841 = vunpack.c.h.b16 %v1477
        %v2842 = vunpack.c.l.b16 %v1478
        %v2843 = vunpack.c.h.b16 %v1478
        %v2844 = vunpack.c.l.b16 %v1479
        %v2845 = vunpack.c.h.b16 %v1479
        %v2846 = vunpack.c.l.b16 %v1480
        %v2847 = vunpack.c.h.b16 %v1480
        %v2848 = vunpack.c.l.b16 %v1481
        %v2849 = vunpack.c.h.b16 %v1481
        %v2850 = vunpack.c.l.b16 %v1482
        %v2851 = vunpack.c.h.b16 %v1482
        %v2852 = vunpack.c.l.b16 %v1483
        %v2853 = vunpack.c.h.b16 %v1483
        %v2854 = vunpack.c.l.b16 %v1484
        %v2855 = vunpack.c.h.b16 %v1484
        %v2856 = vunpack.c.l.b16 %v1485
        %v2857 = vunpack.c.h.b16 %v1485
        %v2858 = vunpack.c.l.b16 %v1486
        %v2859 = vunpack.c.h.b16 %v1486
        %v2860 = vunpack.c.l.b16 %v1487
        %v2861 = vunpack.c.h.b16 %v1487
        %v2862 = vunpack.c.l.b16 %v1488
        %v2863 = vunpack.c.h.b16 %v1488
        %v2864 = vunpack.c.l.b16 %v1489
        %v2865 = vunpack.c.h.b16 %v1489
        %v2866 = vunpack.c.l.b16 %v1490
        %v2867 = vunpack.c.h.b16 %v1490
        %v2868 = vunpack.c.l.b16 %v1491
        %v2869 = vunpack.c.h.b16 %v1491
        %v2870 = vunpack.c.l.b16 %v1492
        %v2871 = vunpack.c.h.b16 %v1492
        %v2872 = vunpack.c.l.b16 %v1493
        %v2873 = vunpack.c.h.b16 %v1493
        %v2874 = vunpack.c.l.b16 %v1494
        %v2875 = vunpack.c.h.b16 %v1494
        %v2876 = vunpack.c.l.b16 %v1495
        %v2877 = vunpack.c.h.b16 %v1495
        %v2878 = vunpack.c.l.b16 %v1496
        %v2879 = vunpack.c.h.b16 %v1496
        %v2880 = vunpack.c.l.b16 %v1497
        %v2881 = vunpack.c.h.b16 %v1497
        %v2882 = vunpack.c.l.b16 %v1498
        %v2883 = vunpack.c.h.b16 %v1498
        %v2884 = vunpack.c.l.b16 %v1499
        %v2885 = vunpack.c.h.b16 %v1499
        %v2886 = vunpack.c.l.b16 %v1500
        %v2887 = vunpack.c.h.b16 %v1500
        %v2888 = vunpack.c.l.b16 %v1501
        %v2889 = vunpack.c.h.b16 %v1501
        %v2890 = vunpack.c.l.b16 %v1502
        %v2891 = vunpack.c.h.b16 %v1502
        %v2892 = vunpack.c.l.b16 %v1503
        %v2893 = vunpack.c.h.b16 %v1503
        %v2894 = vunpack.c.l.b16 %v1504
        %v2895 = vunpack.c.h.b16 %v1504
        %v2896 = vunpack.c.l.b16 %v1505
        %v2897 = vunpack.c.h.b16 %v1505
        %v2898 = vunpack.c.l.b16 %v1506
        %v2899 = vunpack.c.h.b16 %v1506
        %v2900 = vunpack.c.l.b16 %v1507
        %v2901 = vunpack.c.h.b16 %v1507
        %v2902 = vunpack.c.l.b16 %v1508
        %v2903 = vunpack.c.h.b16 %v1508
        %v2904 = vunpack.c.l.b16 %v1509
        %v2905 = vunpack.c.h.b16 %v1509
        %v2906 = vunpack.c.l.b16 %v1510
        %v2907 = vunpack.c.h.b16 %v1510
        %v2908 = vunpack.c.l.b16 %v1511
        %v2909 = vunpack.c.h.b16 %v1511
        %v2910 = vunpack.c.l.b16 %v1512
        %v2911 = vunpack.c.h.b16 %v1512
        %v2912 = vunpack.c.l.b16 %v1513
        %v2913 = vunpack.c.h.b16 %v1513
        %v2914 = vunpack.c.l.b16 %v1514
        %v2915 = vunpack.c.h.b16 %v1514
        %v2916 = vunpack.c.l.b16 %v1515
        %v2917 = vunpack.c.h.b16 %v1515
        %v2918 = vunpack.c.l.b16 %v1516
        %v2919 = vunpack.c.h.b16 %v1516
        %v2920 = vunpack.c.l.b16 %v1517
        %v2921 = vunpack.c.h.b16 %v1517
        %v2922 = vunpack.c.l.b16 %v1518
        %v2923 = vunpack.c.h.b16 %v1518
        %v2924 = vunpack.c.l.b16 %v1519
        %v2925 = vunpack.c.h.b16 %v1519
        %v2926 = vunpack.c.l.b16 %v1520
        %v2927 = vunpack.c.h.b16 %v1520
        %v2928 = vunpack.c.l.b16 %v1521
        %v2929 = vunpack.c.h.b16 %v1521
        %v2930 = vunpack.c.l.b16 %v1522
        %v2931 = vunpack.c.h.b16 %v1522
        %v2932 = vunpack.c.l.b16 %v1523
        %v2933 = vunpack.c.h.b16 %v1523
        %v2934 = vunpack.c.l.b16 %v1524
        %v2935 = vunpack.c.h.b16 %v1524
        %v2936 = vunpack.c.l.b16 %v1525
        %v2937 = vunpack.c.h.b16 %v1525
        %v2938 = vunpack.c.l.b16 %v1526
        %v2939 = vunpack.c.h.b16 %v1526
        %v2940 = vunpack.c.l.b16 %v1527
        %v2941 = vunpack.c.h.b16 %v1527
        %v2942 = vunpack.c.l.b16 %v1528
        %v2943 = vunpack.c.h.b16 %v1528
        %v2944 = vunpack.c.l.b16 %v1529
        %v2945 = vunpack.c.h.b16 %v1529
        %v2946 = vunpack.c.l.b16 %v1530
        %v2947 = vunpack.c.h.b16 %v1530
        %v2948 = vunpack.c.l.b16 %v1531
        %v2949 = vunpack.c.h.b16 %v1531
        %v2950 = vunpack.c.l.b16 %v1532
        %v2951 = vunpack.c.h.b16 %v1532
        %v2952 = vunpack.c.l.b16 %v1533
        %v2953 = vunpack.c.h.b16 %v1533
        %v2954 = vunpack.c.l.b16 %v1534
        %v2955 = vunpack.c.h.b16 %v1534
        %v2956 = vunpack.c.l.b16 %v1535
        %v2957 = vunpack.c.h.b16 %v1535
        %v2958 = vunpack.c.l.b16 %v1536
        %v2959 = vunpack.c.h.b16 %v1536
        %v2960 = vunpack.c.l.b16 %v1537
        %v2961 = vunpack.c.h.b16 %v1537
        %v2962 = vunpack.c.l.b16 %v1538
        %v2963 = vunpack.c.h.b16 %v1538
        %v2964 = vunpack.c.l.b16 %v1539
        %v2965 = vunpack.c.h.b16 %v1539
        %v2966 = vunpack.c.l.b16 %v1540
        %v2967 = vunpack.c.h.b16 %v1540
        %v2968 = vunpack.c.l.b16 %v1541
        %v2969 = vunpack.c.h.b16 %v1541
        %v2970 = vunpack.c.l.b16 %v1542
        %v2971 = vunpack.c.h.b16 %v1542
        %v2972 = vunpack.c.l.b16 %v1543
        %v2973 = vunpack.c.h.b16 %v1543
        %v2974 = vunpack.c.l.b16 %v1544
        %v2975 = vunpack.c.h.b16 %v1544
        %v2976 = vunpack.c.l.b16 %v1545
        %v2977 = vunpack.c.h.b16 %v1545
        %v2978 = vunpack.c.l.b16 %v1546
        %v2979 = vunpack.c.h.b16 %v1546
        %v2980 = vunpack.c.l.b16 %v1547
        %v2981 = vunpack.c.h.b16 %v1547
        %v2982 = vunpack.c.l.b16 %v1548
        %v2983 = vunpack.c.h.b16 %v1548
        %v2984 = vunpack.c.l.b16 %v1549
        %v2985 = vunpack.c.h.b16 %v1549
        %v2986 = vunpack.c.l.b16 %v1550
        %v2987 = vunpack.c.h.b16 %v1550
        %v2988 = vunpack.c.l.b16 %v1551
        %v2989 = vunpack.c.h.b16 %v1551
        %v2990 = vunpack.c.l.b16 %v1552
        %v2991 = vunpack.c.h.b16 %v1552
        %v2992 = vunpack.c.l.b16 %v1553
        %v2993 = vunpack.c.h.b16 %v1553
        %v2994 = vunpack.c.l.b16 %v1554
        %v2995 = vunpack.c.h.b16 %v1554
        %v2996 = vunpack.c.l.b16 %v1555
        %v2997 = vunpack.c.h.b16 %v1555
        %v2998 = vunpack.c.l.b16 %v1556
        %v2999 = vunpack.c.h.b16 %v1556
        %v3000 = vunpack.c.l.b16 %v1557
        %v3001 = vunpack.c.h.b16 %v1557
        %v3002 = vunpack.c.l.b16 %v1558
        %v3003 = vunpack.c.h.b16 %v1558
        %v3004 = vunpack.c.l.b16 %v1559
        %v3005 = vunpack.c.h.b16 %v1559
        %v3006 = vunpack.c.l.b16 %v1560
        %v3007 = vunpack.c.h.b16 %v1560
        %v3008 = vunpack.c.l.b16 %v1561
        %v3009 = vunpack.c.h.b16 %v1561
        %v3010 = vunpack.c.l.b16 %v1562
        %v3011 = vunpack.c.h.b16 %v1562
        %v3012 = vunpack.c.l.b16 %v1563
        %v3013 = vunpack.c.h.b16 %v1563
        %v3014 = vunpack.c.l.b16 %v1564
        %v3015 = vunpack.c.h.b16 %v1564
        %v3016 = vunpack.c.l.b16 %v1565
        %v3017 = vunpack.c.h.b16 %v1565
        %v3018 = vunpack.c.l.b16 %v1566
        %v3019 = vunpack.c.h.b16 %v1566
        %v3020 = vunpack.c.l.b16 %v1567
        %v3021 = vunpack.c.h.b16 %v1567
        %v3022 = vunpack.c.l.b16 %v1568
        %v3023 = vunpack.c.h.b16 %v1568
        %v3024 = vunpack.c.l.b16 %v1569
        %v3025 = vunpack.c.h.b16 %v1569
        %v3026 = vunpack.c.l.b16 %v1570
        %v3027 = vunpack.c.h.b16 %v1570
        %v3028 = vunpack.c.l.b16 %v1571
        %v3029 = vunpack.c.h.b16 %v1571
        %v3030 = vunpack.c.l.b16 %v1572
        %v3031 = vunpack.c.h.b16 %v1572
        %v3032 = vunpack.c.l.b16 %v1573
        %v3033 = vunpack.c.h.b16 %v1573
        %v3034 = vunpack.c.l.b16 %v1574
        %v3035 = vunpack.c.h.b16 %v1574
        %v3036 = vunpack.c.l.b16 %v1575
        %v3037 = vunpack.c.h.b16 %v1575
        %v3038 = vunpack.c.l.b16 %v1576
        %v3039 = vunpack.c.h.b16 %v1576
        %v3040 = vunpack.c.l.b16 %v1577
        %v3041 = vunpack.c.h.b16 %v1577
        %v3042 = vunpack.c.l.b16 %v1578
        %v3043 = vunpack.c.h.b16 %v1578
        %v3044 = vunpack.c.l.b16 %v1579
        %v3045 = vunpack.c.h.b16 %v1579
        %v3046 = vunpack.c.l.b16 %v1580
        %v3047 = vunpack.c.h.b16 %v1580
        %v3048 = vunpack.c.l.b16 %v1581
        %v3049 = vunpack.c.h.b16 %v1581
        %v3050 = vunpack.c.l.b16 %v1582
        %v3051 = vunpack.c.h.b16 %v1582
        %v3052 = vunpack.c.l.b16 %v1583
        %v3053 = vunpack.c.h.b16 %v1583
        %v3054 = vunpack.c.l.b16 %v1584
        %v3055 = vunpack.c.h.b16 %v1584
        %v3056 = vunpack.c.l.b16 %v1585
        %v3057 = vunpack.c.h.b16 %v1585
        %v3058 = vunpack.c.l.b16 %v1586
        %v3059 = vunpack.c.h.b16 %v1586
        %v3060 = vunpack.c.l.b16 %v1587
        %v3061 = vunpack.c.h.b16 %v1587
        %v3062 = vunpack.c.l.b16 %v1588
        %v3063 = vunpack.c.h.b16 %v1588
        %v3064 = vunpack.c.l.b16 %v1589
        %v3065 = vunpack.c.h.b16 %v1589
        %v3066 = vunpack.c.l.b16 %v1590
        %v3067 = vunpack.c.h.b16 %v1590
        %v3068 = vunpack.c.l.b16 %v1591
        %v3069 = vunpack.c.h.b16 %v1591
        %v3070 = vunpack.c.l.b16 %v1592
        %v3071 = vunpack.c.h.b16 %v1592
        %v3072 = vunpack.c.l.b16 %v1593
        %v3073 = vunpack.c.h.b16 %v1593
        %v3074 = vunpack.c.l.b16 %v1594
        %v3075 = vunpack.c.h.b16 %v1594
        %v3076 = vunpack.c.l.b16 %v1595
        %v3077 = vunpack.c.h.b16 %v1595
        %v3078 = vunpack.c.l.b16 %v1596
        %v3079 = vunpack.c.h.b16 %v1596
        %v3080 = vunpack.c.l.b16 %v1597
        %v3081 = vunpack.c.h.b16 %v1597
        %v3082 = vunpack.c.l.b16 %v1598
        %v3083 = vunpack.c.h.b16 %v1598
        %v3084 = vunpack.c.l.b16 %v1599
        %v3085 = vunpack.c.h.b16 %v1599
        %v3086 = vunpack.c.l.b16 %v1600
        %v3087 = vunpack.c.h.b16 %v1600
        %v3088 = vunpack.c.l.b16 %v1601
        %v3089 = vunpack.c.h.b16 %v1601
        %v3090 = vunpack.c.l.b16 %v1602
        %v3091 = vunpack.c.h.b16 %v1602
        %v3092 = vunpack.c.l.b16 %v1603
        %v3093 = vunpack.c.h.b16 %v1603
        %v3094 = vunpack.c.l.b16 %v1604
        %v3095 = vunpack.c.h.b16 %v1604
        %v3096 = vunpack.c.l.b16 %v1605
        %v3097 = vunpack.c.h.b16 %v1605
        %v3098 = vunpack.c.l.b16 %v1606
        %v3099 = vunpack.c.h.b16 %v1606
        %v3100 = vunpack.c.l.b16 %v1607
        %v3101 = vunpack.c.h.b16 %v1607
        %v3102 = vunpack.c.l.b16 %v1608
        %v3103 = vunpack.c.h.b16 %v1608
        %v3104 = vunpack.c.l.b16 %v1609
        %v3105 = vunpack.c.h.b16 %v1609
        %v3106 = vunpack.c.l.b16 %v1610
        %v3107 = vunpack.c.h.b16 %v1610
        %v3108 = vunpack.c.l.b16 %v1611
        %v3109 = vunpack.c.h.b16 %v1611
        %v3110 = vunpack.c.l.b16 %v1612
        %v3111 = vunpack.c.h.b16 %v1612
        %v3112 = vunpack.c.l.b16 %v1613
        %v3113 = vunpack.c.h.b16 %v1613
        %v3114 = vunpack.c.l.b16 %v1614
        %v3115 = vunpack.c.h.b16 %v1614
        %v3116 = vunpack.c.l.b16 %v1615
        %v3117 = vunpack.c.h.b16 %v1615
        %v3118 = vunpack.c.l.b16 %v1616
        %v3119 = vunpack.c.h.b16 %v1616
        %v3120 = vunpack.c.l.b16 %v1617
        %v3121 = vunpack.c.h.b16 %v1617
        %v3122 = vunpack.c.l.b16 %v1618
        %v3123 = vunpack.c.h.b16 %v1618
        %v3124 = vunpack.c.l.b16 %v1619
        %v3125 = vunpack.c.h.b16 %v1619
        %v3126 = vunpack.c.l.b16 %v1620
        %v3127 = vunpack.c.h.b16 %v1620
        %v3128 = vunpack.c.l.b16 %v1621
        %v3129 = vunpack.c.h.b16 %v1621
        %v3130 = vunpack.c.l.b16 %v1622
        %v3131 = vunpack.c.h.b16 %v1622
        %v3132 = vunpack.c.l.b16 %v1623
        %v3133 = vunpack.c.h.b16 %v1623
        %v3134 = vunpack.c.l.b16 %v1624
        %v3135 = vunpack.c.h.b16 %v1624
        %v3136 = vunpack.c.l.b16 %v1625
        %v3137 = vunpack.c.h.b16 %v1625
        %v3138 = vunpack.c.l.b16 %v1626
        %v3139 = vunpack.c.h.b16 %v1626
        %v3140 = vunpack.c.l.b16 %v1627
        %v3141 = vunpack.c.h.b16 %v1627
        %v3142 = vunpack.c.l.b16 %v1628
        %v3143 = vunpack.c.h.b16 %v1628
        %v3144 = vunpack.c.l.b16 %v1629
        %v3145 = vunpack.c.h.b16 %v1629
        %v3146 = vunpack.c.l.b16 %v1630
        %v3147 = vunpack.c.h.b16 %v1630
        %v3148 = vunpack.c.l.b16 %v1631
        %v3149 = vunpack.c.h.b16 %v1631
        %v3150 = vunpack.c.l.b16 %v1632
        %v3151 = vunpack.c.h.b16 %v1632
        %v3152 = vunpack.c.l.b16 %v1633
        %v3153 = vunpack.c.h.b16 %v1633
        %v3154 = vunpack.c.l.b16 %v1634
        %v3155 = vunpack.c.h.b16 %v1634
        %v3156 = vunpack.c.l.b16 %v1635
        %v3157 = vunpack.c.h.b16 %v1635
        %v3158 = vunpack.c.l.b16 %v1636
        %v3159 = vunpack.c.h.b16 %v1636
        %v3160 = vunpack.c.l.b16 %v1637
        %v3161 = vunpack.c.h.b16 %v1637
        %v3162 = vunpack.c.l.b16 %v1638
        %v3163 = vunpack.c.h.b16 %v1638
        %v3164 = vunpack.c.l.b16 %v1639
        %v3165 = vunpack.c.h.b16 %v1639
        %v3166 = vunpack.c.l.b16 %v1640
        %v3167 = vunpack.c.h.b16 %v1640
        %v3168 = vunpack.c.l.b16 %v1641
        %v3169 = vunpack.c.h.b16 %v1641
        %v3170 = vunpack.c.l.b16 %v1642
        %v3171 = vunpack.c.h.b16 %v1642
        %v3172 = vunpack.c.l.b16 %v1643
        %v3173 = vunpack.c.h.b16 %v1643
        %v3174 = vunpack.c.l.b16 %v1644
        %v3175 = vunpack.c.h.b16 %v1644
        %v3176 = vunpack.c.l.b16 %v1645
        %v3177 = vunpack.c.h.b16 %v1645
        %v3178 = vunpack.c.l.b16 %v1646
        %v3179 = vunpack.c.h.b16 %v1646
        %v3180 = vunpack.c.l.b16 %v1647
        %v3181 = vunpack.c.h.b16 %v1647
        %v3182 = vunpack.c.l.b16 %v1648
        %v3183 = vunpack.c.h.b16 %v1648
        %v3184 = vunpack.c.l.b16 %v1649
        %v3185 = vunpack.c.h.b16 %v1649
        %v3186 = vunpack.c.l.b16 %v1650
        %v3187 = vunpack.c.h.b16 %v1650
        %v3188 = vunpack.c.l.b16 %v1651
        %v3189 = vunpack.c.h.b16 %v1651
        %v3190 = vunpack.c.l.b16 %v1652
        %v3191 = vunpack.c.h.b16 %v1652
        %v3192 = vunpack.c.l.b16 %v1653
        %v3193 = vunpack.c.h.b16 %v1653
        %v3194 = vunpack.c.l.b16 %v1654
        %v3195 = vunpack.c.h.b16 %v1654
        %v3196 = vunpack.c.l.b16 %v1655
        %v3197 = vunpack.c.h.b16 %v1655
        %v3198 = vunpack.c.l.b16 %v1656
        %v3199 = vunpack.c.h.b16 %v1656
        %v3200 = vunpack.c.l.b16 %v1657
        %v3201 = vunpack.c.h.b16 %v1657
        %v3202 = vunpack.c.l.b16 %v1658
        %v3203 = vunpack.c.h.b16 %v1658
        %v3204 = vunpack.c.l.b16 %v1659
        %v3205 = vunpack.c.h.b16 %v1659
        %v3206 = vunpack.c.l.b16 %v1660
        %v3207 = vunpack.c.h.b16 %v1660
        %v3208 = vunpack.c.l.b16 %v1661
        %v3209 = vunpack.c.h.b16 %v1661
        %v3210 = vunpack.c.l.b16 %v1662
        %v3211 = vunpack.c.h.b16 %v1662
        %v3212 = vunpack.c.l.b16 %v1663
        %v3213 = vunpack.c.h.b16 %v1663
        %v3214 = vunpack.c.l.b16 %v1664
        %v3215 = vunpack.c.h.b16 %v1664
        %v3216 = vunpack.c.l.b16 %v1665
        %v3217 = vunpack.c.h.b16 %v1665
        %v3218 = vunpack.c.l.b16 %v1666
        %v3219 = vunpack.c.h.b16 %v1666
        %v3220 = vunpack.c.l.b16 %v1667
        %v3221 = vunpack.c.h.b16 %v1667
        %v3222 = vunpack.c.l.b16 %v1668
        %v3223 = vunpack.c.h.b16 %v1668
        %v3224 = vunpack.c.l.b16 %v1669
        %v3225 = vunpack.c.h.b16 %v1669
        %v3226 = vunpack.c.l.b16 %v1670
        %v3227 = vunpack.c.h.b16 %v1670
        %v3228 = vunpack.c.l.b16 %v1671
        %v3229 = vunpack.c.h.b16 %v1671
        %v3230 = vunpack.c.l.b16 %v1672
        %v3231 = vunpack.c.h.b16 %v1672
        %v3232 = vunpack.c.l.b16 %v1673
        %v3233 = vunpack.c.h.b16 %v1673
        %v3234 = vunpack.c.l.b16 %v1674
        %v3235 = vunpack.c.h.b16 %v1674
        %v3236 = vunpack.c.l.b16 %v1675
        %v3237 = vunpack.c.h.b16 %v1675
        %v3238 = vunpack.c.l.b16 %v1676
        %v3239 = vunpack.c.h.b16 %v1676
        %v3240 = vunpack.c.l.b16 %v1677
        %v3241 = vunpack.c.h.b16 %v1677
        %v3242 = vunpack.c.l.b16 %v1678
        %v3243 = vunpack.c.h.b16 %v1678
        %v3244 = vunpack.c.l.b16 %v1679
        %v3245 = vunpack.c.h.b16 %v1679
        %v3246 = vunpack.c.l.b16 %v1680
        %v3247 = vunpack.c.h.b16 %v1680
        %v3248 = vunpack.c.l.b16 %v1681
        %v3249 = vunpack.c.h.b16 %v1681
        %v3250 = vunpack.c.l.b16 %v1682
        %v3251 = vunpack.c.h.b16 %v1682
        %v3252 = vunpack.c.l.b16 %v1683
        %v3253 = vunpack.c.h.b16 %v1683
        %v3254 = vunpack.c.l.b16 %v1684
        %v3255 = vunpack.c.h.b16 %v1684
        %v3256 = vunpack.c.l.b16 %v1685
        %v3257 = vunpack.c.h.b16 %v1685
        %v3258 = vunpack.c.l.b16 %v1686
        %v3259 = vunpack.c.h.b16 %v1686
        %v3260 = vunpack.c.l.b16 %v1687
        %v3261 = vunpack.c.h.b16 %v1687
        %v3262 = vunpack.c.l.b16 %v1688
        %v3263 = vunpack.c.h.b16 %v1688
        %v3264 = vunpack.c.l.b16 %v1689
        %v3265 = vunpack.c.h.b16 %v1689
        %v3266 = vunpack.c.l.b16 %v1690
        %v3267 = vunpack.c.h.b16 %v1690
        %v3268 = vunpack.c.l.b16 %v1691
        %v3269 = vunpack.c.h.b16 %v1691
        %v3270 = vpack.c.b16 %v2254, %v2246
        %v3271 = vpack.c.b16 %v2255, %v2247
        %v3272 = vpack.c.b16 %v2256, %v2248
        %v3273 = vpack.c.b16 %v2257, %v2249
        %v3274 = vpack.c.b16 %v2258, %v2250
        %v3275 = vpack.c.b16 %v2259, %v2251
        %v3276 = vpack.c.b16 %v2260, %v2252
        %v3277 = vpack.c.b16 %v2261, %v2253
        %v3278 = vpack.c.b16 %v2270, %v2262
        %v3279 = vpack.c.b16 %v2271, %v2263
        %v3280 = vpack.c.b16 %v2272, %v2264
        %v3281 = vpack.c.b16 %v2273, %v2265
        %v3282 = vpack.c.b16 %v2274, %v2266
        %v3283 = vpack.c.b16 %v2275, %v2267
        %v3284 = vpack.c.b16 %v2276, %v2268
        %v3285 = vpack.c.b16 %v2277, %v2269
        %v3286 = vpack.c.b16 %v2286, %v2278
        %v3287 = vpack.c.b16 %v2287, %v2279
        %v3288 = vpack.c.b16 %v2288, %v2280
        %v3289 = vpack.c.b16 %v2289, %v2281
        %v3290 = vpack.c.b16 %v2290, %v2282
        %v3291 = vpack.c.b16 %v2291, %v2283
        %v3292 = vpack.c.b16 %v2292, %v2284
        %v3293 = vpack.c.b16 %v2293, %v2285
        %v3294 = vpack.c.b16 %v2302, %v2294
        %v3295 = vpack.c.b16 %v2303, %v2295
        %v3296 = vpack.c.b16 %v2304, %v2296
        %v3297 = vpack.c.b16 %v2305, %v2297
        %v3298 = vpack.c.b16 %v2306, %v2298
        %v3299 = vpack.c.b16 %v2307, %v2299
        %v3300 = vpack.c.b16 %v2308, %v2300
        %v3301 = vpack.c.b16 %v2309, %v2301
        %v3302 = vpack.c.b16 %v2318, %v2310
        %v3303 = vpack.c.b16 %v2319, %v2311
        %v3304 = vpack.c.b16 %v2320, %v2312
        %v3305 = vpack.c.b16 %v2321, %v2313
        %v3306 = vpack.c.b16 %v2322, %v2314
        %v3307 = vpack.c.b16 %v2323, %v2315
        %v3308 = vpack.c.b16 %v2324, %v2316
        %v3309 = vpack.c.b16 %v2325, %v2317
        %v3310 = vpack.c.b16 %v2334, %v2326
        %v3311 = vpack.c.b16 %v2335, %v2327
        %v3312 = vpack.c.b16 %v2336, %v2328
        %v3313 = vpack.c.b16 %v2337, %v2329
        %v3314 = vpack.c.b16 %v2338, %v2330
        %v3315 = vpack.c.b16 %v2339, %v2331
        %v3316 = vpack.c.b16 %v2340, %v2332
        %v3317 = vpack.c.b16 %v2341, %v2333
        %v3318 = vpack.c.b16 %v2350, %v2342
        %v3319 = vpack.c.b16 %v2351, %v2343
        %v3320 = vpack.c.b16 %v2352, %v2344
        %v3321 = vpack.c.b16 %v2353, %v2345
        %v3322 = vpack.c.b16 %v2354, %v2346
        %v3323 = vpack.c.b16 %v2355, %v2347
        %v3324 = vpack.c.b16 %v2356, %v2348
        %v3325 = vpack.c.b16 %v2357, %v2349
        %v3326 = vpack.c.b16 %v2366, %v2358
        %v3327 = vpack.c.b16 %v2367, %v2359
        %v3328 = vpack.c.b16 %v2368, %v2360
        %v3329 = vpack.c.b16 %v2369, %v2361
        %v3330 = vpack.c.b16 %v2370, %v2362
        %v3331 = vpack.c.b16 %v2371, %v2363
        %v3332 = vpack.c.b16 %v2372, %v2364
        %v3333 = vpack.c.b16 %v2373, %v2365
        %v3334 = vpack.c.b16 %v2382, %v2374
        %v3335 = vpack.c.b16 %v2383, %v2375
        %v3336 = vpack.c.b16 %v2384, %v2376
        %v3337 = vpack.c.b16 %v2385, %v2377
        %v3338 = vpack.c.b16 %v2386, %v2378
        %v3339 = vpack.c.b16 %v2387, %v2379
        %v3340 = vpack.c.b16 %v2388, %v2380
        %v3341 = vpack.c.b16 %v2389, %v2381
        %v3342 = vpack.c.b16 %v2398, %v2390
        %v3343 = vpack.c.b16 %v2399, %v2391
        %v3344 = vpack.c.b16 %v2400, %v2392
        %v3345 = vpack.c.b16 %v2401, %v2393
        %v3346 = vpack.c.b16 %v2402, %v2394
        %v3347 = vpack.c.b16 %v2403, %v2395
        %v3348 = vpack.c.b16 %v2404, %v2396
        %v3349 = vpack.c.b16 %v2405, %v2397
        %v3350 = vpack.c.b16 %v2414, %v2406
        %v3351 = vpack.c.b16 %v2415, %v2407
        %v3352 = vpack.c.b16 %v2416, %v2408
        %v3353 = vpack.c.b16 %v2417, %v2409
        %v3354 = vpack.c.b16 %v2418, %v2410
        %v3355 = vpack.c.b16 %v2419, %v2411
        %v3356 = vpack.c.b16 %v2420, %v2412
        %v3357 = vpack.c.b16 %v2421, %v2413
        %v3358 = vpack.c.b16 %v2430, %v2422
        %v3359 = vpack.c.b16 %v2431, %v2423
        %v3360 = vpack.c.b16 %v2432, %v2424
        %v3361 = vpack.c.b16 %v2433, %v2425
        %v3362 = vpack.c.b16 %v2434, %v2426
        %v3363 = vpack.c.b16 %v2435, %v2427
        %v3364 = vpack.c.b16 %v2436, %v2428
        %v3365 = vpack.c.b16 %v2437, %v2429
        %v3366 = vpack.c.b16 %v2446, %v2438
        %v3367 = vpack.c.b16 %v2447, %v2439
        %v3368 = vpack.c.b16 %v2448, %v2440
        %v3369 = vpack.c.b16 %v2449, %v2441
        %v3370 = vpack.c.b16 %v2450, %v2442
        %v3371 = vpack.c.b16 %v2451, %v2443
        %v3372 = vpack.c.b16 %v2452, %v2444
        %v3373 = vpack.c.b16 %v2453, %v2445
        %v3374 = vpack.c.b16 %v2462, %v2454
        %v3375 = vpack.c.b16 %v2463, %v2455
        %v3376 = vpack.c.b16 %v2464, %v2456
        %v3377 = vpack.c.b16 %v2465, %v2457
        %v3378 = vpack.c.b16 %v2466, %v2458
        %v3379 = vpack.c.b16 %v2467, %v2459
        %v3380 = vpack.c.b16 %v2468, %v2460
        %v3381 = vpack.c.b16 %v2469, %v2461
        %v3382 = vpack.c.b16 %v2478, %v2470
        %v3383 = vpack.c.b16 %v2479, %v2471
        %v3384 = vpack.c.b16 %v2480, %v2472
        %v3385 = vpack.c.b16 %v2481, %v2473
        %v3386 = vpack.c.b16 %v2482, %v2474
        %v3387 = vpack.c.b16 %v2483, %v2475
        %v3388 = vpack.c.b16 %v2484, %v2476
        %v3389 = vpack.c.b16 %v2485, %v2477
        %v3390 = vpack.c.b16 %v2494, %v2486
        %v3391 = vpack.c.b16 %v2495, %v2487
        %v3392 = vpack.c.b16 %v2496, %v2488
        %v3393 = vpack.c.b16 %v2497, %v2489
        %v3394 = vpack.c.b16 %v2498, %v2490
        %v3395 = vpack.c.b16 %v2499, %v2491
        %v3396 = vpack.c.b16 %v2500, %v2492
        %v3397 = vpack.c.b16 %v2501, %v2493
        %v3398 = vpack.c.b16 %v2510, %v2502
        %v3399 = vpack.c.b16 %v2511, %v2503
        %v3400 = vpack.c.b16 %v2512, %v2504
        %v3401 = vpack.c.b16 %v2513, %v2505
        %v3402 = vpack.c.b16 %v2514, %v2506
        %v3403 = vpack.c.b16 %v2515, %v2507
        %v3404 = vpack.c.b16 %v2516, %v2508
        %v3405 = vpack.c.b16 %v2517, %v2509
        %v3406 = vpack.c.b16 %v2526, %v2518
        %v3407 = vpack.c.b16 %v2527, %v2519
        %v3408 = vpack.c.b16 %v2528, %v2520
        %v3409 = vpack.c.b16 %v2529, %v2521
        %v3410 = vpack.c.b16 %v2530, %v2522
        %v3411 = vpack.c.b16 %v2531, %v2523
        %v3412 = vpack.c.b16 %v2532, %v2524
        %v3413 = vpack.c.b16 %v2533, %v2525
        %v3414 = vpack.c.b16 %v2542, %v2534
        %v3415 = vpack.c.b16 %v2543, %v2535
        %v3416 = vpack.c.b16 %v2544, %v2536
        %v3417 = vpack.c.b16 %v2545, %v2537
        %v3418 = vpack.c.b16 %v2546, %v2538
        %v3419 = vpack.c.b16 %v2547, %v2539
        %v3420 = vpack.c.b16 %v2548, %v2540
        %v3421 = vpack.c.b16 %v2549, %v2541
        %v3422 = vpack.c.b16 %v2558, %v2550
        %v3423 = vpack.c.b16 %v2559, %v2551
        %v3424 = vpack.c.b16 %v2560, %v2552
        %v3425 = vpack.c.b16 %v2561, %v2553
        %v3426 = vpack.c.b16 %v2562, %v2554
        %v3427 = vpack.c.b16 %v2563, %v2555
        %v3428 = vpack.c.b16 %v2564, %v2556
        %v3429 = vpack.c.b16 %v2565, %v2557
        %v3430 = vpack.c.b16 %v2574, %v2566
        %v3431 = vpack.c.b16 %v2575, %v2567
        %v3432 = vpack.c.b16 %v2576, %v2568
        %v3433 = vpack.c.b16 %v2577, %v2569
        %v3434 = vpack.c.b16 %v2578, %v2570
        %v3435 = vpack.c.b16 %v2579, %v2571
        %v3436 = vpack.c.b16 %v2580, %v2572
        %v3437 = vpack.c.b16 %v2581, %v2573
        %v3438 = vpack.c.b16 %v2590, %v2582
        %v3439 = vpack.c.b16 %v2591, %v2583
        %v3440 = vpack.c.b16 %v2592, %v2584
        %v3441 = vpack.c.b16 %v2593, %v2585
        %v3442 = vpack.c.b16 %v2594, %v2586
        %v3443 = vpack.c.b16 %v2595, %v2587
        %v3444 = vpack.c.b16 %v2596, %v2588
        %v3445 = vpack.c.b16 %v2597, %v2589
        %v3446 = vpack.c.b16 %v2606, %v2598
        %v3447 = vpack.c.b16 %v2607, %v2599
        %v3448 = vpack.c.b16 %v2608, %v2600
        %v3449 = vpack.c.b16 %v2609, %v2601
        %v3450 = vpack.c.b16 %v2610, %v2602
        %v3451 = vpack.c.b16 %v2611, %v2603
        %v3452 = vpack.c.b16 %v2612, %v2604
        %v3453 = vpack.c.b16 %v2613, %v2605
        %v3454 = vpack.c.b16 %v2622, %v2614
        %v3455 = vpack.c.b16 %v2623, %v2615
        %v3456 = vpack.c.b16 %v2624, %v2616
        %v3457 = vpack.c.b16 %v2625, %v2617
        %v3458 = vpack.c.b16 %v2626, %v2618
        %v3459 = vpack.c.b16 %v2627, %v2619
        %v3460 = vpack.c.b16 %v2628, %v2620
        %v3461 = vpack.c.b16 %v2629, %v2621
        %v3462 = vpack.c.b16 %v2638, %v2630
        %v3463 = vpack.c.b16 %v2639, %v2631
        %v3464 = vpack.c.b16 %v2640, %v2632
        %v3465 = vpack.c.b16 %v2641, %v2633
        %v3466 = vpack.c.b16 %v2642, %v2634
        %v3467 = vpack.c.b16 %v2643, %v2635
        %v3468 = vpack.c.b16 %v2644, %v2636
        %v3469 = vpack.c.b16 %v2645, %v2637
        %v3470 = vpack.c.b16 %v2654, %v2646
        %v3471 = vpack.c.b16 %v2655, %v2647
        %v3472 = vpack.c.b16 %v2656, %v2648
        %v3473 = vpack.c.b16 %v2657, %v2649
        %v3474 = vpack.c.b16 %v2658, %v2650
        %v3475 = vpack.c.b16 %v2659, %v2651
        %v3476 = vpack.c.b16 %v2660, %v2652
        %v3477 = vpack.c.b16 %v2661, %v2653
        %v3478 = vpack.c.b16 %v2670, %v2662
        %v3479 = vpack.c.b16 %v2671, %v2663
        %v3480 = vpack.c.b16 %v2672, %v2664
        %v3481 = vpack.c.b16 %v2673, %v2665
        %v3482 = vpack.c.b16 %v2674, %v2666
        %v3483 = vpack.c.b16 %v2675, %v2667
        %v3484 = vpack.c.b16 %v2676, %v2668
        %v3485 = vpack.c.b16 %v2677, %v2669
        %v3486 = vpack.c.b16 %v2686, %v2678
        %v3487 = vpack.c.b16 %v2687, %v2679
        %v3488 = vpack.c.b16 %v2688, %v2680
        %v3489 = vpack.c.b16 %v2689, %v2681
        %v3490 = vpack.c.b16 %v2690, %v2682
        %v3491 = vpack.c.b16 %v2691, %v2683
        %v3492 = vpack.c.b16 %v2692, %v2684
        %v3493 = vpack.c.b16 %v2693, %v2685
        %v3494 = vpack.c.b16 %v2702, %v2694
        %v3495 = vpack.c.b16 %v2703, %v2695
        %v3496 = vpack.c.b16 %v2704, %v2696
        %v3497 = vpack.c.b16 %v2705, %v2697
        %v3498 = vpack.c.b16 %v2706, %v2698
        %v3499 = vpack.c.b16 %v2707, %v2699
        %v3500 = vpack.c.b16 %v2708, %v2700
        %v3501 = vpack.c.b16 %v2709, %v2701
        %v3502 = vpack.c.b16 %v2718, %v2710
        %v3503 = vpack.c.b16 %v2719, %v2711
        %v3504 = vpack.c.b16 %v2720, %v2712
        %v3505 = vpack.c.b16 %v2721, %v2713
        %v3506 = vpack.c.b16 %v2722, %v2714
        %v3507 = vpack.c.b16 %v2723, %v2715
        %v3508 = vpack.c.b16 %v2724, %v2716
        %v3509 = vpack.c.b16 %v2725, %v2717
        %v3510 = vpack.c.b16 %v2734, %v2726
        %v3511 = vpack.c.b16 %v2735, %v2727
        %v3512 = vpack.c.b16 %v2736, %v2728
        %v3513 = vpack.c.b16 %v2737, %v2729
        %v3514 = vpack.c.b16 %v2738, %v2730
        %v3515 = vpack.c.b16 %v2739, %v2731
        %v3516 = vpack.c.b16 %v2740, %v2732
        %v3517 = vpack.c.b16 %v2741, %v2733
        %v3518 = vpack.c.b16 %v2750, %v2742
        %v3519 = vpack.c.b16 %v2751, %v2743
        %v3520 = vpack.c.b16 %v2752, %v2744
        %v3521 = vpack.c.b16 %v2753, %v2745
        %v3522 = vpack.c.b16 %v2754, %v2746
        %v3523 = vpack.c.b16 %v2755, %v2747
        %v3524 = vpack.c.b16 %v2756, %v2748
        %v3525 = vpack.c.b16 %v2757, %v2749
        %v3526 = vpack.c.b16 %v2766, %v2758
        %v3527 = vpack.c.b16 %v2767, %v2759
        %v3528 = vpack.c.b16 %v2768, %v2760
        %v3529 = vpack.c.b16 %v2769, %v2761
        %v3530 = vpack.c.b16 %v2770, %v2762
        %v3531 = vpack.c.b16 %v2771, %v2763
        %v3532 = vpack.c.b16 %v2772, %v2764
        %v3533 = vpack.c.b16 %v2773, %v2765
        %v3534 = vpack.c.b16 %v2782, %v2774
        %v3535 = vpack.c.b16 %v2783, %v2775
        %v3536 = vpack.c.b16 %v2784, %v2776
        %v3537 = vpack.c.b16 %v2785, %v2777
        %v3538 = vpack.c.b16 %v2786, %v2778
        %v3539 = vpack.c.b16 %v2787, %v2779
        %v3540 = vpack.c.b16 %v2788, %v2780
        %v3541 = vpack.c.b16 %v2789, %v2781
        %v3542 = vpack.c.b16 %v2798, %v2790
        %v3543 = vpack.c.b16 %v2799, %v2791
        %v3544 = vpack.c.b16 %v2800, %v2792
        %v3545 = vpack.c.b16 %v2801, %v2793
        %v3546 = vpack.c.b16 %v2802, %v2794
        %v3547 = vpack.c.b16 %v2803, %v2795
        %v3548 = vpack.c.b16 %v2804, %v2796
        %v3549 = vpack.c.b16 %v2805, %v2797
        %v3550 = vpack.c.b16 %v2814, %v2806
        %v3551 = vpack.c.b16 %v2815, %v2807
        %v3552 = vpack.c.b16 %v2816, %v2808
        %v3553 = vpack.c.b16 %v2817, %v2809
        %v3554 = vpack.c.b16 %v2818, %v2810
        %v3555 = vpack.c.b16 %v2819, %v2811
        %v3556 = vpack.c.b16 %v2820, %v2812
        %v3557 = vpack.c.b16 %v2821, %v2813
        %v3558 = vpack.c.b16 %v2830, %v2822
        %v3559 = vpack.c.b16 %v2831, %v2823
        %v3560 = vpack.c.b16 %v2832, %v2824
        %v3561 = vpack.c.b16 %v2833, %v2825
        %v3562 = vpack.c.b16 %v2834, %v2826
        %v3563 = vpack.c.b16 %v2835, %v2827
        %v3564 = vpack.c.b16 %v2836, %v2828
        %v3565 = vpack.c.b16 %v2837, %v2829
        %v3566 = vpack.c.b16 %v2846, %v2838
        %v3567 = vpack.c.b16 %v2847, %v2839
        %v3568 = vpack.c.b16 %v2848, %v2840
        %v3569 = vpack.c.b16 %v2849, %v2841
        %v3570 = vpack.c.b16 %v2850, %v2842
        %v3571 = vpack.c.b16 %v2851, %v2843
        %v3572 = vpack.c.b16 %v2852, %v2844
        %v3573 = vpack.c.b16 %v2853, %v2845
        %v3574 = vpack.c.b16 %v2862, %v2854
        %v3575 = vpack.c.b16 %v2863, %v2855
        %v3576 = vpack.c.b16 %v2864, %v2856
        %v3577 = vpack.c.b16 %v2865, %v2857
        %v3578 = vpack.c.b16 %v2866, %v2858
        %v3579 = vpack.c.b16 %v2867, %v2859
        %v3580 = vpack.c.b16 %v2868, %v2860
        %v3581 = vpack.c.b16 %v2869, %v2861
        %v3582 = vpack.c.b16 %v2878, %v2870
        %v3583 = vpack.c.b16 %v2879, %v2871
        %v3584 = vpack.c.b16 %v2880, %v2872
        %v3585 = vpack.c.b16 %v2881, %v2873
        %v3586 = vpack.c.b16 %v2882, %v2874
        %v3587 = vpack.c.b16 %v2883, %v2875
        %v3588 = vpack.c.b16 %v2884, %v2876
        %v3589 = vpack.c.b16 %v2885, %v2877
        %v3590 = vpack.c.b16 %v2894, %v2886
        %v3591 = vpack.c.b16 %v2895, %v2887
        %v3592 = vpack.c.b16 %v2896, %v2888
        %v3593 = vpack.c.b16 %v2897, %v2889
        %v3594 = vpack.c.b16 %v2898, %v2890
        %v3595 = vpack.c.b16 %v2899, %v2891
        %v3596 = vpack.c.b16 %v2900, %v2892
        %v3597 = vpack.c.b16 %v2901, %v2893
        %v3598 = vpack.c.b16 %v2910, %v2902
        %v3599 = vpack.c.b16 %v2911, %v2903
        %v3600 = vpack.c.b16 %v2912, %v2904
        %v3601 = vpack.c.b16 %v2913, %v2905
        %v3602 = vpack.c.b16 %v2914, %v2906
        %v3603 = vpack.c.b16 %v2915, %v2907
        %v3604 = vpack.c.b16 %v2916, %v2908
        %v3605 = vpack.c.b16 %v2917, %v2909
        %v3606 = vpack.c.b16 %v2926, %v2918
        %v3607 = vpack.c.b16 %v2927, %v2919
        %v3608 = vpack.c.b16 %v2928, %v2920
        %v3609 = vpack.c.b16 %v2929, %v2921
        %v3610 = vpack.c.b16 %v2930, %v2922
        %v3611 = vpack.c.b16 %v2931, %v2923
        %v3612 = vpack.c.b16 %v2932, %v2924
        %v3613 = vpack.c.b16 %v2933, %v2925
        %v3614 = vpack.c.b16 %v2942, %v2934
        %v3615 = vpack.c.b16 %v2943, %v2935
        %v3616 = vpack.c.b16 %v2944, %v2936
        %v3617 = vpack.c.b16 %v2945, %v2937
        %v3618 = vpack.c.b16 %v2946, %v2938
        %v3619 = vpack.c.b16 %v2947, %v2939
        %v3620 = vpack.c.b16 %v2948, %v2940
        %v3621 = vpack.c.b16 %v2949, %v2941
        %v3622 = vpack.c.b16 %v2958, %v2950
        %v3623 = vpack.c.b16 %v2959, %v2951
        %v3624 = vpack.c.b16 %v2960, %v2952
        %v3625 = vpack.c.b16 %v2961, %v2953
        %v3626 = vpack.c.b16 %v2962, %v2954
        %v3627 = vpack.c.b16 %v2963, %v2955
        %v3628 = vpack.c.b16 %v2964, %v2956
        %v3629 = vpack.c.b16 %v2965, %v2957
        %v3630 = vpack.c.b16 %v2974, %v2966
        %v3631 = vpack.c.b16 %v2975, %v2967
        %v3632 = vpack.c.b16 %v2976, %v2968
        %v3633 = vpack.c.b16 %v2977, %v2969
        %v3634 = vpack.c.b16 %v2978, %v2970
        %v3635 = vpack.c.b16 %v2979, %v2971
        %v3636 = vpack.c.b16 %v2980, %v2972
        %v3637 = vpack.c.b16 %v2981, %v2973
        %v3638 = vpack.c.b16 %v2990, %v2982
        %v3639 = vpack.c.b16 %v2991, %v2983
        %v3640 = vpack.c.b16 %v2992, %v2984
        %v3641 = vpack.c.b16 %v2993, %v2985
        %v3642 = vpack.c.b16 %v2994, %v2986
        %v3643 = vpack.c.b16 %v2995, %v2987
        %v3644 = vpack.c.b16 %v2996, %v2988
        %v3645 = vpack.c.b16 %v2997, %v2989
        %v3646 = vpack.c.b16 %v3006, %v2998
        %v3647 = vpack.c.b16 %v3007, %v2999
        %v3648 = vpack.c.b16 %v3008, %v3000
        %v3649 = vpack.c.b16 %v3009, %v3001
        %v3650 = vpack.c.b16 %v3010, %v3002
        %v3651 = vpack.c.b16 %v3011, %v3003
        %v3652 = vpack.c.b16 %v3012, %v3004
        %v3653 = vpack.c.b16 %v3013, %v3005
        %v3654 = vpack.c.b16 %v3022, %v3014
        %v3655 = vpack.c.b16 %v3023, %v3015
        %v3656 = vpack.c.b16 %v3024, %v3016
        %v3657 = vpack.c.b16 %v3025, %v3017
        %v3658 = vpack.c.b16 %v3026, %v3018
        %v3659 = vpack.c.b16 %v3027, %v3019
        %v3660 = vpack.c.b16 %v3028, %v3020
        %v3661 = vpack.c.b16 %v3029, %v3021
        %v3662 = vpack.c.b16 %v3038, %v3030
        %v3663 = vpack.c.b16 %v3039, %v3031
        %v3664 = vpack.c.b16 %v3040, %v3032
        %v3665 = vpack.c.b16 %v3041, %v3033
        %v3666 = vpack.c.b16 %v3042, %v3034
        %v3667 = vpack.c.b16 %v3043, %v3035
        %v3668 = vpack.c.b16 %v3044, %v3036
        %v3669 = vpack.c.b16 %v3045, %v3037
        %v3670 = vpack.c.b16 %v3054, %v3046
        %v3671 = vpack.c.b16 %v3055, %v3047
        %v3672 = vpack.c.b16 %v3056, %v3048
        %v3673 = vpack.c.b16 %v3057, %v3049
        %v3674 = vpack.c.b16 %v3058, %v3050
        %v3675 = vpack.c.b16 %v3059, %v3051
        %v3676 = vpack.c.b16 %v3060, %v3052
        %v3677 = vpack.c.b16 %v3061, %v3053
        %v3678 = vpack.c.b16 %v3070, %v3062
        %v3679 = vpack.c.b16 %v3071, %v3063
        %v3680 = vpack.c.b16 %v3072, %v3064
        %v3681 = vpack.c.b16 %v3073, %v3065
        %v3682 = vpack.c.b16 %v3074, %v3066
        %v3683 = vpack.c.b16 %v3075, %v3067
        %v3684 = vpack.c.b16 %v3076, %v3068
        %v3685 = vpack.c.b16 %v3077, %v3069
        %v3686 = vpack.c.b16 %v3086, %v3078
        %v3687 = vpack.c.b16 %v3087, %v3079
        %v3688 = vpack.c.b16 %v3088, %v3080
        %v3689 = vpack.c.b16 %v3089, %v3081
        %v3690 = vpack.c.b16 %v3090, %v3082
        %v3691 = vpack.c.b16 %v3091, %v3083
        %v3692 = vpack.c.b16 %v3092, %v3084
        %v3693 = vpack.c.b16 %v3093, %v3085
        %v3694 = vpack.c.b16 %v3102, %v3094
        %v3695 = vpack.c.b16 %v3103, %v3095
        %v3696 = vpack.c.b16 %v3104, %v3096
        %v3697 = vpack.c.b16 %v3105, %v3097
        %v3698 = vpack.c.b16 %v3106, %v3098
        %v3699 = vpack.c.b16 %v3107, %v3099
        %v3700 = vpack.c.b16 %v3108, %v3100
        %v3701 = vpack.c.b16 %v3109, %v3101
        %v3702 = vpack.c.b16 %v3118, %v3110
        %v3703 = vpack.c.b16 %v3119, %v3111
        %v3704 = vpack.c.b16 %v3120, %v3112
        %v3705 = vpack.c.b16 %v3121, %v3113
        %v3706 = vpack.c.b16 %v3122, %v3114
        %v3707 = vpack.c.b16 %v3123, %v3115
        %v3708 = vpack.c.b16 %v3124, %v3116
        %v3709 = vpack.c.b16 %v3125, %v3117
        %v3710 = vpack.c.b16 %v3134, %v3126
        %v3711 = vpack.c.b16 %v3135, %v3127
        %v3712 = vpack.c.b16 %v3136, %v3128
        %v3713 = vpack.c.b16 %v3137, %v3129
        %v3714 = vpack.c.b16 %v3138, %v3130
        %v3715 = vpack.c.b16 %v3139, %v3131
        %v3716 = vpack.c.b16 %v3140, %v3132
        %v3717 = vpack.c.b16 %v3141, %v3133
        %v3718 = vpack.c.b16 %v3150, %v3142
        %v3719 = vpack.c.b16 %v3151, %v3143
        %v3720 = vpack.c.b16 %v3152, %v3144
        %v3721 = vpack.c.b16 %v3153, %v3145
        %v3722 = vpack.c.b16 %v3154, %v3146
        %v3723 = vpack.c.b16 %v3155, %v3147
        %v3724 = vpack.c.b16 %v3156, %v3148
        %v3725 = vpack.c.b16 %v3157, %v3149
        %v3726 = vpack.c.b16 %v3166, %v3158
        %v3727 = vpack.c.b16 %v3167, %v3159
        %v3728 = vpack.c.b16 %v3168, %v3160
        %v3729 = vpack.c.b16 %v3169, %v3161
        %v3730 = vpack.c.b16 %v3170, %v3162
        %v3731 = vpack.c.b16 %v3171, %v3163
        %v3732 = vpack.c.b16 %v3172, %v3164
        %v3733 = vpack.c.b16 %v3173, %v3165
        %v3734 = vpack.c.b16 %v3182, %v3174
        %v3735 = vpack.c.b16 %v3183, %v3175
        %v3736 = vpack.c.b16 %v3184, %v3176
        %v3737 = vpack.c.b16 %v3185, %v3177
        %v3738 = vpack.c.b16 %v3186, %v3178
        %v3739 = vpack.c.b16 %v3187, %v3179
        %v3740 = vpack.c.b16 %v3188, %v3180
        %v3741 = vpack.c.b16 %v3189, %v3181
        %v3742 = vpack.c.b16 %v3198, %v3190
        %v3743 = vpack.c.b16 %v3199, %v3191
        %v3744 = vpack.c.b16 %v3200, %v3192
        %v3745 = vpack.c.b16 %v3201, %v3193
        %v3746 = vpack.c.b16 %v3202, %v3194
        %v3747 = vpack.c.b16 %v3203, %v3195
        %v3748 = vpack.c.b16 %v3204, %v3196
        %v3749 = vpack.c.b16 %v3205, %v3197
        %v3750 = vpack.c.b16 %v3214, %v3206
        %v3751 = vpack.c.b16 %v3215, %v3207
        %v3752 = vpack.c.b16 %v3216, %v3208
        %v3753 = vpack.c.b16 %v3217, %v3209
        %v3754 = vpack.c.b16 %v3218, %v3210
        %v3755 = vpack.c.b16 %v3219, %v3211
        %v3756 = vpack.c.b16 %v3220, %v3212
        %v3757 = vpack.c.b16 %v3221, %v3213
        %v3758 = vpack.c.b16 %v3230, %v3222
        %v3759 = vpack.c.b16 %v3231, %v3223
        %v3760 = vpack.c.b16 %v3232, %v3224
        %v3761 = vpack.c.b16 %v3233, %v3225
        %v3762 = vpack.c.b16 %v3234, %v3226
        %v3763 = vpack.c.b16 %v3235, %v3227
        %v3764 = vpack.c.b16 %v3236, %v3228
        %v3765 = vpack.c.b16 %v3237, %v3229
        %v3766 = vpack.c.b16 %v3246, %v3238
        %v3767 = vpack.c.b16 %v3247, %v3239
        %v3768 = vpack.c.b16 %v3248, %v3240
        %v3769 = vpack.c.b16 %v3249, %v3241
        %v3770 = vpack.c.b16 %v3250, %v3242
        %v3771 = vpack.c.b16 %v3251, %v3243
        %v3772 = vpack.c.b16 %v3252, %v3244
        %v3773 = vpack.c.b16 %v3253, %v3245
        %v3774 = vpack.c.b16 %v3262, %v3254
        %v3775 = vpack.c.b16 %v3263, %v3255
        %v3776 = vpack.c.b16 %v3264, %v3256
        %v3777 = vpack.c.b16 %v3265, %v3257
        %v3778 = vpack.c.b16 %v3266, %v3258
        %v3779 = vpack.c.b16 %v3267, %v3259
        %v3780 = vpack.c.b16 %v3268, %v3260
        %v3781 = vpack.c.b16 %v3269, %v3261
        %4294 = vmatprep.subr.bf16.mxu0 %v3271
        %4295 = vmatpush1.bf16.msra.mxu0 %v3270
        %4296 = vmatprep.subr.bf16.mxu0 %v3279
        %4297 = vmatpush1.bf16.msra.mxu0 %v3278
        %4298 = vmatprep.subr.bf16.mxu0 %v3287
        %4299 = vmatpush1.bf16.msra.mxu0 %v3286
        %4300 = vmatprep.subr.bf16.mxu0 %v3295
        %4301 = vmatpush1.bf16.msra.mxu0 %v3294
        %4302 = vmatprep.subr.bf16.mxu0 %v3303
        %4303 = vmatpush1.bf16.msra.mxu0 %v3302
        %4304 = vmatprep.subr.bf16.mxu0 %v3311
        %4305 = vmatpush1.bf16.msra.mxu0 %v3310
        %4306 = vmatprep.subr.bf16.mxu0 %v3319
        %4307 = vmatpush1.bf16.msra.mxu0 %v3318
        %4308 = vmatprep.subr.bf16.mxu0 %v3327
        %4309 = vmatpush1.bf16.msra.mxu0 %v3326
        %4310 = vmatprep.subr.bf16.mxu0 %v3335
        %4311 = vmatpush1.bf16.msra.mxu0 %v3334
        %4312 = vmatprep.subr.bf16.mxu0 %v3343
        %4313 = vmatpush1.bf16.msra.mxu0 %v3342
        %4314 = vmatprep.subr.bf16.mxu0 %v3351
        %4315 = vmatpush1.bf16.msra.mxu0 %v3350
        %4316 = vmatprep.subr.bf16.mxu0 %v3359
        %4317 = vmatpush1.bf16.msra.mxu0 %v3358
        %4318 = vmatprep.subr.bf16.mxu0 %v3367
        %4319 = vmatpush1.bf16.msra.mxu0 %v3366
        %4320 = vmatprep.subr.bf16.mxu0 %v3375
        %4321 = vmatpush1.bf16.msra.mxu0 %v3374
        %4322 = vmatprep.subr.bf16.mxu0 %v3383
        %4323 = vmatpush1.bf16.msra.mxu0 %v3382
        %4324 = vmatprep.subr.bf16.mxu0 %v3391
        %4325 = vmatpush1.bf16.msra.mxu0 %v3390
        %4326 = vmatprep.mubr.bf16.mxu0 %v1165
        %4327 = vmatmul.mubr.bf16.gmra.mrb[0].mxu0 %v1164
        %v4328 = vpop.f32.mrb[0].mxu0
        %v4329 = vadd.f32 %v1697, %v4328
        %v4330 = vpop.f32.mrb[0].mxu0
        %v4331 = vadd.f32 %v1701, %v4330
        %v4332 = vpop.f32.mrb[0].mxu0
        %v4333 = vadd.f32 %v1697, %v4332
        %v4334 = vpop.f32.mrb[0].mxu0
        %v4335 = vadd.f32 %v1701, %v4334
        %4336 = vmatprep.mubr.bf16.mxu0 %v1173
        %4337 = vmatmul.mubr.bf16.gmra.mrb[0].mxu0 %v1172
        %v4338 = vpop.f32.mrb[0].mxu0
        %v4339 = vadd.f32 %v1697, %v4338
        %v4340 = vpop.f32.mrb[0].mxu0
        %v4341 = vadd.f32 %v1701, %v4340
        %v4342 = vpop.f32.mrb[0].mxu0
        %v4343 = vadd.f32 %v1697, %v4342
        %v4344 = vpop.f32.mrb[0].mxu0
        %v4345 = vadd.f32 %v1701, %v4344
        %4346 = vdwg.mxu0
        %4347 = vmatprep.subr.bf16.mxu0 %v3399
        %4348 = vmatpush1.bf16.msra.mxu0 %v3398
        %4349 = vmatprep.subr.bf16.mxu0 %v3407
        %4350 = vmatpush1.bf16.msra.mxu0 %v3406
        %4351 = vmatprep.subr.bf16.mxu0 %v3415
        %4352 = vmatpush1.bf16.msra.mxu0 %v3414
        %4353 = vmatprep.subr.bf16.mxu0 %v3423
        %4354 = vmatpush1.bf16.msra.mxu0 %v3422
        %4355 = vmatprep.subr.bf16.mxu0 %v3431
        %4356 = vmatpush1.bf16.msra.mxu0 %v3430
        %4357 = vmatprep.subr.bf16.mxu0 %v3439
        %4358 = vmatpush1.bf16.msra.mxu0 %v3438
        %4359 = vmatprep.subr.bf16.mxu0 %v3447
        %4360 = vmatpush1.bf16.msra.mxu0 %v3446
        %4361 = vmatprep.subr.bf16.mxu0 %v3455
        %4362 = vmatpush1.bf16.msra.mxu0 %v3454
        %4363 = vmatprep.subr.bf16.mxu0 %v3463
        %4364 = vmatpush1.bf16.msra.mxu0 %v3462
        %4365 = vmatprep.subr.bf16.mxu0 %v3471
        %4366 = vmatpush1.bf16.msra.mxu0 %v3470
        %4367 = vmatprep.subr.bf16.mxu0 %v3479
        %4368 = vmatpush1.bf16.msra.mxu0 %v3478
        %4369 = vmatprep.subr.bf16.mxu0 %v3487
        %4370 = vmatpush1.bf16.msra.mxu0 %v3486
        %4371 = vmatprep.subr.bf16.mxu0 %v3495
        %4372 = vmatpush1.bf16.msra.mxu0 %v3494
        %4373 = vmatprep.subr.bf16.mxu0 %v3503
        %4374 = vmatpush1.bf16.msra.mxu0 %v3502
        %4375 = vmatprep.subr.bf16.mxu0 %v3511
        %4376 = vmatpush1.bf16.msra.mxu0 %v3510
        %4377 = vmatprep.subr.bf16.mxu0 %v3519
        %4378 = vmatpush1.bf16.msra.mxu0 %v3518
        %4379 = vmatprep.mubr.bf16.mxu0 %v1167
        %4380 = vmatmul.mubr.bf16.gmra.mrb[0].mxu0 %v1166
        %v4381 = vpop.f32.mrb[0].mxu0
        %v4382 = vadd.f32 %v4329, %v4381
        %v4383 = vpop.f32.mrb[0].mxu0
        %v4384 = vadd.f32 %v4331, %v4383
        %v4385 = vpop.f32.mrb[0].mxu0
        %v4386 = vadd.f32 %v4333, %v4385
        %v4387 = vpop.f32.mrb[0].mxu0
        %v4388 = vadd.f32 %v4335, %v4387
        %4389 = vmatprep.mubr.bf16.mxu0 %v1175
        %4390 = vmatmul.mubr.bf16.gmra.mrb[0].mxu0 %v1174
        %v4391 = vpop.f32.mrb[0].mxu0
        %v4392 = vadd.f32 %v4339, %v4391
        %v4393 = vpop.f32.mrb[0].mxu0
        %v4394 = vadd.f32 %v4341, %v4393
        %v4395 = vpop.f32.mrb[0].mxu0
        %v4396 = vadd.f32 %v4343, %v4395
        %v4397 = vpop.f32.mrb[0].mxu0
        %v4398 = vadd.f32 %v4345, %v4397
        %4399 = vdwg.mxu0
        %4400 = vmatprep.subr.bf16.mxu0 %v3527
        %4401 = vmatpush1.bf16.msra.mxu0 %v3526
        %4402 = vmatprep.subr.bf16.mxu0 %v3535
        %4403 = vmatpush1.bf16.msra.mxu0 %v3534
        %4404 = vmatprep.subr.bf16.mxu0 %v3543
        %4405 = vmatpush1.bf16.msra.mxu0 %v3542
        %4406 = vmatprep.subr.bf16.mxu0 %v3551
        %4407 = vmatpush1.bf16.msra.mxu0 %v3550
        %4408 = vmatprep.subr.bf16.mxu0 %v3559
        %4409 = vmatpush1.bf16.msra.mxu0 %v3558
        %4410 = vmatprep.subr.bf16.mxu0 %v3567
        %4411 = vmatpush1.bf16.msra.mxu0 %v3566
        %4412 = vmatprep.subr.bf16.mxu0 %v3575
        %4413 = vmatpush1.bf16.msra.mxu0 %v3574
        %4414 = vmatprep.subr.bf16.mxu0 %v3583
        %4415 = vmatpush1.bf16.msra.mxu0 %v3582
        %4416 = vmatprep.subr.bf16.mxu0 %v3591
        %4417 = vmatpush1.bf16.msra.mxu0 %v3590
        %4418 = vmatprep.subr.bf16.mxu0 %v3599
        %4419 = vmatpush1.bf16.msra.mxu0 %v3598
        %4420 = vmatprep.subr.bf16.mxu0 %v3607
        %4421 = vmatpush1.bf16.msra.mxu0 %v3606
        %4422 = vmatprep.subr.bf16.mxu0 %v3615
        %4423 = vmatpush1.bf16.msra.mxu0 %v3614
        %4424 = vmatprep.subr.bf16.mxu0 %v3623
        %4425 = vmatpush1.bf16.msra.mxu0 %v3622
        %4426 = vmatprep.subr.bf16.mxu0 %v3631
        %4427 = vmatpush1.bf16.msra.mxu0 %v3630
        %4428 = vmatprep.subr.bf16.mxu0 %v3639
        %4429 = vmatpush1.bf16.msra.mxu0 %v3638
        %4430 = vmatprep.subr.bf16.mxu0 %v3647
        %4431 = vmatpush1.bf16.msra.mxu0 %v3646
        %4432 = vmatprep.mubr.bf16.mxu0 %v1169
        %4433 = vmatmul.mubr.bf16.gmra.mrb[0].mxu0 %v1168
        %v4434 = vpop.f32.mrb[0].mxu0
        %v4435 = vadd.f32 %v4382, %v4434
        %v4436 = vpop.f32.mrb[0].mxu0
        %v4437 = vadd.f32 %v4384, %v4436
        %v4438 = vpop.f32.mrb[0].mxu0
        %v4439 = vadd.f32 %v4386, %v4438
        %v4440 = vpop.f32.mrb[0].mxu0
        %v4441 = vadd.f32 %v4388, %v4440
        %4442 = vmatprep.mubr.bf16.mxu0 %v1177
        %4443 = vmatmul.mubr.bf16.gmra.mrb[0].mxu0 %v1176
        %v4444 = vpop.f32.mrb[0].mxu0
        %v4445 = vadd.f32 %v4392, %v4444
        %v4446 = vpop.f32.mrb[0].mxu0
        %v4447 = vadd.f32 %v4394, %v4446
        %v4448 = vpop.f32.mrb[0].mxu0
        %v4449 = vadd.f32 %v4396, %v4448
        %v4450 = vpop.f32.mrb[0].mxu0
        %v4451 = vadd.f32 %v4398, %v4450
        %4452 = vdwg.mxu0
        %4453 = vmatprep.subr.bf16.mxu0 %v3655
        %4454 = vmatpush1.bf16.msra.mxu0 %v3654
        %4455 = vmatprep.subr.bf16.mxu0 %v3663
        %4456 = vmatpush1.bf16.msra.mxu0 %v3662
        %4457 = vmatprep.subr.bf16.mxu0 %v3671
        %4458 = vmatpush1.bf16.msra.mxu0 %v3670
        %4459 = vmatprep.subr.bf16.mxu0 %v3679
        %4460 = vmatpush1.bf16.msra.mxu0 %v3678
        %4461 = vmatprep.subr.bf16.mxu0 %v3687
        %4462 = vmatpush1.bf16.msra.mxu0 %v3686
        %4463 = vmatprep.subr.bf16.mxu0 %v3695
        %4464 = vmatpush1.bf16.msra.mxu0 %v3694
        %4465 = vmatprep.subr.bf16.mxu0 %v3703
        %4466 = vmatpush1.bf16.msra.mxu0 %v3702
        %4467 = vmatprep.subr.bf16.mxu0 %v3711
        %4468 = vmatpush1.bf16.msra.mxu0 %v3710
        %4469 = vmatprep.subr.bf16.mxu0 %v3719
        %4470 = vmatpush1.bf16.msra.mxu0 %v3718
        %4471 = vmatprep.subr.bf16.mxu0 %v3727
        %4472 = vmatpush1.bf16.msra.mxu0 %v3726
        %4473 = vmatprep.subr.bf16.mxu0 %v3735
        %4474 = vmatpush1.bf16.msra.mxu0 %v3734
        %4475 = vmatprep.subr.bf16.mxu0 %v3743
        %4476 = vmatpush1.bf16.msra.mxu0 %v3742
        %4477 = vmatprep.subr.bf16.mxu0 %v3751
        %4478 = vmatpush1.bf16.msra.mxu0 %v3750
        %4479 = vmatprep.subr.bf16.mxu0 %v3759
        %4480 = vmatpush1.bf16.msra.mxu0 %v3758
        %4481 = vmatprep.subr.bf16.mxu0 %v3767
        %4482 = vmatpush1.bf16.msra.mxu0 %v3766
        %4483 = vmatprep.subr.bf16.mxu0 %v3775
        %4484 = vmatpush1.bf16.msra.mxu0 %v3774
        %4485 = vmatprep.mubr.bf16.mxu0 %v1171
        %4486 = vmatmul.mubr.bf16.gmra.mrb[0].mxu0 %v1170
        %v4487 = vpop.f32.mrb[0].mxu0
        %v4488 = vadd.f32 %v4435, %v4487
        %v4489 = vpop.f32.mrb[0].mxu0
        %v4490 = vadd.f32 %v4437, %v4489
        %v4491 = vpop.f32.mrb[0].mxu0
        %v4492 = vadd.f32 %v4439, %v4491
        %v4493 = vpop.f32.mrb[0].mxu0
        %v4494 = vadd.f32 %v4441, %v4493
        %4495 = vmatprep.mubr.bf16.mxu0 %v1179
        %4496 = vmatmul.mubr.bf16.gmra.mrb[0].mxu0 %v1178
        %v4497 = vpop.f32.mrb[0].mxu0
        %v4498 = vadd.f32 %v4445, %v4497
        %v4499 = vpop.f32.mrb[0].mxu0
        %v4500 = vadd.f32 %v4447, %v4499
        %v4501 = vpop.f32.mrb[0].mxu0
        %v4502 = vadd.f32 %v4449, %v4501
        %v4503 = vpop.f32.mrb[0].mxu0
        %v4504 = vadd.f32 %v4451, %v4503
        %4505 = vdwg.mxu0
        %4506 = vmatprep.subr.bf16.mxu0 %v3273
        %4507 = vmatpush1.bf16.msra.mxu0 %v3272
        %4508 = vmatprep.subr.bf16.mxu0 %v3281
        %4509 = vmatpush1.bf16.msra.mxu0 %v3280
        %4510 = vmatprep.subr.bf16.mxu0 %v3289
        %4511 = vmatpush1.bf16.msra.mxu0 %v3288
        %4512 = vmatprep.subr.bf16.mxu0 %v3297
        %4513 = vmatpush1.bf16.msra.mxu0 %v3296
        %4514 = vmatprep.subr.bf16.mxu0 %v3305
        %4515 = vmatpush1.bf16.msra.mxu0 %v3304
        %4516 = vmatprep.subr.bf16.mxu0 %v3313
        %4517 = vmatpush1.bf16.msra.mxu0 %v3312
        %4518 = vmatprep.subr.bf16.mxu0 %v3321
        %4519 = vmatpush1.bf16.msra.mxu0 %v3320
        %4520 = vmatprep.subr.bf16.mxu0 %v3329
        %4521 = vmatpush1.bf16.msra.mxu0 %v3328
        %4522 = vmatprep.subr.bf16.mxu0 %v3337
        %4523 = vmatpush1.bf16.msra.mxu0 %v3336
        %4524 = vmatprep.subr.bf16.mxu0 %v3345
        %4525 = vmatpush1.bf16.msra.mxu0 %v3344
        %4526 = vmatprep.subr.bf16.mxu0 %v3353
        %4527 = vmatpush1.bf16.msra.mxu0 %v3352
        %4528 = vmatprep.subr.bf16.mxu0 %v3361
        %4529 = vmatpush1.bf16.msra.mxu0 %v3360
        %4530 = vmatprep.subr.bf16.mxu0 %v3369
        %4531 = vmatpush1.bf16.msra.mxu0 %v3368
        %4532 = vmatprep.subr.bf16.mxu0 %v3377
        %4533 = vmatpush1.bf16.msra.mxu0 %v3376
        %4534 = vmatprep.subr.bf16.mxu0 %v3385
        %4535 = vmatpush1.bf16.msra.mxu0 %v3384
        %4536 = vmatprep.subr.bf16.mxu0 %v3393
        %4537 = vmatpush1.bf16.msra.mxu0 %v3392
        %4538 = vmatprep.mubr.bf16.mxu0 %v1165
        %4539 = vmatmul.mubr.bf16.gmra.mrb[0].mxu0 %v1164
        %v4540 = vpop.f32.mrb[0].mxu0
        %v4541 = vadd.f32 %v1705, %v4540
        %v4542 = vpop.f32.mrb[0].mxu0
        %v4543 = vadd.f32 %v1709, %v4542
        %v4544 = vpop.f32.mrb[0].mxu0
        %v4545 = vadd.f32 %v1705, %v4544
        %v4546 = vpop.f32.mrb[0].mxu0
        %v4547 = vadd.f32 %v1709, %v4546
        %4548 = vmatprep.mubr.bf16.mxu0 %v1173
        %4549 = vmatmul.mubr.bf16.gmra.mrb[0].mxu0 %v1172
        %v4550 = vpop.f32.mrb[0].mxu0
        %v4551 = vadd.f32 %v1705, %v4550
        %v4552 = vpop.f32.mrb[0].mxu0
        %v4553 = vadd.f32 %v1709, %v4552
        %v4554 = vpop.f32.mrb[0].mxu0
        %v4555 = vadd.f32 %v1705, %v4554
        %v4556 = vpop.f32.mrb[0].mxu0
        %v4557 = vadd.f32 %v1709, %v4556
        %4558 = vdwg.mxu0
        %4559 = vmatprep.subr.bf16.mxu0 %v3401
        %4560 = vmatpush1.bf16.msra.mxu0 %v3400
        %4561 = vmatprep.subr.bf16.mxu0 %v3409
        %4562 = vmatpush1.bf16.msra.mxu0 %v3408
        %4563 = vmatprep.subr.bf16.mxu0 %v3417
        %4564 = vmatpush1.bf16.msra.mxu0 %v3416
        %4565 = vmatprep.subr.bf16.mxu0 %v3425
        %4566 = vmatpush1.bf16.msra.mxu0 %v3424
        %4567 = vmatprep.subr.bf16.mxu0 %v3433
        %4568 = vmatpush1.bf16.msra.mxu0 %v3432
        %4569 = vmatprep.subr.bf16.mxu0 %v3441
        %4570 = vmatpush1.bf16.msra.mxu0 %v3440
        %4571 = vmatprep.subr.bf16.mxu0 %v3449
        %4572 = vmatpush1.bf16.msra.mxu0 %v3448
        %4573 = vmatprep.subr.bf16.mxu0 %v3457
        %4574 = vmatpush1.bf16.msra.mxu0 %v3456
        %4575 = vmatprep.subr.bf16.mxu0 %v3465
        %4576 = vmatpush1.bf16.msra.mxu0 %v3464
        %4577 = vmatprep.subr.bf16.mxu0 %v3473
        %4578 = vmatpush1.bf16.msra.mxu0 %v3472
        %4579 = vmatprep.subr.bf16.mxu0 %v3481
        %4580 = vmatpush1.bf16.msra.mxu0 %v3480
        %4581 = vmatprep.subr.bf16.mxu0 %v3489
        %4582 = vmatpush1.bf16.msra.mxu0 %v3488
        %4583 = vmatprep.subr.bf16.mxu0 %v3497
        %4584 = vmatpush1.bf16.msra.mxu0 %v3496
        %4585 = vmatprep.subr.bf16.mxu0 %v3505
        %4586 = vmatpush1.bf16.msra.mxu0 %v3504
        %4587 = vmatprep.subr.bf16.mxu0 %v3513
        %4588 = vmatpush1.bf16.msra.mxu0 %v3512
        %4589 = vmatprep.subr.bf16.mxu0 %v3521
        %4590 = vmatpush1.bf16.msra.mxu0 %v3520
        %4591 = vmatprep.mubr.bf16.mxu0 %v1167
        %4592 = vmatmul.mubr.bf16.gmra.mrb[0].mxu0 %v1166
        %v4593 = vpop.f32.mrb[0].mxu0
        %v4594 = vadd.f32 %v4541, %v4593
        %v4595 = vpop.f32.mrb[0].mxu0
        %v4596 = vadd.f32 %v4543, %v4595
        %v4597 = vpop.f32.mrb[0].mxu0
        %v4598 = vadd.f32 %v4545, %v4597
        %v4599 = vpop.f32.mrb[0].mxu0
        %v4600 = vadd.f32 %v4547, %v4599
        %4601 = vmatprep.mubr.bf16.mxu0 %v1175
        %4602 = vmatmul.mubr.bf16.gmra.mrb[0].mxu0 %v1174
        %v4603 = vpop.f32.mrb[0].mxu0
        %v4604 = vadd.f32 %v4551, %v4603
        %v4605 = vpop.f32.mrb[0].mxu0
        %v4606 = vadd.f32 %v4553, %v4605
        %v4607 = vpop.f32.mrb[0].mxu0
        %v4608 = vadd.f32 %v4555, %v4607
        %v4609 = vpop.f32.mrb[0].mxu0
        %v4610 = vadd.f32 %v4557, %v4609
        %4611 = vdwg.mxu0
        %4612 = vmatprep.subr.bf16.mxu0 %v3529
        %4613 = vmatpush1.bf16.msra.mxu0 %v3528
        %4614 = vmatprep.subr.bf16.mxu0 %v3537
        %4615 = vmatpush1.bf16.msra.mxu0 %v3536
        %4616 = vmatprep.subr.bf16.mxu0 %v3545
        %4617 = vmatpush1.bf16.msra.mxu0 %v3544
        %4618 = vmatprep.subr.bf16.mxu0 %v3553
        %4619 = vmatpush1.bf16.msra.mxu0 %v3552
        %4620 = vmatprep.subr.bf16.mxu0 %v3561
        %4621 = vmatpush1.bf16.msra.mxu0 %v3560
        %4622 = vmatprep.subr.bf16.mxu0 %v3569
        %4623 = vmatpush1.bf16.msra.mxu0 %v3568
        %4624 = vmatprep.subr.bf16.mxu0 %v3577
        %4625 = vmatpush1.bf16.msra.mxu0 %v3576
        %4626 = vmatprep.subr.bf16.mxu0 %v3585
        %4627 = vmatpush1.bf16.msra.mxu0 %v3584
        %4628 = vmatprep.subr.bf16.mxu0 %v3593
        %4629 = vmatpush1.bf16.msra.mxu0 %v3592
        %4630 = vmatprep.subr.bf16.mxu0 %v3601
        %4631 = vmatpush1.bf16.msra.mxu0 %v3600
        %4632 = vmatprep.subr.bf16.mxu0 %v3609
        %4633 = vmatpush1.bf16.msra.mxu0 %v3608
        %4634 = vmatprep.subr.bf16.mxu0 %v3617
        %4635 = vmatpush1.bf16.msra.mxu0 %v3616
        %4636 = vmatprep.subr.bf16.mxu0 %v3625
        %4637 = vmatpush1.bf16.msra.mxu0 %v3624
        %4638 = vmatprep.subr.bf16.mxu0 %v3633
        %4639 = vmatpush1.bf16.msra.mxu0 %v3632
        %4640 = vmatprep.subr.bf16.mxu0 %v3641
        %4641 = vmatpush1.bf16.msra.mxu0 %v3640
        %4642 = vmatprep.subr.bf16.mxu0 %v3649
        %4643 = vmatpush1.bf16.msra.mxu0 %v3648
        %4644 = vmatprep.mubr.bf16.mxu0 %v1169
        %4645 = vmatmul.mubr.bf16.gmra.mrb[0].mxu0 %v1168
        %v4646 = vpop.f32.mrb[0].mxu0
        %v4647 = vadd.f32 %v4594, %v4646
        %v4648 = vpop.f32.mrb[0].mxu0
        %v4649 = vadd.f32 %v4596, %v4648
        %v4650 = vpop.f32.mrb[0].mxu0
        %v4651 = vadd.f32 %v4598, %v4650
        %v4652 = vpop.f32.mrb[0].mxu0
        %v4653 = vadd.f32 %v4600, %v4652
        %4654 = vmatprep.mubr.bf16.mxu0 %v1177
        %4655 = vmatmul.mubr.bf16.gmra.mrb[0].mxu0 %v1176
        %v4656 = vpop.f32.mrb[0].mxu0
        %v4657 = vadd.f32 %v4604, %v4656
        %v4658 = vpop.f32.mrb[0].mxu0
        %v4659 = vadd.f32 %v4606, %v4658
        %v4660 = vpop.f32.mrb[0].mxu0
        %v4661 = vadd.f32 %v4608, %v4660
        %v4662 = vpop.f32.mrb[0].mxu0
        %v4663 = vadd.f32 %v4610, %v4662
        %4664 = vdwg.mxu0
        %4665 = vmatprep.subr.bf16.mxu0 %v3657
        %4666 = vmatpush1.bf16.msra.mxu0 %v3656
        %4667 = vmatprep.subr.bf16.mxu0 %v3665
        %4668 = vmatpush1.bf16.msra.mxu0 %v3664
        %4669 = vmatprep.subr.bf16.mxu0 %v3673
        %4670 = vmatpush1.bf16.msra.mxu0 %v3672
        %4671 = vmatprep.subr.bf16.mxu0 %v3681
        %4672 = vmatpush1.bf16.msra.mxu0 %v3680
        %4673 = vmatprep.subr.bf16.mxu0 %v3689
        %4674 = vmatpush1.bf16.msra.mxu0 %v3688
        %4675 = vmatprep.subr.bf16.mxu0 %v3697
        %4676 = vmatpush1.bf16.msra.mxu0 %v3696
        %4677 = vmatprep.subr.bf16.mxu0 %v3705
        %4678 = vmatpush1.bf16.msra.mxu0 %v3704
        %4679 = vmatprep.subr.bf16.mxu0 %v3713
        %4680 = vmatpush1.bf16.msra.mxu0 %v3712
        %4681 = vmatprep.subr.bf16.mxu0 %v3721
        %4682 = vmatpush1.bf16.msra.mxu0 %v3720
        %4683 = vmatprep.subr.bf16.mxu0 %v3729
        %4684 = vmatpush1.bf16.msra.mxu0 %v3728
        %4685 = vmatprep.subr.bf16.mxu0 %v3737
        %4686 = vmatpush1.bf16.msra.mxu0 %v3736
        %4687 = vmatprep.subr.bf16.mxu0 %v3745
        %4688 = vmatpush1.bf16.msra.mxu0 %v3744
        %4689 = vmatprep.subr.bf16.mxu0 %v3753
        %4690 = vmatpush1.bf16.msra.mxu0 %v3752
        %4691 = vmatprep.subr.bf16.mxu0 %v3761
        %4692 = vmatpush1.bf16.msra.mxu0 %v3760
        %4693 = vmatprep.subr.bf16.mxu0 %v3769
        %4694 = vmatpush1.bf16.msra.mxu0 %v3768
        %4695 = vmatprep.subr.bf16.mxu0 %v3777
        %4696 = vmatpush1.bf16.msra.mxu0 %v3776
        %4697 = vmatprep.mubr.bf16.mxu0 %v1171
        %4698 = vmatmul.mubr.bf16.gmra.mrb[0].mxu0 %v1170
        %v4699 = vpop.f32.mrb[0].mxu0
        %v4700 = vadd.f32 %v4647, %v4699
        %v4701 = vpop.f32.mrb[0].mxu0
        %v4702 = vadd.f32 %v4649, %v4701
        %v4703 = vpop.f32.mrb[0].mxu0
        %v4704 = vadd.f32 %v4651, %v4703
        %v4705 = vpop.f32.mrb[0].mxu0
        %v4706 = vadd.f32 %v4653, %v4705
        %4707 = vmatprep.mubr.bf16.mxu0 %v1179
        %4708 = vmatmul.mubr.bf16.gmra.mrb[0].mxu0 %v1178
        %v4709 = vpop.f32.mrb[0].mxu0
        %v4710 = vadd.f32 %v4657, %v4709
        %v4711 = vpop.f32.mrb[0].mxu0
        %v4712 = vadd.f32 %v4659, %v4711
        %v4713 = vpop.f32.mrb[0].mxu0
        %v4714 = vadd.f32 %v4661, %v4713
        %v4715 = vpop.f32.mrb[0].mxu0
        %v4716 = vadd.f32 %v4663, %v4715
        %4717 = vdwg.mxu0
        %4718 = vmatprep.subr.bf16.mxu0 %v3275
        %4719 = vmatpush1.bf16.msra.mxu0 %v3274
        %4720 = vmatprep.subr.bf16.mxu0 %v3283
        %4721 = vmatpush1.bf16.msra.mxu0 %v3282
        %4722 = vmatprep.subr.bf16.mxu0 %v3291
        %4723 = vmatpush1.bf16.msra.mxu0 %v3290
        %4724 = vmatprep.subr.bf16.mxu0 %v3299
        %4725 = vmatpush1.bf16.msra.mxu0 %v3298
        %4726 = vmatprep.subr.bf16.mxu0 %v3307
        %4727 = vmatpush1.bf16.msra.mxu0 %v3306
        %4728 = vmatprep.subr.bf16.mxu0 %v3315
        %4729 = vmatpush1.bf16.msra.mxu0 %v3314
        %4730 = vmatprep.subr.bf16.mxu0 %v3323
        %4731 = vmatpush1.bf16.msra.mxu0 %v3322
        %4732 = vmatprep.subr.bf16.mxu0 %v3331
        %4733 = vmatpush1.bf16.msra.mxu0 %v3330
        %4734 = vmatprep.subr.bf16.mxu0 %v3339
        %4735 = vmatpush1.bf16.msra.mxu0 %v3338
        %4736 = vmatprep.subr.bf16.mxu0 %v3347
        %4737 = vmatpush1.bf16.msra.mxu0 %v3346
        %4738 = vmatprep.subr.bf16.mxu0 %v3355
        %4739 = vmatpush1.bf16.msra.mxu0 %v3354
        %4740 = vmatprep.subr.bf16.mxu0 %v3363
        %4741 = vmatpush1.bf16.msra.mxu0 %v3362
        %4742 = vmatprep.subr.bf16.mxu0 %v3371
        %4743 = vmatpush1.bf16.msra.mxu0 %v3370
        %4744 = vmatprep.subr.bf16.mxu0 %v3379
        %4745 = vmatpush1.bf16.msra.mxu0 %v3378
        %4746 = vmatprep.subr.bf16.mxu0 %v3387
        %4747 = vmatpush1.bf16.msra.mxu0 %v3386
        %4748 = vmatprep.subr.bf16.mxu0 %v3395
        %4749 = vmatpush1.bf16.msra.mxu0 %v3394
        %4750 = vmatprep.mubr.bf16.mxu0 %v1165
        %4751 = vmatmul.mubr.bf16.gmra.mrb[0].mxu0 %v1164
        %v4752 = vpop.f32.mrb[0].mxu0
        %v4753 = vadd.f32 %v1713, %v4752
        %v4754 = vpop.f32.mrb[0].mxu0
        %v4755 = vadd.f32 %v1717, %v4754
        %v4756 = vpop.f32.mrb[0].mxu0
        %v4757 = vadd.f32 %v1713, %v4756
        %v4758 = vpop.f32.mrb[0].mxu0
        %v4759 = vadd.f32 %v1717, %v4758
        %4760 = vmatprep.mubr.bf16.mxu0 %v1173
        %4761 = vmatmul.mubr.bf16.gmra.mrb[0].mxu0 %v1172
        %v4762 = vpop.f32.mrb[0].mxu0
        %v4763 = vadd.f32 %v1713, %v4762
        %v4764 = vpop.f32.mrb[0].mxu0
        %v4765 = vadd.f32 %v1717, %v4764
        %v4766 = vpop.f32.mrb[0].mxu0
        %v4767 = vadd.f32 %v1713, %v4766
        %v4768 = vpop.f32.mrb[0].mxu0
        %v4769 = vadd.f32 %v1717, %v4768
        %4770 = vdwg.mxu0
        %4771 = vmatprep.subr.bf16.mxu0 %v3403
        %4772 = vmatpush1.bf16.msra.mxu0 %v3402
        %4773 = vmatprep.subr.bf16.mxu0 %v3411
        %4774 = vmatpush1.bf16.msra.mxu0 %v3410
        %4775 = vmatprep.subr.bf16.mxu0 %v3419
        %4776 = vmatpush1.bf16.msra.mxu0 %v3418
        %4777 = vmatprep.subr.bf16.mxu0 %v3427
        %4778 = vmatpush1.bf16.msra.mxu0 %v3426
        %4779 = vmatprep.subr.bf16.mxu0 %v3435
        %4780 = vmatpush1.bf16.msra.mxu0 %v3434
        %4781 = vmatprep.subr.bf16.mxu0 %v3443
        %4782 = vmatpush1.bf16.msra.mxu0 %v3442
        %4783 = vmatprep.subr.bf16.mxu0 %v3451
        %4784 = vmatpush1.bf16.msra.mxu0 %v3450
        %4785 = vmatprep.subr.bf16.mxu0 %v3459
        %4786 = vmatpush1.bf16.msra.mxu0 %v3458
        %4787 = vmatprep.subr.bf16.mxu0 %v3467
        %4788 = vmatpush1.bf16.msra.mxu0 %v3466
        %4789 = vmatprep.subr.bf16.mxu0 %v3475
        %4790 = vmatpush1.bf16.msra.mxu0 %v3474
        %4791 = vmatprep.subr.bf16.mxu0 %v3483
        %4792 = vmatpush1.bf16.msra.mxu0 %v3482
        %4793 = vmatprep.subr.bf16.mxu0 %v3491
        %4794 = vmatpush1.bf16.msra.mxu0 %v3490
        %4795 = vmatprep.subr.bf16.mxu0 %v3499
        %4796 = vmatpush1.bf16.msra.mxu0 %v3498
        %4797 = vmatprep.subr.bf16.mxu0 %v3507
        %4798 = vmatpush1.bf16.msra.mxu0 %v3506
        %4799 = vmatprep.subr.bf16.mxu0 %v3515
        %4800 = vmatpush1.bf16.msra.mxu0 %v3514
        %4801 = vmatprep.subr.bf16.mxu0 %v3523
        %4802 = vmatpush1.bf16.msra.mxu0 %v3522
        %4803 = vmatprep.mubr.bf16.mxu0 %v1167
        %4804 = vmatmul.mubr.bf16.gmra.mrb[0].mxu0 %v1166
        %v4805 = vpop.f32.mrb[0].mxu0
        %v4806 = vadd.f32 %v4753, %v4805
        %v4807 = vpop.f32.mrb[0].mxu0
        %v4808 = vadd.f32 %v4755, %v4807
        %v4809 = vpop.f32.mrb[0].mxu0
        %v4810 = vadd.f32 %v4757, %v4809
        %v4811 = vpop.f32.mrb[0].mxu0
        %v4812 = vadd.f32 %v4759, %v4811
        %4813 = vmatprep.mubr.bf16.mxu0 %v1175
        %4814 = vmatmul.mubr.bf16.gmra.mrb[0].mxu0 %v1174
        %v4815 = vpop.f32.mrb[0].mxu0
        %v4816 = vadd.f32 %v4763, %v4815
        %v4817 = vpop.f32.mrb[0].mxu0
        %v4818 = vadd.f32 %v4765, %v4817
        %v4819 = vpop.f32.mrb[0].mxu0
        %v4820 = vadd.f32 %v4767, %v4819
        %v4821 = vpop.f32.mrb[0].mxu0
        %v4822 = vadd.f32 %v4769, %v4821
        %4823 = vdwg.mxu0
        %4824 = vmatprep.subr.bf16.mxu0 %v3531
        %4825 = vmatpush1.bf16.msra.mxu0 %v3530
        %4826 = vmatprep.subr.bf16.mxu0 %v3539
        %4827 = vmatpush1.bf16.msra.mxu0 %v3538
        %4828 = vmatprep.subr.bf16.mxu0 %v3547
        %4829 = vmatpush1.bf16.msra.mxu0 %v3546
        %4830 = vmatprep.subr.bf16.mxu0 %v3555
        %4831 = vmatpush1.bf16.msra.mxu0 %v3554
        %4832 = vmatprep.subr.bf16.mxu0 %v3563
        %4833 = vmatpush1.bf16.msra.mxu0 %v3562
        %4834 = vmatprep.subr.bf16.mxu0 %v3571
        %4835 = vmatpush1.bf16.msra.mxu0 %v3570
        %4836 = vmatprep.subr.bf16.mxu0 %v3579
        %4837 = vmatpush1.bf16.msra.mxu0 %v3578
        %4838 = vmatprep.subr.bf16.mxu0 %v3587
        %4839 = vmatpush1.bf16.msra.mxu0 %v3586
        %4840 = vmatprep.subr.bf16.mxu0 %v3595
        %4841 = vmatpush1.bf16.msra.mxu0 %v3594
        %4842 = vmatprep.subr.bf16.mxu0 %v3603
        %4843 = vmatpush1.bf16.msra.mxu0 %v3602
        %4844 = vmatprep.subr.bf16.mxu0 %v3611
        %4845 = vmatpush1.bf16.msra.mxu0 %v3610
        %4846 = vmatprep.subr.bf16.mxu0 %v3619
        %4847 = vmatpush1.bf16.msra.mxu0 %v3618
        %4848 = vmatprep.subr.bf16.mxu0 %v3627
        %4849 = vmatpush1.bf16.msra.mxu0 %v3626
        %4850 = vmatprep.subr.bf16.mxu0 %v3635
        %4851 = vmatpush1.bf16.msra.mxu0 %v3634
        %4852 = vmatprep.subr.bf16.mxu0 %v3643
        %4853 = vmatpush1.bf16.msra.mxu0 %v3642
        %4854 = vmatprep.subr.bf16.mxu0 %v3651
        %4855 = vmatpush1.bf16.msra.mxu0 %v3650
        %4856 = vmatprep.mubr.bf16.mxu0 %v1169
        %4857 = vmatmul.mubr.bf16.gmra.mrb[0].mxu0 %v1168
        %v4858 = vpop.f32.mrb[0].mxu0
        %v4859 = vadd.f32 %v4806, %v4858
        %v4860 = vpop.f32.mrb[0].mxu0
        %v4861 = vadd.f32 %v4808, %v4860
        %v4862 = vpop.f32.mrb[0].mxu0
        %v4863 = vadd.f32 %v4810, %v4862
        %v4864 = vpop.f32.mrb[0].mxu0
        %v4865 = vadd.f32 %v4812, %v4864
        %4866 = vmatprep.mubr.bf16.mxu0 %v1177
        %4867 = vmatmul.mubr.bf16.gmra.mrb[0].mxu0 %v1176
        %v4868 = vpop.f32.mrb[0].mxu0
        %v4869 = vadd.f32 %v4816, %v4868
        %v4870 = vpop.f32.mrb[0].mxu0
        %v4871 = vadd.f32 %v4818, %v4870
        %v4872 = vpop.f32.mrb[0].mxu0
        %v4873 = vadd.f32 %v4820, %v4872
        %v4874 = vpop.f32.mrb[0].mxu0
        %v4875 = vadd.f32 %v4822, %v4874
        %4876 = vdwg.mxu0
        %4877 = vmatprep.subr.bf16.mxu0 %v3659
        %4878 = vmatpush1.bf16.msra.mxu0 %v3658
        %4879 = vmatprep.subr.bf16.mxu0 %v3667
        %4880 = vmatpush1.bf16.msra.mxu0 %v3666
        %4881 = vmatprep.subr.bf16.mxu0 %v3675
        %4882 = vmatpush1.bf16.msra.mxu0 %v3674
        %4883 = vmatprep.subr.bf16.mxu0 %v3683
        %4884 = vmatpush1.bf16.msra.mxu0 %v3682
        %4885 = vmatprep.subr.bf16.mxu0 %v3691
        %4886 = vmatpush1.bf16.msra.mxu0 %v3690
        %4887 = vmatprep.subr.bf16.mxu0 %v3699
        %4888 = vmatpush1.bf16.msra.mxu0 %v3698
        %4889 = vmatprep.subr.bf16.mxu0 %v3707
        %4890 = vmatpush1.bf16.msra.mxu0 %v3706
        %4891 = vmatprep.subr.bf16.mxu0 %v3715
        %4892 = vmatpush1.bf16.msra.mxu0 %v3714
        %4893 = vmatprep.subr.bf16.mxu0 %v3723
        %4894 = vmatpush1.bf16.msra.mxu0 %v3722
        %4895 = vmatprep.subr.bf16.mxu0 %v3731
        %4896 = vmatpush1.bf16.msra.mxu0 %v3730
        %4897 = vmatprep.subr.bf16.mxu0 %v3739
        %4898 = vmatpush1.bf16.msra.mxu0 %v3738
        %4899 = vmatprep.subr.bf16.mxu0 %v3747
        %4900 = vmatpush1.bf16.msra.mxu0 %v3746
        %4901 = vmatprep.subr.bf16.mxu0 %v3755
        %4902 = vmatpush1.bf16.msra.mxu0 %v3754
        %4903 = vmatprep.subr.bf16.mxu0 %v3763
        %4904 = vmatpush1.bf16.msra.mxu0 %v3762
        %4905 = vmatprep.subr.bf16.mxu0 %v3771
        %4906 = vmatpush1.bf16.msra.mxu0 %v3770
        %4907 = vmatprep.subr.bf16.mxu0 %v3779
        %4908 = vmatpush1.bf16.msra.mxu0 %v3778
        %4909 = vmatprep.mubr.bf16.mxu0 %v1171
        %4910 = vmatmul.mubr.bf16.gmra.mrb[0].mxu0 %v1170
        %v4911 = vpop.f32.mrb[0].mxu0
        %v4912 = vadd.f32 %v4859, %v4911
        %v4913 = vpop.f32.mrb[0].mxu0
        %v4914 = vadd.f32 %v4861, %v4913
        %v4915 = vpop.f32.mrb[0].mxu0
        %v4916 = vadd.f32 %v4863, %v4915
        %v4917 = vpop.f32.mrb[0].mxu0
        %v4918 = vadd.f32 %v4865, %v4917
        %4919 = vmatprep.mubr.bf16.mxu0 %v1179
        %4920 = vmatmul.mubr.bf16.gmra.mrb[0].mxu0 %v1178
        %v4921 = vpop.f32.mrb[0].mxu0
        %v4922 = vadd.f32 %v4869, %v4921
        %v4923 = vpop.f32.mrb[0].mxu0
        %v4924 = vadd.f32 %v4871, %v4923
        %v4925 = vpop.f32.mrb[0].mxu0
        %v4926 = vadd.f32 %v4873, %v4925
        %v4927 = vpop.f32.mrb[0].mxu0
        %v4928 = vadd.f32 %v4875, %v4927
        %4929 = vdwg.mxu0
        %4930 = vmatprep.subr.bf16.mxu0 %v3277
        %4931 = vmatpush1.bf16.msra.mxu0 %v3276
        %4932 = vmatprep.subr.bf16.mxu0 %v3285
        %4933 = vmatpush1.bf16.msra.mxu0 %v3284
        %4934 = vmatprep.subr.bf16.mxu0 %v3293
        %4935 = vmatpush1.bf16.msra.mxu0 %v3292
        %4936 = vmatprep.subr.bf16.mxu0 %v3301
        %4937 = vmatpush1.bf16.msra.mxu0 %v3300
        %4938 = vmatprep.subr.bf16.mxu0 %v3309
        %4939 = vmatpush1.bf16.msra.mxu0 %v3308
        %4940 = vmatprep.subr.bf16.mxu0 %v3317
        %4941 = vmatpush1.bf16.msra.mxu0 %v3316
        %4942 = vmatprep.subr.bf16.mxu0 %v3325
        %4943 = vmatpush1.bf16.msra.mxu0 %v3324
        %4944 = vmatprep.subr.bf16.mxu0 %v3333
        %4945 = vmatpush1.bf16.msra.mxu0 %v3332
        %4946 = vmatprep.subr.bf16.mxu0 %v3341
        %4947 = vmatpush1.bf16.msra.mxu0 %v3340
        %4948 = vmatprep.subr.bf16.mxu0 %v3349
        %4949 = vmatpush1.bf16.msra.mxu0 %v3348
        %4950 = vmatprep.subr.bf16.mxu0 %v3357
        %4951 = vmatpush1.bf16.msra.mxu0 %v3356
        %4952 = vmatprep.subr.bf16.mxu0 %v3365
        %4953 = vmatpush1.bf16.msra.mxu0 %v3364
        %4954 = vmatprep.subr.bf16.mxu0 %v3373
        %4955 = vmatpush1.bf16.msra.mxu0 %v3372
        %4956 = vmatprep.subr.bf16.mxu0 %v3381
        %4957 = vmatpush1.bf16.msra.mxu0 %v3380
        %4958 = vmatprep.subr.bf16.mxu0 %v3389
        %4959 = vmatpush1.bf16.msra.mxu0 %v3388
        %4960 = vmatprep.subr.bf16.mxu0 %v3397
        %4961 = vmatpush1.bf16.msra.mxu0 %v3396
        %4962 = vmatprep.mubr.bf16.mxu0 %v1165
        %4963 = vmatmul.mubr.bf16.gmra.mrb[0].mxu0 %v1164
        %v4964 = vpop.f32.mrb[0].mxu0
        %v4965 = vadd.f32 %v1721, %v4964
        %v4966 = vpop.f32.mrb[0].mxu0
        %v4967 = vadd.f32 %v1725, %v4966
        %v4968 = vpop.f32.mrb[0].mxu0
        %v4969 = vadd.f32 %v1721, %v4968
        %v4970 = vpop.f32.mrb[0].mxu0
        %v4971 = vadd.f32 %v1725, %v4970
        %4972 = vmatprep.mubr.bf16.mxu0 %v1173
        %4973 = vmatmul.mubr.bf16.gmra.mrb[0].mxu0 %v1172
        %v4974 = vpop.f32.mrb[0].mxu0
        %v4975 = vadd.f32 %v1721, %v4974
        %v4976 = vpop.f32.mrb[0].mxu0
        %v4977 = vadd.f32 %v1725, %v4976
        %v4978 = vpop.f32.mrb[0].mxu0
        %v4979 = vadd.f32 %v1721, %v4978
        %v4980 = vpop.f32.mrb[0].mxu0
        %v4981 = vadd.f32 %v1725, %v4980
        %4982 = vdwg.mxu0
        %4983 = vmatprep.subr.bf16.mxu0 %v3405
        %4984 = vmatpush1.bf16.msra.mxu0 %v3404
        %4985 = vmatprep.subr.bf16.mxu0 %v3413
        %4986 = vmatpush1.bf16.msra.mxu0 %v3412
        %4987 = vmatprep.subr.bf16.mxu0 %v3421
        %4988 = vmatpush1.bf16.msra.mxu0 %v3420
        %4989 = vmatprep.subr.bf16.mxu0 %v3429
        %4990 = vmatpush1.bf16.msra.mxu0 %v3428
        %4991 = vmatprep.subr.bf16.mxu0 %v3437
        %4992 = vmatpush1.bf16.msra.mxu0 %v3436
        %4993 = vmatprep.subr.bf16.mxu0 %v3445
        %4994 = vmatpush1.bf16.msra.mxu0 %v3444
        %4995 = vmatprep.subr.bf16.mxu0 %v3453
        %4996 = vmatpush1.bf16.msra.mxu0 %v3452
        %4997 = vmatprep.subr.bf16.mxu0 %v3461
        %4998 = vmatpush1.bf16.msra.mxu0 %v3460
        %4999 = vmatprep.subr.bf16.mxu0 %v3469
        %5000 = vmatpush1.bf16.msra.mxu0 %v3468
        %5001 = vmatprep.subr.bf16.mxu0 %v3477
        %5002 = vmatpush1.bf16.msra.mxu0 %v3476
        %5003 = vmatprep.subr.bf16.mxu0 %v3485
        %5004 = vmatpush1.bf16.msra.mxu0 %v3484
        %5005 = vmatprep.subr.bf16.mxu0 %v3493
        %5006 = vmatpush1.bf16.msra.mxu0 %v3492
        %5007 = vmatprep.subr.bf16.mxu0 %v3501
        %5008 = vmatpush1.bf16.msra.mxu0 %v3500
        %5009 = vmatprep.subr.bf16.mxu0 %v3509
        %5010 = vmatpush1.bf16.msra.mxu0 %v3508
        %5011 = vmatprep.subr.bf16.mxu0 %v3517
        %5012 = vmatpush1.bf16.msra.mxu0 %v3516
        %5013 = vmatprep.subr.bf16.mxu0 %v3525
        %5014 = vmatpush1.bf16.msra.mxu0 %v3524
        %5015 = vmatprep.mubr.bf16.mxu0 %v1167
        %5016 = vmatmul.mubr.bf16.gmra.mrb[0].mxu0 %v1166
        %v5017 = vpop.f32.mrb[0].mxu0
        %v5018 = vadd.f32 %v4965, %v5017
        %v5019 = vpop.f32.mrb[0].mxu0
        %v5020 = vadd.f32 %v4967, %v5019
        %v5021 = vpop.f32.mrb[0].mxu0
        %v5022 = vadd.f32 %v4969, %v5021
        %v5023 = vpop.f32.mrb[0].mxu0
        %v5024 = vadd.f32 %v4971, %v5023
        %5025 = vmatprep.mubr.bf16.mxu0 %v1175
        %5026 = vmatmul.mubr.bf16.gmra.mrb[0].mxu0 %v1174
        %v5027 = vpop.f32.mrb[0].mxu0
        %v5028 = vadd.f32 %v4975, %v5027
        %v5029 = vpop.f32.mrb[0].mxu0
        %v5030 = vadd.f32 %v4977, %v5029
        %v5031 = vpop.f32.mrb[0].mxu0
        %v5032 = vadd.f32 %v4979, %v5031
        %v5033 = vpop.f32.mrb[0].mxu0
        %v5034 = vadd.f32 %v4981, %v5033
        %5035 = vdwg.mxu0
        %5036 = vmatprep.subr.bf16.mxu0 %v3533
        %5037 = vmatpush1.bf16.msra.mxu0 %v3532
        %5038 = vmatprep.subr.bf16.mxu0 %v3541
        %5039 = vmatpush1.bf16.msra.mxu0 %v3540
        %5040 = vmatprep.subr.bf16.mxu0 %v3549
        %5041 = vmatpush1.bf16.msra.mxu0 %v3548
        %5042 = vmatprep.subr.bf16.mxu0 %v3557
        %5043 = vmatpush1.bf16.msra.mxu0 %v3556
        %5044 = vmatprep.subr.bf16.mxu0 %v3565
        %5045 = vmatpush1.bf16.msra.mxu0 %v3564
        %5046 = vmatprep.subr.bf16.mxu0 %v3573
        %5047 = vmatpush1.bf16.msra.mxu0 %v3572
        %5048 = vmatprep.subr.bf16.mxu0 %v3581
        %5049 = vmatpush1.bf16.msra.mxu0 %v3580
        %5050 = vmatprep.subr.bf16.mxu0 %v3589
        %5051 = vmatpush1.bf16.msra.mxu0 %v3588
        %5052 = vmatprep.subr.bf16.mxu0 %v3597
        %5053 = vmatpush1.bf16.msra.mxu0 %v3596
        %5054 = vmatprep.subr.bf16.mxu0 %v3605
        %5055 = vmatpush1.bf16.msra.mxu0 %v3604
        %5056 = vmatprep.subr.bf16.mxu0 %v3613
        %5057 = vmatpush1.bf16.msra.mxu0 %v3612
        %5058 = vmatprep.subr.bf16.mxu0 %v3621
        %5059 = vmatpush1.bf16.msra.mxu0 %v3620
        %5060 = vmatprep.subr.bf16.mxu0 %v3629
        %5061 = vmatpush1.bf16.msra.mxu0 %v3628
        %5062 = vmatprep.subr.bf16.mxu0 %v3637
        %5063 = vmatpush1.bf16.msra.mxu0 %v3636
        %5064 = vmatprep.subr.bf16.mxu0 %v3645
        %5065 = vmatpush1.bf16.msra.mxu0 %v3644
        %5066 = vmatprep.subr.bf16.mxu0 %v3653
        %5067 = vmatpush1.bf16.msra.mxu0 %v3652
        %5068 = vmatprep.mubr.bf16.mxu0 %v1169
        %5069 = vmatmul.mubr.bf16.gmra.mrb[0].mxu0 %v1168
        %v5070 = vpop.f32.mrb[0].mxu0
        %v5071 = vadd.f32 %v5018, %v5070
        %v5072 = vpop.f32.mrb[0].mxu0
        %v5073 = vadd.f32 %v5020, %v5072
        %v5074 = vpop.f32.mrb[0].mxu0
        %v5075 = vadd.f32 %v5022, %v5074
        %v5076 = vpop.f32.mrb[0].mxu0
        %v5077 = vadd.f32 %v5024, %v5076
        %5078 = vmatprep.mubr.bf16.mxu0 %v1177
        %5079 = vmatmul.mubr.bf16.gmra.mrb[0].mxu0 %v1176
        %v5080 = vpop.f32.mrb[0].mxu0
        %v5081 = vadd.f32 %v5028, %v5080
        %v5082 = vpop.f32.mrb[0].mxu0
        %v5083 = vadd.f32 %v5030, %v5082
        %v5084 = vpop.f32.mrb[0].mxu0
        %v5085 = vadd.f32 %v5032, %v5084
        %v5086 = vpop.f32.mrb[0].mxu0
        %v5087 = vadd.f32 %v5034, %v5086
        %5088 = vdwg.mxu0
        %5089 = vmatprep.subr.bf16.mxu0 %v3661
        %5090 = vmatpush1.bf16.msra.mxu0 %v3660
        %5091 = vmatprep.subr.bf16.mxu0 %v3669
        %5092 = vmatpush1.bf16.msra.mxu0 %v3668
        %5093 = vmatprep.subr.bf16.mxu0 %v3677
        %5094 = vmatpush1.bf16.msra.mxu0 %v3676
        %5095 = vmatprep.subr.bf16.mxu0 %v3685
        %5096 = vmatpush1.bf16.msra.mxu0 %v3684
        %5097 = vmatprep.subr.bf16.mxu0 %v3693
        %5098 = vmatpush1.bf16.msra.mxu0 %v3692
        %5099 = vmatprep.subr.bf16.mxu0 %v3701
        %5100 = vmatpush1.bf16.msra.mxu0 %v3700
        %5101 = vmatprep.subr.bf16.mxu0 %v3709
        %5102 = vmatpush1.bf16.msra.mxu0 %v3708
        %5103 = vmatprep.subr.bf16.mxu0 %v3717
        %5104 = vmatpush1.bf16.msra.mxu0 %v3716
        %5105 = vmatprep.subr.bf16.mxu0 %v3725
        %5106 = vmatpush1.bf16.msra.mxu0 %v3724
        %5107 = vmatprep.subr.bf16.mxu0 %v3733
        %5108 = vmatpush1.bf16.msra.mxu0 %v3732
        %5109 = vmatprep.subr.bf16.mxu0 %v3741
        %5110 = vmatpush1.bf16.msra.mxu0 %v3740
        %5111 = vmatprep.subr.bf16.mxu0 %v3749
        %5112 = vmatpush1.bf16.msra.mxu0 %v3748
        %5113 = vmatprep.subr.bf16.mxu0 %v3757
        %5114 = vmatpush1.bf16.msra.mxu0 %v3756
        %5115 = vmatprep.subr.bf16.mxu0 %v3765
        %5116 = vmatpush1.bf16.msra.mxu0 %v3764
        %5117 = vmatprep.subr.bf16.mxu0 %v3773
        %5118 = vmatpush1.bf16.msra.mxu0 %v3772
        %5119 = vmatprep.subr.bf16.mxu0 %v3781
        %5120 = vmatpush1.bf16.msra.mxu0 %v3780
        %5121 = vmatprep.mubr.bf16.mxu0 %v1171
        %5122 = vmatmul.mubr.bf16.gmra.mrb[0].mxu0 %v1170
        %v5123 = vpop.f32.mrb[0].mxu0
        %v5124 = vadd.f32 %v5071, %v5123
        %v5125 = vpop.f32.mrb[0].mxu0
        %v5126 = vadd.f32 %v5073, %v5125
        %v5127 = vpop.f32.mrb[0].mxu0
        %v5128 = vadd.f32 %v5075, %v5127
        %v5129 = vpop.f32.mrb[0].mxu0
        %v5130 = vadd.f32 %v5077, %v5129
        %5131 = vmatprep.mubr.bf16.mxu0 %v1179
        %5132 = vmatmul.mubr.bf16.gmra.mrb[0].mxu0 %v1178
        %v5133 = vpop.f32.mrb[0].mxu0
        %v5134 = vadd.f32 %v5081, %v5133
        %v5135 = vpop.f32.mrb[0].mxu0
        %v5136 = vadd.f32 %v5083, %v5135
        %v5137 = vpop.f32.mrb[0].mxu0
        %v5138 = vadd.f32 %v5085, %v5137
        %v5139 = vpop.f32.mrb[0].mxu0
        %v5140 = vadd.f32 %v5087, %v5139
        %5141 = vdwg.mxu0
        %v5142 = vmul.f32 %v4488, 0.2
        %v5143 = vmul.f32 %v4490, 0.2
        %v5144 = vmul.f32 %v4700, 0.2
        %v5145 = vmul.f32 %v4702, 0.2
        %v5146 = vmul.f32 %v4912, 0.2
        %v5147 = vmul.f32 %v4914, 0.2
        %v5148 = vmul.f32 %v5124, 0.2
        %v5149 = vmul.f32 %v5126, 0.2
        %v5150 = vmul.f32 %v4492, 0.2
        %v5151 = vmul.f32 %v4494, 0.2
        %v5152 = vmul.f32 %v4704, 0.2
        %v5153 = vmul.f32 %v4706, 0.2
        %v5154 = vmul.f32 %v4916, 0.2
        %v5155 = vmul.f32 %v4918, 0.2
        %v5156 = vmul.f32 %v5128, 0.2
        %v5157 = vmul.f32 %v5130, 0.2
        %v5158 = vmul.f32 %v4498, 0.2
        %v5159 = vmul.f32 %v4500, 0.2
        %v5160 = vmul.f32 %v4710, 0.2
        %v5161 = vmul.f32 %v4712, 0.2
        %v5162 = vmul.f32 %v4922, 0.2
        %v5163 = vmul.f32 %v4924, 0.2
        %v5164 = vmul.f32 %v5134, 0.2
        %v5165 = vmul.f32 %v5136, 0.2
        %v5166 = vmul.f32 %v4502, 0.2
        %v5167 = vmul.f32 %v4504, 0.2
        %v5168 = vmul.f32 %v4714, 0.2
        %v5169 = vmul.f32 %v4716, 0.2
        %v5170 = vmul.f32 %v4926, 0.2
        %v5171 = vmul.f32 %v4928, 0.2
        %v5172 = vmul.f32 %v5138, 0.2
        %v5173 = vmul.f32 %v5140, 0.2
        %v5174 = vmax.f32 %v4488, %v5142
        %v5175 = vmax.f32 %v4490, %v5143
        %v5176 = vmax.f32 %v4700, %v5144
        %v5177 = vmax.f32 %v4702, %v5145
        %v5178 = vmax.f32 %v4912, %v5146
        %v5179 = vmax.f32 %v4914, %v5147
        %v5180 = vmax.f32 %v5124, %v5148
        %v5181 = vmax.f32 %v5126, %v5149
        %v5182 = vmax.f32 %v4492, %v5150
        %v5183 = vmax.f32 %v4494, %v5151
        %v5184 = vmax.f32 %v4704, %v5152
        %v5185 = vmax.f32 %v4706, %v5153
        %v5186 = vmax.f32 %v4916, %v5154
        %v5187 = vmax.f32 %v4918, %v5155
        %v5188 = vmax.f32 %v5128, %v5156
        %v5189 = vmax.f32 %v5130, %v5157
        %v5190 = vmax.f32 %v4498, %v5158
        %v5191 = vmax.f32 %v4500, %v5159
        %v5192 = vmax.f32 %v4710, %v5160
        %v5193 = vmax.f32 %v4712, %v5161
        %v5194 = vmax.f32 %v4922, %v5162
        %v5195 = vmax.f32 %v4924, %v5163
        %v5196 = vmax.f32 %v5134, %v5164
        %v5197 = vmax.f32 %v5136, %v5165
        %v5198 = vmax.f32 %v4502, %v5166
        %v5199 = vmax.f32 %v4504, %v5167
        %v5200 = vmax.f32 %v4714, %v5168
        %v5201 = vmax.f32 %v4716, %v5169
        %v5202 = vmax.f32 %v4926, %v5170
        %v5203 = vmax.f32 %v4928, %v5171
        %v5204 = vmax.f32 %v5138, %v5172
        %v5205 = vmax.f32 %v5140, %v5173
        %v5206 = vpack.c.bf16 %v5182, %v5174
        %v5207 = vpack.c.bf16 %v5183, %v5175
        %v5208 = vpack.c.bf16 %v5184, %v5176
        %v5209 = vpack.c.bf16 %v5185, %v5177
        %v5210 = vpack.c.bf16 %v5186, %v5178
        %v5211 = vpack.c.bf16 %v5187, %v5179
        %v5212 = vpack.c.bf16 %v5188, %v5180
        %v5213 = vpack.c.bf16 %v5189, %v5181
        %v5214 = vpack.c.bf16 %v5198, %v5190
        %v5215 = vpack.c.bf16 %v5199, %v5191
        %v5216 = vpack.c.bf16 %v5200, %v5192
        %v5217 = vpack.c.bf16 %v5201, %v5193
        %v5218 = vpack.c.bf16 %v5202, %v5194
        %v5219 = vpack.c.bf16 %v5203, %v5195
        %v5220 = vpack.c.bf16 %v5204, %v5196
        %v5221 = vpack.c.bf16 %v5205, %v5197
        %v5222 = vld [vmem:[#allocation9] sm:$0xff]
        %v5223 = vld [vmem:[#allocation9 + $0x8] sm:$0xff]
        %v5224 = vld [vmem:[#allocation9 + $0x10] sm:$0xff]
        %v5225 = vld [vmem:[#allocation9 + $0x18] sm:$0xff]
        %v5226 = vld [vmem:[#allocation9 + $0x20] sm:$0xff]
        %v5227 = vld [vmem:[#allocation9 + $0x28] sm:$0xff]
        %v5228 = vld [vmem:[#allocation9 + $0x30] sm:$0xff]
        %v5229 = vld [vmem:[#allocation9 + $0x38] sm:$0xff]
        %v5230 = vld [vmem:[#allocation9 + $0x40] sm:$0xff]
        %v5231 = vld [vmem:[#allocation9 + $0x48] sm:$0xff]
        %v5232 = vld [vmem:[#allocation9 + $0x50] sm:$0xff]
        %v5233 = vld [vmem:[#allocation9 + $0x58] sm:$0xff]
        %v5234 = vld [vmem:[#allocation9 + $0x60] sm:$0xff]
        %v5235 = vld [vmem:[#allocation9 + $0x68] sm:$0xff]
        %v5236 = vld [vmem:[#allocation9 + $0x70] sm:$0xff]
        %v5237 = vld [vmem:[#allocation9 + $0x78] sm:$0xff]
        %v5238 = vld [vmem:[#allocation9 + $0x80] sm:$0xff]
        %v5239 = vld [vmem:[#allocation9 + $0x88] sm:$0xff]
        %v5240 = vld [vmem:[#allocation9 + $0x90] sm:$0xff]
        %v5241 = vld [vmem:[#allocation9 + $0x98] sm:$0xff]
        %v5242 = vld [vmem:[#allocation9 + $0xa0] sm:$0xff]
        %v5243 = vld [vmem:[#allocation9 + $0xa8] sm:$0xff]
        %v5244 = vld [vmem:[#allocation9 + $0xb0] sm:$0xff]
        %v5245 = vld [vmem:[#allocation9 + $0xb8] sm:$0xff]
        %v5246 = vld [vmem:[#allocation9 + $0xc0] sm:$0xff]
        %v5247 = vld [vmem:[#allocation9 + $0xc8] sm:$0xff]
        %v5248 = vld [vmem:[#allocation9 + $0xd0] sm:$0xff]
        %v5249 = vld [vmem:[#allocation9 + $0xd8] sm:$0xff]
        %v5250 = vld [vmem:[#allocation9 + $0xe0] sm:$0xff]
        %v5251 = vld [vmem:[#allocation9 + $0xe8] sm:$0xff]
        %v5252 = vld [vmem:[#allocation9 + $0xf0] sm:$0xff]
        %v5253 = vld [vmem:[#allocation9 + $0xf8] sm:$0xff]
        %v5254 = vld [vmem:[#allocation9 + $0x100] sm:$0xff]
        %v5255 = vld [vmem:[#allocation9 + $0x108] sm:$0xff]
        %v5256 = vld [vmem:[#allocation9 + $0x110] sm:$0xff]
        %v5257 = vld [vmem:[#allocation9 + $0x118] sm:$0xff]
        %v5258 = vld [vmem:[#allocation9 + $0x120] sm:$0xff]
        %v5259 = vld [vmem:[#allocation9 + $0x128] sm:$0xff]
        %v5260 = vld [vmem:[#allocation9 + $0x130] sm:$0xff]
        %v5261 = vld [vmem:[#allocation9 + $0x138] sm:$0xff]
        %v5262 = vld [vmem:[#allocation9 + $0x140] sm:$0xff]
        %v5263 = vld [vmem:[#allocation9 + $0x148] sm:$0xff]
        %v5264 = vld [vmem:[#allocation9 + $0x150] sm:$0xff]
        %v5265 = vld [vmem:[#allocation9 + $0x158] sm:$0xff]
        %v5266 = vld [vmem:[#allocation9 + $0x160] sm:$0xff]
        %v5267 = vld [vmem:[#allocation9 + $0x168] sm:$0xff]
        %v5268 = vld [vmem:[#allocation9 + $0x170] sm:$0xff]
        %v5269 = vld [vmem:[#allocation9 + $0x178] sm:$0xff]
        %v5270 = vld [vmem:[#allocation9 + $0x180] sm:$0xff]
        %v5271 = vld [vmem:[#allocation9 + $0x188] sm:$0xff]
        %v5272 = vld [vmem:[#allocation9 + $0x190] sm:$0xff]
        %v5273 = vld [vmem:[#allocation9 + $0x198] sm:$0xff]
        %v5274 = vld [vmem:[#allocation9 + $0x1a0] sm:$0xff]
        %v5275 = vld [vmem:[#allocation9 + $0x1a8] sm:$0xff]
        %v5276 = vld [vmem:[#allocation9 + $0x1b0] sm:$0xff]
        %v5277 = vld [vmem:[#allocation9 + $0x1b8] sm:$0xff]
        %v5278 = vld [vmem:[#allocation9 + $0x1c0] sm:$0xff]
        %v5279 = vld [vmem:[#allocation9 + $0x1c8] sm:$0xff]
        %v5280 = vld [vmem:[#allocation9 + $0x1d0] sm:$0xff]
        %v5281 = vld [vmem:[#allocation9 + $0x1d8] sm:$0xff]
        %v5282 = vld [vmem:[#allocation9 + $0x1e0] sm:$0xff]
        %v5283 = vld [vmem:[#allocation9 + $0x1e8] sm:$0xff]
        %v5284 = vld [vmem:[#allocation9 + $0x1f0] sm:$0xff]
        %v5285 = vld [vmem:[#allocation9 + $0x1f8] sm:$0xff]
        %v5286 = vld [vmem:[#allocation9 + $0x200] sm:$0xff]
        %v5287 = vld [vmem:[#allocation9 + $0x208] sm:$0xff]
        %v5288 = vld [vmem:[#allocation9 + $0x210] sm:$0xff]
        %v5289 = vld [vmem:[#allocation9 + $0x218] sm:$0xff]
        %v5290 = vld [vmem:[#allocation9 + $0x220] sm:$0xff]
        %v5291 = vld [vmem:[#allocation9 + $0x228] sm:$0xff]
        %v5292 = vld [vmem:[#allocation9 + $0x230] sm:$0xff]
        %v5293 = vld [vmem:[#allocation9 + $0x238] sm:$0xff]
        %v5294 = vld [vmem:[#allocation9 + $0x240] sm:$0xff]
        %v5295 = vld [vmem:[#allocation9 + $0x248] sm:$0xff]
        %v5296 = vld [vmem:[#allocation9 + $0x250] sm:$0xff]
        %v5297 = vld [vmem:[#allocation9 + $0x258] sm:$0xff]
        %v5298 = vld [vmem:[#allocation9 + $0x260] sm:$0xff]
        %v5299 = vld [vmem:[#allocation9 + $0x268] sm:$0xff]
        %v5300 = vld [vmem:[#allocation9 + $0x270] sm:$0xff]
        %v5301 = vld [vmem:[#allocation9 + $0x278] sm:$0xff]
        %v5302 = vld [vmem:[#allocation9 + $0x280] sm:$0xff]
        %v5303 = vld [vmem:[#allocation9 + $0x288] sm:$0xff]
        %v5304 = vld [vmem:[#allocation9 + $0x290] sm:$0xff]
        %v5305 = vld [vmem:[#allocation9 + $0x298] sm:$0xff]
        %v5306 = vld [vmem:[#allocation9 + $0x2a0] sm:$0xff]
        %v5307 = vld [vmem:[#allocation9 + $0x2a8] sm:$0xff]
        %v5308 = vld [vmem:[#allocation9 + $0x2b0] sm:$0xff]
        %v5309 = vld [vmem:[#allocation9 + $0x2b8] sm:$0xff]
        %v5310 = vld [vmem:[#allocation9 + $0x2c0] sm:$0xff]
        %v5311 = vld [vmem:[#allocation9 + $0x2c8] sm:$0xff]
        %v5312 = vld [vmem:[#allocation9 + $0x2d0] sm:$0xff]
        %v5313 = vld [vmem:[#allocation9 + $0x2d8] sm:$0xff]
        %v5314 = vld [vmem:[#allocation9 + $0x2e0] sm:$0xff]
        %v5315 = vld [vmem:[#allocation9 + $0x2e8] sm:$0xff]
        %v5316 = vld [vmem:[#allocation9 + $0x2f0] sm:$0xff]
        %v5317 = vld [vmem:[#allocation9 + $0x2f8] sm:$0xff]
        %v5318 = vld [vmem:[#allocation9 + $0x300] sm:$0xff]
        %v5319 = vld [vmem:[#allocation9 + $0x308] sm:$0xff]
        %v5320 = vld [vmem:[#allocation9 + $0x310] sm:$0xff]
        %v5321 = vld [vmem:[#allocation9 + $0x318] sm:$0xff]
        %v5322 = vld [vmem:[#allocation9 + $0x320] sm:$0xff]
        %v5323 = vld [vmem:[#allocation9 + $0x328] sm:$0xff]
        %v5324 = vld [vmem:[#allocation9 + $0x330] sm:$0xff]
        %v5325 = vld [vmem:[#allocation9 + $0x338] sm:$0xff]
        %v5326 = vld [vmem:[#allocation9 + $0x340] sm:$0xff]
        %v5327 = vld [vmem:[#allocation9 + $0x348] sm:$0xff]
        %v5328 = vld [vmem:[#allocation9 + $0x350] sm:$0xff]
        %v5329 = vld [vmem:[#allocation9 + $0x358] sm:$0xff]
        %v5330 = vld [vmem:[#allocation9 + $0x360] sm:$0xff]
        %v5331 = vld [vmem:[#allocation9 + $0x368] sm:$0xff]
        %v5332 = vld [vmem:[#allocation9 + $0x370] sm:$0xff]
        %v5333 = vld [vmem:[#allocation9 + $0x378] sm:$0xff]
        %v5334 = vld [vmem:[#allocation9 + $0x380] sm:$0xff]
        %v5335 = vld [vmem:[#allocation9 + $0x388] sm:$0xff]
        %v5336 = vld [vmem:[#allocation9 + $0x390] sm:$0xff]
        %v5337 = vld [vmem:[#allocation9 + $0x398] sm:$0xff]
        %v5338 = vld [vmem:[#allocation9 + $0x3a0] sm:$0xff]
        %v5339 = vld [vmem:[#allocation9 + $0x3a8] sm:$0xff]
        %v5340 = vld [vmem:[#allocation9 + $0x3b0] sm:$0xff]
        %v5341 = vld [vmem:[#allocation9 + $0x3b8] sm:$0xff]
        %v5342 = vld [vmem:[#allocation9 + $0x3c0] sm:$0xff]
        %v5343 = vld [vmem:[#allocation9 + $0x3c8] sm:$0xff]
        %v5344 = vld [vmem:[#allocation9 + $0x3d0] sm:$0xff]
        %v5345 = vld [vmem:[#allocation9 + $0x3d8] sm:$0xff]
        %v5346 = vld [vmem:[#allocation9 + $0x3e0] sm:$0xff]
        %v5347 = vld [vmem:[#allocation9 + $0x3e8] sm:$0xff]
        %v5348 = vld [vmem:[#allocation9 + $0x3f0] sm:$0xff]
        %v5349 = vld [vmem:[#allocation9 + $0x3f8] sm:$0xff]
        %v5350 = vld [vmem:[#allocation9 + $0x400] sm:$0xff]
        %v5351 = vld [vmem:[#allocation9 + $0x408] sm:$0xff]
        %v5352 = vld [vmem:[#allocation9 + $0x410] sm:$0xff]
        %v5353 = vld [vmem:[#allocation9 + $0x418] sm:$0xff]
        %v5354 = vld [vmem:[#allocation9 + $0x420] sm:$0xff]
        %v5355 = vld [vmem:[#allocation9 + $0x428] sm:$0xff]
        %v5356 = vld [vmem:[#allocation9 + $0x430] sm:$0xff]
        %v5357 = vld [vmem:[#allocation9 + $0x438] sm:$0xff]
        %v5358 = vld [vmem:[#allocation9 + $0x440] sm:$0xff]
        %v5359 = vld [vmem:[#allocation9 + $0x448] sm:$0xff]
        %v5360 = vld [vmem:[#allocation9 + $0x450] sm:$0xff]
        %v5361 = vld [vmem:[#allocation9 + $0x458] sm:$0xff]
        %v5362 = vld [vmem:[#allocation9 + $0x460] sm:$0xff]
        %v5363 = vld [vmem:[#allocation9 + $0x468] sm:$0xff]
        %v5364 = vld [vmem:[#allocation9 + $0x470] sm:$0xff]
        %v5365 = vld [vmem:[#allocation9 + $0x478] sm:$0xff]
        %v5366 = vld [vmem:[#allocation9 + $0x480] sm:$0xff]
        %v5367 = vld [vmem:[#allocation9 + $0x488] sm:$0xff]
        %v5368 = vld [vmem:[#allocation9 + $0x490] sm:$0xff]
        %v5369 = vld [vmem:[#allocation9 + $0x498] sm:$0xff]
        %v5370 = vld [vmem:[#allocation9 + $0x4a0] sm:$0xff]
        %v5371 = vld [vmem:[#allocation9 + $0x4a8] sm:$0xff]
        %v5372 = vld [vmem:[#allocation9 + $0x4b0] sm:$0xff]
        %v5373 = vld [vmem:[#allocation9 + $0x4b8] sm:$0xff]
        %v5374 = vld [vmem:[#allocation9 + $0x4c0] sm:$0xff]
        %v5375 = vld [vmem:[#allocation9 + $0x4c8] sm:$0xff]
        %v5376 = vld [vmem:[#allocation9 + $0x4d0] sm:$0xff]
        %v5377 = vld [vmem:[#allocation9 + $0x4d8] sm:$0xff]
        %v5378 = vld [vmem:[#allocation9 + $0x4e0] sm:$0xff]
        %v5379 = vld [vmem:[#allocation9 + $0x4e8] sm:$0xff]
        %v5380 = vld [vmem:[#allocation9 + $0x4f0] sm:$0xff]
        %v5381 = vld [vmem:[#allocation9 + $0x4f8] sm:$0xff]
        %v5382 = vld [vmem:[#allocation9 + $0x500] sm:$0xff]
        %v5383 = vld [vmem:[#allocation9 + $0x508] sm:$0xff]
        %v5384 = vld [vmem:[#allocation9 + $0x510] sm:$0xff]
        %v5385 = vld [vmem:[#allocation9 + $0x518] sm:$0xff]
        %v5386 = vld [vmem:[#allocation9 + $0x520] sm:$0xff]
        %v5387 = vld [vmem:[#allocation9 + $0x528] sm:$0xff]
        %v5388 = vld [vmem:[#allocation9 + $0x530] sm:$0xff]
        %v5389 = vld [vmem:[#allocation9 + $0x538] sm:$0xff]
        %v5390 = vld [vmem:[#allocation9 + $0x540] sm:$0xff]
        %v5391 = vld [vmem:[#allocation9 + $0x548] sm:$0xff]
        %v5392 = vld [vmem:[#allocation9 + $0x550] sm:$0xff]
        %v5393 = vld [vmem:[#allocation9 + $0x558] sm:$0xff]
        %v5394 = vld [vmem:[#allocation9 + $0x560] sm:$0xff]
        %v5395 = vld [vmem:[#allocation9 + $0x568] sm:$0xff]
        %v5396 = vld [vmem:[#allocation9 + $0x570] sm:$0xff]
        %v5397 = vld [vmem:[#allocation9 + $0x578] sm:$0xff]
        %v5398 = vld [vmem:[#allocation9 + $0x580] sm:$0xff]
        %v5399 = vld [vmem:[#allocation9 + $0x588] sm:$0xff]
        %v5400 = vld [vmem:[#allocation9 + $0x590] sm:$0xff]
        %v5401 = vld [vmem:[#allocation9 + $0x598] sm:$0xff]
        %v5402 = vld [vmem:[#allocation9 + $0x5a0] sm:$0xff]
        %v5403 = vld [vmem:[#allocation9 + $0x5a8] sm:$0xff]
        %v5404 = vld [vmem:[#allocation9 + $0x5b0] sm:$0xff]
        %v5405 = vld [vmem:[#allocation9 + $0x5b8] sm:$0xff]
        %v5406 = vld [vmem:[#allocation9 + $0x5c0] sm:$0xff]
        %v5407 = vld [vmem:[#allocation9 + $0x5c8] sm:$0xff]
        %v5408 = vld [vmem:[#allocation9 + $0x5d0] sm:$0xff]
        %v5409 = vld [vmem:[#allocation9 + $0x5d8] sm:$0xff]
        %v5410 = vld [vmem:[#allocation9 + $0x5e0] sm:$0xff]
        %v5411 = vld [vmem:[#allocation9 + $0x5e8] sm:$0xff]
        %v5412 = vld [vmem:[#allocation9 + $0x5f0] sm:$0xff]
        %v5413 = vld [vmem:[#allocation9 + $0x5f8] sm:$0xff]
        %v5414 = vld [vmem:[#allocation9 + $0x600] sm:$0xff]
        %v5415 = vld [vmem:[#allocation9 + $0x608] sm:$0xff]
        %v5416 = vld [vmem:[#allocation9 + $0x610] sm:$0xff]
        %v5417 = vld [vmem:[#allocation9 + $0x618] sm:$0xff]
        %v5418 = vld [vmem:[#allocation9 + $0x620] sm:$0xff]
        %v5419 = vld [vmem:[#allocation9 + $0x628] sm:$0xff]
        %v5420 = vld [vmem:[#allocation9 + $0x630] sm:$0xff]
        %v5421 = vld [vmem:[#allocation9 + $0x638] sm:$0xff]
        %v5422 = vld [vmem:[#allocation9 + $0x640] sm:$0xff]
        %v5423 = vld [vmem:[#allocation9 + $0x648] sm:$0xff]
        %v5424 = vld [vmem:[#allocation9 + $0x650] sm:$0xff]
        %v5425 = vld [vmem:[#allocation9 + $0x658] sm:$0xff]
        %v5426 = vld [vmem:[#allocation9 + $0x660] sm:$0xff]
        %v5427 = vld [vmem:[#allocation9 + $0x668] sm:$0xff]
        %v5428 = vld [vmem:[#allocation9 + $0x670] sm:$0xff]
        %v5429 = vld [vmem:[#allocation9 + $0x678] sm:$0xff]
        %v5430 = vld [vmem:[#allocation9 + $0x680] sm:$0xff]
        %v5431 = vld [vmem:[#allocation9 + $0x688] sm:$0xff]
        %v5432 = vld [vmem:[#allocation9 + $0x690] sm:$0xff]
        %v5433 = vld [vmem:[#allocation9 + $0x698] sm:$0xff]
        %v5434 = vld [vmem:[#allocation9 + $0x6a0] sm:$0xff]
        %v5435 = vld [vmem:[#allocation9 + $0x6a8] sm:$0xff]
        %v5436 = vld [vmem:[#allocation9 + $0x6b0] sm:$0xff]
        %v5437 = vld [vmem:[#allocation9 + $0x6b8] sm:$0xff]
        %v5438 = vld [vmem:[#allocation9 + $0x6c0] sm:$0xff]
        %v5439 = vld [vmem:[#allocation9 + $0x6c8] sm:$0xff]
        %v5440 = vld [vmem:[#allocation9 + $0x6d0] sm:$0xff]
        %v5441 = vld [vmem:[#allocation9 + $0x6d8] sm:$0xff]
        %v5442 = vld [vmem:[#allocation9 + $0x6e0] sm:$0xff]
        %v5443 = vld [vmem:[#allocation9 + $0x6e8] sm:$0xff]
        %v5444 = vld [vmem:[#allocation9 + $0x6f0] sm:$0xff]
        %v5445 = vld [vmem:[#allocation9 + $0x6f8] sm:$0xff]
        %v5446 = vld [vmem:[#allocation9 + $0x700] sm:$0xff]
        %v5447 = vld [vmem:[#allocation9 + $0x708] sm:$0xff]
        %v5448 = vld [vmem:[#allocation9 + $0x710] sm:$0xff]
        %v5449 = vld [vmem:[#allocation9 + $0x718] sm:$0xff]
        %v5450 = vld [vmem:[#allocation9 + $0x720] sm:$0xff]
        %v5451 = vld [vmem:[#allocation9 + $0x728] sm:$0xff]
        %v5452 = vld [vmem:[#allocation9 + $0x730] sm:$0xff]
        %v5453 = vld [vmem:[#allocation9 + $0x738] sm:$0xff]
        %v5454 = vld [vmem:[#allocation9 + $0x740] sm:$0xff]
        %v5455 = vld [vmem:[#allocation9 + $0x748] sm:$0xff]
        %v5456 = vld [vmem:[#allocation9 + $0x750] sm:$0xff]
        %v5457 = vld [vmem:[#allocation9 + $0x758] sm:$0xff]
        %v5458 = vld [vmem:[#allocation9 + $0x760] sm:$0xff]
        %v5459 = vld [vmem:[#allocation9 + $0x768] sm:$0xff]
        %v5460 = vld [vmem:[#allocation9 + $0x770] sm:$0xff]
        %v5461 = vld [vmem:[#allocation9 + $0x778] sm:$0xff]
        %v5462 = vld [vmem:[#allocation9 + $0x780] sm:$0xff]
        %v5463 = vld [vmem:[#allocation9 + $0x788] sm:$0xff]
        %v5464 = vld [vmem:[#allocation9 + $0x790] sm:$0xff]
        %v5465 = vld [vmem:[#allocation9 + $0x798] sm:$0xff]
        %v5466 = vld [vmem:[#allocation9 + $0x7a0] sm:$0xff]
        %v5467 = vld [vmem:[#allocation9 + $0x7a8] sm:$0xff]
        %v5468 = vld [vmem:[#allocation9 + $0x7b0] sm:$0xff]
        %v5469 = vld [vmem:[#allocation9 + $0x7b8] sm:$0xff]
        %v5470 = vld [vmem:[#allocation9 + $0x7c0] sm:$0xff]
        %v5471 = vld [vmem:[#allocation9 + $0x7c8] sm:$0xff]
        %v5472 = vld [vmem:[#allocation9 + $0x7d0] sm:$0xff]
        %v5473 = vld [vmem:[#allocation9 + $0x7d8] sm:$0xff]
        %v5474 = vld [vmem:[#allocation9 + $0x7e0] sm:$0xff]
        %v5475 = vld [vmem:[#allocation9 + $0x7e8] sm:$0xff]
        %v5476 = vld [vmem:[#allocation9 + $0x7f0] sm:$0xff]
        %v5477 = vld [vmem:[#allocation9 + $0x7f8] sm:$0xff]
        %v5478 = vld [vmem:[#allocation9 + $0x800] sm:$0xff]
        %v5479 = vld [vmem:[#allocation9 + $0x808] sm:$0xff]
        %v5480 = vld [vmem:[#allocation9 + $0x810] sm:$0xff]
        %v5481 = vld [vmem:[#allocation9 + $0x818] sm:$0xff]
        %v5482 = vld [vmem:[#allocation9 + $0x820] sm:$0xff]
        %v5483 = vld [vmem:[#allocation9 + $0x828] sm:$0xff]
        %v5484 = vld [vmem:[#allocation9 + $0x830] sm:$0xff]
        %v5485 = vld [vmem:[#allocation9 + $0x838] sm:$0xff]
        %v5486 = vld [vmem:[#allocation9 + $0x840] sm:$0xff]
        %v5487 = vld [vmem:[#allocation9 + $0x848] sm:$0xff]
        %v5488 = vld [vmem:[#allocation9 + $0x850] sm:$0xff]
        %v5489 = vld [vmem:[#allocation9 + $0x858] sm:$0xff]
        %v5490 = vld [vmem:[#allocation9 + $0x860] sm:$0xff]
        %v5491 = vld [vmem:[#allocation9 + $0x868] sm:$0xff]
        %v5492 = vld [vmem:[#allocation9 + $0x870] sm:$0xff]
        %v5493 = vld [vmem:[#allocation9 + $0x878] sm:$0xff]
        %v5494 = vld [vmem:[#allocation9 + $0x880] sm:$0xff]
        %v5495 = vld [vmem:[#allocation9 + $0x888] sm:$0xff]
        %v5496 = vld [vmem:[#allocation9 + $0x890] sm:$0xff]
        %v5497 = vld [vmem:[#allocation9 + $0x898] sm:$0xff]
        %v5498 = vld [vmem:[#allocation9 + $0x8a0] sm:$0xff]
        %v5499 = vld [vmem:[#allocation9 + $0x8a8] sm:$0xff]
        %v5500 = vld [vmem:[#allocation9 + $0x8b0] sm:$0xff]
        %v5501 = vld [vmem:[#allocation9 + $0x8b8] sm:$0xff]
        %v5502 = vld [vmem:[#allocation9 + $0x8c0] sm:$0xff]
        %v5503 = vld [vmem:[#allocation9 + $0x8c8] sm:$0xff]
        %v5504 = vld [vmem:[#allocation9 + $0x8d0] sm:$0xff]
        %v5505 = vld [vmem:[#allocation9 + $0x8d8] sm:$0xff]
        %v5506 = vld [vmem:[#allocation9 + $0x8e0] sm:$0xff]
        %v5507 = vld [vmem:[#allocation9 + $0x8e8] sm:$0xff]
        %v5508 = vld [vmem:[#allocation9 + $0x8f0] sm:$0xff]
        %v5509 = vld [vmem:[#allocation9 + $0x8f8] sm:$0xff]
        %v5510 = vld [vmem:[#allocation9 + $0x900] sm:$0xff]
        %v5511 = vld [vmem:[#allocation9 + $0x908] sm:$0xff]
        %v5512 = vld [vmem:[#allocation9 + $0x910] sm:$0xff]
        %v5513 = vld [vmem:[#allocation9 + $0x918] sm:$0xff]
        %v5514 = vld [vmem:[#allocation9 + $0x920] sm:$0xff]
        %v5515 = vld [vmem:[#allocation9 + $0x928] sm:$0xff]
        %v5516 = vld [vmem:[#allocation9 + $0x930] sm:$0xff]
        %v5517 = vld [vmem:[#allocation9 + $0x938] sm:$0xff]
        %v5518 = vld [vmem:[#allocation9 + $0x940] sm:$0xff]
        %v5519 = vld [vmem:[#allocation9 + $0x948] sm:$0xff]
        %v5520 = vld [vmem:[#allocation9 + $0x950] sm:$0xff]
        %v5521 = vld [vmem:[#allocation9 + $0x958] sm:$0xff]
        %v5522 = vld [vmem:[#allocation9 + $0x960] sm:$0xff]
        %v5523 = vld [vmem:[#allocation9 + $0x968] sm:$0xff]
        %v5524 = vld [vmem:[#allocation9 + $0x970] sm:$0xff]
        %v5525 = vld [vmem:[#allocation9 + $0x978] sm:$0xff]
        %v5526 = vld [vmem:[#allocation9 + $0x980] sm:$0xff]
        %v5527 = vld [vmem:[#allocation9 + $0x988] sm:$0xff]
        %v5528 = vld [vmem:[#allocation9 + $0x990] sm:$0xff]
        %v5529 = vld [vmem:[#allocation9 + $0x998] sm:$0xff]
        %v5530 = vld [vmem:[#allocation9 + $0x9a0] sm:$0xff]
        %v5531 = vld [vmem:[#allocation9 + $0x9a8] sm:$0xff]
        %v5532 = vld [vmem:[#allocation9 + $0x9b0] sm:$0xff]
        %v5533 = vld [vmem:[#allocation9 + $0x9b8] sm:$0xff]
        %v5534 = vld [vmem:[#allocation9 + $0x9c0] sm:$0xff]
        %v5535 = vld [vmem:[#allocation9 + $0x9c8] sm:$0xff]
        %v5536 = vld [vmem:[#allocation9 + $0x9d0] sm:$0xff]
        %v5537 = vld [vmem:[#allocation9 + $0x9d8] sm:$0xff]
        %v5538 = vld [vmem:[#allocation9 + $0x9e0] sm:$0xff]
        %v5539 = vld [vmem:[#allocation9 + $0x9e8] sm:$0xff]
        %v5540 = vld [vmem:[#allocation9 + $0x9f0] sm:$0xff]
        %v5541 = vld [vmem:[#allocation9 + $0x9f8] sm:$0xff]
        %v5542 = vld [vmem:[#allocation9 + $0xa00] sm:$0xff]
        %v5543 = vld [vmem:[#allocation9 + $0xa08] sm:$0xff]
        %v5544 = vld [vmem:[#allocation9 + $0xa10] sm:$0xff]
        %v5545 = vld [vmem:[#allocation9 + $0xa18] sm:$0xff]
        %v5546 = vld [vmem:[#allocation9 + $0xa20] sm:$0xff]
        %v5547 = vld [vmem:[#allocation9 + $0xa28] sm:$0xff]
        %v5548 = vld [vmem:[#allocation9 + $0xa30] sm:$0xff]
        %v5549 = vld [vmem:[#allocation9 + $0xa38] sm:$0xff]
        %v5550 = vld [vmem:[#allocation9 + $0xa40] sm:$0xff]
        %v5551 = vld [vmem:[#allocation9 + $0xa48] sm:$0xff]
        %v5552 = vld [vmem:[#allocation9 + $0xa50] sm:$0xff]
        %v5553 = vld [vmem:[#allocation9 + $0xa58] sm:$0xff]
        %v5554 = vld [vmem:[#allocation9 + $0xa60] sm:$0xff]
        %v5555 = vld [vmem:[#allocation9 + $0xa68] sm:$0xff]
        %v5556 = vld [vmem:[#allocation9 + $0xa70] sm:$0xff]
        %v5557 = vld [vmem:[#allocation9 + $0xa78] sm:$0xff]
        %v5558 = vld [vmem:[#allocation9 + $0xa80] sm:$0xff]
        %v5559 = vld [vmem:[#allocation9 + $0xa88] sm:$0xff]
        %v5560 = vld [vmem:[#allocation9 + $0xa90] sm:$0xff]
        %v5561 = vld [vmem:[#allocation9 + $0xa98] sm:$0xff]
        %v5562 = vld [vmem:[#allocation9 + $0xaa0] sm:$0xff]
        %v5563 = vld [vmem:[#allocation9 + $0xaa8] sm:$0xff]
        %v5564 = vld [vmem:[#allocation9 + $0xab0] sm:$0xff]
        %v5565 = vld [vmem:[#allocation9 + $0xab8] sm:$0xff]
        %v5566 = vld [vmem:[#allocation9 + $0xac0] sm:$0xff]
        %v5567 = vld [vmem:[#allocation9 + $0xac8] sm:$0xff]
        %v5568 = vld [vmem:[#allocation9 + $0xad0] sm:$0xff]
        %v5569 = vld [vmem:[#allocation9 + $0xad8] sm:$0xff]
        %v5570 = vld [vmem:[#allocation9 + $0xae0] sm:$0xff]
        %v5571 = vld [vmem:[#allocation9 + $0xae8] sm:$0xff]
        %v5572 = vld [vmem:[#allocation9 + $0xaf0] sm:$0xff]
        %v5573 = vld [vmem:[#allocation9 + $0xaf8] sm:$0xff]
        %v5574 = vld [vmem:[#allocation9 + $0xb00] sm:$0xff]
        %v5575 = vld [vmem:[#allocation9 + $0xb08] sm:$0xff]
        %v5576 = vld [vmem:[#allocation9 + $0xb10] sm:$0xff]
        %v5577 = vld [vmem:[#allocation9 + $0xb18] sm:$0xff]
        %v5578 = vld [vmem:[#allocation9 + $0xb20] sm:$0xff]
        %v5579 = vld [vmem:[#allocation9 + $0xb28] sm:$0xff]
        %v5580 = vld [vmem:[#allocation9 + $0xb30] sm:$0xff]
        %v5581 = vld [vmem:[#allocation9 + $0xb38] sm:$0xff]
        %v5582 = vld [vmem:[#allocation9 + $0xb40] sm:$0xff]
        %v5583 = vld [vmem:[#allocation9 + $0xb48] sm:$0xff]
        %v5584 = vld [vmem:[#allocation9 + $0xb50] sm:$0xff]
        %v5585 = vld [vmem:[#allocation9 + $0xb58] sm:$0xff]
        %v5586 = vld [vmem:[#allocation9 + $0xb60] sm:$0xff]
        %v5587 = vld [vmem:[#allocation9 + $0xb68] sm:$0xff]
        %v5588 = vld [vmem:[#allocation9 + $0xb70] sm:$0xff]
        %v5589 = vld [vmem:[#allocation9 + $0xb78] sm:$0xff]
        %v5590 = vld [vmem:[#allocation9 + $0xb80] sm:$0xff]
        %v5591 = vld [vmem:[#allocation9 + $0xb88] sm:$0xff]
        %v5592 = vld [vmem:[#allocation9 + $0xb90] sm:$0xff]
        %v5593 = vld [vmem:[#allocation9 + $0xb98] sm:$0xff]
        %v5594 = vld [vmem:[#allocation9 + $0xba0] sm:$0xff]
        %v5595 = vld [vmem:[#allocation9 + $0xba8] sm:$0xff]
        %v5596 = vld [vmem:[#allocation9 + $0xbb0] sm:$0xff]
        %v5597 = vld [vmem:[#allocation9 + $0xbb8] sm:$0xff]
        %v5598 = vld [vmem:[#allocation9 + $0xbc0] sm:$0xff]
        %v5599 = vld [vmem:[#allocation9 + $0xbc8] sm:$0xff]
        %v5600 = vld [vmem:[#allocation9 + $0xbd0] sm:$0xff]
        %v5601 = vld [vmem:[#allocation9 + $0xbd8] sm:$0xff]
        %v5602 = vld [vmem:[#allocation9 + $0xbe0] sm:$0xff]
        %v5603 = vld [vmem:[#allocation9 + $0xbe8] sm:$0xff]
        %v5604 = vld [vmem:[#allocation9 + $0xbf0] sm:$0xff]
        %v5605 = vld [vmem:[#allocation9 + $0xbf8] sm:$0xff]
        %v5606 = vld [vmem:[#allocation9 + $0xc00] sm:$0xff]
        %v5607 = vld [vmem:[#allocation9 + $0xc08] sm:$0xff]
        %v5608 = vld [vmem:[#allocation9 + $0xc10] sm:$0xff]
        %v5609 = vld [vmem:[#allocation9 + $0xc18] sm:$0xff]
        %v5610 = vld [vmem:[#allocation9 + $0xc20] sm:$0xff]
        %v5611 = vld [vmem:[#allocation9 + $0xc28] sm:$0xff]
        %v5612 = vld [vmem:[#allocation9 + $0xc30] sm:$0xff]
        %v5613 = vld [vmem:[#allocation9 + $0xc38] sm:$0xff]
        %v5614 = vld [vmem:[#allocation9 + $0xc40] sm:$0xff]
        %v5615 = vld [vmem:[#allocation9 + $0xc48] sm:$0xff]
        %v5616 = vld [vmem:[#allocation9 + $0xc50] sm:$0xff]
        %v5617 = vld [vmem:[#allocation9 + $0xc58] sm:$0xff]
        %v5618 = vld [vmem:[#allocation9 + $0xc60] sm:$0xff]
        %v5619 = vld [vmem:[#allocation9 + $0xc68] sm:$0xff]
        %v5620 = vld [vmem:[#allocation9 + $0xc70] sm:$0xff]
        %v5621 = vld [vmem:[#allocation9 + $0xc78] sm:$0xff]
        %v5622 = vld [vmem:[#allocation9 + $0xc80] sm:$0xff]
        %v5623 = vld [vmem:[#allocation9 + $0xc88] sm:$0xff]
        %v5624 = vld [vmem:[#allocation9 + $0xc90] sm:$0xff]
        %v5625 = vld [vmem:[#allocation9 + $0xc98] sm:$0xff]
        %v5626 = vld [vmem:[#allocation9 + $0xca0] sm:$0xff]
        %v5627 = vld [vmem:[#allocation9 + $0xca8] sm:$0xff]
        %v5628 = vld [vmem:[#allocation9 + $0xcb0] sm:$0xff]
        %v5629 = vld [vmem:[#allocation9 + $0xcb8] sm:$0xff]
        %v5630 = vld [vmem:[#allocation9 + $0xcc0] sm:$0xff]
        %v5631 = vld [vmem:[#allocation9 + $0xcc8] sm:$0xff]
        %v5632 = vld [vmem:[#allocation9 + $0xcd0] sm:$0xff]
        %v5633 = vld [vmem:[#allocation9 + $0xcd8] sm:$0xff]
        %v5634 = vld [vmem:[#allocation9 + $0xce0] sm:$0xff]
        %v5635 = vld [vmem:[#allocation9 + $0xce8] sm:$0xff]
        %v5636 = vld [vmem:[#allocation9 + $0xcf0] sm:$0xff]
        %v5637 = vld [vmem:[#allocation9 + $0xcf8] sm:$0xff]
        %v5638 = vld [vmem:[#allocation9 + $0xd00] sm:$0xff]
        %v5639 = vld [vmem:[#allocation9 + $0xd08] sm:$0xff]
        %v5640 = vld [vmem:[#allocation9 + $0xd10] sm:$0xff]
        %v5641 = vld [vmem:[#allocation9 + $0xd18] sm:$0xff]
        %v5642 = vld [vmem:[#allocation9 + $0xd20] sm:$0xff]
        %v5643 = vld [vmem:[#allocation9 + $0xd28] sm:$0xff]
        %v5644 = vld [vmem:[#allocation9 + $0xd30] sm:$0xff]
        %v5645 = vld [vmem:[#allocation9 + $0xd38] sm:$0xff]
        %v5646 = vld [vmem:[#allocation9 + $0xd40] sm:$0xff]
        %v5647 = vld [vmem:[#allocation9 + $0xd48] sm:$0xff]
        %v5648 = vld [vmem:[#allocation9 + $0xd50] sm:$0xff]
        %v5649 = vld [vmem:[#allocation9 + $0xd58] sm:$0xff]
        %v5650 = vld [vmem:[#allocation9 + $0xd60] sm:$0xff]
        %v5651 = vld [vmem:[#allocation9 + $0xd68] sm:$0xff]
        %v5652 = vld [vmem:[#allocation9 + $0xd70] sm:$0xff]
        %v5653 = vld [vmem:[#allocation9 + $0xd78] sm:$0xff]
        %v5654 = vld [vmem:[#allocation9 + $0xd80] sm:$0xff]
        %v5655 = vld [vmem:[#allocation9 + $0xd88] sm:$0xff]
        %v5656 = vld [vmem:[#allocation9 + $0xd90] sm:$0xff]
        %v5657 = vld [vmem:[#allocation9 + $0xd98] sm:$0xff]
        %v5658 = vld [vmem:[#allocation9 + $0xda0] sm:$0xff]
        %v5659 = vld [vmem:[#allocation9 + $0xda8] sm:$0xff]
        %v5660 = vld [vmem:[#allocation9 + $0xdb0] sm:$0xff]
        %v5661 = vld [vmem:[#allocation9 + $0xdb8] sm:$0xff]
        %v5662 = vld [vmem:[#allocation9 + $0xdc0] sm:$0xff]
        %v5663 = vld [vmem:[#allocation9 + $0xdc8] sm:$0xff]
        %v5664 = vld [vmem:[#allocation9 + $0xdd0] sm:$0xff]
        %v5665 = vld [vmem:[#allocation9 + $0xdd8] sm:$0xff]
        %v5666 = vld [vmem:[#allocation9 + $0xde0] sm:$0xff]
        %v5667 = vld [vmem:[#allocation9 + $0xde8] sm:$0xff]
        %v5668 = vld [vmem:[#allocation9 + $0xdf0] sm:$0xff]
        %v5669 = vld [vmem:[#allocation9 + $0xdf8] sm:$0xff]
        %v5670 = vld [vmem:[#allocation9 + $0xe00] sm:$0xff]
        %v5671 = vld [vmem:[#allocation9 + $0xe08] sm:$0xff]
        %v5672 = vld [vmem:[#allocation9 + $0xe10] sm:$0xff]
        %v5673 = vld [vmem:[#allocation9 + $0xe18] sm:$0xff]
        %v5674 = vld [vmem:[#allocation9 + $0xe20] sm:$0xff]
        %v5675 = vld [vmem:[#allocation9 + $0xe28] sm:$0xff]
        %v5676 = vld [vmem:[#allocation9 + $0xe30] sm:$0xff]
        %v5677 = vld [vmem:[#allocation9 + $0xe38] sm:$0xff]
        %v5678 = vld [vmem:[#allocation9 + $0xe40] sm:$0xff]
        %v5679 = vld [vmem:[#allocation9 + $0xe48] sm:$0xff]
        %v5680 = vld [vmem:[#allocation9 + $0xe50] sm:$0xff]
        %v5681 = vld [vmem:[#allocation9 + $0xe58] sm:$0xff]
        %v5682 = vld [vmem:[#allocation9 + $0xe60] sm:$0xff]
        %v5683 = vld [vmem:[#allocation9 + $0xe68] sm:$0xff]
        %v5684 = vld [vmem:[#allocation9 + $0xe70] sm:$0xff]
        %v5685 = vld [vmem:[#allocation9 + $0xe78] sm:$0xff]
        %v5686 = vld [vmem:[#allocation9 + $0xe80] sm:$0xff]
        %v5687 = vld [vmem:[#allocation9 + $0xe88] sm:$0xff]
        %v5688 = vld [vmem:[#allocation9 + $0xe90] sm:$0xff]
        %v5689 = vld [vmem:[#allocation9 + $0xe98] sm:$0xff]
        %v5690 = vld [vmem:[#allocation9 + $0xea0] sm:$0xff]
        %v5691 = vld [vmem:[#allocation9 + $0xea8] sm:$0xff]
        %v5692 = vld [vmem:[#allocation9 + $0xeb0] sm:$0xff]
        %v5693 = vld [vmem:[#allocation9 + $0xeb8] sm:$0xff]
        %v5694 = vld [vmem:[#allocation9 + $0xec0] sm:$0xff]
        %v5695 = vld [vmem:[#allocation9 + $0xec8] sm:$0xff]
        %v5696 = vld [vmem:[#allocation9 + $0xed0] sm:$0xff]
        %v5697 = vld [vmem:[#allocation9 + $0xed8] sm:$0xff]
        %v5698 = vld [vmem:[#allocation9 + $0xee0] sm:$0xff]
        %v5699 = vld [vmem:[#allocation9 + $0xee8] sm:$0xff]
        %v5700 = vld [vmem:[#allocation9 + $0xef0] sm:$0xff]
        %v5701 = vld [vmem:[#allocation9 + $0xef8] sm:$0xff]
        %v5702 = vld [vmem:[#allocation9 + $0xf00] sm:$0xff]
        %v5703 = vld [vmem:[#allocation9 + $0xf08] sm:$0xff]
        %v5704 = vld [vmem:[#allocation9 + $0xf10] sm:$0xff]
        %v5705 = vld [vmem:[#allocation9 + $0xf18] sm:$0xff]
        %v5706 = vld [vmem:[#allocation9 + $0xf20] sm:$0xff]
        %v5707 = vld [vmem:[#allocation9 + $0xf28] sm:$0xff]
        %v5708 = vld [vmem:[#allocation9 + $0xf30] sm:$0xff]
        %v5709 = vld [vmem:[#allocation9 + $0xf38] sm:$0xff]
        %v5710 = vld [vmem:[#allocation9 + $0xf40] sm:$0xff]
        %v5711 = vld [vmem:[#allocation9 + $0xf48] sm:$0xff]
        %v5712 = vld [vmem:[#allocation9 + $0xf50] sm:$0xff]
        %v5713 = vld [vmem:[#allocation9 + $0xf58] sm:$0xff]
        %v5714 = vld [vmem:[#allocation9 + $0xf60] sm:$0xff]
        %v5715 = vld [vmem:[#allocation9 + $0xf68] sm:$0xff]
        %v5716 = vld [vmem:[#allocation9 + $0xf70] sm:$0xff]
        %v5717 = vld [vmem:[#allocation9 + $0xf78] sm:$0xff]
        %v5718 = vld [vmem:[#allocation9 + $0xf80] sm:$0xff]
        %v5719 = vld [vmem:[#allocation9 + $0xf88] sm:$0xff]
        %v5720 = vld [vmem:[#allocation9 + $0xf90] sm:$0xff]
        %v5721 = vld [vmem:[#allocation9 + $0xf98] sm:$0xff]
        %v5722 = vld [vmem:[#allocation9 + $0xfa0] sm:$0xff]
        %v5723 = vld [vmem:[#allocation9 + $0xfa8] sm:$0xff]
        %v5724 = vld [vmem:[#allocation9 + $0xfb0] sm:$0xff]
        %v5725 = vld [vmem:[#allocation9 + $0xfb8] sm:$0xff]
        %v5726 = vld [vmem:[#allocation9 + $0xfc0] sm:$0xff]
        %v5727 = vld [vmem:[#allocation9 + $0xfc8] sm:$0xff]
        %v5728 = vld [vmem:[#allocation9 + $0xfd0] sm:$0xff]
        %v5729 = vld [vmem:[#allocation9 + $0xfd8] sm:$0xff]
        %v5730 = vld [vmem:[#allocation9 + $0xfe0] sm:$0xff]
        %v5731 = vld [vmem:[#allocation9 + $0xfe8] sm:$0xff]
        %v5732 = vld [vmem:[#allocation9 + $0xff0] sm:$0xff]
        %v5733 = vld [vmem:[#allocation9 + $0xff8] sm:$0xff]
        %v5734 = vld [vmem:[#allocation10] sm:$0xff]
        %v5736 = vlaneseq
        %v5737 = vshrl.u32 %v5736, 7
        %v5738 = vsub.s32 0, %v5737
        %v5739 = vrot.slane %v5734, %v5738
        %v5740 = vlaneseq
        %v5741 = vshrl.u32 %v5740, 7
        %v5742 = vsub.s32 1, %v5741
        %v5743 = vrot.slane %v5734, %v5742
        %v5744 = vlaneseq
        %v5745 = vshrl.u32 %v5744, 7
        %v5746 = vsub.s32 2, %v5745
        %v5747 = vrot.slane %v5734, %v5746
        %v5748 = vlaneseq
        %v5749 = vshrl.u32 %v5748, 7
        %v5750 = vsub.s32 3, %v5749
        %v5751 = vrot.slane %v5734, %v5750
        %v5752 = vlaneseq
        %v5753 = vshrl.u32 %v5752, 7
        %v5754 = vsub.s32 4, %v5753
        %v5755 = vrot.slane %v5734, %v5754
        %v5756 = vlaneseq
        %v5757 = vshrl.u32 %v5756, 7
        %v5758 = vsub.s32 5, %v5757
        %v5759 = vrot.slane %v5734, %v5758
        %v5760 = vlaneseq
        %v5761 = vshrl.u32 %v5760, 7
        %v5762 = vsub.s32 6, %v5761
        %v5763 = vrot.slane %v5734, %v5762
        %v5764 = vlaneseq
        %v5765 = vshrl.u32 %v5764, 7
        %v5766 = vsub.s32 7, %v5765
        %v5767 = vrot.slane %v5734, %v5766
        %v6288 = vunpack.c.l.b16 %v5222
        %v6289 = vunpack.c.h.b16 %v5222
        %v6290 = vunpack.c.l.b16 %v5223
        %v6291 = vunpack.c.h.b16 %v5223
        %v6292 = vunpack.c.l.b16 %v5224
        %v6293 = vunpack.c.h.b16 %v5224
        %v6294 = vunpack.c.l.b16 %v5225
        %v6295 = vunpack.c.h.b16 %v5225
        %v6296 = vunpack.c.l.b16 %v5226
        %v6297 = vunpack.c.h.b16 %v5226
        %v6298 = vunpack.c.l.b16 %v5227
        %v6299 = vunpack.c.h.b16 %v5227
        %v6300 = vunpack.c.l.b16 %v5228
        %v6301 = vunpack.c.h.b16 %v5228
        %v6302 = vunpack.c.l.b16 %v5229
        %v6303 = vunpack.c.h.b16 %v5229
        %v6304 = vunpack.c.l.b16 %v5230
        %v6305 = vunpack.c.h.b16 %v5230
        %v6306 = vunpack.c.l.b16 %v5231
        %v6307 = vunpack.c.h.b16 %v5231
        %v6308 = vunpack.c.l.b16 %v5232
        %v6309 = vunpack.c.h.b16 %v5232
        %v6310 = vunpack.c.l.b16 %v5233
        %v6311 = vunpack.c.h.b16 %v5233
        %v6312 = vunpack.c.l.b16 %v5234
        %v6313 = vunpack.c.h.b16 %v5234
        %v6314 = vunpack.c.l.b16 %v5235
        %v6315 = vunpack.c.h.b16 %v5235
        %v6316 = vunpack.c.l.b16 %v5236
        %v6317 = vunpack.c.h.b16 %v5236
        %v6318 = vunpack.c.l.b16 %v5237
        %v6319 = vunpack.c.h.b16 %v5237
        %v6320 = vunpack.c.l.b16 %v5238
        %v6321 = vunpack.c.h.b16 %v5238
        %v6322 = vunpack.c.l.b16 %v5239
        %v6323 = vunpack.c.h.b16 %v5239
        %v6324 = vunpack.c.l.b16 %v5240
        %v6325 = vunpack.c.h.b16 %v5240
        %v6326 = vunpack.c.l.b16 %v5241
        %v6327 = vunpack.c.h.b16 %v5241
        %v6328 = vunpack.c.l.b16 %v5242
        %v6329 = vunpack.c.h.b16 %v5242
        %v6330 = vunpack.c.l.b16 %v5243
        %v6331 = vunpack.c.h.b16 %v5243
        %v6332 = vunpack.c.l.b16 %v5244
        %v6333 = vunpack.c.h.b16 %v5244
        %v6334 = vunpack.c.l.b16 %v5245
        %v6335 = vunpack.c.h.b16 %v5245
        %v6336 = vunpack.c.l.b16 %v5246
        %v6337 = vunpack.c.h.b16 %v5246
        %v6338 = vunpack.c.l.b16 %v5247
        %v6339 = vunpack.c.h.b16 %v5247
        %v6340 = vunpack.c.l.b16 %v5248
        %v6341 = vunpack.c.h.b16 %v5248
        %v6342 = vunpack.c.l.b16 %v5249
        %v6343 = vunpack.c.h.b16 %v5249
        %v6344 = vunpack.c.l.b16 %v5250
        %v6345 = vunpack.c.h.b16 %v5250
        %v6346 = vunpack.c.l.b16 %v5251
        %v6347 = vunpack.c.h.b16 %v5251
        %v6348 = vunpack.c.l.b16 %v5252
        %v6349 = vunpack.c.h.b16 %v5252
        %v6350 = vunpack.c.l.b16 %v5253
        %v6351 = vunpack.c.h.b16 %v5253
        %v6352 = vunpack.c.l.b16 %v5254
        %v6353 = vunpack.c.h.b16 %v5254
        %v6354 = vunpack.c.l.b16 %v5255
        %v6355 = vunpack.c.h.b16 %v5255
        %v6356 = vunpack.c.l.b16 %v5256
        %v6357 = vunpack.c.h.b16 %v5256
        %v6358 = vunpack.c.l.b16 %v5257
        %v6359 = vunpack.c.h.b16 %v5257
        %v6360 = vunpack.c.l.b16 %v5258
        %v6361 = vunpack.c.h.b16 %v5258
        %v6362 = vunpack.c.l.b16 %v5259
        %v6363 = vunpack.c.h.b16 %v5259
        %v6364 = vunpack.c.l.b16 %v5260
        %v6365 = vunpack.c.h.b16 %v5260
        %v6366 = vunpack.c.l.b16 %v5261
        %v6367 = vunpack.c.h.b16 %v5261
        %v6368 = vunpack.c.l.b16 %v5262
        %v6369 = vunpack.c.h.b16 %v5262
        %v6370 = vunpack.c.l.b16 %v5263
        %v6371 = vunpack.c.h.b16 %v5263
        %v6372 = vunpack.c.l.b16 %v5264
        %v6373 = vunpack.c.h.b16 %v5264
        %v6374 = vunpack.c.l.b16 %v5265
        %v6375 = vunpack.c.h.b16 %v5265
        %v6376 = vunpack.c.l.b16 %v5266
        %v6377 = vunpack.c.h.b16 %v5266
        %v6378 = vunpack.c.l.b16 %v5267
        %v6379 = vunpack.c.h.b16 %v5267
        %v6380 = vunpack.c.l.b16 %v5268
        %v6381 = vunpack.c.h.b16 %v5268
        %v6382 = vunpack.c.l.b16 %v5269
        %v6383 = vunpack.c.h.b16 %v5269
        %v6384 = vunpack.c.l.b16 %v5270
        %v6385 = vunpack.c.h.b16 %v5270
        %v6386 = vunpack.c.l.b16 %v5271
        %v6387 = vunpack.c.h.b16 %v5271
        %v6388 = vunpack.c.l.b16 %v5272
        %v6389 = vunpack.c.h.b16 %v5272
        %v6390 = vunpack.c.l.b16 %v5273
        %v6391 = vunpack.c.h.b16 %v5273
        %v6392 = vunpack.c.l.b16 %v5274
        %v6393 = vunpack.c.h.b16 %v5274
        %v6394 = vunpack.c.l.b16 %v5275
        %v6395 = vunpack.c.h.b16 %v5275
        %v6396 = vunpack.c.l.b16 %v5276
        %v6397 = vunpack.c.h.b16 %v5276
        %v6398 = vunpack.c.l.b16 %v5277
        %v6399 = vunpack.c.h.b16 %v5277
        %v6400 = vunpack.c.l.b16 %v5278
        %v6401 = vunpack.c.h.b16 %v5278
        %v6402 = vunpack.c.l.b16 %v5279
        %v6403 = vunpack.c.h.b16 %v5279
        %v6404 = vunpack.c.l.b16 %v5280
        %v6405 = vunpack.c.h.b16 %v5280
        %v6406 = vunpack.c.l.b16 %v5281
        %v6407 = vunpack.c.h.b16 %v5281
        %v6408 = vunpack.c.l.b16 %v5282
        %v6409 = vunpack.c.h.b16 %v5282
        %v6410 = vunpack.c.l.b16 %v5283
        %v6411 = vunpack.c.h.b16 %v5283
        %v6412 = vunpack.c.l.b16 %v5284
        %v6413 = vunpack.c.h.b16 %v5284
        %v6414 = vunpack.c.l.b16 %v5285
        %v6415 = vunpack.c.h.b16 %v5285
        %v6416 = vunpack.c.l.b16 %v5286
        %v6417 = vunpack.c.h.b16 %v5286
        %v6418 = vunpack.c.l.b16 %v5287
        %v6419 = vunpack.c.h.b16 %v5287
        %v6420 = vunpack.c.l.b16 %v5288
        %v6421 = vunpack.c.h.b16 %v5288
        %v6422 = vunpack.c.l.b16 %v5289
        %v6423 = vunpack.c.h.b16 %v5289
        %v6424 = vunpack.c.l.b16 %v5290
        %v6425 = vunpack.c.h.b16 %v5290
        %v6426 = vunpack.c.l.b16 %v5291
        %v6427 = vunpack.c.h.b16 %v5291
        %v6428 = vunpack.c.l.b16 %v5292
        %v6429 = vunpack.c.h.b16 %v5292
        %v6430 = vunpack.c.l.b16 %v5293
        %v6431 = vunpack.c.h.b16 %v5293
        %v6432 = vunpack.c.l.b16 %v5294
        %v6433 = vunpack.c.h.b16 %v5294
        %v6434 = vunpack.c.l.b16 %v5295
        %v6435 = vunpack.c.h.b16 %v5295
        %v6436 = vunpack.c.l.b16 %v5296
        %v6437 = vunpack.c.h.b16 %v5296
        %v6438 = vunpack.c.l.b16 %v5297
        %v6439 = vunpack.c.h.b16 %v5297
        %v6440 = vunpack.c.l.b16 %v5298
        %v6441 = vunpack.c.h.b16 %v5298
        %v6442 = vunpack.c.l.b16 %v5299
        %v6443 = vunpack.c.h.b16 %v5299
        %v6444 = vunpack.c.l.b16 %v5300
        %v6445 = vunpack.c.h.b16 %v5300
        %v6446 = vunpack.c.l.b16 %v5301
        %v6447 = vunpack.c.h.b16 %v5301
        %v6448 = vunpack.c.l.b16 %v5302
        %v6449 = vunpack.c.h.b16 %v5302
        %v6450 = vunpack.c.l.b16 %v5303
        %v6451 = vunpack.c.h.b16 %v5303
        %v6452 = vunpack.c.l.b16 %v5304
        %v6453 = vunpack.c.h.b16 %v5304
        %v6454 = vunpack.c.l.b16 %v5305
        %v6455 = vunpack.c.h.b16 %v5305
        %v6456 = vunpack.c.l.b16 %v5306
        %v6457 = vunpack.c.h.b16 %v5306
        %v6458 = vunpack.c.l.b16 %v5307
        %v6459 = vunpack.c.h.b16 %v5307
        %v6460 = vunpack.c.l.b16 %v5308
        %v6461 = vunpack.c.h.b16 %v5308
        %v6462 = vunpack.c.l.b16 %v5309
        %v6463 = vunpack.c.h.b16 %v5309
        %v6464 = vunpack.c.l.b16 %v5310
        %v6465 = vunpack.c.h.b16 %v5310
        %v6466 = vunpack.c.l.b16 %v5311
        %v6467 = vunpack.c.h.b16 %v5311
        %v6468 = vunpack.c.l.b16 %v5312
        %v6469 = vunpack.c.h.b16 %v5312
        %v6470 = vunpack.c.l.b16 %v5313
        %v6471 = vunpack.c.h.b16 %v5313
        %v6472 = vunpack.c.l.b16 %v5314
        %v6473 = vunpack.c.h.b16 %v5314
        %v6474 = vunpack.c.l.b16 %v5315
        %v6475 = vunpack.c.h.b16 %v5315
        %v6476 = vunpack.c.l.b16 %v5316
        %v6477 = vunpack.c.h.b16 %v5316
        %v6478 = vunpack.c.l.b16 %v5317
        %v6479 = vunpack.c.h.b16 %v5317
        %v6480 = vunpack.c.l.b16 %v5318
        %v6481 = vunpack.c.h.b16 %v5318
        %v6482 = vunpack.c.l.b16 %v5319
        %v6483 = vunpack.c.h.b16 %v5319
        %v6484 = vunpack.c.l.b16 %v5320
        %v6485 = vunpack.c.h.b16 %v5320
        %v6486 = vunpack.c.l.b16 %v5321
        %v6487 = vunpack.c.h.b16 %v5321
        %v6488 = vunpack.c.l.b16 %v5322
        %v6489 = vunpack.c.h.b16 %v5322
        %v6490 = vunpack.c.l.b16 %v5323
        %v6491 = vunpack.c.h.b16 %v5323
        %v6492 = vunpack.c.l.b16 %v5324
        %v6493 = vunpack.c.h.b16 %v5324
        %v6494 = vunpack.c.l.b16 %v5325
        %v6495 = vunpack.c.h.b16 %v5325
        %v6496 = vunpack.c.l.b16 %v5326
        %v6497 = vunpack.c.h.b16 %v5326
        %v6498 = vunpack.c.l.b16 %v5327
        %v6499 = vunpack.c.h.b16 %v5327
        %v6500 = vunpack.c.l.b16 %v5328
        %v6501 = vunpack.c.h.b16 %v5328
        %v6502 = vunpack.c.l.b16 %v5329
        %v6503 = vunpack.c.h.b16 %v5329
        %v6504 = vunpack.c.l.b16 %v5330
        %v6505 = vunpack.c.h.b16 %v5330
        %v6506 = vunpack.c.l.b16 %v5331
        %v6507 = vunpack.c.h.b16 %v5331
        %v6508 = vunpack.c.l.b16 %v5332
        %v6509 = vunpack.c.h.b16 %v5332
        %v6510 = vunpack.c.l.b16 %v5333
        %v6511 = vunpack.c.h.b16 %v5333
        %v6512 = vunpack.c.l.b16 %v5334
        %v6513 = vunpack.c.h.b16 %v5334
        %v6514 = vunpack.c.l.b16 %v5335
        %v6515 = vunpack.c.h.b16 %v5335
        %v6516 = vunpack.c.l.b16 %v5336
        %v6517 = vunpack.c.h.b16 %v5336
        %v6518 = vunpack.c.l.b16 %v5337
        %v6519 = vunpack.c.h.b16 %v5337
        %v6520 = vunpack.c.l.b16 %v5338
        %v6521 = vunpack.c.h.b16 %v5338
        %v6522 = vunpack.c.l.b16 %v5339
        %v6523 = vunpack.c.h.b16 %v5339
        %v6524 = vunpack.c.l.b16 %v5340
        %v6525 = vunpack.c.h.b16 %v5340
        %v6526 = vunpack.c.l.b16 %v5341
        %v6527 = vunpack.c.h.b16 %v5341
        %v6528 = vunpack.c.l.b16 %v5342
        %v6529 = vunpack.c.h.b16 %v5342
        %v6530 = vunpack.c.l.b16 %v5343
        %v6531 = vunpack.c.h.b16 %v5343
        %v6532 = vunpack.c.l.b16 %v5344
        %v6533 = vunpack.c.h.b16 %v5344
        %v6534 = vunpack.c.l.b16 %v5345
        %v6535 = vunpack.c.h.b16 %v5345
        %v6536 = vunpack.c.l.b16 %v5346
        %v6537 = vunpack.c.h.b16 %v5346
        %v6538 = vunpack.c.l.b16 %v5347
        %v6539 = vunpack.c.h.b16 %v5347
        %v6540 = vunpack.c.l.b16 %v5348
        %v6541 = vunpack.c.h.b16 %v5348
        %v6542 = vunpack.c.l.b16 %v5349
        %v6543 = vunpack.c.h.b16 %v5349
        %v6544 = vunpack.c.l.b16 %v5350
        %v6545 = vunpack.c.h.b16 %v5350
        %v6546 = vunpack.c.l.b16 %v5351
        %v6547 = vunpack.c.h.b16 %v5351
        %v6548 = vunpack.c.l.b16 %v5352
        %v6549 = vunpack.c.h.b16 %v5352
        %v6550 = vunpack.c.l.b16 %v5353
        %v6551 = vunpack.c.h.b16 %v5353
        %v6552 = vunpack.c.l.b16 %v5354
        %v6553 = vunpack.c.h.b16 %v5354
        %v6554 = vunpack.c.l.b16 %v5355
        %v6555 = vunpack.c.h.b16 %v5355
        %v6556 = vunpack.c.l.b16 %v5356
        %v6557 = vunpack.c.h.b16 %v5356
        %v6558 = vunpack.c.l.b16 %v5357
        %v6559 = vunpack.c.h.b16 %v5357
        %v6560 = vunpack.c.l.b16 %v5358
        %v6561 = vunpack.c.h.b16 %v5358
        %v6562 = vunpack.c.l.b16 %v5359
        %v6563 = vunpack.c.h.b16 %v5359
        %v6564 = vunpack.c.l.b16 %v5360
        %v6565 = vunpack.c.h.b16 %v5360
        %v6566 = vunpack.c.l.b16 %v5361
        %v6567 = vunpack.c.h.b16 %v5361
        %v6568 = vunpack.c.l.b16 %v5362
        %v6569 = vunpack.c.h.b16 %v5362
        %v6570 = vunpack.c.l.b16 %v5363
        %v6571 = vunpack.c.h.b16 %v5363
        %v6572 = vunpack.c.l.b16 %v5364
        %v6573 = vunpack.c.h.b16 %v5364
        %v6574 = vunpack.c.l.b16 %v5365
        %v6575 = vunpack.c.h.b16 %v5365
        %v6576 = vunpack.c.l.b16 %v5366
        %v6577 = vunpack.c.h.b16 %v5366
        %v6578 = vunpack.c.l.b16 %v5367
        %v6579 = vunpack.c.h.b16 %v5367
        %v6580 = vunpack.c.l.b16 %v5368
        %v6581 = vunpack.c.h.b16 %v5368
        %v6582 = vunpack.c.l.b16 %v5369
        %v6583 = vunpack.c.h.b16 %v5369
        %v6584 = vunpack.c.l.b16 %v5370
        %v6585 = vunpack.c.h.b16 %v5370
        %v6586 = vunpack.c.l.b16 %v5371
        %v6587 = vunpack.c.h.b16 %v5371
        %v6588 = vunpack.c.l.b16 %v5372
        %v6589 = vunpack.c.h.b16 %v5372
        %v6590 = vunpack.c.l.b16 %v5373
        %v6591 = vunpack.c.h.b16 %v5373
        %v6592 = vunpack.c.l.b16 %v5374
        %v6593 = vunpack.c.h.b16 %v5374
        %v6594 = vunpack.c.l.b16 %v5375
        %v6595 = vunpack.c.h.b16 %v5375
        %v6596 = vunpack.c.l.b16 %v5376
        %v6597 = vunpack.c.h.b16 %v5376
        %v6598 = vunpack.c.l.b16 %v5377
        %v6599 = vunpack.c.h.b16 %v5377
        %v6600 = vunpack.c.l.b16 %v5378
        %v6601 = vunpack.c.h.b16 %v5378
        %v6602 = vunpack.c.l.b16 %v5379
        %v6603 = vunpack.c.h.b16 %v5379
        %v6604 = vunpack.c.l.b16 %v5380
        %v6605 = vunpack.c.h.b16 %v5380
        %v6606 = vunpack.c.l.b16 %v5381
        %v6607 = vunpack.c.h.b16 %v5381
        %v6608 = vunpack.c.l.b16 %v5382
        %v6609 = vunpack.c.h.b16 %v5382
        %v6610 = vunpack.c.l.b16 %v5383
        %v6611 = vunpack.c.h.b16 %v5383
        %v6612 = vunpack.c.l.b16 %v5384
        %v6613 = vunpack.c.h.b16 %v5384
        %v6614 = vunpack.c.l.b16 %v5385
        %v6615 = vunpack.c.h.b16 %v5385
        %v6616 = vunpack.c.l.b16 %v5386
        %v6617 = vunpack.c.h.b16 %v5386
        %v6618 = vunpack.c.l.b16 %v5387
        %v6619 = vunpack.c.h.b16 %v5387
        %v6620 = vunpack.c.l.b16 %v5388
        %v6621 = vunpack.c.h.b16 %v5388
        %v6622 = vunpack.c.l.b16 %v5389
        %v6623 = vunpack.c.h.b16 %v5389
        %v6624 = vunpack.c.l.b16 %v5390
        %v6625 = vunpack.c.h.b16 %v5390
        %v6626 = vunpack.c.l.b16 %v5391
        %v6627 = vunpack.c.h.b16 %v5391
        %v6628 = vunpack.c.l.b16 %v5392
        %v6629 = vunpack.c.h.b16 %v5392
        %v6630 = vunpack.c.l.b16 %v5393
        %v6631 = vunpack.c.h.b16 %v5393
        %v6632 = vunpack.c.l.b16 %v5394
        %v6633 = vunpack.c.h.b16 %v5394
        %v6634 = vunpack.c.l.b16 %v5395
        %v6635 = vunpack.c.h.b16 %v5395
        %v6636 = vunpack.c.l.b16 %v5396
        %v6637 = vunpack.c.h.b16 %v5396
        %v6638 = vunpack.c.l.b16 %v5397
        %v6639 = vunpack.c.h.b16 %v5397
        %v6640 = vunpack.c.l.b16 %v5398
        %v6641 = vunpack.c.h.b16 %v5398
        %v6642 = vunpack.c.l.b16 %v5399
        %v6643 = vunpack.c.h.b16 %v5399
        %v6644 = vunpack.c.l.b16 %v5400
        %v6645 = vunpack.c.h.b16 %v5400
        %v6646 = vunpack.c.l.b16 %v5401
        %v6647 = vunpack.c.h.b16 %v5401
        %v6648 = vunpack.c.l.b16 %v5402
        %v6649 = vunpack.c.h.b16 %v5402
        %v6650 = vunpack.c.l.b16 %v5403
        %v6651 = vunpack.c.h.b16 %v5403
        %v6652 = vunpack.c.l.b16 %v5404
        %v6653 = vunpack.c.h.b16 %v5404
        %v6654 = vunpack.c.l.b16 %v5405
        %v6655 = vunpack.c.h.b16 %v5405
        %v6656 = vunpack.c.l.b16 %v5406
        %v6657 = vunpack.c.h.b16 %v5406
        %v6658 = vunpack.c.l.b16 %v5407
        %v6659 = vunpack.c.h.b16 %v5407
        %v6660 = vunpack.c.l.b16 %v5408
        %v6661 = vunpack.c.h.b16 %v5408
        %v6662 = vunpack.c.l.b16 %v5409
        %v6663 = vunpack.c.h.b16 %v5409
        %v6664 = vunpack.c.l.b16 %v5410
        %v6665 = vunpack.c.h.b16 %v5410
        %v6666 = vunpack.c.l.b16 %v5411
        %v6667 = vunpack.c.h.b16 %v5411
        %v6668 = vunpack.c.l.b16 %v5412
        %v6669 = vunpack.c.h.b16 %v5412
        %v6670 = vunpack.c.l.b16 %v5413
        %v6671 = vunpack.c.h.b16 %v5413
        %v6672 = vunpack.c.l.b16 %v5414
        %v6673 = vunpack.c.h.b16 %v5414
        %v6674 = vunpack.c.l.b16 %v5415
        %v6675 = vunpack.c.h.b16 %v5415
        %v6676 = vunpack.c.l.b16 %v5416
        %v6677 = vunpack.c.h.b16 %v5416
        %v6678 = vunpack.c.l.b16 %v5417
        %v6679 = vunpack.c.h.b16 %v5417
        %v6680 = vunpack.c.l.b16 %v5418
        %v6681 = vunpack.c.h.b16 %v5418
        %v6682 = vunpack.c.l.b16 %v5419
        %v6683 = vunpack.c.h.b16 %v5419
        %v6684 = vunpack.c.l.b16 %v5420
        %v6685 = vunpack.c.h.b16 %v5420
        %v6686 = vunpack.c.l.b16 %v5421
        %v6687 = vunpack.c.h.b16 %v5421
        %v6688 = vunpack.c.l.b16 %v5422
        %v6689 = vunpack.c.h.b16 %v5422
        %v6690 = vunpack.c.l.b16 %v5423
        %v6691 = vunpack.c.h.b16 %v5423
        %v6692 = vunpack.c.l.b16 %v5424
        %v6693 = vunpack.c.h.b16 %v5424
        %v6694 = vunpack.c.l.b16 %v5425
        %v6695 = vunpack.c.h.b16 %v5425
        %v6696 = vunpack.c.l.b16 %v5426
        %v6697 = vunpack.c.h.b16 %v5426
        %v6698 = vunpack.c.l.b16 %v5427
        %v6699 = vunpack.c.h.b16 %v5427
        %v6700 = vunpack.c.l.b16 %v5428
        %v6701 = vunpack.c.h.b16 %v5428
        %v6702 = vunpack.c.l.b16 %v5429
        %v6703 = vunpack.c.h.b16 %v5429
        %v6704 = vunpack.c.l.b16 %v5430
        %v6705 = vunpack.c.h.b16 %v5430
        %v6706 = vunpack.c.l.b16 %v5431
        %v6707 = vunpack.c.h.b16 %v5431
        %v6708 = vunpack.c.l.b16 %v5432
        %v6709 = vunpack.c.h.b16 %v5432
        %v6710 = vunpack.c.l.b16 %v5433
        %v6711 = vunpack.c.h.b16 %v5433
        %v6712 = vunpack.c.l.b16 %v5434
        %v6713 = vunpack.c.h.b16 %v5434
        %v6714 = vunpack.c.l.b16 %v5435
        %v6715 = vunpack.c.h.b16 %v5435
        %v6716 = vunpack.c.l.b16 %v5436
        %v6717 = vunpack.c.h.b16 %v5436
        %v6718 = vunpack.c.l.b16 %v5437
        %v6719 = vunpack.c.h.b16 %v5437
        %v6720 = vunpack.c.l.b16 %v5438
        %v6721 = vunpack.c.h.b16 %v5438
        %v6722 = vunpack.c.l.b16 %v5439
        %v6723 = vunpack.c.h.b16 %v5439
        %v6724 = vunpack.c.l.b16 %v5440
        %v6725 = vunpack.c.h.b16 %v5440
        %v6726 = vunpack.c.l.b16 %v5441
        %v6727 = vunpack.c.h.b16 %v5441
        %v6728 = vunpack.c.l.b16 %v5442
        %v6729 = vunpack.c.h.b16 %v5442
        %v6730 = vunpack.c.l.b16 %v5443
        %v6731 = vunpack.c.h.b16 %v5443
        %v6732 = vunpack.c.l.b16 %v5444
        %v6733 = vunpack.c.h.b16 %v5444
        %v6734 = vunpack.c.l.b16 %v5445
        %v6735 = vunpack.c.h.b16 %v5445
        %v6736 = vunpack.c.l.b16 %v5446
        %v6737 = vunpack.c.h.b16 %v5446
        %v6738 = vunpack.c.l.b16 %v5447
        %v6739 = vunpack.c.h.b16 %v5447
        %v6740 = vunpack.c.l.b16 %v5448
        %v6741 = vunpack.c.h.b16 %v5448
        %v6742 = vunpack.c.l.b16 %v5449
        %v6743 = vunpack.c.h.b16 %v5449
        %v6744 = vunpack.c.l.b16 %v5450
        %v6745 = vunpack.c.h.b16 %v5450
        %v6746 = vunpack.c.l.b16 %v5451
        %v6747 = vunpack.c.h.b16 %v5451
        %v6748 = vunpack.c.l.b16 %v5452
        %v6749 = vunpack.c.h.b16 %v5452
        %v6750 = vunpack.c.l.b16 %v5453
        %v6751 = vunpack.c.h.b16 %v5453
        %v6752 = vunpack.c.l.b16 %v5454
        %v6753 = vunpack.c.h.b16 %v5454
        %v6754 = vunpack.c.l.b16 %v5455
        %v6755 = vunpack.c.h.b16 %v5455
        %v6756 = vunpack.c.l.b16 %v5456
        %v6757 = vunpack.c.h.b16 %v5456
        %v6758 = vunpack.c.l.b16 %v5457
        %v6759 = vunpack.c.h.b16 %v5457
        %v6760 = vunpack.c.l.b16 %v5458
        %v6761 = vunpack.c.h.b16 %v5458
        %v6762 = vunpack.c.l.b16 %v5459
        %v6763 = vunpack.c.h.b16 %v5459
        %v6764 = vunpack.c.l.b16 %v5460
        %v6765 = vunpack.c.h.b16 %v5460
        %v6766 = vunpack.c.l.b16 %v5461
        %v6767 = vunpack.c.h.b16 %v5461
        %v6768 = vunpack.c.l.b16 %v5462
        %v6769 = vunpack.c.h.b16 %v5462
        %v6770 = vunpack.c.l.b16 %v5463
        %v6771 = vunpack.c.h.b16 %v5463
        %v6772 = vunpack.c.l.b16 %v5464
        %v6773 = vunpack.c.h.b16 %v5464
        %v6774 = vunpack.c.l.b16 %v5465
        %v6775 = vunpack.c.h.b16 %v5465
        %v6776 = vunpack.c.l.b16 %v5466
        %v6777 = vunpack.c.h.b16 %v5466
        %v6778 = vunpack.c.l.b16 %v5467
        %v6779 = vunpack.c.h.b16 %v5467
        %v6780 = vunpack.c.l.b16 %v5468
        %v6781 = vunpack.c.h.b16 %v5468
        %v6782 = vunpack.c.l.b16 %v5469
        %v6783 = vunpack.c.h.b16 %v5469
        %v6784 = vunpack.c.l.b16 %v5470
        %v6785 = vunpack.c.h.b16 %v5470
        %v6786 = vunpack.c.l.b16 %v5471
        %v6787 = vunpack.c.h.b16 %v5471
        %v6788 = vunpack.c.l.b16 %v5472
        %v6789 = vunpack.c.h.b16 %v5472
        %v6790 = vunpack.c.l.b16 %v5473
        %v6791 = vunpack.c.h.b16 %v5473
        %v6792 = vunpack.c.l.b16 %v5474
        %v6793 = vunpack.c.h.b16 %v5474
        %v6794 = vunpack.c.l.b16 %v5475
        %v6795 = vunpack.c.h.b16 %v5475
        %v6796 = vunpack.c.l.b16 %v5476
        %v6797 = vunpack.c.h.b16 %v5476
        %v6798 = vunpack.c.l.b16 %v5477
        %v6799 = vunpack.c.h.b16 %v5477
        %v6800 = vunpack.c.l.b16 %v5478
        %v6801 = vunpack.c.h.b16 %v5478
        %v6802 = vunpack.c.l.b16 %v5479
        %v6803 = vunpack.c.h.b16 %v5479
        %v6804 = vunpack.c.l.b16 %v5480
        %v6805 = vunpack.c.h.b16 %v5480
        %v6806 = vunpack.c.l.b16 %v5481
        %v6807 = vunpack.c.h.b16 %v5481
        %v6808 = vunpack.c.l.b16 %v5482
        %v6809 = vunpack.c.h.b16 %v5482
        %v6810 = vunpack.c.l.b16 %v5483
        %v6811 = vunpack.c.h.b16 %v5483
        %v6812 = vunpack.c.l.b16 %v5484
        %v6813 = vunpack.c.h.b16 %v5484
        %v6814 = vunpack.c.l.b16 %v5485
        %v6815 = vunpack.c.h.b16 %v5485
        %v6816 = vunpack.c.l.b16 %v5486
        %v6817 = vunpack.c.h.b16 %v5486
        %v6818 = vunpack.c.l.b16 %v5487
        %v6819 = vunpack.c.h.b16 %v5487
        %v6820 = vunpack.c.l.b16 %v5488
        %v6821 = vunpack.c.h.b16 %v5488
        %v6822 = vunpack.c.l.b16 %v5489
        %v6823 = vunpack.c.h.b16 %v5489
        %v6824 = vunpack.c.l.b16 %v5490
        %v6825 = vunpack.c.h.b16 %v5490
        %v6826 = vunpack.c.l.b16 %v5491
        %v6827 = vunpack.c.h.b16 %v5491
        %v6828 = vunpack.c.l.b16 %v5492
        %v6829 = vunpack.c.h.b16 %v5492
        %v6830 = vunpack.c.l.b16 %v5493
        %v6831 = vunpack.c.h.b16 %v5493
        %v6832 = vunpack.c.l.b16 %v5494
        %v6833 = vunpack.c.h.b16 %v5494
        %v6834 = vunpack.c.l.b16 %v5495
        %v6835 = vunpack.c.h.b16 %v5495
        %v6836 = vunpack.c.l.b16 %v5496
        %v6837 = vunpack.c.h.b16 %v5496
        %v6838 = vunpack.c.l.b16 %v5497
        %v6839 = vunpack.c.h.b16 %v5497
        %v6840 = vunpack.c.l.b16 %v5498
        %v6841 = vunpack.c.h.b16 %v5498
        %v6842 = vunpack.c.l.b16 %v5499
        %v6843 = vunpack.c.h.b16 %v5499
        %v6844 = vunpack.c.l.b16 %v5500
        %v6845 = vunpack.c.h.b16 %v5500
        %v6846 = vunpack.c.l.b16 %v5501
        %v6847 = vunpack.c.h.b16 %v5501
        %v6848 = vunpack.c.l.b16 %v5502
        %v6849 = vunpack.c.h.b16 %v5502
        %v6850 = vunpack.c.l.b16 %v5503
        %v6851 = vunpack.c.h.b16 %v5503
        %v6852 = vunpack.c.l.b16 %v5504
        %v6853 = vunpack.c.h.b16 %v5504
        %v6854 = vunpack.c.l.b16 %v5505
        %v6855 = vunpack.c.h.b16 %v5505
        %v6856 = vunpack.c.l.b16 %v5506
        %v6857 = vunpack.c.h.b16 %v5506
        %v6858 = vunpack.c.l.b16 %v5507
        %v6859 = vunpack.c.h.b16 %v5507
        %v6860 = vunpack.c.l.b16 %v5508
        %v6861 = vunpack.c.h.b16 %v5508
        %v6862 = vunpack.c.l.b16 %v5509
        %v6863 = vunpack.c.h.b16 %v5509
        %v6864 = vunpack.c.l.b16 %v5510
        %v6865 = vunpack.c.h.b16 %v5510
        %v6866 = vunpack.c.l.b16 %v5511
        %v6867 = vunpack.c.h.b16 %v5511
        %v6868 = vunpack.c.l.b16 %v5512
        %v6869 = vunpack.c.h.b16 %v5512
        %v6870 = vunpack.c.l.b16 %v5513
        %v6871 = vunpack.c.h.b16 %v5513
        %v6872 = vunpack.c.l.b16 %v5514
        %v6873 = vunpack.c.h.b16 %v5514
        %v6874 = vunpack.c.l.b16 %v5515
        %v6875 = vunpack.c.h.b16 %v5515
        %v6876 = vunpack.c.l.b16 %v5516
        %v6877 = vunpack.c.h.b16 %v5516
        %v6878 = vunpack.c.l.b16 %v5517
        %v6879 = vunpack.c.h.b16 %v5517
        %v6880 = vunpack.c.l.b16 %v5518
        %v6881 = vunpack.c.h.b16 %v5518
        %v6882 = vunpack.c.l.b16 %v5519
        %v6883 = vunpack.c.h.b16 %v5519
        %v6884 = vunpack.c.l.b16 %v5520
        %v6885 = vunpack.c.h.b16 %v5520
        %v6886 = vunpack.c.l.b16 %v5521
        %v6887 = vunpack.c.h.b16 %v5521
        %v6888 = vunpack.c.l.b16 %v5522
        %v6889 = vunpack.c.h.b16 %v5522
        %v6890 = vunpack.c.l.b16 %v5523
        %v6891 = vunpack.c.h.b16 %v5523
        %v6892 = vunpack.c.l.b16 %v5524
        %v6893 = vunpack.c.h.b16 %v5524
        %v6894 = vunpack.c.l.b16 %v5525
        %v6895 = vunpack.c.h.b16 %v5525
        %v6896 = vunpack.c.l.b16 %v5526
        %v6897 = vunpack.c.h.b16 %v5526
        %v6898 = vunpack.c.l.b16 %v5527
        %v6899 = vunpack.c.h.b16 %v5527
        %v6900 = vunpack.c.l.b16 %v5528
        %v6901 = vunpack.c.h.b16 %v5528
        %v6902 = vunpack.c.l.b16 %v5529
        %v6903 = vunpack.c.h.b16 %v5529
        %v6904 = vunpack.c.l.b16 %v5530
        %v6905 = vunpack.c.h.b16 %v5530
        %v6906 = vunpack.c.l.b16 %v5531
        %v6907 = vunpack.c.h.b16 %v5531
        %v6908 = vunpack.c.l.b16 %v5532
        %v6909 = vunpack.c.h.b16 %v5532
        %v6910 = vunpack.c.l.b16 %v5533
        %v6911 = vunpack.c.h.b16 %v5533
        %v6912 = vunpack.c.l.b16 %v5534
        %v6913 = vunpack.c.h.b16 %v5534
        %v6914 = vunpack.c.l.b16 %v5535
        %v6915 = vunpack.c.h.b16 %v5535
        %v6916 = vunpack.c.l.b16 %v5536
        %v6917 = vunpack.c.h.b16 %v5536
        %v6918 = vunpack.c.l.b16 %v5537
        %v6919 = vunpack.c.h.b16 %v5537
        %v6920 = vunpack.c.l.b16 %v5538
        %v6921 = vunpack.c.h.b16 %v5538
        %v6922 = vunpack.c.l.b16 %v5539
        %v6923 = vunpack.c.h.b16 %v5539
        %v6924 = vunpack.c.l.b16 %v5540
        %v6925 = vunpack.c.h.b16 %v5540
        %v6926 = vunpack.c.l.b16 %v5541
        %v6927 = vunpack.c.h.b16 %v5541
        %v6928 = vunpack.c.l.b16 %v5542
        %v6929 = vunpack.c.h.b16 %v5542
        %v6930 = vunpack.c.l.b16 %v5543
        %v6931 = vunpack.c.h.b16 %v5543
        %v6932 = vunpack.c.l.b16 %v5544
        %v6933 = vunpack.c.h.b16 %v5544
        %v6934 = vunpack.c.l.b16 %v5545
        %v6935 = vunpack.c.h.b16 %v5545
        %v6936 = vunpack.c.l.b16 %v5546
        %v6937 = vunpack.c.h.b16 %v5546
        %v6938 = vunpack.c.l.b16 %v5547
        %v6939 = vunpack.c.h.b16 %v5547
        %v6940 = vunpack.c.l.b16 %v5548
        %v6941 = vunpack.c.h.b16 %v5548
        %v6942 = vunpack.c.l.b16 %v5549
        %v6943 = vunpack.c.h.b16 %v5549
        %v6944 = vunpack.c.l.b16 %v5550
        %v6945 = vunpack.c.h.b16 %v5550
        %v6946 = vunpack.c.l.b16 %v5551
        %v6947 = vunpack.c.h.b16 %v5551
        %v6948 = vunpack.c.l.b16 %v5552
        %v6949 = vunpack.c.h.b16 %v5552
        %v6950 = vunpack.c.l.b16 %v5553
        %v6951 = vunpack.c.h.b16 %v5553
        %v6952 = vunpack.c.l.b16 %v5554
        %v6953 = vunpack.c.h.b16 %v5554
        %v6954 = vunpack.c.l.b16 %v5555
        %v6955 = vunpack.c.h.b16 %v5555
        %v6956 = vunpack.c.l.b16 %v5556
        %v6957 = vunpack.c.h.b16 %v5556
        %v6958 = vunpack.c.l.b16 %v5557
        %v6959 = vunpack.c.h.b16 %v5557
        %v6960 = vunpack.c.l.b16 %v5558
        %v6961 = vunpack.c.h.b16 %v5558
        %v6962 = vunpack.c.l.b16 %v5559
        %v6963 = vunpack.c.h.b16 %v5559
        %v6964 = vunpack.c.l.b16 %v5560
        %v6965 = vunpack.c.h.b16 %v5560
        %v6966 = vunpack.c.l.b16 %v5561
        %v6967 = vunpack.c.h.b16 %v5561
        %v6968 = vunpack.c.l.b16 %v5562
        %v6969 = vunpack.c.h.b16 %v5562
        %v6970 = vunpack.c.l.b16 %v5563
        %v6971 = vunpack.c.h.b16 %v5563
        %v6972 = vunpack.c.l.b16 %v5564
        %v6973 = vunpack.c.h.b16 %v5564
        %v6974 = vunpack.c.l.b16 %v5565
        %v6975 = vunpack.c.h.b16 %v5565
        %v6976 = vunpack.c.l.b16 %v5566
        %v6977 = vunpack.c.h.b16 %v5566
        %v6978 = vunpack.c.l.b16 %v5567
        %v6979 = vunpack.c.h.b16 %v5567
        %v6980 = vunpack.c.l.b16 %v5568
        %v6981 = vunpack.c.h.b16 %v5568
        %v6982 = vunpack.c.l.b16 %v5569
        %v6983 = vunpack.c.h.b16 %v5569
        %v6984 = vunpack.c.l.b16 %v5570
        %v6985 = vunpack.c.h.b16 %v5570
        %v6986 = vunpack.c.l.b16 %v5571
        %v6987 = vunpack.c.h.b16 %v5571
        %v6988 = vunpack.c.l.b16 %v5572
        %v6989 = vunpack.c.h.b16 %v5572
        %v6990 = vunpack.c.l.b16 %v5573
        %v6991 = vunpack.c.h.b16 %v5573
        %v6992 = vunpack.c.l.b16 %v5574
        %v6993 = vunpack.c.h.b16 %v5574
        %v6994 = vunpack.c.l.b16 %v5575
        %v6995 = vunpack.c.h.b16 %v5575
        %v6996 = vunpack.c.l.b16 %v5576
        %v6997 = vunpack.c.h.b16 %v5576
        %v6998 = vunpack.c.l.b16 %v5577
        %v6999 = vunpack.c.h.b16 %v5577
        %v7000 = vunpack.c.l.b16 %v5578
        %v7001 = vunpack.c.h.b16 %v5578
        %v7002 = vunpack.c.l.b16 %v5579
        %v7003 = vunpack.c.h.b16 %v5579
        %v7004 = vunpack.c.l.b16 %v5580
        %v7005 = vunpack.c.h.b16 %v5580
        %v7006 = vunpack.c.l.b16 %v5581
        %v7007 = vunpack.c.h.b16 %v5581
        %v7008 = vunpack.c.l.b16 %v5582
        %v7009 = vunpack.c.h.b16 %v5582
        %v7010 = vunpack.c.l.b16 %v5583
        %v7011 = vunpack.c.h.b16 %v5583
        %v7012 = vunpack.c.l.b16 %v5584
        %v7013 = vunpack.c.h.b16 %v5584
        %v7014 = vunpack.c.l.b16 %v5585
        %v7015 = vunpack.c.h.b16 %v5585
        %v7016 = vunpack.c.l.b16 %v5586
        %v7017 = vunpack.c.h.b16 %v5586
        %v7018 = vunpack.c.l.b16 %v5587
        %v7019 = vunpack.c.h.b16 %v5587
        %v7020 = vunpack.c.l.b16 %v5588
        %v7021 = vunpack.c.h.b16 %v5588
        %v7022 = vunpack.c.l.b16 %v5589
        %v7023 = vunpack.c.h.b16 %v5589
        %v7024 = vunpack.c.l.b16 %v5590
        %v7025 = vunpack.c.h.b16 %v5590
        %v7026 = vunpack.c.l.b16 %v5591
        %v7027 = vunpack.c.h.b16 %v5591
        %v7028 = vunpack.c.l.b16 %v5592
        %v7029 = vunpack.c.h.b16 %v5592
        %v7030 = vunpack.c.l.b16 %v5593
        %v7031 = vunpack.c.h.b16 %v5593
        %v7032 = vunpack.c.l.b16 %v5594
        %v7033 = vunpack.c.h.b16 %v5594
        %v7034 = vunpack.c.l.b16 %v5595
        %v7035 = vunpack.c.h.b16 %v5595
        %v7036 = vunpack.c.l.b16 %v5596
        %v7037 = vunpack.c.h.b16 %v5596
        %v7038 = vunpack.c.l.b16 %v5597
        %v7039 = vunpack.c.h.b16 %v5597
        %v7040 = vunpack.c.l.b16 %v5598
        %v7041 = vunpack.c.h.b16 %v5598
        %v7042 = vunpack.c.l.b16 %v5599
        %v7043 = vunpack.c.h.b16 %v5599
        %v7044 = vunpack.c.l.b16 %v5600
        %v7045 = vunpack.c.h.b16 %v5600
        %v7046 = vunpack.c.l.b16 %v5601
        %v7047 = vunpack.c.h.b16 %v5601
        %v7048 = vunpack.c.l.b16 %v5602
        %v7049 = vunpack.c.h.b16 %v5602
        %v7050 = vunpack.c.l.b16 %v5603
        %v7051 = vunpack.c.h.b16 %v5603
        %v7052 = vunpack.c.l.b16 %v5604
        %v7053 = vunpack.c.h.b16 %v5604
        %v7054 = vunpack.c.l.b16 %v5605
        %v7055 = vunpack.c.h.b16 %v5605
        %v7056 = vunpack.c.l.b16 %v5606
        %v7057 = vunpack.c.h.b16 %v5606
        %v7058 = vunpack.c.l.b16 %v5607
        %v7059 = vunpack.c.h.b16 %v5607
        %v7060 = vunpack.c.l.b16 %v5608
        %v7061 = vunpack.c.h.b16 %v5608
        %v7062 = vunpack.c.l.b16 %v5609
        %v7063 = vunpack.c.h.b16 %v5609
        %v7064 = vunpack.c.l.b16 %v5610
        %v7065 = vunpack.c.h.b16 %v5610
        %v7066 = vunpack.c.l.b16 %v5611
        %v7067 = vunpack.c.h.b16 %v5611
        %v7068 = vunpack.c.l.b16 %v5612
        %v7069 = vunpack.c.h.b16 %v5612
        %v7070 = vunpack.c.l.b16 %v5613
        %v7071 = vunpack.c.h.b16 %v5613
        %v7072 = vunpack.c.l.b16 %v5614
        %v7073 = vunpack.c.h.b16 %v5614
        %v7074 = vunpack.c.l.b16 %v5615
        %v7075 = vunpack.c.h.b16 %v5615
        %v7076 = vunpack.c.l.b16 %v5616
        %v7077 = vunpack.c.h.b16 %v5616
        %v7078 = vunpack.c.l.b16 %v5617
        %v7079 = vunpack.c.h.b16 %v5617
        %v7080 = vunpack.c.l.b16 %v5618
        %v7081 = vunpack.c.h.b16 %v5618
        %v7082 = vunpack.c.l.b16 %v5619
        %v7083 = vunpack.c.h.b16 %v5619
        %v7084 = vunpack.c.l.b16 %v5620
        %v7085 = vunpack.c.h.b16 %v5620
        %v7086 = vunpack.c.l.b16 %v5621
        %v7087 = vunpack.c.h.b16 %v5621
        %v7088 = vunpack.c.l.b16 %v5622
        %v7089 = vunpack.c.h.b16 %v5622
        %v7090 = vunpack.c.l.b16 %v5623
        %v7091 = vunpack.c.h.b16 %v5623
        %v7092 = vunpack.c.l.b16 %v5624
        %v7093 = vunpack.c.h.b16 %v5624
        %v7094 = vunpack.c.l.b16 %v5625
        %v7095 = vunpack.c.h.b16 %v5625
        %v7096 = vunpack.c.l.b16 %v5626
        %v7097 = vunpack.c.h.b16 %v5626
        %v7098 = vunpack.c.l.b16 %v5627
        %v7099 = vunpack.c.h.b16 %v5627
        %v7100 = vunpack.c.l.b16 %v5628
        %v7101 = vunpack.c.h.b16 %v5628
        %v7102 = vunpack.c.l.b16 %v5629
        %v7103 = vunpack.c.h.b16 %v5629
        %v7104 = vunpack.c.l.b16 %v5630
        %v7105 = vunpack.c.h.b16 %v5630
        %v7106 = vunpack.c.l.b16 %v5631
        %v7107 = vunpack.c.h.b16 %v5631
        %v7108 = vunpack.c.l.b16 %v5632
        %v7109 = vunpack.c.h.b16 %v5632
        %v7110 = vunpack.c.l.b16 %v5633
        %v7111 = vunpack.c.h.b16 %v5633
        %v7112 = vunpack.c.l.b16 %v5634
        %v7113 = vunpack.c.h.b16 %v5634
        %v7114 = vunpack.c.l.b16 %v5635
        %v7115 = vunpack.c.h.b16 %v5635
        %v7116 = vunpack.c.l.b16 %v5636
        %v7117 = vunpack.c.h.b16 %v5636
        %v7118 = vunpack.c.l.b16 %v5637
        %v7119 = vunpack.c.h.b16 %v5637
        %v7120 = vunpack.c.l.b16 %v5638
        %v7121 = vunpack.c.h.b16 %v5638
        %v7122 = vunpack.c.l.b16 %v5639
        %v7123 = vunpack.c.h.b16 %v5639
        %v7124 = vunpack.c.l.b16 %v5640
        %v7125 = vunpack.c.h.b16 %v5640
        %v7126 = vunpack.c.l.b16 %v5641
        %v7127 = vunpack.c.h.b16 %v5641
        %v7128 = vunpack.c.l.b16 %v5642
        %v7129 = vunpack.c.h.b16 %v5642
        %v7130 = vunpack.c.l.b16 %v5643
        %v7131 = vunpack.c.h.b16 %v5643
        %v7132 = vunpack.c.l.b16 %v5644
        %v7133 = vunpack.c.h.b16 %v5644
        %v7134 = vunpack.c.l.b16 %v5645
        %v7135 = vunpack.c.h.b16 %v5645
        %v7136 = vunpack.c.l.b16 %v5646
        %v7137 = vunpack.c.h.b16 %v5646
        %v7138 = vunpack.c.l.b16 %v5647
        %v7139 = vunpack.c.h.b16 %v5647
        %v7140 = vunpack.c.l.b16 %v5648
        %v7141 = vunpack.c.h.b16 %v5648
        %v7142 = vunpack.c.l.b16 %v5649
        %v7143 = vunpack.c.h.b16 %v5649
        %v7144 = vunpack.c.l.b16 %v5650
        %v7145 = vunpack.c.h.b16 %v5650
        %v7146 = vunpack.c.l.b16 %v5651
        %v7147 = vunpack.c.h.b16 %v5651
        %v7148 = vunpack.c.l.b16 %v5652
        %v7149 = vunpack.c.h.b16 %v5652
        %v7150 = vunpack.c.l.b16 %v5653
        %v7151 = vunpack.c.h.b16 %v5653
        %v7152 = vunpack.c.l.b16 %v5654
        %v7153 = vunpack.c.h.b16 %v5654
        %v7154 = vunpack.c.l.b16 %v5655
        %v7155 = vunpack.c.h.b16 %v5655
        %v7156 = vunpack.c.l.b16 %v5656
        %v7157 = vunpack.c.h.b16 %v5656
        %v7158 = vunpack.c.l.b16 %v5657
        %v7159 = vunpack.c.h.b16 %v5657
        %v7160 = vunpack.c.l.b16 %v5658
        %v7161 = vunpack.c.h.b16 %v5658
        %v7162 = vunpack.c.l.b16 %v5659
        %v7163 = vunpack.c.h.b16 %v5659
        %v7164 = vunpack.c.l.b16 %v5660
        %v7165 = vunpack.c.h.b16 %v5660
        %v7166 = vunpack.c.l.b16 %v5661
        %v7167 = vunpack.c.h.b16 %v5661
        %v7168 = vunpack.c.l.b16 %v5662
        %v7169 = vunpack.c.h.b16 %v5662
        %v7170 = vunpack.c.l.b16 %v5663
        %v7171 = vunpack.c.h.b16 %v5663
        %v7172 = vunpack.c.l.b16 %v5664
        %v7173 = vunpack.c.h.b16 %v5664
        %v7174 = vunpack.c.l.b16 %v5665
        %v7175 = vunpack.c.h.b16 %v5665
        %v7176 = vunpack.c.l.b16 %v5666
        %v7177 = vunpack.c.h.b16 %v5666
        %v7178 = vunpack.c.l.b16 %v5667
        %v7179 = vunpack.c.h.b16 %v5667
        %v7180 = vunpack.c.l.b16 %v5668
        %v7181 = vunpack.c.h.b16 %v5668
        %v7182 = vunpack.c.l.b16 %v5669
        %v7183 = vunpack.c.h.b16 %v5669
        %v7184 = vunpack.c.l.b16 %v5670
        %v7185 = vunpack.c.h.b16 %v5670
        %v7186 = vunpack.c.l.b16 %v5671
        %v7187 = vunpack.c.h.b16 %v5671
        %v7188 = vunpack.c.l.b16 %v5672
        %v7189 = vunpack.c.h.b16 %v5672
        %v7190 = vunpack.c.l.b16 %v5673
        %v7191 = vunpack.c.h.b16 %v5673
        %v7192 = vunpack.c.l.b16 %v5674
        %v7193 = vunpack.c.h.b16 %v5674
        %v7194 = vunpack.c.l.b16 %v5675
        %v7195 = vunpack.c.h.b16 %v5675
        %v7196 = vunpack.c.l.b16 %v5676
        %v7197 = vunpack.c.h.b16 %v5676
        %v7198 = vunpack.c.l.b16 %v5677
        %v7199 = vunpack.c.h.b16 %v5677
        %v7200 = vunpack.c.l.b16 %v5678
        %v7201 = vunpack.c.h.b16 %v5678
        %v7202 = vunpack.c.l.b16 %v5679
        %v7203 = vunpack.c.h.b16 %v5679
        %v7204 = vunpack.c.l.b16 %v5680
        %v7205 = vunpack.c.h.b16 %v5680
        %v7206 = vunpack.c.l.b16 %v5681
        %v7207 = vunpack.c.h.b16 %v5681
        %v7208 = vunpack.c.l.b16 %v5682
        %v7209 = vunpack.c.h.b16 %v5682
        %v7210 = vunpack.c.l.b16 %v5683
        %v7211 = vunpack.c.h.b16 %v5683
        %v7212 = vunpack.c.l.b16 %v5684
        %v7213 = vunpack.c.h.b16 %v5684
        %v7214 = vunpack.c.l.b16 %v5685
        %v7215 = vunpack.c.h.b16 %v5685
        %v7216 = vunpack.c.l.b16 %v5686
        %v7217 = vunpack.c.h.b16 %v5686
        %v7218 = vunpack.c.l.b16 %v5687
        %v7219 = vunpack.c.h.b16 %v5687
        %v7220 = vunpack.c.l.b16 %v5688
        %v7221 = vunpack.c.h.b16 %v5688
        %v7222 = vunpack.c.l.b16 %v5689
        %v7223 = vunpack.c.h.b16 %v5689
        %v7224 = vunpack.c.l.b16 %v5690
        %v7225 = vunpack.c.h.b16 %v5690
        %v7226 = vunpack.c.l.b16 %v5691
        %v7227 = vunpack.c.h.b16 %v5691
        %v7228 = vunpack.c.l.b16 %v5692
        %v7229 = vunpack.c.h.b16 %v5692
        %v7230 = vunpack.c.l.b16 %v5693
        %v7231 = vunpack.c.h.b16 %v5693
        %v7232 = vunpack.c.l.b16 %v5694
        %v7233 = vunpack.c.h.b16 %v5694
        %v7234 = vunpack.c.l.b16 %v5695
        %v7235 = vunpack.c.h.b16 %v5695
        %v7236 = vunpack.c.l.b16 %v5696
        %v7237 = vunpack.c.h.b16 %v5696
        %v7238 = vunpack.c.l.b16 %v5697
        %v7239 = vunpack.c.h.b16 %v5697
        %v7240 = vunpack.c.l.b16 %v5698
        %v7241 = vunpack.c.h.b16 %v5698
        %v7242 = vunpack.c.l.b16 %v5699
        %v7243 = vunpack.c.h.b16 %v5699
        %v7244 = vunpack.c.l.b16 %v5700
        %v7245 = vunpack.c.h.b16 %v5700
        %v7246 = vunpack.c.l.b16 %v5701
        %v7247 = vunpack.c.h.b16 %v5701
        %v7248 = vunpack.c.l.b16 %v5702
        %v7249 = vunpack.c.h.b16 %v5702
        %v7250 = vunpack.c.l.b16 %v5703
        %v7251 = vunpack.c.h.b16 %v5703
        %v7252 = vunpack.c.l.b16 %v5704
        %v7253 = vunpack.c.h.b16 %v5704
        %v7254 = vunpack.c.l.b16 %v5705
        %v7255 = vunpack.c.h.b16 %v5705
        %v7256 = vunpack.c.l.b16 %v5706
        %v7257 = vunpack.c.h.b16 %v5706
        %v7258 = vunpack.c.l.b16 %v5707
        %v7259 = vunpack.c.h.b16 %v5707
        %v7260 = vunpack.c.l.b16 %v5708
        %v7261 = vunpack.c.h.b16 %v5708
        %v7262 = vunpack.c.l.b16 %v5709
        %v7263 = vunpack.c.h.b16 %v5709
        %v7264 = vunpack.c.l.b16 %v5710
        %v7265 = vunpack.c.h.b16 %v5710
        %v7266 = vunpack.c.l.b16 %v5711
        %v7267 = vunpack.c.h.b16 %v5711
        %v7268 = vunpack.c.l.b16 %v5712
        %v7269 = vunpack.c.h.b16 %v5712
        %v7270 = vunpack.c.l.b16 %v5713
        %v7271 = vunpack.c.h.b16 %v5713
        %v7272 = vunpack.c.l.b16 %v5714
        %v7273 = vunpack.c.h.b16 %v5714
        %v7274 = vunpack.c.l.b16 %v5715
        %v7275 = vunpack.c.h.b16 %v5715
        %v7276 = vunpack.c.l.b16 %v5716
        %v7277 = vunpack.c.h.b16 %v5716
        %v7278 = vunpack.c.l.b16 %v5717
        %v7279 = vunpack.c.h.b16 %v5717
        %v7280 = vunpack.c.l.b16 %v5718
        %v7281 = vunpack.c.h.b16 %v5718
        %v7282 = vunpack.c.l.b16 %v5719
        %v7283 = vunpack.c.h.b16 %v5719
        %v7284 = vunpack.c.l.b16 %v5720
        %v7285 = vunpack.c.h.b16 %v5720
        %v7286 = vunpack.c.l.b16 %v5721
        %v7287 = vunpack.c.h.b16 %v5721
        %v7288 = vunpack.c.l.b16 %v5722
        %v7289 = vunpack.c.h.b16 %v5722
        %v7290 = vunpack.c.l.b16 %v5723
        %v7291 = vunpack.c.h.b16 %v5723
        %v7292 = vunpack.c.l.b16 %v5724
        %v7293 = vunpack.c.h.b16 %v5724
        %v7294 = vunpack.c.l.b16 %v5725
        %v7295 = vunpack.c.h.b16 %v5725
        %v7296 = vunpack.c.l.b16 %v5726
        %v7297 = vunpack.c.h.b16 %v5726
        %v7298 = vunpack.c.l.b16 %v5727
        %v7299 = vunpack.c.h.b16 %v5727
        %v7300 = vunpack.c.l.b16 %v5728
        %v7301 = vunpack.c.h.b16 %v5728
        %v7302 = vunpack.c.l.b16 %v5729
        %v7303 = vunpack.c.h.b16 %v5729
        %v7304 = vunpack.c.l.b16 %v5730
        %v7305 = vunpack.c.h.b16 %v5730
        %v7306 = vunpack.c.l.b16 %v5731
        %v7307 = vunpack.c.h.b16 %v5731
        %v7308 = vunpack.c.l.b16 %v5732
        %v7309 = vunpack.c.h.b16 %v5732
        %v7310 = vunpack.c.l.b16 %v5733
        %v7311 = vunpack.c.h.b16 %v5733
        %v7312 = vpack.c.b16 %v6296, %v6288
        %v7313 = vpack.c.b16 %v6297, %v6289
        %v7314 = vpack.c.b16 %v6298, %v6290
        %v7315 = vpack.c.b16 %v6299, %v6291
        %v7316 = vpack.c.b16 %v6300, %v6292
        %v7317 = vpack.c.b16 %v6301, %v6293
        %v7318 = vpack.c.b16 %v6302, %v6294
        %v7319 = vpack.c.b16 %v6303, %v6295
        %v7320 = vpack.c.b16 %v6312, %v6304
        %v7321 = vpack.c.b16 %v6313, %v6305
        %v7322 = vpack.c.b16 %v6314, %v6306
        %v7323 = vpack.c.b16 %v6315, %v6307
        %v7324 = vpack.c.b16 %v6316, %v6308
        %v7325 = vpack.c.b16 %v6317, %v6309
        %v7326 = vpack.c.b16 %v6318, %v6310
        %v7327 = vpack.c.b16 %v6319, %v6311
        %v7328 = vpack.c.b16 %v6328, %v6320
        %v7329 = vpack.c.b16 %v6329, %v6321
        %v7330 = vpack.c.b16 %v6330, %v6322
        %v7331 = vpack.c.b16 %v6331, %v6323
        %v7332 = vpack.c.b16 %v6332, %v6324
        %v7333 = vpack.c.b16 %v6333, %v6325
        %v7334 = vpack.c.b16 %v6334, %v6326
        %v7335 = vpack.c.b16 %v6335, %v6327
        %v7336 = vpack.c.b16 %v6344, %v6336
        %v7337 = vpack.c.b16 %v6345, %v6337
        %v7338 = vpack.c.b16 %v6346, %v6338
        %v7339 = vpack.c.b16 %v6347, %v6339
        %v7340 = vpack.c.b16 %v6348, %v6340
        %v7341 = vpack.c.b16 %v6349, %v6341
        %v7342 = vpack.c.b16 %v6350, %v6342
        %v7343 = vpack.c.b16 %v6351, %v6343
        %v7344 = vpack.c.b16 %v6360, %v6352
        %v7345 = vpack.c.b16 %v6361, %v6353
        %v7346 = vpack.c.b16 %v6362, %v6354
        %v7347 = vpack.c.b16 %v6363, %v6355
        %v7348 = vpack.c.b16 %v6364, %v6356
        %v7349 = vpack.c.b16 %v6365, %v6357
        %v7350 = vpack.c.b16 %v6366, %v6358
        %v7351 = vpack.c.b16 %v6367, %v6359
        %v7352 = vpack.c.b16 %v6376, %v6368
        %v7353 = vpack.c.b16 %v6377, %v6369
        %v7354 = vpack.c.b16 %v6378, %v6370
        %v7355 = vpack.c.b16 %v6379, %v6371
        %v7356 = vpack.c.b16 %v6380, %v6372
        %v7357 = vpack.c.b16 %v6381, %v6373
        %v7358 = vpack.c.b16 %v6382, %v6374
        %v7359 = vpack.c.b16 %v6383, %v6375
        %v7360 = vpack.c.b16 %v6392, %v6384
        %v7361 = vpack.c.b16 %v6393, %v6385
        %v7362 = vpack.c.b16 %v6394, %v6386
        %v7363 = vpack.c.b16 %v6395, %v6387
        %v7364 = vpack.c.b16 %v6396, %v6388
        %v7365 = vpack.c.b16 %v6397, %v6389
        %v7366 = vpack.c.b16 %v6398, %v6390
        %v7367 = vpack.c.b16 %v6399, %v6391
        %v7368 = vpack.c.b16 %v6408, %v6400
        %v7369 = vpack.c.b16 %v6409, %v6401
        %v7370 = vpack.c.b16 %v6410, %v6402
        %v7371 = vpack.c.b16 %v6411, %v6403
        %v7372 = vpack.c.b16 %v6412, %v6404
        %v7373 = vpack.c.b16 %v6413, %v6405
        %v7374 = vpack.c.b16 %v6414, %v6406
        %v7375 = vpack.c.b16 %v6415, %v6407
        %v7376 = vpack.c.b16 %v6424, %v6416
        %v7377 = vpack.c.b16 %v6425, %v6417
        %v7378 = vpack.c.b16 %v6426, %v6418
        %v7379 = vpack.c.b16 %v6427, %v6419
        %v7380 = vpack.c.b16 %v6428, %v6420
        %v7381 = vpack.c.b16 %v6429, %v6421
        %v7382 = vpack.c.b16 %v6430, %v6422
        %v7383 = vpack.c.b16 %v6431, %v6423
        %v7384 = vpack.c.b16 %v6440, %v6432
        %v7385 = vpack.c.b16 %v6441, %v6433
        %v7386 = vpack.c.b16 %v6442, %v6434
        %v7387 = vpack.c.b16 %v6443, %v6435
        %v7388 = vpack.c.b16 %v6444, %v6436
        %v7389 = vpack.c.b16 %v6445, %v6437
        %v7390 = vpack.c.b16 %v6446, %v6438
        %v7391 = vpack.c.b16 %v6447, %v6439
        %v7392 = vpack.c.b16 %v6456, %v6448
        %v7393 = vpack.c.b16 %v6457, %v6449
        %v7394 = vpack.c.b16 %v6458, %v6450
        %v7395 = vpack.c.b16 %v6459, %v6451
        %v7396 = vpack.c.b16 %v6460, %v6452
        %v7397 = vpack.c.b16 %v6461, %v6453
        %v7398 = vpack.c.b16 %v6462, %v6454
        %v7399 = vpack.c.b16 %v6463, %v6455
        %v7400 = vpack.c.b16 %v6472, %v6464
        %v7401 = vpack.c.b16 %v6473, %v6465
        %v7402 = vpack.c.b16 %v6474, %v6466
        %v7403 = vpack.c.b16 %v6475, %v6467
        %v7404 = vpack.c.b16 %v6476, %v6468
        %v7405 = vpack.c.b16 %v6477, %v6469
        %v7406 = vpack.c.b16 %v6478, %v6470
        %v7407 = vpack.c.b16 %v6479, %v6471
        %v7408 = vpack.c.b16 %v6488, %v6480
        %v7409 = vpack.c.b16 %v6489, %v6481
        %v7410 = vpack.c.b16 %v6490, %v6482
        %v7411 = vpack.c.b16 %v6491, %v6483
        %v7412 = vpack.c.b16 %v6492, %v6484
        %v7413 = vpack.c.b16 %v6493, %v6485
        %v7414 = vpack.c.b16 %v6494, %v6486
        %v7415 = vpack.c.b16 %v6495, %v6487
        %v7416 = vpack.c.b16 %v6504, %v6496
        %v7417 = vpack.c.b16 %v6505, %v6497
        %v7418 = vpack.c.b16 %v6506, %v6498
        %v7419 = vpack.c.b16 %v6507, %v6499
        %v7420 = vpack.c.b16 %v6508, %v6500
        %v7421 = vpack.c.b16 %v6509, %v6501
        %v7422 = vpack.c.b16 %v6510, %v6502
        %v7423 = vpack.c.b16 %v6511, %v6503
        %v7424 = vpack.c.b16 %v6520, %v6512
        %v7425 = vpack.c.b16 %v6521, %v6513
        %v7426 = vpack.c.b16 %v6522, %v6514
        %v7427 = vpack.c.b16 %v6523, %v6515
        %v7428 = vpack.c.b16 %v6524, %v6516
        %v7429 = vpack.c.b16 %v6525, %v6517
        %v7430 = vpack.c.b16 %v6526, %v6518
        %v7431 = vpack.c.b16 %v6527, %v6519
        %v7432 = vpack.c.b16 %v6536, %v6528
        %v7433 = vpack.c.b16 %v6537, %v6529
        %v7434 = vpack.c.b16 %v6538, %v6530
        %v7435 = vpack.c.b16 %v6539, %v6531
        %v7436 = vpack.c.b16 %v6540, %v6532
        %v7437 = vpack.c.b16 %v6541, %v6533
        %v7438 = vpack.c.b16 %v6542, %v6534
        %v7439 = vpack.c.b16 %v6543, %v6535
        %v7440 = vpack.c.b16 %v6552, %v6544
        %v7441 = vpack.c.b16 %v6553, %v6545
        %v7442 = vpack.c.b16 %v6554, %v6546
        %v7443 = vpack.c.b16 %v6555, %v6547
        %v7444 = vpack.c.b16 %v6556, %v6548
        %v7445 = vpack.c.b16 %v6557, %v6549
        %v7446 = vpack.c.b16 %v6558, %v6550
        %v7447 = vpack.c.b16 %v6559, %v6551
        %v7448 = vpack.c.b16 %v6568, %v6560
        %v7449 = vpack.c.b16 %v6569, %v6561
        %v7450 = vpack.c.b16 %v6570, %v6562
        %v7451 = vpack.c.b16 %v6571, %v6563
        %v7452 = vpack.c.b16 %v6572, %v6564
        %v7453 = vpack.c.b16 %v6573, %v6565
        %v7454 = vpack.c.b16 %v6574, %v6566
        %v7455 = vpack.c.b16 %v6575, %v6567
        %v7456 = vpack.c.b16 %v6584, %v6576
        %v7457 = vpack.c.b16 %v6585, %v6577
        %v7458 = vpack.c.b16 %v6586, %v6578
        %v7459 = vpack.c.b16 %v6587, %v6579
        %v7460 = vpack.c.b16 %v6588, %v6580
        %v7461 = vpack.c.b16 %v6589, %v6581
        %v7462 = vpack.c.b16 %v6590, %v6582
        %v7463 = vpack.c.b16 %v6591, %v6583
        %v7464 = vpack.c.b16 %v6600, %v6592
        %v7465 = vpack.c.b16 %v6601, %v6593
        %v7466 = vpack.c.b16 %v6602, %v6594
        %v7467 = vpack.c.b16 %v6603, %v6595
        %v7468 = vpack.c.b16 %v6604, %v6596
        %v7469 = vpack.c.b16 %v6605, %v6597
        %v7470 = vpack.c.b16 %v6606, %v6598
        %v7471 = vpack.c.b16 %v6607, %v6599
        %v7472 = vpack.c.b16 %v6616, %v6608
        %v7473 = vpack.c.b16 %v6617, %v6609
        %v7474 = vpack.c.b16 %v6618, %v6610
        %v7475 = vpack.c.b16 %v6619, %v6611
        %v7476 = vpack.c.b16 %v6620, %v6612
        %v7477 = vpack.c.b16 %v6621, %v6613
        %v7478 = vpack.c.b16 %v6622, %v6614
        %v7479 = vpack.c.b16 %v6623, %v6615
        %v7480 = vpack.c.b16 %v6632, %v6624
        %v7481 = vpack.c.b16 %v6633, %v6625
        %v7482 = vpack.c.b16 %v6634, %v6626
        %v7483 = vpack.c.b16 %v6635, %v6627
        %v7484 = vpack.c.b16 %v6636, %v6628
        %v7485 = vpack.c.b16 %v6637, %v6629
        %v7486 = vpack.c.b16 %v6638, %v6630
        %v7487 = vpack.c.b16 %v6639, %v6631
        %v7488 = vpack.c.b16 %v6648, %v6640
        %v7489 = vpack.c.b16 %v6649, %v6641
        %v7490 = vpack.c.b16 %v6650, %v6642
        %v7491 = vpack.c.b16 %v6651, %v6643
        %v7492 = vpack.c.b16 %v6652, %v6644
        %v7493 = vpack.c.b16 %v6653, %v6645
        %v7494 = vpack.c.b16 %v6654, %v6646
        %v7495 = vpack.c.b16 %v6655, %v6647
        %v7496 = vpack.c.b16 %v6664, %v6656
        %v7497 = vpack.c.b16 %v6665, %v6657
        %v7498 = vpack.c.b16 %v6666, %v6658
        %v7499 = vpack.c.b16 %v6667, %v6659
        %v7500 = vpack.c.b16 %v6668, %v6660
        %v7501 = vpack.c.b16 %v6669, %v6661
        %v7502 = vpack.c.b16 %v6670, %v6662
        %v7503 = vpack.c.b16 %v6671, %v6663
        %v7504 = vpack.c.b16 %v6680, %v6672
        %v7505 = vpack.c.b16 %v6681, %v6673
        %v7506 = vpack.c.b16 %v6682, %v6674
        %v7507 = vpack.c.b16 %v6683, %v6675
        %v7508 = vpack.c.b16 %v6684, %v6676
        %v7509 = vpack.c.b16 %v6685, %v6677
        %v7510 = vpack.c.b16 %v6686, %v6678
        %v7511 = vpack.c.b16 %v6687, %v6679
        %v7512 = vpack.c.b16 %v6696, %v6688
        %v7513 = vpack.c.b16 %v6697, %v6689
        %v7514 = vpack.c.b16 %v6698, %v6690
        %v7515 = vpack.c.b16 %v6699, %v6691
        %v7516 = vpack.c.b16 %v6700, %v6692
        %v7517 = vpack.c.b16 %v6701, %v6693
        %v7518 = vpack.c.b16 %v6702, %v6694
        %v7519 = vpack.c.b16 %v6703, %v6695
        %v7520 = vpack.c.b16 %v6712, %v6704
        %v7521 = vpack.c.b16 %v6713, %v6705
        %v7522 = vpack.c.b16 %v6714, %v6706
        %v7523 = vpack.c.b16 %v6715, %v6707
        %v7524 = vpack.c.b16 %v6716, %v6708
        %v7525 = vpack.c.b16 %v6717, %v6709
        %v7526 = vpack.c.b16 %v6718, %v6710
        %v7527 = vpack.c.b16 %v6719, %v6711
        %v7528 = vpack.c.b16 %v6728, %v6720
        %v7529 = vpack.c.b16 %v6729, %v6721
        %v7530 = vpack.c.b16 %v6730, %v6722
        %v7531 = vpack.c.b16 %v6731, %v6723
        %v7532 = vpack.c.b16 %v6732, %v6724
        %v7533 = vpack.c.b16 %v6733, %v6725
        %v7534 = vpack.c.b16 %v6734, %v6726
        %v7535 = vpack.c.b16 %v6735, %v6727
        %v7536 = vpack.c.b16 %v6744, %v6736
        %v7537 = vpack.c.b16 %v6745, %v6737
        %v7538 = vpack.c.b16 %v6746, %v6738
        %v7539 = vpack.c.b16 %v6747, %v6739
        %v7540 = vpack.c.b16 %v6748, %v6740
        %v7541 = vpack.c.b16 %v6749, %v6741
        %v7542 = vpack.c.b16 %v6750, %v6742
        %v7543 = vpack.c.b16 %v6751, %v6743
        %v7544 = vpack.c.b16 %v6760, %v6752
        %v7545 = vpack.c.b16 %v6761, %v6753
        %v7546 = vpack.c.b16 %v6762, %v6754
        %v7547 = vpack.c.b16 %v6763, %v6755
        %v7548 = vpack.c.b16 %v6764, %v6756
        %v7549 = vpack.c.b16 %v6765, %v6757
        %v7550 = vpack.c.b16 %v6766, %v6758
        %v7551 = vpack.c.b16 %v6767, %v6759
        %v7552 = vpack.c.b16 %v6776, %v6768
        %v7553 = vpack.c.b16 %v6777, %v6769
        %v7554 = vpack.c.b16 %v6778, %v6770
        %v7555 = vpack.c.b16 %v6779, %v6771
        %v7556 = vpack.c.b16 %v6780, %v6772
        %v7557 = vpack.c.b16 %v6781, %v6773
        %v7558 = vpack.c.b16 %v6782, %v6774
        %v7559 = vpack.c.b16 %v6783, %v6775
        %v7560 = vpack.c.b16 %v6792, %v6784
        %v7561 = vpack.c.b16 %v6793, %v6785
        %v7562 = vpack.c.b16 %v6794, %v6786
        %v7563 = vpack.c.b16 %v6795, %v6787
        %v7564 = vpack.c.b16 %v6796, %v6788
        %v7565 = vpack.c.b16 %v6797, %v6789
        %v7566 = vpack.c.b16 %v6798, %v6790
        %v7567 = vpack.c.b16 %v6799, %v6791
        %v7568 = vpack.c.b16 %v6808, %v6800
        %v7569 = vpack.c.b16 %v6809, %v6801
        %v7570 = vpack.c.b16 %v6810, %v6802
        %v7571 = vpack.c.b16 %v6811, %v6803
        %v7572 = vpack.c.b16 %v6812, %v6804
        %v7573 = vpack.c.b16 %v6813, %v6805
        %v7574 = vpack.c.b16 %v6814, %v6806
        %v7575 = vpack.c.b16 %v6815, %v6807
        %v7576 = vpack.c.b16 %v6824, %v6816
        %v7577 = vpack.c.b16 %v6825, %v6817
        %v7578 = vpack.c.b16 %v6826, %v6818
        %v7579 = vpack.c.b16 %v6827, %v6819
        %v7580 = vpack.c.b16 %v6828, %v6820
        %v7581 = vpack.c.b16 %v6829, %v6821
        %v7582 = vpack.c.b16 %v6830, %v6822
        %v7583 = vpack.c.b16 %v6831, %v6823
        %v7584 = vpack.c.b16 %v6840, %v6832
        %v7585 = vpack.c.b16 %v6841, %v6833
        %v7586 = vpack.c.b16 %v6842, %v6834
        %v7587 = vpack.c.b16 %v6843, %v6835
        %v7588 = vpack.c.b16 %v6844, %v6836
        %v7589 = vpack.c.b16 %v6845, %v6837
        %v7590 = vpack.c.b16 %v6846, %v6838
        %v7591 = vpack.c.b16 %v6847, %v6839
        %v7592 = vpack.c.b16 %v6856, %v6848
        %v7593 = vpack.c.b16 %v6857, %v6849
        %v7594 = vpack.c.b16 %v6858, %v6850
        %v7595 = vpack.c.b16 %v6859, %v6851
        %v7596 = vpack.c.b16 %v6860, %v6852
        %v7597 = vpack.c.b16 %v6861, %v6853
        %v7598 = vpack.c.b16 %v6862, %v6854
        %v7599 = vpack.c.b16 %v6863, %v6855
        %v7600 = vpack.c.b16 %v6872, %v6864
        %v7601 = vpack.c.b16 %v6873, %v6865
        %v7602 = vpack.c.b16 %v6874, %v6866
        %v7603 = vpack.c.b16 %v6875, %v6867
        %v7604 = vpack.c.b16 %v6876, %v6868
        %v7605 = vpack.c.b16 %v6877, %v6869
        %v7606 = vpack.c.b16 %v6878, %v6870
        %v7607 = vpack.c.b16 %v6879, %v6871
        %v7608 = vpack.c.b16 %v6888, %v6880
        %v7609 = vpack.c.b16 %v6889, %v6881
        %v7610 = vpack.c.b16 %v6890, %v6882
        %v7611 = vpack.c.b16 %v6891, %v6883
        %v7612 = vpack.c.b16 %v6892, %v6884
        %v7613 = vpack.c.b16 %v6893, %v6885
        %v7614 = vpack.c.b16 %v6894, %v6886
        %v7615 = vpack.c.b16 %v6895, %v6887
        %v7616 = vpack.c.b16 %v6904, %v6896
        %v7617 = vpack.c.b16 %v6905, %v6897
        %v7618 = vpack.c.b16 %v6906, %v6898
        %v7619 = vpack.c.b16 %v6907, %v6899
        %v7620 = vpack.c.b16 %v6908, %v6900
        %v7621 = vpack.c.b16 %v6909, %v6901
        %v7622 = vpack.c.b16 %v6910, %v6902
        %v7623 = vpack.c.b16 %v6911, %v6903
        %v7624 = vpack.c.b16 %v6920, %v6912
        %v7625 = vpack.c.b16 %v6921, %v6913
        %v7626 = vpack.c.b16 %v6922, %v6914
        %v7627 = vpack.c.b16 %v6923, %v6915
        %v7628 = vpack.c.b16 %v6924, %v6916
        %v7629 = vpack.c.b16 %v6925, %v6917
        %v7630 = vpack.c.b16 %v6926, %v6918
        %v7631 = vpack.c.b16 %v6927, %v6919
        %v7632 = vpack.c.b16 %v6936, %v6928
        %v7633 = vpack.c.b16 %v6937, %v6929
        %v7634 = vpack.c.b16 %v6938, %v6930
        %v7635 = vpack.c.b16 %v6939, %v6931
        %v7636 = vpack.c.b16 %v6940, %v6932
        %v7637 = vpack.c.b16 %v6941, %v6933
        %v7638 = vpack.c.b16 %v6942, %v6934
        %v7639 = vpack.c.b16 %v6943, %v6935
        %v7640 = vpack.c.b16 %v6952, %v6944
        %v7641 = vpack.c.b16 %v6953, %v6945
        %v7642 = vpack.c.b16 %v6954, %v6946
        %v7643 = vpack.c.b16 %v6955, %v6947
        %v7644 = vpack.c.b16 %v6956, %v6948
        %v7645 = vpack.c.b16 %v6957, %v6949
        %v7646 = vpack.c.b16 %v6958, %v6950
        %v7647 = vpack.c.b16 %v6959, %v6951
        %v7648 = vpack.c.b16 %v6968, %v6960
        %v7649 = vpack.c.b16 %v6969, %v6961
        %v7650 = vpack.c.b16 %v6970, %v6962
        %v7651 = vpack.c.b16 %v6971, %v6963
        %v7652 = vpack.c.b16 %v6972, %v6964
        %v7653 = vpack.c.b16 %v6973, %v6965
        %v7654 = vpack.c.b16 %v6974, %v6966
        %v7655 = vpack.c.b16 %v6975, %v6967
        %v7656 = vpack.c.b16 %v6984, %v6976
        %v7657 = vpack.c.b16 %v6985, %v6977
        %v7658 = vpack.c.b16 %v6986, %v6978
        %v7659 = vpack.c.b16 %v6987, %v6979
        %v7660 = vpack.c.b16 %v6988, %v6980
        %v7661 = vpack.c.b16 %v6989, %v6981
        %v7662 = vpack.c.b16 %v6990, %v6982
        %v7663 = vpack.c.b16 %v6991, %v6983
        %v7664 = vpack.c.b16 %v7000, %v6992
        %v7665 = vpack.c.b16 %v7001, %v6993
        %v7666 = vpack.c.b16 %v7002, %v6994
        %v7667 = vpack.c.b16 %v7003, %v6995
        %v7668 = vpack.c.b16 %v7004, %v6996
        %v7669 = vpack.c.b16 %v7005, %v6997
        %v7670 = vpack.c.b16 %v7006, %v6998
        %v7671 = vpack.c.b16 %v7007, %v6999
        %v7672 = vpack.c.b16 %v7016, %v7008
        %v7673 = vpack.c.b16 %v7017, %v7009
        %v7674 = vpack.c.b16 %v7018, %v7010
        %v7675 = vpack.c.b16 %v7019, %v7011
        %v7676 = vpack.c.b16 %v7020, %v7012
        %v7677 = vpack.c.b16 %v7021, %v7013
        %v7678 = vpack.c.b16 %v7022, %v7014
        %v7679 = vpack.c.b16 %v7023, %v7015
        %v7680 = vpack.c.b16 %v7032, %v7024
        %v7681 = vpack.c.b16 %v7033, %v7025
        %v7682 = vpack.c.b16 %v7034, %v7026
        %v7683 = vpack.c.b16 %v7035, %v7027
        %v7684 = vpack.c.b16 %v7036, %v7028
        %v7685 = vpack.c.b16 %v7037, %v7029
        %v7686 = vpack.c.b16 %v7038, %v7030
        %v7687 = vpack.c.b16 %v7039, %v7031
        %v7688 = vpack.c.b16 %v7048, %v7040
        %v7689 = vpack.c.b16 %v7049, %v7041
        %v7690 = vpack.c.b16 %v7050, %v7042
        %v7691 = vpack.c.b16 %v7051, %v7043
        %v7692 = vpack.c.b16 %v7052, %v7044
        %v7693 = vpack.c.b16 %v7053, %v7045
        %v7694 = vpack.c.b16 %v7054, %v7046
        %v7695 = vpack.c.b16 %v7055, %v7047
        %v7696 = vpack.c.b16 %v7064, %v7056
        %v7697 = vpack.c.b16 %v7065, %v7057
        %v7698 = vpack.c.b16 %v7066, %v7058
        %v7699 = vpack.c.b16 %v7067, %v7059
        %v7700 = vpack.c.b16 %v7068, %v7060
        %v7701 = vpack.c.b16 %v7069, %v7061
        %v7702 = vpack.c.b16 %v7070, %v7062
        %v7703 = vpack.c.b16 %v7071, %v7063
        %v7704 = vpack.c.b16 %v7080, %v7072
        %v7705 = vpack.c.b16 %v7081, %v7073
        %v7706 = vpack.c.b16 %v7082, %v7074
        %v7707 = vpack.c.b16 %v7083, %v7075
        %v7708 = vpack.c.b16 %v7084, %v7076
        %v7709 = vpack.c.b16 %v7085, %v7077
        %v7710 = vpack.c.b16 %v7086, %v7078
        %v7711 = vpack.c.b16 %v7087, %v7079
        %v7712 = vpack.c.b16 %v7096, %v7088
        %v7713 = vpack.c.b16 %v7097, %v7089
        %v7714 = vpack.c.b16 %v7098, %v7090
        %v7715 = vpack.c.b16 %v7099, %v7091
        %v7716 = vpack.c.b16 %v7100, %v7092
        %v7717 = vpack.c.b16 %v7101, %v7093
        %v7718 = vpack.c.b16 %v7102, %v7094
        %v7719 = vpack.c.b16 %v7103, %v7095
        %v7720 = vpack.c.b16 %v7112, %v7104
        %v7721 = vpack.c.b16 %v7113, %v7105
        %v7722 = vpack.c.b16 %v7114, %v7106
        %v7723 = vpack.c.b16 %v7115, %v7107
        %v7724 = vpack.c.b16 %v7116, %v7108
        %v7725 = vpack.c.b16 %v7117, %v7109
        %v7726 = vpack.c.b16 %v7118, %v7110
        %v7727 = vpack.c.b16 %v7119, %v7111
        %v7728 = vpack.c.b16 %v7128, %v7120
        %v7729 = vpack.c.b16 %v7129, %v7121
        %v7730 = vpack.c.b16 %v7130, %v7122
        %v7731 = vpack.c.b16 %v7131, %v7123
        %v7732 = vpack.c.b16 %v7132, %v7124
        %v7733 = vpack.c.b16 %v7133, %v7125
        %v7734 = vpack.c.b16 %v7134, %v7126
        %v7735 = vpack.c.b16 %v7135, %v7127
        %v7736 = vpack.c.b16 %v7144, %v7136
        %v7737 = vpack.c.b16 %v7145, %v7137
        %v7738 = vpack.c.b16 %v7146, %v7138
        %v7739 = vpack.c.b16 %v7147, %v7139
        %v7740 = vpack.c.b16 %v7148, %v7140
        %v7741 = vpack.c.b16 %v7149, %v7141
        %v7742 = vpack.c.b16 %v7150, %v7142
        %v7743 = vpack.c.b16 %v7151, %v7143
        %v7744 = vpack.c.b16 %v7160, %v7152
        %v7745 = vpack.c.b16 %v7161, %v7153
        %v7746 = vpack.c.b16 %v7162, %v7154
        %v7747 = vpack.c.b16 %v7163, %v7155
        %v7748 = vpack.c.b16 %v7164, %v7156
        %v7749 = vpack.c.b16 %v7165, %v7157
        %v7750 = vpack.c.b16 %v7166, %v7158
        %v7751 = vpack.c.b16 %v7167, %v7159
        %v7752 = vpack.c.b16 %v7176, %v7168
        %v7753 = vpack.c.b16 %v7177, %v7169
        %v7754 = vpack.c.b16 %v7178, %v7170
        %v7755 = vpack.c.b16 %v7179, %v7171
        %v7756 = vpack.c.b16 %v7180, %v7172
        %v7757 = vpack.c.b16 %v7181, %v7173
        %v7758 = vpack.c.b16 %v7182, %v7174
        %v7759 = vpack.c.b16 %v7183, %v7175
        %v7760 = vpack.c.b16 %v7192, %v7184
        %v7761 = vpack.c.b16 %v7193, %v7185
        %v7762 = vpack.c.b16 %v7194, %v7186
        %v7763 = vpack.c.b16 %v7195, %v7187
        %v7764 = vpack.c.b16 %v7196, %v7188
        %v7765 = vpack.c.b16 %v7197, %v7189
        %v7766 = vpack.c.b16 %v7198, %v7190
        %v7767 = vpack.c.b16 %v7199, %v7191
        %v7768 = vpack.c.b16 %v7208, %v7200
        %v7769 = vpack.c.b16 %v7209, %v7201
        %v7770 = vpack.c.b16 %v7210, %v7202
        %v7771 = vpack.c.b16 %v7211, %v7203
        %v7772 = vpack.c.b16 %v7212, %v7204
        %v7773 = vpack.c.b16 %v7213, %v7205
        %v7774 = vpack.c.b16 %v7214, %v7206
        %v7775 = vpack.c.b16 %v7215, %v7207
        %v7776 = vpack.c.b16 %v7224, %v7216
        %v7777 = vpack.c.b16 %v7225, %v7217
        %v7778 = vpack.c.b16 %v7226, %v7218
        %v7779 = vpack.c.b16 %v7227, %v7219
        %v7780 = vpack.c.b16 %v7228, %v7220
        %v7781 = vpack.c.b16 %v7229, %v7221
        %v7782 = vpack.c.b16 %v7230, %v7222
        %v7783 = vpack.c.b16 %v7231, %v7223
        %v7784 = vpack.c.b16 %v7240, %v7232
        %v7785 = vpack.c.b16 %v7241, %v7233
        %v7786 = vpack.c.b16 %v7242, %v7234
        %v7787 = vpack.c.b16 %v7243, %v7235
        %v7788 = vpack.c.b16 %v7244, %v7236
        %v7789 = vpack.c.b16 %v7245, %v7237
        %v7790 = vpack.c.b16 %v7246, %v7238
        %v7791 = vpack.c.b16 %v7247, %v7239
        %v7792 = vpack.c.b16 %v7256, %v7248
        %v7793 = vpack.c.b16 %v7257, %v7249
        %v7794 = vpack.c.b16 %v7258, %v7250
        %v7795 = vpack.c.b16 %v7259, %v7251
        %v7796 = vpack.c.b16 %v7260, %v7252
        %v7797 = vpack.c.b16 %v7261, %v7253
        %v7798 = vpack.c.b16 %v7262, %v7254
        %v7799 = vpack.c.b16 %v7263, %v7255
        %v7800 = vpack.c.b16 %v7272, %v7264
        %v7801 = vpack.c.b16 %v7273, %v7265
        %v7802 = vpack.c.b16 %v7274, %v7266
        %v7803 = vpack.c.b16 %v7275, %v7267
        %v7804 = vpack.c.b16 %v7276, %v7268
        %v7805 = vpack.c.b16 %v7277, %v7269
        %v7806 = vpack.c.b16 %v7278, %v7270
        %v7807 = vpack.c.b16 %v7279, %v7271
        %v7808 = vpack.c.b16 %v7288, %v7280
        %v7809 = vpack.c.b16 %v7289, %v7281
        %v7810 = vpack.c.b16 %v7290, %v7282
        %v7811 = vpack.c.b16 %v7291, %v7283
        %v7812 = vpack.c.b16 %v7292, %v7284
        %v7813 = vpack.c.b16 %v7293, %v7285
        %v7814 = vpack.c.b16 %v7294, %v7286
        %v7815 = vpack.c.b16 %v7295, %v7287
        %v7816 = vpack.c.b16 %v7304, %v7296
        %v7817 = vpack.c.b16 %v7305, %v7297
        %v7818 = vpack.c.b16 %v7306, %v7298
        %v7819 = vpack.c.b16 %v7307, %v7299
        %v7820 = vpack.c.b16 %v7308, %v7300
        %v7821 = vpack.c.b16 %v7309, %v7301
        %v7822 = vpack.c.b16 %v7310, %v7302
        %v7823 = vpack.c.b16 %v7311, %v7303
        %8336 = vmatprep.subr.bf16.mxu0 %v7313
        %8337 = vmatpush1.bf16.msra.mxu0 %v7312
        %8338 = vmatprep.subr.bf16.mxu0 %v7321
        %8339 = vmatpush1.bf16.msra.mxu0 %v7320
        %8340 = vmatprep.subr.bf16.mxu0 %v7329
        %8341 = vmatpush1.bf16.msra.mxu0 %v7328
        %8342 = vmatprep.subr.bf16.mxu0 %v7337
        %8343 = vmatpush1.bf16.msra.mxu0 %v7336
        %8344 = vmatprep.subr.bf16.mxu0 %v7345
        %8345 = vmatpush1.bf16.msra.mxu0 %v7344
        %8346 = vmatprep.subr.bf16.mxu0 %v7353
        %8347 = vmatpush1.bf16.msra.mxu0 %v7352
        %8348 = vmatprep.subr.bf16.mxu0 %v7361
        %8349 = vmatpush1.bf16.msra.mxu0 %v7360
        %8350 = vmatprep.subr.bf16.mxu0 %v7369
        %8351 = vmatpush1.bf16.msra.mxu0 %v7368
        %8352 = vmatprep.subr.bf16.mxu0 %v7377
        %8353 = vmatpush1.bf16.msra.mxu0 %v7376
        %8354 = vmatprep.subr.bf16.mxu0 %v7385
        %8355 = vmatpush1.bf16.msra.mxu0 %v7384
        %8356 = vmatprep.subr.bf16.mxu0 %v7393
        %8357 = vmatpush1.bf16.msra.mxu0 %v7392
        %8358 = vmatprep.subr.bf16.mxu0 %v7401
        %8359 = vmatpush1.bf16.msra.mxu0 %v7400
        %8360 = vmatprep.subr.bf16.mxu0 %v7409
        %8361 = vmatpush1.bf16.msra.mxu0 %v7408
        %8362 = vmatprep.subr.bf16.mxu0 %v7417
        %8363 = vmatpush1.bf16.msra.mxu0 %v7416
        %8364 = vmatprep.subr.bf16.mxu0 %v7425
        %8365 = vmatpush1.bf16.msra.mxu0 %v7424
        %8366 = vmatprep.subr.bf16.mxu0 %v7433
        %8367 = vmatpush1.bf16.msra.mxu0 %v7432
        %8368 = vmatprep.mubr.bf16.mxu0 %v5207
        %8369 = vmatmul.mubr.bf16.gmra.mrb[0].mxu0 %v5206
        %v8370 = vpop.f32.mrb[0].mxu0
        %v8371 = vadd.f32 %v5739, %v8370
        %v8372 = vpop.f32.mrb[0].mxu0
        %v8373 = vadd.f32 %v5743, %v8372
        %v8374 = vpop.f32.mrb[0].mxu0
        %v8375 = vadd.f32 %v5739, %v8374
        %v8376 = vpop.f32.mrb[0].mxu0
        %v8377 = vadd.f32 %v5743, %v8376
        %8378 = vmatprep.mubr.bf16.mxu0 %v5215
        %8379 = vmatmul.mubr.bf16.gmra.mrb[0].mxu0 %v5214
        %v8380 = vpop.f32.mrb[0].mxu0
        %v8381 = vadd.f32 %v5739, %v8380
        %v8382 = vpop.f32.mrb[0].mxu0
        %v8383 = vadd.f32 %v5743, %v8382
        %v8384 = vpop.f32.mrb[0].mxu0
        %v8385 = vadd.f32 %v5739, %v8384
        %v8386 = vpop.f32.mrb[0].mxu0
        %v8387 = vadd.f32 %v5743, %v8386
        %8388 = vdwg.mxu0
        %8389 = vmatprep.subr.bf16.mxu0 %v7441
        %8390 = vmatpush1.bf16.msra.mxu0 %v7440
        %8391 = vmatprep.subr.bf16.mxu0 %v7449
        %8392 = vmatpush1.bf16.msra.mxu0 %v7448
        %8393 = vmatprep.subr.bf16.mxu0 %v7457
        %8394 = vmatpush1.bf16.msra.mxu0 %v7456
        %8395 = vmatprep.subr.bf16.mxu0 %v7465
        %8396 = vmatpush1.bf16.msra.mxu0 %v7464
        %8397 = vmatprep.subr.bf16.mxu0 %v7473
        %8398 = vmatpush1.bf16.msra.mxu0 %v7472
        %8399 = vmatprep.subr.bf16.mxu0 %v7481
        %8400 = vmatpush1.bf16.msra.mxu0 %v7480
        %8401 = vmatprep.subr.bf16.mxu0 %v7489
        %8402 = vmatpush1.bf16.msra.mxu0 %v7488
        %8403 = vmatprep.subr.bf16.mxu0 %v7497
        %8404 = vmatpush1.bf16.msra.mxu0 %v7496
        %8405 = vmatprep.subr.bf16.mxu0 %v7505
        %8406 = vmatpush1.bf16.msra.mxu0 %v7504
        %8407 = vmatprep.subr.bf16.mxu0 %v7513
        %8408 = vmatpush1.bf16.msra.mxu0 %v7512
        %8409 = vmatprep.subr.bf16.mxu0 %v7521
        %8410 = vmatpush1.bf16.msra.mxu0 %v7520
        %8411 = vmatprep.subr.bf16.mxu0 %v7529
        %8412 = vmatpush1.bf16.msra.mxu0 %v7528
        %8413 = vmatprep.subr.bf16.mxu0 %v7537
        %8414 = vmatpush1.bf16.msra.mxu0 %v7536
        %8415 = vmatprep.subr.bf16.mxu0 %v7545
        %8416 = vmatpush1.bf16.msra.mxu0 %v7544
        %8417 = vmatprep.subr.bf16.mxu0 %v7553
        %8418 = vmatpush1.bf16.msra.mxu0 %v7552
        %8419 = vmatprep.subr.bf16.mxu0 %v7561
        %8420 = vmatpush1.bf16.msra.mxu0 %v7560
        %8421 = vmatprep.mubr.bf16.mxu0 %v5209
        %8422 = vmatmul.mubr.bf16.gmra.mrb[0].mxu0 %v5208
        %v8423 = vpop.f32.mrb[0].mxu0
        %v8424 = vadd.f32 %v8371, %v8423
        %v8425 = vpop.f32.mrb[0].mxu0
        %v8426 = vadd.f32 %v8373, %v8425
        %v8427 = vpop.f32.mrb[0].mxu0
        %v8428 = vadd.f32 %v8375, %v8427
        %v8429 = vpop.f32.mrb[0].mxu0
        %v8430 = vadd.f32 %v8377, %v8429
        %8431 = vmatprep.mubr.bf16.mxu0 %v5217
        %8432 = vmatmul.mubr.bf16.gmra.mrb[0].mxu0 %v5216
        %v8433 = vpop.f32.mrb[0].mxu0
        %v8434 = vadd.f32 %v8381, %v8433
        %v8435 = vpop.f32.mrb[0].mxu0
        %v8436 = vadd.f32 %v8383, %v8435
        %v8437 = vpop.f32.mrb[0].mxu0
        %v8438 = vadd.f32 %v8385, %v8437
        %v8439 = vpop.f32.mrb[0].mxu0
        %v8440 = vadd.f32 %v8387, %v8439
        %8441 = vdwg.mxu0
        %8442 = vmatprep.subr.bf16.mxu0 %v7569
        %8443 = vmatpush1.bf16.msra.mxu0 %v7568
        %8444 = vmatprep.subr.bf16.mxu0 %v7577
        %8445 = vmatpush1.bf16.msra.mxu0 %v7576
        %8446 = vmatprep.subr.bf16.mxu0 %v7585
        %8447 = vmatpush1.bf16.msra.mxu0 %v7584
        %8448 = vmatprep.subr.bf16.mxu0 %v7593
        %8449 = vmatpush1.bf16.msra.mxu0 %v7592
        %8450 = vmatprep.subr.bf16.mxu0 %v7601
        %8451 = vmatpush1.bf16.msra.mxu0 %v7600
        %8452 = vmatprep.subr.bf16.mxu0 %v7609
        %8453 = vmatpush1.bf16.msra.mxu0 %v7608
        %8454 = vmatprep.subr.bf16.mxu0 %v7617
        %8455 = vmatpush1.bf16.msra.mxu0 %v7616
        %8456 = vmatprep.subr.bf16.mxu0 %v7625
        %8457 = vmatpush1.bf16.msra.mxu0 %v7624
        %8458 = vmatprep.subr.bf16.mxu0 %v7633
        %8459 = vmatpush1.bf16.msra.mxu0 %v7632
        %8460 = vmatprep.subr.bf16.mxu0 %v7641
        %8461 = vmatpush1.bf16.msra.mxu0 %v7640
        %8462 = vmatprep.subr.bf16.mxu0 %v7649
        %8463 = vmatpush1.bf16.msra.mxu0 %v7648
        %8464 = vmatprep.subr.bf16.mxu0 %v7657
        %8465 = vmatpush1.bf16.msra.mxu0 %v7656
        %8466 = vmatprep.subr.bf16.mxu0 %v7665
        %8467 = vmatpush1.bf16.msra.mxu0 %v7664
        %8468 = vmatprep.subr.bf16.mxu0 %v7673
        %8469 = vmatpush1.bf16.msra.mxu0 %v7672
        %8470 = vmatprep.subr.bf16.mxu0 %v7681
        %8471 = vmatpush1.bf16.msra.mxu0 %v7680
        %8472 = vmatprep.subr.bf16.mxu0 %v7689
        %8473 = vmatpush1.bf16.msra.mxu0 %v7688
        %8474 = vmatprep.mubr.bf16.mxu0 %v5211
        %8475 = vmatmul.mubr.bf16.gmra.mrb[0].mxu0 %v5210
        %v8476 = vpop.f32.mrb[0].mxu0
        %v8477 = vadd.f32 %v8424, %v8476
        %v8478 = vpop.f32.mrb[0].mxu0
        %v8479 = vadd.f32 %v8426, %v8478
        %v8480 = vpop.f32.mrb[0].mxu0
        %v8481 = vadd.f32 %v8428, %v8480
        %v8482 = vpop.f32.mrb[0].mxu0
        %v8483 = vadd.f32 %v8430, %v8482
        %8484 = vmatprep.mubr.bf16.mxu0 %v5219
        %8485 = vmatmul.mubr.bf16.gmra.mrb[0].mxu0 %v5218
        %v8486 = vpop.f32.mrb[0].mxu0
        %v8487 = vadd.f32 %v8434, %v8486
        %v8488 = vpop.f32.mrb[0].mxu0
        %v8489 = vadd.f32 %v8436, %v8488
        %v8490 = vpop.f32.mrb[0].mxu0
        %v8491 = vadd.f32 %v8438, %v8490
        %v8492 = vpop.f32.mrb[0].mxu0
        %v8493 = vadd.f32 %v8440, %v8492
        %8494 = vdwg.mxu0
        %8495 = vmatprep.subr.bf16.mxu0 %v7697
        %8496 = vmatpush1.bf16.msra.mxu0 %v7696
        %8497 = vmatprep.subr.bf16.mxu0 %v7705
        %8498 = vmatpush1.bf16.msra.mxu0 %v7704
        %8499 = vmatprep.subr.bf16.mxu0 %v7713
        %8500 = vmatpush1.bf16.msra.mxu0 %v7712
        %8501 = vmatprep.subr.bf16.mxu0 %v7721
        %8502 = vmatpush1.bf16.msra.mxu0 %v7720
        %8503 = vmatprep.subr.bf16.mxu0 %v7729
        %8504 = vmatpush1.bf16.msra.mxu0 %v7728
        %8505 = vmatprep.subr.bf16.mxu0 %v7737
        %8506 = vmatpush1.bf16.msra.mxu0 %v7736
        %8507 = vmatprep.subr.bf16.mxu0 %v7745
        %8508 = vmatpush1.bf16.msra.mxu0 %v7744
        %8509 = vmatprep.subr.bf16.mxu0 %v7753
        %8510 = vmatpush1.bf16.msra.mxu0 %v7752
        %8511 = vmatprep.subr.bf16.mxu0 %v7761
        %8512 = vmatpush1.bf16.msra.mxu0 %v7760
        %8513 = vmatprep.subr.bf16.mxu0 %v7769
        %8514 = vmatpush1.bf16.msra.mxu0 %v7768
        %8515 = vmatprep.subr.bf16.mxu0 %v7777
        %8516 = vmatpush1.bf16.msra.mxu0 %v7776
        %8517 = vmatprep.subr.bf16.mxu0 %v7785
        %8518 = vmatpush1.bf16.msra.mxu0 %v7784
        %8519 = vmatprep.subr.bf16.mxu0 %v7793
        %8520 = vmatpush1.bf16.msra.mxu0 %v7792
        %8521 = vmatprep.subr.bf16.mxu0 %v7801
        %8522 = vmatpush1.bf16.msra.mxu0 %v7800
        %8523 = vmatprep.subr.bf16.mxu0 %v7809
        %8524 = vmatpush1.bf16.msra.mxu0 %v7808
        %8525 = vmatprep.subr.bf16.mxu0 %v7817
        %8526 = vmatpush1.bf16.msra.mxu0 %v7816
        %8527 = vmatprep.mubr.bf16.mxu0 %v5213
        %8528 = vmatmul.mubr.bf16.gmra.mrb[0].mxu0 %v5212
        %v8529 = vpop.f32.mrb[0].mxu0
        %v8530 = vadd.f32 %v8477, %v8529
        %v8531 = vpop.f32.mrb[0].mxu0
        %v8532 = vadd.f32 %v8479, %v8531
        %v8533 = vpop.f32.mrb[0].mxu0
        %v8534 = vadd.f32 %v8481, %v8533
        %v8535 = vpop.f32.mrb[0].mxu0
        %v8536 = vadd.f32 %v8483, %v8535
        %8537 = vmatprep.mubr.bf16.mxu0 %v5221
        %8538 = vmatmul.mubr.bf16.gmra.mrb[0].mxu0 %v5220
        %v8539 = vpop.f32.mrb[0].mxu0
        %v8540 = vadd.f32 %v8487, %v8539
        %v8541 = vpop.f32.mrb[0].mxu0
        %v8542 = vadd.f32 %v8489, %v8541
        %v8543 = vpop.f32.mrb[0].mxu0
        %v8544 = vadd.f32 %v8491, %v8543
        %v8545 = vpop.f32.mrb[0].mxu0
        %v8546 = vadd.f32 %v8493, %v8545
        %8547 = vdwg.mxu0
        %8548 = vmatprep.subr.bf16.mxu0 %v7315
        %8549 = vmatpush1.bf16.msra.mxu0 %v7314
        %8550 = vmatprep.subr.bf16.mxu0 %v7323
        %8551 = vmatpush1.bf16.msra.mxu0 %v7322
        %8552 = vmatprep.subr.bf16.mxu0 %v7331
        %8553 = vmatpush1.bf16.msra.mxu0 %v7330
        %8554 = vmatprep.subr.bf16.mxu0 %v7339
        %8555 = vmatpush1.bf16.msra.mxu0 %v7338
        %8556 = vmatprep.subr.bf16.mxu0 %v7347
        %8557 = vmatpush1.bf16.msra.mxu0 %v7346
        %8558 = vmatprep.subr.bf16.mxu0 %v7355
        %8559 = vmatpush1.bf16.msra.mxu0 %v7354
        %8560 = vmatprep.subr.bf16.mxu0 %v7363
        %8561 = vmatpush1.bf16.msra.mxu0 %v7362
        %8562 = vmatprep.subr.bf16.mxu0 %v7371
        %8563 = vmatpush1.bf16.msra.mxu0 %v7370
        %8564 = vmatprep.subr.bf16.mxu0 %v7379
        %8565 = vmatpush1.bf16.msra.mxu0 %v7378
        %8566 = vmatprep.subr.bf16.mxu0 %v7387
        %8567 = vmatpush1.bf16.msra.mxu0 %v7386
        %8568 = vmatprep.subr.bf16.mxu0 %v7395
        %8569 = vmatpush1.bf16.msra.mxu0 %v7394
        %8570 = vmatprep.subr.bf16.mxu0 %v7403
        %8571 = vmatpush1.bf16.msra.mxu0 %v7402
        %8572 = vmatprep.subr.bf16.mxu0 %v7411
        %8573 = vmatpush1.bf16.msra.mxu0 %v7410
        %8574 = vmatprep.subr.bf16.mxu0 %v7419
        %8575 = vmatpush1.bf16.msra.mxu0 %v7418
        %8576 = vmatprep.subr.bf16.mxu0 %v7427
        %8577 = vmatpush1.bf16.msra.mxu0 %v7426
        %8578 = vmatprep.subr.bf16.mxu0 %v7435
        %8579 = vmatpush1.bf16.msra.mxu0 %v7434
        %8580 = vmatprep.mubr.bf16.mxu0 %v5207
        %8581 = vmatmul.mubr.bf16.gmra.mrb[0].mxu0 %v5206
        %v8582 = vpop.f32.mrb[0].mxu0
        %v8583 = vadd.f32 %v5747, %v8582
        %v8584 = vpop.f32.mrb[0].mxu0
        %v8585 = vadd.f32 %v5751, %v8584
        %v8586 = vpop.f32.mrb[0].mxu0
        %v8587 = vadd.f32 %v5747, %v8586
        %v8588 = vpop.f32.mrb[0].mxu0
        %v8589 = vadd.f32 %v5751, %v8588
        %8590 = vmatprep.mubr.bf16.mxu0 %v5215
        %8591 = vmatmul.mubr.bf16.gmra.mrb[0].mxu0 %v5214
        %v8592 = vpop.f32.mrb[0].mxu0
        %v8593 = vadd.f32 %v5747, %v8592
        %v8594 = vpop.f32.mrb[0].mxu0
        %v8595 = vadd.f32 %v5751, %v8594
        %v8596 = vpop.f32.mrb[0].mxu0
        %v8597 = vadd.f32 %v5747, %v8596
        %v8598 = vpop.f32.mrb[0].mxu0
        %v8599 = vadd.f32 %v5751, %v8598
        %8600 = vdwg.mxu0
        %8601 = vmatprep.subr.bf16.mxu0 %v7443
        %8602 = vmatpush1.bf16.msra.mxu0 %v7442
        %8603 = vmatprep.subr.bf16.mxu0 %v7451
        %8604 = vmatpush1.bf16.msra.mxu0 %v7450
        %8605 = vmatprep.subr.bf16.mxu0 %v7459
        %8606 = vmatpush1.bf16.msra.mxu0 %v7458
        %8607 = vmatprep.subr.bf16.mxu0 %v7467
        %8608 = vmatpush1.bf16.msra.mxu0 %v7466
        %8609 = vmatprep.subr.bf16.mxu0 %v7475
        %8610 = vmatpush1.bf16.msra.mxu0 %v7474
        %8611 = vmatprep.subr.bf16.mxu0 %v7483
        %8612 = vmatpush1.bf16.msra.mxu0 %v7482
        %8613 = vmatprep.subr.bf16.mxu0 %v7491
        %8614 = vmatpush1.bf16.msra.mxu0 %v7490
        %8615 = vmatprep.subr.bf16.mxu0 %v7499
        %8616 = vmatpush1.bf16.msra.mxu0 %v7498
        %8617 = vmatprep.subr.bf16.mxu0 %v7507
        %8618 = vmatpush1.bf16.msra.mxu0 %v7506
        %8619 = vmatprep.subr.bf16.mxu0 %v7515
        %8620 = vmatpush1.bf16.msra.mxu0 %v7514
        %8621 = vmatprep.subr.bf16.mxu0 %v7523
        %8622 = vmatpush1.bf16.msra.mxu0 %v7522
        %8623 = vmatprep.subr.bf16.mxu0 %v7531
        %8624 = vmatpush1.bf16.msra.mxu0 %v7530
        %8625 = vmatprep.subr.bf16.mxu0 %v7539
        %8626 = vmatpush1.bf16.msra.mxu0 %v7538
        %8627 = vmatprep.subr.bf16.mxu0 %v7547
        %8628 = vmatpush1.bf16.msra.mxu0 %v7546
        %8629 = vmatprep.subr.bf16.mxu0 %v7555
        %8630 = vmatpush1.bf16.msra.mxu0 %v7554
        %8631 = vmatprep.subr.bf16.mxu0 %v7563
        %8632 = vmatpush1.bf16.msra.mxu0 %v7562
        %8633 = vmatprep.mubr.bf16.mxu0 %v5209
        %8634 = vmatmul.mubr.bf16.gmra.mrb[0].mxu0 %v5208
        %v8635 = vpop.f32.mrb[0].mxu0
        %v8636 = vadd.f32 %v8583, %v8635
        %v8637 = vpop.f32.mrb[0].mxu0
        %v8638 = vadd.f32 %v8585, %v8637
        %v8639 = vpop.f32.mrb[0].mxu0
        %v8640 = vadd.f32 %v8587, %v8639
        %v8641 = vpop.f32.mrb[0].mxu0
        %v8642 = vadd.f32 %v8589, %v8641
        %8643 = vmatprep.mubr.bf16.mxu0 %v5217
        %8644 = vmatmul.mubr.bf16.gmra.mrb[0].mxu0 %v5216
        %v8645 = vpop.f32.mrb[0].mxu0
        %v8646 = vadd.f32 %v8593, %v8645
        %v8647 = vpop.f32.mrb[0].mxu0
        %v8648 = vadd.f32 %v8595, %v8647
        %v8649 = vpop.f32.mrb[0].mxu0
        %v8650 = vadd.f32 %v8597, %v8649
        %v8651 = vpop.f32.mrb[0].mxu0
        %v8652 = vadd.f32 %v8599, %v8651
        %8653 = vdwg.mxu0
        %8654 = vmatprep.subr.bf16.mxu0 %v7571
        %8655 = vmatpush1.bf16.msra.mxu0 %v7570
        %8656 = vmatprep.subr.bf16.mxu0 %v7579
        %8657 = vmatpush1.bf16.msra.mxu0 %v7578
        %8658 = vmatprep.subr.bf16.mxu0 %v7587
        %8659 = vmatpush1.bf16.msra.mxu0 %v7586
        %8660 = vmatprep.subr.bf16.mxu0 %v7595
        %8661 = vmatpush1.bf16.msra.mxu0 %v7594
        %8662 = vmatprep.subr.bf16.mxu0 %v7603
        %8663 = vmatpush1.bf16.msra.mxu0 %v7602
        %8664 = vmatprep.subr.bf16.mxu0 %v7611
        %8665 = vmatpush1.bf16.msra.mxu0 %v7610
        %8666 = vmatprep.subr.bf16.mxu0 %v7619
        %8667 = vmatpush1.bf16.msra.mxu0 %v7618
        %8668 = vmatprep.subr.bf16.mxu0 %v7627
        %8669 = vmatpush1.bf16.msra.mxu0 %v7626
        %8670 = vmatprep.subr.bf16.mxu0 %v7635
        %8671 = vmatpush1.bf16.msra.mxu0 %v7634
        %8672 = vmatprep.subr.bf16.mxu0 %v7643
        %8673 = vmatpush1.bf16.msra.mxu0 %v7642
        %8674 = vmatprep.subr.bf16.mxu0 %v7651
        %8675 = vmatpush1.bf16.msra.mxu0 %v7650
        %8676 = vmatprep.subr.bf16.mxu0 %v7659
        %8677 = vmatpush1.bf16.msra.mxu0 %v7658
        %8678 = vmatprep.subr.bf16.mxu0 %v7667
        %8679 = vmatpush1.bf16.msra.mxu0 %v7666
        %8680 = vmatprep.subr.bf16.mxu0 %v7675
        %8681 = vmatpush1.bf16.msra.mxu0 %v7674
        %8682 = vmatprep.subr.bf16.mxu0 %v7683
        %8683 = vmatpush1.bf16.msra.mxu0 %v7682
        %8684 = vmatprep.subr.bf16.mxu0 %v7691
        %8685 = vmatpush1.bf16.msra.mxu0 %v7690
        %8686 = vmatprep.mubr.bf16.mxu0 %v5211
        %8687 = vmatmul.mubr.bf16.gmra.mrb[0].mxu0 %v5210
        %v8688 = vpop.f32.mrb[0].mxu0
        %v8689 = vadd.f32 %v8636, %v8688
        %v8690 = vpop.f32.mrb[0].mxu0
        %v8691 = vadd.f32 %v8638, %v8690
        %v8692 = vpop.f32.mrb[0].mxu0
        %v8693 = vadd.f32 %v8640, %v8692
        %v8694 = vpop.f32.mrb[0].mxu0
        %v8695 = vadd.f32 %v8642, %v8694
        %8696 = vmatprep.mubr.bf16.mxu0 %v5219
        %8697 = vmatmul.mubr.bf16.gmra.mrb[0].mxu0 %v5218
        %v8698 = vpop.f32.mrb[0].mxu0
        %v8699 = vadd.f32 %v8646, %v8698
        %v8700 = vpop.f32.mrb[0].mxu0
        %v8701 = vadd.f32 %v8648, %v8700
        %v8702 = vpop.f32.mrb[0].mxu0
        %v8703 = vadd.f32 %v8650, %v8702
        %v8704 = vpop.f32.mrb[0].mxu0
        %v8705 = vadd.f32 %v8652, %v8704
        %8706 = vdwg.mxu0
        %8707 = vmatprep.subr.bf16.mxu0 %v7699
        %8708 = vmatpush1.bf16.msra.mxu0 %v7698
        %8709 = vmatprep.subr.bf16.mxu0 %v7707
        %8710 = vmatpush1.bf16.msra.mxu0 %v7706
        %8711 = vmatprep.subr.bf16.mxu0 %v7715
        %8712 = vmatpush1.bf16.msra.mxu0 %v7714
        %8713 = vmatprep.subr.bf16.mxu0 %v7723
        %8714 = vmatpush1.bf16.msra.mxu0 %v7722
        %8715 = vmatprep.subr.bf16.mxu0 %v7731
        %8716 = vmatpush1.bf16.msra.mxu0 %v7730
        %8717 = vmatprep.subr.bf16.mxu0 %v7739
        %8718 = vmatpush1.bf16.msra.mxu0 %v7738
        %8719 = vmatprep.subr.bf16.mxu0 %v7747
        %8720 = vmatpush1.bf16.msra.mxu0 %v7746
        %8721 = vmatprep.subr.bf16.mxu0 %v7755
        %8722 = vmatpush1.bf16.msra.mxu0 %v7754
        %8723 = vmatprep.subr.bf16.mxu0 %v7763
        %8724 = vmatpush1.bf16.msra.mxu0 %v7762
        %8725 = vmatprep.subr.bf16.mxu0 %v7771
        %8726 = vmatpush1.bf16.msra.mxu0 %v7770
        %8727 = vmatprep.subr.bf16.mxu0 %v7779
        %8728 = vmatpush1.bf16.msra.mxu0 %v7778
        %8729 = vmatprep.subr.bf16.mxu0 %v7787
        %8730 = vmatpush1.bf16.msra.mxu0 %v7786
        %8731 = vmatprep.subr.bf16.mxu0 %v7795
        %8732 = vmatpush1.bf16.msra.mxu0 %v7794
        %8733 = vmatprep.subr.bf16.mxu0 %v7803
        %8734 = vmatpush1.bf16.msra.mxu0 %v7802
        %8735 = vmatprep.subr.bf16.mxu0 %v7811
        %8736 = vmatpush1.bf16.msra.mxu0 %v7810
        %8737 = vmatprep.subr.bf16.mxu0 %v7819
        %8738 = vmatpush1.bf16.msra.mxu0 %v7818
        %8739 = vmatprep.mubr.bf16.mxu0 %v5213
        %8740 = vmatmul.mubr.bf16.gmra.mrb[0].mxu0 %v5212
        %v8741 = vpop.f32.mrb[0].mxu0
        %v8742 = vadd.f32 %v8689, %v8741
        %v8743 = vpop.f32.mrb[0].mxu0
        %v8744 = vadd.f32 %v8691, %v8743
        %v8745 = vpop.f32.mrb[0].mxu0
        %v8746 = vadd.f32 %v8693, %v8745
        %v8747 = vpop.f32.mrb[0].mxu0
        %v8748 = vadd.f32 %v8695, %v8747
        %8749 = vmatprep.mubr.bf16.mxu0 %v5221
        %8750 = vmatmul.mubr.bf16.gmra.mrb[0].mxu0 %v5220
        %v8751 = vpop.f32.mrb[0].mxu0
        %v8752 = vadd.f32 %v8699, %v8751
        %v8753 = vpop.f32.mrb[0].mxu0
        %v8754 = vadd.f32 %v8701, %v8753
        %v8755 = vpop.f32.mrb[0].mxu0
        %v8756 = vadd.f32 %v8703, %v8755
        %v8757 = vpop.f32.mrb[0].mxu0
        %v8758 = vadd.f32 %v8705, %v8757
        %8759 = vdwg.mxu0
        %8760 = vmatprep.subr.bf16.mxu0 %v7317
        %8761 = vmatpush1.bf16.msra.mxu0 %v7316
        %8762 = vmatprep.subr.bf16.mxu0 %v7325
        %8763 = vmatpush1.bf16.msra.mxu0 %v7324
        %8764 = vmatprep.subr.bf16.mxu0 %v7333
        %8765 = vmatpush1.bf16.msra.mxu0 %v7332
        %8766 = vmatprep.subr.bf16.mxu0 %v7341
        %8767 = vmatpush1.bf16.msra.mxu0 %v7340
        %8768 = vmatprep.subr.bf16.mxu0 %v7349
        %8769 = vmatpush1.bf16.msra.mxu0 %v7348
        %8770 = vmatprep.subr.bf16.mxu0 %v7357
        %8771 = vmatpush1.bf16.msra.mxu0 %v7356
        %8772 = vmatprep.subr.bf16.mxu0 %v7365
        %8773 = vmatpush1.bf16.msra.mxu0 %v7364
        %8774 = vmatprep.subr.bf16.mxu0 %v7373
        %8775 = vmatpush1.bf16.msra.mxu0 %v7372
        %8776 = vmatprep.subr.bf16.mxu0 %v7381
        %8777 = vmatpush1.bf16.msra.mxu0 %v7380
        %8778 = vmatprep.subr.bf16.mxu0 %v7389
        %8779 = vmatpush1.bf16.msra.mxu0 %v7388
        %8780 = vmatprep.subr.bf16.mxu0 %v7397
        %8781 = vmatpush1.bf16.msra.mxu0 %v7396
        %8782 = vmatprep.subr.bf16.mxu0 %v7405
        %8783 = vmatpush1.bf16.msra.mxu0 %v7404
        %8784 = vmatprep.subr.bf16.mxu0 %v7413
        %8785 = vmatpush1.bf16.msra.mxu0 %v7412
        %8786 = vmatprep.subr.bf16.mxu0 %v7421
        %8787 = vmatpush1.bf16.msra.mxu0 %v7420
        %8788 = vmatprep.subr.bf16.mxu0 %v7429
        %8789 = vmatpush1.bf16.msra.mxu0 %v7428
        %8790 = vmatprep.subr.bf16.mxu0 %v7437
        %8791 = vmatpush1.bf16.msra.mxu0 %v7436
        %8792 = vmatprep.mubr.bf16.mxu0 %v5207
        %8793 = vmatmul.mubr.bf16.gmra.mrb[0].mxu0 %v5206
        %v8794 = vpop.f32.mrb[0].mxu0
        %v8795 = vadd.f32 %v5755, %v8794
        %v8796 = vpop.f32.mrb[0].mxu0
        %v8797 = vadd.f32 %v5759, %v8796
        %v8798 = vpop.f32.mrb[0].mxu0
        %v8799 = vadd.f32 %v5755, %v8798
        %v8800 = vpop.f32.mrb[0].mxu0
        %v8801 = vadd.f32 %v5759, %v8800
        %8802 = vmatprep.mubr.bf16.mxu0 %v5215
        %8803 = vmatmul.mubr.bf16.gmra.mrb[0].mxu0 %v5214
        %v8804 = vpop.f32.mrb[0].mxu0
        %v8805 = vadd.f32 %v5755, %v8804
        %v8806 = vpop.f32.mrb[0].mxu0
        %v8807 = vadd.f32 %v5759, %v8806
        %v8808 = vpop.f32.mrb[0].mxu0
        %v8809 = vadd.f32 %v5755, %v8808
        %v8810 = vpop.f32.mrb[0].mxu0
        %v8811 = vadd.f32 %v5759, %v8810
        %8812 = vdwg.mxu0
        %8813 = vmatprep.subr.bf16.mxu0 %v7445
        %8814 = vmatpush1.bf16.msra.mxu0 %v7444
        %8815 = vmatprep.subr.bf16.mxu0 %v7453
        %8816 = vmatpush1.bf16.msra.mxu0 %v7452
        %8817 = vmatprep.subr.bf16.mxu0 %v7461
        %8818 = vmatpush1.bf16.msra.mxu0 %v7460
        %8819 = vmatprep.subr.bf16.mxu0 %v7469
        %8820 = vmatpush1.bf16.msra.mxu0 %v7468
        %8821 = vmatprep.subr.bf16.mxu0 %v7477
        %8822 = vmatpush1.bf16.msra.mxu0 %v7476
        %8823 = vmatprep.subr.bf16.mxu0 %v7485
        %8824 = vmatpush1.bf16.msra.mxu0 %v7484
        %8825 = vmatprep.subr.bf16.mxu0 %v7493
        %8826 = vmatpush1.bf16.msra.mxu0 %v7492
        %8827 = vmatprep.subr.bf16.mxu0 %v7501
        %8828 = vmatpush1.bf16.msra.mxu0 %v7500
        %8829 = vmatprep.subr.bf16.mxu0 %v7509
        %8830 = vmatpush1.bf16.msra.mxu0 %v7508
        %8831 = vmatprep.subr.bf16.mxu0 %v7517
        %8832 = vmatpush1.bf16.msra.mxu0 %v7516
        %8833 = vmatprep.subr.bf16.mxu0 %v7525
        %8834 = vmatpush1.bf16.msra.mxu0 %v7524
        %8835 = vmatprep.subr.bf16.mxu0 %v7533
        %8836 = vmatpush1.bf16.msra.mxu0 %v7532
        %8837 = vmatprep.subr.bf16.mxu0 %v7541
        %8838 = vmatpush1.bf16.msra.mxu0 %v7540
        %8839 = vmatprep.subr.bf16.mxu0 %v7549
        %8840 = vmatpush1.bf16.msra.mxu0 %v7548
        %8841 = vmatprep.subr.bf16.mxu0 %v7557
        %8842 = vmatpush1.bf16.msra.mxu0 %v7556
        %8843 = vmatprep.subr.bf16.mxu0 %v7565
        %8844 = vmatpush1.bf16.msra.mxu0 %v7564
        %8845 = vmatprep.mubr.bf16.mxu0 %v5209
        %8846 = vmatmul.mubr.bf16.gmra.mrb[0].mxu0 %v5208
        %v8847 = vpop.f32.mrb[0].mxu0
        %v8848 = vadd.f32 %v8795, %v8847
        %v8849 = vpop.f32.mrb[0].mxu0
        %v8850 = vadd.f32 %v8797, %v8849
        %v8851 = vpop.f32.mrb[0].mxu0
        %v8852 = vadd.f32 %v8799, %v8851
        %v8853 = vpop.f32.mrb[0].mxu0
        %v8854 = vadd.f32 %v8801, %v8853
        %8855 = vmatprep.mubr.bf16.mxu0 %v5217
        %8856 = vmatmul.mubr.bf16.gmra.mrb[0].mxu0 %v5216
        %v8857 = vpop.f32.mrb[0].mxu0
        %v8858 = vadd.f32 %v8805, %v8857
        %v8859 = vpop.f32.mrb[0].mxu0
        %v8860 = vadd.f32 %v8807, %v8859
        %v8861 = vpop.f32.mrb[0].mxu0
        %v8862 = vadd.f32 %v8809, %v8861
        %v8863 = vpop.f32.mrb[0].mxu0
        %v8864 = vadd.f32 %v8811, %v8863
        %8865 = vdwg.mxu0
        %8866 = vmatprep.subr.bf16.mxu0 %v7573
        %8867 = vmatpush1.bf16.msra.mxu0 %v7572
        %8868 = vmatprep.subr.bf16.mxu0 %v7581
        %8869 = vmatpush1.bf16.msra.mxu0 %v7580
        %8870 = vmatprep.subr.bf16.mxu0 %v7589
        %8871 = vmatpush1.bf16.msra.mxu0 %v7588
        %8872 = vmatprep.subr.bf16.mxu0 %v7597
        %8873 = vmatpush1.bf16.msra.mxu0 %v7596
        %8874 = vmatprep.subr.bf16.mxu0 %v7605
        %8875 = vmatpush1.bf16.msra.mxu0 %v7604
        %8876 = vmatprep.subr.bf16.mxu0 %v7613
        %8877 = vmatpush1.bf16.msra.mxu0 %v7612
        %8878 = vmatprep.subr.bf16.mxu0 %v7621
        %8879 = vmatpush1.bf16.msra.mxu0 %v7620
        %8880 = vmatprep.subr.bf16.mxu0 %v7629
        %8881 = vmatpush1.bf16.msra.mxu0 %v7628
        %8882 = vmatprep.subr.bf16.mxu0 %v7637
        %8883 = vmatpush1.bf16.msra.mxu0 %v7636
        %8884 = vmatprep.subr.bf16.mxu0 %v7645
        %8885 = vmatpush1.bf16.msra.mxu0 %v7644
        %8886 = vmatprep.subr.bf16.mxu0 %v7653
        %8887 = vmatpush1.bf16.msra.mxu0 %v7652
        %8888 = vmatprep.subr.bf16.mxu0 %v7661
        %8889 = vmatpush1.bf16.msra.mxu0 %v7660
        %8890 = vmatprep.subr.bf16.mxu0 %v7669
        %8891 = vmatpush1.bf16.msra.mxu0 %v7668
        %8892 = vmatprep.subr.bf16.mxu0 %v7677
        %8893 = vmatpush1.bf16.msra.mxu0 %v7676
        %8894 = vmatprep.subr.bf16.mxu0 %v7685
        %8895 = vmatpush1.bf16.msra.mxu0 %v7684
        %8896 = vmatprep.subr.bf16.mxu0 %v7693
        %8897 = vmatpush1.bf16.msra.mxu0 %v7692
        %8898 = vmatprep.mubr.bf16.mxu0 %v5211
        %8899 = vmatmul.mubr.bf16.gmra.mrb[0].mxu0 %v5210
        %v8900 = vpop.f32.mrb[0].mxu0
        %v8901 = vadd.f32 %v8848, %v8900
        %v8902 = vpop.f32.mrb[0].mxu0
        %v8903 = vadd.f32 %v8850, %v8902
        %v8904 = vpop.f32.mrb[0].mxu0
        %v8905 = vadd.f32 %v8852, %v8904
        %v8906 = vpop.f32.mrb[0].mxu0
        %v8907 = vadd.f32 %v8854, %v8906
        %8908 = vmatprep.mubr.bf16.mxu0 %v5219
        %8909 = vmatmul.mubr.bf16.gmra.mrb[0].mxu0 %v5218
        %v8910 = vpop.f32.mrb[0].mxu0
        %v8911 = vadd.f32 %v8858, %v8910
        %v8912 = vpop.f32.mrb[0].mxu0
        %v8913 = vadd.f32 %v8860, %v8912
        %v8914 = vpop.f32.mrb[0].mxu0
        %v8915 = vadd.f32 %v8862, %v8914
        %v8916 = vpop.f32.mrb[0].mxu0
        %v8917 = vadd.f32 %v8864, %v8916
        %8918 = vdwg.mxu0
        %8919 = vmatprep.subr.bf16.mxu0 %v7701
        %8920 = vmatpush1.bf16.msra.mxu0 %v7700
        %8921 = vmatprep.subr.bf16.mxu0 %v7709
        %8922 = vmatpush1.bf16.msra.mxu0 %v7708
        %8923 = vmatprep.subr.bf16.mxu0 %v7717
        %8924 = vmatpush1.bf16.msra.mxu0 %v7716
        %8925 = vmatprep.subr.bf16.mxu0 %v7725
        %8926 = vmatpush1.bf16.msra.mxu0 %v7724
        %8927 = vmatprep.subr.bf16.mxu0 %v7733
        %8928 = vmatpush1.bf16.msra.mxu0 %v7732
        %8929 = vmatprep.subr.bf16.mxu0 %v7741
        %8930 = vmatpush1.bf16.msra.mxu0 %v7740
        %8931 = vmatprep.subr.bf16.mxu0 %v7749
        %8932 = vmatpush1.bf16.msra.mxu0 %v7748
        %8933 = vmatprep.subr.bf16.mxu0 %v7757
        %8934 = vmatpush1.bf16.msra.mxu0 %v7756
        %8935 = vmatprep.subr.bf16.mxu0 %v7765
        %8936 = vmatpush1.bf16.msra.mxu0 %v7764
        %8937 = vmatprep.subr.bf16.mxu0 %v7773
        %8938 = vmatpush1.bf16.msra.mxu0 %v7772
        %8939 = vmatprep.subr.bf16.mxu0 %v7781
        %8940 = vmatpush1.bf16.msra.mxu0 %v7780
        %8941 = vmatprep.subr.bf16.mxu0 %v7789
        %8942 = vmatpush1.bf16.msra.mxu0 %v7788
        %8943 = vmatprep.subr.bf16.mxu0 %v7797
        %8944 = vmatpush1.bf16.msra.mxu0 %v7796
        %8945 = vmatprep.subr.bf16.mxu0 %v7805
        %8946 = vmatpush1.bf16.msra.mxu0 %v7804
        %8947 = vmatprep.subr.bf16.mxu0 %v7813
        %8948 = vmatpush1.bf16.msra.mxu0 %v7812
        %8949 = vmatprep.subr.bf16.mxu0 %v7821
        %8950 = vmatpush1.bf16.msra.mxu0 %v7820
        %8951 = vmatprep.mubr.bf16.mxu0 %v5213
        %8952 = vmatmul.mubr.bf16.gmra.mrb[0].mxu0 %v5212
        %v8953 = vpop.f32.mrb[0].mxu0
        %v8954 = vadd.f32 %v8901, %v8953
        %v8955 = vpop.f32.mrb[0].mxu0
        %v8956 = vadd.f32 %v8903, %v8955
        %v8957 = vpop.f32.mrb[0].mxu0
        %v8958 = vadd.f32 %v8905, %v8957
        %v8959 = vpop.f32.mrb[0].mxu0
        %v8960 = vadd.f32 %v8907, %v8959
        %8961 = vmatprep.mubr.bf16.mxu0 %v5221
        %8962 = vmatmul.mubr.bf16.gmra.mrb[0].mxu0 %v5220
        %v8963 = vpop.f32.mrb[0].mxu0
        %v8964 = vadd.f32 %v8911, %v8963
        %v8965 = vpop.f32.mrb[0].mxu0
        %v8966 = vadd.f32 %v8913, %v8965
        %v8967 = vpop.f32.mrb[0].mxu0
        %v8968 = vadd.f32 %v8915, %v8967
        %v8969 = vpop.f32.mrb[0].mxu0
        %v8970 = vadd.f32 %v8917, %v8969
        %8971 = vdwg.mxu0
        %8972 = vmatprep.subr.bf16.mxu0 %v7319
        %8973 = vmatpush1.bf16.msra.mxu0 %v7318
        %8974 = vmatprep.subr.bf16.mxu0 %v7327
        %8975 = vmatpush1.bf16.msra.mxu0 %v7326
        %8976 = vmatprep.subr.bf16.mxu0 %v7335
        %8977 = vmatpush1.bf16.msra.mxu0 %v7334
        %8978 = vmatprep.subr.bf16.mxu0 %v7343
        %8979 = vmatpush1.bf16.msra.mxu0 %v7342
        %8980 = vmatprep.subr.bf16.mxu0 %v7351
        %8981 = vmatpush1.bf16.msra.mxu0 %v7350
        %8982 = vmatprep.subr.bf16.mxu0 %v7359
        %8983 = vmatpush1.bf16.msra.mxu0 %v7358
        %8984 = vmatprep.subr.bf16.mxu0 %v7367
        %8985 = vmatpush1.bf16.msra.mxu0 %v7366
        %8986 = vmatprep.subr.bf16.mxu0 %v7375
        %8987 = vmatpush1.bf16.msra.mxu0 %v7374
        %8988 = vmatprep.subr.bf16.mxu0 %v7383
        %8989 = vmatpush1.bf16.msra.mxu0 %v7382
        %8990 = vmatprep.subr.bf16.mxu0 %v7391
        %8991 = vmatpush1.bf16.msra.mxu0 %v7390
        %8992 = vmatprep.subr.bf16.mxu0 %v7399
        %8993 = vmatpush1.bf16.msra.mxu0 %v7398
        %8994 = vmatprep.subr.bf16.mxu0 %v7407
        %8995 = vmatpush1.bf16.msra.mxu0 %v7406
        %8996 = vmatprep.subr.bf16.mxu0 %v7415
        %8997 = vmatpush1.bf16.msra.mxu0 %v7414
        %8998 = vmatprep.subr.bf16.mxu0 %v7423
        %8999 = vmatpush1.bf16.msra.mxu0 %v7422
        %9000 = vmatprep.subr.bf16.mxu0 %v7431
        %9001 = vmatpush1.bf16.msra.mxu0 %v7430
        %9002 = vmatprep.subr.bf16.mxu0 %v7439
        %9003 = vmatpush1.bf16.msra.mxu0 %v7438
        %9004 = vmatprep.mubr.bf16.mxu0 %v5207
        %9005 = vmatmul.mubr.bf16.gmra.mrb[0].mxu0 %v5206
        %v9006 = vpop.f32.mrb[0].mxu0
        %v9007 = vadd.f32 %v5763, %v9006
        %v9008 = vpop.f32.mrb[0].mxu0
        %v9009 = vadd.f32 %v5767, %v9008
        %v9010 = vpop.f32.mrb[0].mxu0
        %v9011 = vadd.f32 %v5763, %v9010
        %v9012 = vpop.f32.mrb[0].mxu0
        %v9013 = vadd.f32 %v5767, %v9012
        %9014 = vmatprep.mubr.bf16.mxu0 %v5215
        %9015 = vmatmul.mubr.bf16.gmra.mrb[0].mxu0 %v5214
        %v9016 = vpop.f32.mrb[0].mxu0
        %v9017 = vadd.f32 %v5763, %v9016
        %v9018 = vpop.f32.mrb[0].mxu0
        %v9019 = vadd.f32 %v5767, %v9018
        %v9020 = vpop.f32.mrb[0].mxu0
        %v9021 = vadd.f32 %v5763, %v9020
        %v9022 = vpop.f32.mrb[0].mxu0
        %v9023 = vadd.f32 %v5767, %v9022
        %9024 = vdwg.mxu0
        %9025 = vmatprep.subr.bf16.mxu0 %v7447
        %9026 = vmatpush1.bf16.msra.mxu0 %v7446
        %9027 = vmatprep.subr.bf16.mxu0 %v7455
        %9028 = vmatpush1.bf16.msra.mxu0 %v7454
        %9029 = vmatprep.subr.bf16.mxu0 %v7463
        %9030 = vmatpush1.bf16.msra.mxu0 %v7462
        %9031 = vmatprep.subr.bf16.mxu0 %v7471
        %9032 = vmatpush1.bf16.msra.mxu0 %v7470
        %9033 = vmatprep.subr.bf16.mxu0 %v7479
        %9034 = vmatpush1.bf16.msra.mxu0 %v7478
        %9035 = vmatprep.subr.bf16.mxu0 %v7487
        %9036 = vmatpush1.bf16.msra.mxu0 %v7486
        %9037 = vmatprep.subr.bf16.mxu0 %v7495
        %9038 = vmatpush1.bf16.msra.mxu0 %v7494
        %9039 = vmatprep.subr.bf16.mxu0 %v7503
        %9040 = vmatpush1.bf16.msra.mxu0 %v7502
        %9041 = vmatprep.subr.bf16.mxu0 %v7511
        %9042 = vmatpush1.bf16.msra.mxu0 %v7510
        %9043 = vmatprep.subr.bf16.mxu0 %v7519
        %9044 = vmatpush1.bf16.msra.mxu0 %v7518
        %9045 = vmatprep.subr.bf16.mxu0 %v7527
        %9046 = vmatpush1.bf16.msra.mxu0 %v7526
        %9047 = vmatprep.subr.bf16.mxu0 %v7535
        %9048 = vmatpush1.bf16.msra.mxu0 %v7534
        %9049 = vmatprep.subr.bf16.mxu0 %v7543
        %9050 = vmatpush1.bf16.msra.mxu0 %v7542
        %9051 = vmatprep.subr.bf16.mxu0 %v7551
        %9052 = vmatpush1.bf16.msra.mxu0 %v7550
        %9053 = vmatprep.subr.bf16.mxu0 %v7559
        %9054 = vmatpush1.bf16.msra.mxu0 %v7558
        %9055 = vmatprep.subr.bf16.mxu0 %v7567
        %9056 = vmatpush1.bf16.msra.mxu0 %v7566
        %9057 = vmatprep.mubr.bf16.mxu0 %v5209
        %9058 = vmatmul.mubr.bf16.gmra.mrb[0].mxu0 %v5208
        %v9059 = vpop.f32.mrb[0].mxu0
        %v9060 = vadd.f32 %v9007, %v9059
        %v9061 = vpop.f32.mrb[0].mxu0
        %v9062 = vadd.f32 %v9009, %v9061
        %v9063 = vpop.f32.mrb[0].mxu0
        %v9064 = vadd.f32 %v9011, %v9063
        %v9065 = vpop.f32.mrb[0].mxu0
        %v9066 = vadd.f32 %v9013, %v9065
        %9067 = vmatprep.mubr.bf16.mxu0 %v5217
        %9068 = vmatmul.mubr.bf16.gmra.mrb[0].mxu0 %v5216
        %v9069 = vpop.f32.mrb[0].mxu0
        %v9070 = vadd.f32 %v9017, %v9069
        %v9071 = vpop.f32.mrb[0].mxu0
        %v9072 = vadd.f32 %v9019, %v9071
        %v9073 = vpop.f32.mrb[0].mxu0
        %v9074 = vadd.f32 %v9021, %v9073
        %v9075 = vpop.f32.mrb[0].mxu0
        %v9076 = vadd.f32 %v9023, %v9075
        %9077 = vdwg.mxu0
        %9078 = vmatprep.subr.bf16.mxu0 %v7575
        %9079 = vmatpush1.bf16.msra.mxu0 %v7574
        %9080 = vmatprep.subr.bf16.mxu0 %v7583
        %9081 = vmatpush1.bf16.msra.mxu0 %v7582
        %9082 = vmatprep.subr.bf16.mxu0 %v7591
        %9083 = vmatpush1.bf16.msra.mxu0 %v7590
        %9084 = vmatprep.subr.bf16.mxu0 %v7599
        %9085 = vmatpush1.bf16.msra.mxu0 %v7598
        %9086 = vmatprep.subr.bf16.mxu0 %v7607
        %9087 = vmatpush1.bf16.msra.mxu0 %v7606
        %9088 = vmatprep.subr.bf16.mxu0 %v7615
        %9089 = vmatpush1.bf16.msra.mxu0 %v7614
        %9090 = vmatprep.subr.bf16.mxu0 %v7623
        %9091 = vmatpush1.bf16.msra.mxu0 %v7622
        %9092 = vmatprep.subr.bf16.mxu0 %v7631
        %9093 = vmatpush1.bf16.msra.mxu0 %v7630
        %9094 = vmatprep.subr.bf16.mxu0 %v7639
        %9095 = vmatpush1.bf16.msra.mxu0 %v7638
        %9096 = vmatprep.subr.bf16.mxu0 %v7647
        %9097 = vmatpush1.bf16.msra.mxu0 %v7646
        %9098 = vmatprep.subr.bf16.mxu0 %v7655
        %9099 = vmatpush1.bf16.msra.mxu0 %v7654
        %9100 = vmatprep.subr.bf16.mxu0 %v7663
        %9101 = vmatpush1.bf16.msra.mxu0 %v7662
        %9102 = vmatprep.subr.bf16.mxu0 %v7671
        %9103 = vmatpush1.bf16.msra.mxu0 %v7670
        %9104 = vmatprep.subr.bf16.mxu0 %v7679
        %9105 = vmatpush1.bf16.msra.mxu0 %v7678
        %9106 = vmatprep.subr.bf16.mxu0 %v7687
        %9107 = vmatpush1.bf16.msra.mxu0 %v7686
        %9108 = vmatprep.subr.bf16.mxu0 %v7695
        %9109 = vmatpush1.bf16.msra.mxu0 %v7694
        %9110 = vmatprep.mubr.bf16.mxu0 %v5211
        %9111 = vmatmul.mubr.bf16.gmra.mrb[0].mxu0 %v5210
        %v9112 = vpop.f32.mrb[0].mxu0
        %v9113 = vadd.f32 %v9060, %v9112
        %v9114 = vpop.f32.mrb[0].mxu0
        %v9115 = vadd.f32 %v9062, %v9114
        %v9116 = vpop.f32.mrb[0].mxu0
        %v9117 = vadd.f32 %v9064, %v9116
        %v9118 = vpop.f32.mrb[0].mxu0
        %v9119 = vadd.f32 %v9066, %v9118
        %9120 = vmatprep.mubr.bf16.mxu0 %v5219
        %9121 = vmatmul.mubr.bf16.gmra.mrb[0].mxu0 %v5218
        %v9122 = vpop.f32.mrb[0].mxu0
        %v9123 = vadd.f32 %v9070, %v9122
        %v9124 = vpop.f32.mrb[0].mxu0
        %v9125 = vadd.f32 %v9072, %v9124
        %v9126 = vpop.f32.mrb[0].mxu0
        %v9127 = vadd.f32 %v9074, %v9126
        %v9128 = vpop.f32.mrb[0].mxu0
        %v9129 = vadd.f32 %v9076, %v9128
        %9130 = vdwg.mxu0
        %9131 = vmatprep.subr.bf16.mxu0 %v7703
        %9132 = vmatpush1.bf16.msra.mxu0 %v7702
        %9133 = vmatprep.subr.bf16.mxu0 %v7711
        %9134 = vmatpush1.bf16.msra.mxu0 %v7710
        %9135 = vmatprep.subr.bf16.mxu0 %v7719
        %9136 = vmatpush1.bf16.msra.mxu0 %v7718
        %9137 = vmatprep.subr.bf16.mxu0 %v7727
        %9138 = vmatpush1.bf16.msra.mxu0 %v7726
        %9139 = vmatprep.subr.bf16.mxu0 %v7735
        %9140 = vmatpush1.bf16.msra.mxu0 %v7734
        %9141 = vmatprep.subr.bf16.mxu0 %v7743
        %9142 = vmatpush1.bf16.msra.mxu0 %v7742
        %9143 = vmatprep.subr.bf16.mxu0 %v7751
        %9144 = vmatpush1.bf16.msra.mxu0 %v7750
        %9145 = vmatprep.subr.bf16.mxu0 %v7759
        %9146 = vmatpush1.bf16.msra.mxu0 %v7758
        %9147 = vmatprep.subr.bf16.mxu0 %v7767
        %9148 = vmatpush1.bf16.msra.mxu0 %v7766
        %9149 = vmatprep.subr.bf16.mxu0 %v7775
        %9150 = vmatpush1.bf16.msra.mxu0 %v7774
        %9151 = vmatprep.subr.bf16.mxu0 %v7783
        %9152 = vmatpush1.bf16.msra.mxu0 %v7782
        %9153 = vmatprep.subr.bf16.mxu0 %v7791
        %9154 = vmatpush1.bf16.msra.mxu0 %v7790
        %9155 = vmatprep.subr.bf16.mxu0 %v7799
        %9156 = vmatpush1.bf16.msra.mxu0 %v7798
        %9157 = vmatprep.subr.bf16.mxu0 %v7807
        %9158 = vmatpush1.bf16.msra.mxu0 %v7806
        %9159 = vmatprep.subr.bf16.mxu0 %v7815
        %9160 = vmatpush1.bf16.msra.mxu0 %v7814
        %9161 = vmatprep.subr.bf16.mxu0 %v7823
        %9162 = vmatpush1.bf16.msra.mxu0 %v7822
        %9163 = vmatprep.mubr.bf16.mxu0 %v5213
        %9164 = vmatmul.mubr.bf16.gmra.mrb[0].mxu0 %v5212
        %v9165 = vpop.f32.mrb[0].mxu0
        %v9166 = vadd.f32 %v9113, %v9165
        %v9167 = vpop.f32.mrb[0].mxu0
        %v9168 = vadd.f32 %v9115, %v9167
        %v9169 = vpop.f32.mrb[0].mxu0
        %v9170 = vadd.f32 %v9117, %v9169
        %v9171 = vpop.f32.mrb[0].mxu0
        %v9172 = vadd.f32 %v9119, %v9171
        %9173 = vmatprep.mubr.bf16.mxu0 %v5221
        %9174 = vmatmul.mubr.bf16.gmra.mrb[0].mxu0 %v5220
        %v9175 = vpop.f32.mrb[0].mxu0
        %v9176 = vadd.f32 %v9123, %v9175
        %v9177 = vpop.f32.mrb[0].mxu0
        %v9178 = vadd.f32 %v9125, %v9177
        %v9179 = vpop.f32.mrb[0].mxu0
        %v9180 = vadd.f32 %v9127, %v9179
        %v9181 = vpop.f32.mrb[0].mxu0
        %v9182 = vadd.f32 %v9129, %v9181
        %9183 = vdwg.mxu0
        %v9184 = vmul.f32 %v8530, 0.2
        %v9185 = vmul.f32 %v8532, 0.2
        %v9186 = vmul.f32 %v8742, 0.2
        %v9187 = vmul.f32 %v8744, 0.2
        %v9188 = vmul.f32 %v8954, 0.2
        %v9189 = vmul.f32 %v8956, 0.2
        %v9190 = vmul.f32 %v9166, 0.2
        %v9191 = vmul.f32 %v9168, 0.2
        %v9192 = vmul.f32 %v8534, 0.2
        %v9193 = vmul.f32 %v8536, 0.2
        %v9194 = vmul.f32 %v8746, 0.2
        %v9195 = vmul.f32 %v8748, 0.2
        %v9196 = vmul.f32 %v8958, 0.2
        %v9197 = vmul.f32 %v8960, 0.2
        %v9198 = vmul.f32 %v9170, 0.2
        %v9199 = vmul.f32 %v9172, 0.2
        %v9200 = vmul.f32 %v8540, 0.2
        %v9201 = vmul.f32 %v8542, 0.2
        %v9202 = vmul.f32 %v8752, 0.2
        %v9203 = vmul.f32 %v8754, 0.2
        %v9204 = vmul.f32 %v8964, 0.2
        %v9205 = vmul.f32 %v8966, 0.2
        %v9206 = vmul.f32 %v9176, 0.2
        %v9207 = vmul.f32 %v9178, 0.2
        %v9208 = vmul.f32 %v8544, 0.2
        %v9209 = vmul.f32 %v8546, 0.2
        %v9210 = vmul.f32 %v8756, 0.2
        %v9211 = vmul.f32 %v8758, 0.2
        %v9212 = vmul.f32 %v8968, 0.2
        %v9213 = vmul.f32 %v8970, 0.2
        %v9214 = vmul.f32 %v9180, 0.2
        %v9215 = vmul.f32 %v9182, 0.2
        %v9216 = vmax.f32 %v8530, %v9184
        %v9217 = vmax.f32 %v8532, %v9185
        %v9218 = vmax.f32 %v8742, %v9186
        %v9219 = vmax.f32 %v8744, %v9187
        %v9220 = vmax.f32 %v8954, %v9188
        %v9221 = vmax.f32 %v8956, %v9189
        %v9222 = vmax.f32 %v9166, %v9190
        %v9223 = vmax.f32 %v9168, %v9191
        %v9224 = vmax.f32 %v8534, %v9192
        %v9225 = vmax.f32 %v8536, %v9193
        %v9226 = vmax.f32 %v8746, %v9194
        %v9227 = vmax.f32 %v8748, %v9195
        %v9228 = vmax.f32 %v8958, %v9196
        %v9229 = vmax.f32 %v8960, %v9197
        %v9230 = vmax.f32 %v9170, %v9198
        %v9231 = vmax.f32 %v9172, %v9199
        %v9232 = vmax.f32 %v8540, %v9200
        %v9233 = vmax.f32 %v8542, %v9201
        %v9234 = vmax.f32 %v8752, %v9202
        %v9235 = vmax.f32 %v8754, %v9203
        %v9236 = vmax.f32 %v8964, %v9204
        %v9237 = vmax.f32 %v8966, %v9205
        %v9238 = vmax.f32 %v9176, %v9206
        %v9239 = vmax.f32 %v9178, %v9207
        %v9240 = vmax.f32 %v8544, %v9208
        %v9241 = vmax.f32 %v8546, %v9209
        %v9242 = vmax.f32 %v8756, %v9210
        %v9243 = vmax.f32 %v8758, %v9211
        %v9244 = vmax.f32 %v8968, %v9212
        %v9245 = vmax.f32 %v8970, %v9213
        %v9246 = vmax.f32 %v9180, %v9214
        %v9247 = vmax.f32 %v9182, %v9215
        %v9248 = vpack.c.bf16 %v9224, %v9216
        %v9249 = vpack.c.bf16 %v9225, %v9217
        %v9250 = vpack.c.bf16 %v9226, %v9218
        %v9251 = vpack.c.bf16 %v9227, %v9219
        %v9252 = vpack.c.bf16 %v9228, %v9220
        %v9253 = vpack.c.bf16 %v9229, %v9221
        %v9254 = vpack.c.bf16 %v9230, %v9222
        %v9255 = vpack.c.bf16 %v9231, %v9223
        %v9256 = vpack.c.bf16 %v9240, %v9232
        %v9257 = vpack.c.bf16 %v9241, %v9233
        %v9258 = vpack.c.bf16 %v9242, %v9234
        %v9259 = vpack.c.bf16 %v9243, %v9235
        %v9260 = vpack.c.bf16 %v9244, %v9236
        %v9261 = vpack.c.bf16 %v9245, %v9237
        %v9262 = vpack.c.bf16 %v9246, %v9238
        %v9263 = vpack.c.bf16 %v9247, %v9239
        %v9264 = vld [vmem:[#allocation12] sm:$0xf]
        %v9265 = vld [vmem:[#allocation12 + $0x4] sm:$0xf]
        %v9266 = vld [vmem:[#allocation12 + $0x8] sm:$0xf]
        %v9267 = vld [vmem:[#allocation12 + $0xc] sm:$0xf]
        %v9268 = vld [vmem:[#allocation12 + $0x10] sm:$0xf]
        %v9269 = vld [vmem:[#allocation12 + $0x14] sm:$0xf]
        %v9270 = vld [vmem:[#allocation12 + $0x18] sm:$0xf]
        %v9271 = vld [vmem:[#allocation12 + $0x1c] sm:$0xf]
        %v9272 = vld [vmem:[#allocation12 + $0x20] sm:$0xf]
        %v9273 = vld [vmem:[#allocation12 + $0x24] sm:$0xf]
        %v9274 = vld [vmem:[#allocation12 + $0x28] sm:$0xf]
        %v9275 = vld [vmem:[#allocation12 + $0x2c] sm:$0xf]
        %v9276 = vld [vmem:[#allocation12 + $0x30] sm:$0xf]
        %v9277 = vld [vmem:[#allocation12 + $0x34] sm:$0xf]
        %v9278 = vld [vmem:[#allocation12 + $0x38] sm:$0xf]
        %v9279 = vld [vmem:[#allocation12 + $0x3c] sm:$0xf]
        %v9280 = vld [vmem:[#allocation12 + $0x40] sm:$0xf]
        %v9281 = vld [vmem:[#allocation12 + $0x44] sm:$0xf]
        %v9282 = vld [vmem:[#allocation12 + $0x48] sm:$0xf]
        %v9283 = vld [vmem:[#allocation12 + $0x4c] sm:$0xf]
        %v9284 = vld [vmem:[#allocation12 + $0x50] sm:$0xf]
        %v9285 = vld [vmem:[#allocation12 + $0x54] sm:$0xf]
        %v9286 = vld [vmem:[#allocation12 + $0x58] sm:$0xf]
        %v9287 = vld [vmem:[#allocation12 + $0x5c] sm:$0xf]
        %v9288 = vld [vmem:[#allocation12 + $0x60] sm:$0xf]
        %v9289 = vld [vmem:[#allocation12 + $0x64] sm:$0xf]
        %v9290 = vld [vmem:[#allocation12 + $0x68] sm:$0xf]
        %v9291 = vld [vmem:[#allocation12 + $0x6c] sm:$0xf]
        %v9292 = vld [vmem:[#allocation12 + $0x70] sm:$0xf]
        %v9293 = vld [vmem:[#allocation12 + $0x74] sm:$0xf]
        %v9294 = vld [vmem:[#allocation12 + $0x78] sm:$0xf]
        %v9295 = vld [vmem:[#allocation12 + $0x7c] sm:$0xf]
        %v9296 = vld [vmem:[#allocation12 + $0x80] sm:$0xf]
        %v9297 = vld [vmem:[#allocation12 + $0x84] sm:$0xf]
        %v9298 = vld [vmem:[#allocation12 + $0x88] sm:$0xf]
        %v9299 = vld [vmem:[#allocation12 + $0x8c] sm:$0xf]
        %v9300 = vld [vmem:[#allocation12 + $0x90] sm:$0xf]
        %v9301 = vld [vmem:[#allocation12 + $0x94] sm:$0xf]
        %v9302 = vld [vmem:[#allocation12 + $0x98] sm:$0xf]
        %v9303 = vld [vmem:[#allocation12 + $0x9c] sm:$0xf]
        %v9304 = vld [vmem:[#allocation12 + $0xa0] sm:$0xf]
        %v9305 = vld [vmem:[#allocation12 + $0xa4] sm:$0xf]
        %v9306 = vld [vmem:[#allocation12 + $0xa8] sm:$0xf]
        %v9307 = vld [vmem:[#allocation12 + $0xac] sm:$0xf]
        %v9308 = vld [vmem:[#allocation12 + $0xb0] sm:$0xf]
        %v9309 = vld [vmem:[#allocation12 + $0xb4] sm:$0xf]
        %v9310 = vld [vmem:[#allocation12 + $0xb8] sm:$0xf]
        %v9311 = vld [vmem:[#allocation12 + $0xbc] sm:$0xf]
        %v9312 = vld [vmem:[#allocation12 + $0xc0] sm:$0xf]
        %v9313 = vld [vmem:[#allocation12 + $0xc4] sm:$0xf]
        %v9314 = vld [vmem:[#allocation12 + $0xc8] sm:$0xf]
        %v9315 = vld [vmem:[#allocation12 + $0xcc] sm:$0xf]
        %v9316 = vld [vmem:[#allocation12 + $0xd0] sm:$0xf]
        %v9317 = vld [vmem:[#allocation12 + $0xd4] sm:$0xf]
        %v9318 = vld [vmem:[#allocation12 + $0xd8] sm:$0xf]
        %v9319 = vld [vmem:[#allocation12 + $0xdc] sm:$0xf]
        %v9320 = vld [vmem:[#allocation12 + $0xe0] sm:$0xf]
        %v9321 = vld [vmem:[#allocation12 + $0xe4] sm:$0xf]
        %v9322 = vld [vmem:[#allocation12 + $0xe8] sm:$0xf]
        %v9323 = vld [vmem:[#allocation12 + $0xec] sm:$0xf]
        %v9324 = vld [vmem:[#allocation12 + $0xf0] sm:$0xf]
        %v9325 = vld [vmem:[#allocation12 + $0xf4] sm:$0xf]
        %v9326 = vld [vmem:[#allocation12 + $0xf8] sm:$0xf]
        %v9327 = vld [vmem:[#allocation12 + $0xfc] sm:$0xf]
        %v9328 = vld [vmem:[#allocation12 + $0x100] sm:$0xf]
        %v9329 = vld [vmem:[#allocation12 + $0x104] sm:$0xf]
        %v9330 = vld [vmem:[#allocation12 + $0x108] sm:$0xf]
        %v9331 = vld [vmem:[#allocation12 + $0x10c] sm:$0xf]
        %v9332 = vld [vmem:[#allocation12 + $0x110] sm:$0xf]
        %v9333 = vld [vmem:[#allocation12 + $0x114] sm:$0xf]
        %v9334 = vld [vmem:[#allocation12 + $0x118] sm:$0xf]
        %v9335 = vld [vmem:[#allocation12 + $0x11c] sm:$0xf]
        %v9336 = vld [vmem:[#allocation12 + $0x120] sm:$0xf]
        %v9337 = vld [vmem:[#allocation12 + $0x124] sm:$0xf]
        %v9338 = vld [vmem:[#allocation12 + $0x128] sm:$0xf]
        %v9339 = vld [vmem:[#allocation12 + $0x12c] sm:$0xf]
        %v9340 = vld [vmem:[#allocation12 + $0x130] sm:$0xf]
        %v9341 = vld [vmem:[#allocation12 + $0x134] sm:$0xf]
        %v9342 = vld [vmem:[#allocation12 + $0x138] sm:$0xf]
        %v9343 = vld [vmem:[#allocation12 + $0x13c] sm:$0xf]
        %v9344 = vld [vmem:[#allocation12 + $0x140] sm:$0xf]
        %v9345 = vld [vmem:[#allocation12 + $0x144] sm:$0xf]
        %v9346 = vld [vmem:[#allocation12 + $0x148] sm:$0xf]
        %v9347 = vld [vmem:[#allocation12 + $0x14c] sm:$0xf]
        %v9348 = vld [vmem:[#allocation12 + $0x150] sm:$0xf]
        %v9349 = vld [vmem:[#allocation12 + $0x154] sm:$0xf]
        %v9350 = vld [vmem:[#allocation12 + $0x158] sm:$0xf]
        %v9351 = vld [vmem:[#allocation12 + $0x15c] sm:$0xf]
        %v9352 = vld [vmem:[#allocation12 + $0x160] sm:$0xf]
        %v9353 = vld [vmem:[#allocation12 + $0x164] sm:$0xf]
        %v9354 = vld [vmem:[#allocation12 + $0x168] sm:$0xf]
        %v9355 = vld [vmem:[#allocation12 + $0x16c] sm:$0xf]
        %v9356 = vld [vmem:[#allocation12 + $0x170] sm:$0xf]
        %v9357 = vld [vmem:[#allocation12 + $0x174] sm:$0xf]
        %v9358 = vld [vmem:[#allocation12 + $0x178] sm:$0xf]
        %v9359 = vld [vmem:[#allocation12 + $0x17c] sm:$0xf]
        %v9360 = vld [vmem:[#allocation12 + $0x180] sm:$0xf]
        %v9361 = vld [vmem:[#allocation12 + $0x184] sm:$0xf]
        %v9362 = vld [vmem:[#allocation12 + $0x188] sm:$0xf]
        %v9363 = vld [vmem:[#allocation12 + $0x18c] sm:$0xf]
        %v9364 = vld [vmem:[#allocation12 + $0x190] sm:$0xf]
        %v9365 = vld [vmem:[#allocation12 + $0x194] sm:$0xf]
        %v9366 = vld [vmem:[#allocation12 + $0x198] sm:$0xf]
        %v9367 = vld [vmem:[#allocation12 + $0x19c] sm:$0xf]
        %v9368 = vld [vmem:[#allocation12 + $0x1a0] sm:$0xf]
        %v9369 = vld [vmem:[#allocation12 + $0x1a4] sm:$0xf]
        %v9370 = vld [vmem:[#allocation12 + $0x1a8] sm:$0xf]
        %v9371 = vld [vmem:[#allocation12 + $0x1ac] sm:$0xf]
        %v9372 = vld [vmem:[#allocation12 + $0x1b0] sm:$0xf]
        %v9373 = vld [vmem:[#allocation12 + $0x1b4] sm:$0xf]
        %v9374 = vld [vmem:[#allocation12 + $0x1b8] sm:$0xf]
        %v9375 = vld [vmem:[#allocation12 + $0x1bc] sm:$0xf]
        %v9376 = vld [vmem:[#allocation12 + $0x1c0] sm:$0xf]
        %v9377 = vld [vmem:[#allocation12 + $0x1c4] sm:$0xf]
        %v9378 = vld [vmem:[#allocation12 + $0x1c8] sm:$0xf]
        %v9379 = vld [vmem:[#allocation12 + $0x1cc] sm:$0xf]
        %v9380 = vld [vmem:[#allocation12 + $0x1d0] sm:$0xf]
        %v9381 = vld [vmem:[#allocation12 + $0x1d4] sm:$0xf]
        %v9382 = vld [vmem:[#allocation12 + $0x1d8] sm:$0xf]
        %v9383 = vld [vmem:[#allocation12 + $0x1dc] sm:$0xf]
        %v9384 = vld [vmem:[#allocation12 + $0x1e0] sm:$0xf]
        %v9385 = vld [vmem:[#allocation12 + $0x1e4] sm:$0xf]
        %v9386 = vld [vmem:[#allocation12 + $0x1e8] sm:$0xf]
        %v9387 = vld [vmem:[#allocation12 + $0x1ec] sm:$0xf]
        %v9388 = vld [vmem:[#allocation12 + $0x1f0] sm:$0xf]
        %v9389 = vld [vmem:[#allocation12 + $0x1f4] sm:$0xf]
        %v9390 = vld [vmem:[#allocation12 + $0x1f8] sm:$0xf]
        %v9391 = vld [vmem:[#allocation12 + $0x1fc] sm:$0xf]
        %v9392 = vld [vmem:[#allocation13] sm:$0x1]
        %v9394 = vlaneseq
        %v9395 = vshrl.u32 %v9394, 7
        %v9396 = vsub.s32 0, %v9395
        %v9397 = vrot.slane %v9392, %v9396
        %v9527 = vunpack.c.l.b16 %v9264
        %v9528 = vunpack.c.l.b16 %v9265
        %v9529 = vunpack.c.l.b16 %v9266
        %v9530 = vunpack.c.l.b16 %v9267
        %v9531 = vunpack.c.l.b16 %v9268
        %v9532 = vunpack.c.l.b16 %v9269
        %v9533 = vunpack.c.l.b16 %v9270
        %v9534 = vunpack.c.l.b16 %v9271
        %v9535 = vunpack.c.l.b16 %v9272
        %v9536 = vunpack.c.l.b16 %v9273
        %v9537 = vunpack.c.l.b16 %v9274
        %v9538 = vunpack.c.l.b16 %v9275
        %v9539 = vunpack.c.l.b16 %v9276
        %v9540 = vunpack.c.l.b16 %v9277
        %v9541 = vunpack.c.l.b16 %v9278
        %v9542 = vunpack.c.l.b16 %v9279
        %v9543 = vunpack.c.l.b16 %v9280
        %v9544 = vunpack.c.l.b16 %v9281
        %v9545 = vunpack.c.l.b16 %v9282
        %v9546 = vunpack.c.l.b16 %v9283
        %v9547 = vunpack.c.l.b16 %v9284
        %v9548 = vunpack.c.l.b16 %v9285
        %v9549 = vunpack.c.l.b16 %v9286
        %v9550 = vunpack.c.l.b16 %v9287
        %v9551 = vunpack.c.l.b16 %v9288
        %v9552 = vunpack.c.l.b16 %v9289
        %v9553 = vunpack.c.l.b16 %v9290
        %v9554 = vunpack.c.l.b16 %v9291
        %v9555 = vunpack.c.l.b16 %v9292
        %v9556 = vunpack.c.l.b16 %v9293
        %v9557 = vunpack.c.l.b16 %v9294
        %v9558 = vunpack.c.l.b16 %v9295
        %v9559 = vunpack.c.l.b16 %v9296
        %v9560 = vunpack.c.l.b16 %v9297
        %v9561 = vunpack.c.l.b16 %v9298
        %v9562 = vunpack.c.l.b16 %v9299
        %v9563 = vunpack.c.l.b16 %v9300
        %v9564 = vunpack.c.l.b16 %v9301
        %v9565 = vunpack.c.l.b16 %v9302
        %v9566 = vunpack.c.l.b16 %v9303
        %v9567 = vunpack.c.l.b16 %v9304
        %v9568 = vunpack.c.l.b16 %v9305
        %v9569 = vunpack.c.l.b16 %v9306
        %v9570 = vunpack.c.l.b16 %v9307
        %v9571 = vunpack.c.l.b16 %v9308
        %v9572 = vunpack.c.l.b16 %v9309
        %v9573 = vunpack.c.l.b16 %v9310
        %v9574 = vunpack.c.l.b16 %v9311
        %v9575 = vunpack.c.l.b16 %v9312
        %v9576 = vunpack.c.l.b16 %v9313
        %v9577 = vunpack.c.l.b16 %v9314
        %v9578 = vunpack.c.l.b16 %v9315
        %v9579 = vunpack.c.l.b16 %v9316
        %v9580 = vunpack.c.l.b16 %v9317
        %v9581 = vunpack.c.l.b16 %v9318
        %v9582 = vunpack.c.l.b16 %v9319
        %v9583 = vunpack.c.l.b16 %v9320
        %v9584 = vunpack.c.l.b16 %v9321
        %v9585 = vunpack.c.l.b16 %v9322
        %v9586 = vunpack.c.l.b16 %v9323
        %v9587 = vunpack.c.l.b16 %v9324
        %v9588 = vunpack.c.l.b16 %v9325
        %v9589 = vunpack.c.l.b16 %v9326
        %v9590 = vunpack.c.l.b16 %v9327
        %v9591 = vunpack.c.l.b16 %v9328
        %v9592 = vunpack.c.l.b16 %v9329
        %v9593 = vunpack.c.l.b16 %v9330
        %v9594 = vunpack.c.l.b16 %v9331
        %v9595 = vunpack.c.l.b16 %v9332
        %v9596 = vunpack.c.l.b16 %v9333
        %v9597 = vunpack.c.l.b16 %v9334
        %v9598 = vunpack.c.l.b16 %v9335
        %v9599 = vunpack.c.l.b16 %v9336
        %v9600 = vunpack.c.l.b16 %v9337
        %v9601 = vunpack.c.l.b16 %v9338
        %v9602 = vunpack.c.l.b16 %v9339
        %v9603 = vunpack.c.l.b16 %v9340
        %v9604 = vunpack.c.l.b16 %v9341
        %v9605 = vunpack.c.l.b16 %v9342
        %v9606 = vunpack.c.l.b16 %v9343
        %v9607 = vunpack.c.l.b16 %v9344
        %v9608 = vunpack.c.l.b16 %v9345
        %v9609 = vunpack.c.l.b16 %v9346
        %v9610 = vunpack.c.l.b16 %v9347
        %v9611 = vunpack.c.l.b16 %v9348
        %v9612 = vunpack.c.l.b16 %v9349
        %v9613 = vunpack.c.l.b16 %v9350
        %v9614 = vunpack.c.l.b16 %v9351
        %v9615 = vunpack.c.l.b16 %v9352
        %v9616 = vunpack.c.l.b16 %v9353
        %v9617 = vunpack.c.l.b16 %v9354
        %v9618 = vunpack.c.l.b16 %v9355
        %v9619 = vunpack.c.l.b16 %v9356
        %v9620 = vunpack.c.l.b16 %v9357
        %v9621 = vunpack.c.l.b16 %v9358
        %v9622 = vunpack.c.l.b16 %v9359
        %v9623 = vunpack.c.l.b16 %v9360
        %v9624 = vunpack.c.l.b16 %v9361
        %v9625 = vunpack.c.l.b16 %v9362
        %v9626 = vunpack.c.l.b16 %v9363
        %v9627 = vunpack.c.l.b16 %v9364
        %v9628 = vunpack.c.l.b16 %v9365
        %v9629 = vunpack.c.l.b16 %v9366
        %v9630 = vunpack.c.l.b16 %v9367
        %v9631 = vunpack.c.l.b16 %v9368
        %v9632 = vunpack.c.l.b16 %v9369
        %v9633 = vunpack.c.l.b16 %v9370
        %v9634 = vunpack.c.l.b16 %v9371
        %v9635 = vunpack.c.l.b16 %v9372
        %v9636 = vunpack.c.l.b16 %v9373
        %v9637 = vunpack.c.l.b16 %v9374
        %v9638 = vunpack.c.l.b16 %v9375
        %v9639 = vunpack.c.l.b16 %v9376
        %v9640 = vunpack.c.l.b16 %v9377
        %v9641 = vunpack.c.l.b16 %v9378
        %v9642 = vunpack.c.l.b16 %v9379
        %v9643 = vunpack.c.l.b16 %v9380
        %v9644 = vunpack.c.l.b16 %v9381
        %v9645 = vunpack.c.l.b16 %v9382
        %v9646 = vunpack.c.l.b16 %v9383
        %v9647 = vunpack.c.l.b16 %v9384
        %v9648 = vunpack.c.l.b16 %v9385
        %v9649 = vunpack.c.l.b16 %v9386
        %v9650 = vunpack.c.l.b16 %v9387
        %v9651 = vunpack.c.l.b16 %v9388
        %v9652 = vunpack.c.l.b16 %v9389
        %v9653 = vunpack.c.l.b16 %v9390
        %v9654 = vunpack.c.l.b16 %v9391
        %v9655 = vpack.c.b16 %v9528, %v9527
        %v9656 = vpack.c.b16 %v9530, %v9529
        %v9657 = vpack.c.b16 %v9532, %v9531
        %v9658 = vpack.c.b16 %v9534, %v9533
        %v9659 = vpack.c.b16 %v9536, %v9535
        %v9660 = vpack.c.b16 %v9538, %v9537
        %v9661 = vpack.c.b16 %v9540, %v9539
        %v9662 = vpack.c.b16 %v9542, %v9541
        %v9663 = vpack.c.b16 %v9544, %v9543
        %v9664 = vpack.c.b16 %v9546, %v9545
        %v9665 = vpack.c.b16 %v9548, %v9547
        %v9666 = vpack.c.b16 %v9550, %v9549
        %v9667 = vpack.c.b16 %v9552, %v9551
        %v9668 = vpack.c.b16 %v9554, %v9553
        %v9669 = vpack.c.b16 %v9556, %v9555
        %v9670 = vpack.c.b16 %v9558, %v9557
        %v9671 = vpack.c.b16 %v9560, %v9559
        %v9672 = vpack.c.b16 %v9562, %v9561
        %v9673 = vpack.c.b16 %v9564, %v9563
        %v9674 = vpack.c.b16 %v9566, %v9565
        %v9675 = vpack.c.b16 %v9568, %v9567
        %v9676 = vpack.c.b16 %v9570, %v9569
        %v9677 = vpack.c.b16 %v9572, %v9571
        %v9678 = vpack.c.b16 %v9574, %v9573
        %v9679 = vpack.c.b16 %v9576, %v9575
        %v9680 = vpack.c.b16 %v9578, %v9577
        %v9681 = vpack.c.b16 %v9580, %v9579
        %v9682 = vpack.c.b16 %v9582, %v9581
        %v9683 = vpack.c.b16 %v9584, %v9583
        %v9684 = vpack.c.b16 %v9586, %v9585
        %v9685 = vpack.c.b16 %v9588, %v9587
        %v9686 = vpack.c.b16 %v9590, %v9589
        %v9687 = vpack.c.b16 %v9592, %v9591
        %v9688 = vpack.c.b16 %v9594, %v9593
        %v9689 = vpack.c.b16 %v9596, %v9595
        %v9690 = vpack.c.b16 %v9598, %v9597
        %v9691 = vpack.c.b16 %v9600, %v9599
        %v9692 = vpack.c.b16 %v9602, %v9601
        %v9693 = vpack.c.b16 %v9604, %v9603
        %v9694 = vpack.c.b16 %v9606, %v9605
        %v9695 = vpack.c.b16 %v9608, %v9607
        %v9696 = vpack.c.b16 %v9610, %v9609
        %v9697 = vpack.c.b16 %v9612, %v9611
        %v9698 = vpack.c.b16 %v9614, %v9613
        %v9699 = vpack.c.b16 %v9616, %v9615
        %v9700 = vpack.c.b16 %v9618, %v9617
        %v9701 = vpack.c.b16 %v9620, %v9619
        %v9702 = vpack.c.b16 %v9622, %v9621
        %v9703 = vpack.c.b16 %v9624, %v9623
        %v9704 = vpack.c.b16 %v9626, %v9625
        %v9705 = vpack.c.b16 %v9628, %v9627
        %v9706 = vpack.c.b16 %v9630, %v9629
        %v9707 = vpack.c.b16 %v9632, %v9631
        %v9708 = vpack.c.b16 %v9634, %v9633
        %v9709 = vpack.c.b16 %v9636, %v9635
        %v9710 = vpack.c.b16 %v9638, %v9637
        %v9711 = vpack.c.b16 %v9640, %v9639
        %v9712 = vpack.c.b16 %v9642, %v9641
        %v9713 = vpack.c.b16 %v9644, %v9643
        %v9714 = vpack.c.b16 %v9646, %v9645
        %v9715 = vpack.c.b16 %v9648, %v9647
        %v9716 = vpack.c.b16 %v9650, %v9649
        %v9717 = vpack.c.b16 %v9652, %v9651
        %v9718 = vpack.c.b16 %v9654, %v9653
        %9783 = vmatprep.subr.bf16.mxu0 0
        %9784 = vmatpush1.bf16.msra.mxu0 %v9655
        %9785 = vmatprep.subr.bf16.mxu0 0
        %9786 = vmatpush1.bf16.msra.mxu0 %v9656
        %9787 = vmatprep.subr.bf16.mxu0 0
        %9788 = vmatpush1.bf16.msra.mxu0 %v9657
        %9789 = vmatprep.subr.bf16.mxu0 0
        %9790 = vmatpush1.bf16.msra.mxu0 %v9658
        %9791 = vmatprep.subr.bf16.mxu0 0
        %9792 = vmatpush1.bf16.msra.mxu0 %v9659
        %9793 = vmatprep.subr.bf16.mxu0 0
        %9794 = vmatpush1.bf16.msra.mxu0 %v9660
        %9795 = vmatprep.subr.bf16.mxu0 0
        %9796 = vmatpush1.bf16.msra.mxu0 %v9661
        %9797 = vmatprep.subr.bf16.mxu0 0
        %9798 = vmatpush1.bf16.msra.mxu0 %v9662
        %9799 = vmatprep.subr.bf16.mxu0 0
        %9800 = vmatpush1.bf16.msra.mxu0 %v9663
        %9801 = vmatprep.subr.bf16.mxu0 0
        %9802 = vmatpush1.bf16.msra.mxu0 %v9664
        %9803 = vmatprep.subr.bf16.mxu0 0
        %9804 = vmatpush1.bf16.msra.mxu0 %v9665
        %9805 = vmatprep.subr.bf16.mxu0 0
        %9806 = vmatpush1.bf16.msra.mxu0 %v9666
        %9807 = vmatprep.subr.bf16.mxu0 0
        %9808 = vmatpush1.bf16.msra.mxu0 %v9667
        %9809 = vmatprep.subr.bf16.mxu0 0
        %9810 = vmatpush1.bf16.msra.mxu0 %v9668
        %9811 = vmatprep.subr.bf16.mxu0 0
        %9812 = vmatpush1.bf16.msra.mxu0 %v9669
        %9813 = vmatprep.subr.bf16.mxu0 0
        %9814 = vmatpush1.bf16.msra.mxu0 %v9670
        %9815 = vmatprep.mubr.bf16.mxu0 %v9249
        %9816 = vmatmul.mubr.bf16.gmra.mrb[0].mxu0 %v9248
        %v9817 = vpop.f32.mrb[0].mxu0
        %v9818 = vadd.f32 %v9397, %v9817
        %v9819 = vpop.f32.mrb[0].mxu0
        %v9820 = vpop.f32.mrb[0].mxu0
        %v9821 = vadd.f32 %v9397, %v9820
        %v9822 = vpop.f32.mrb[0].mxu0
        %9823 = vmatprep.mubr.bf16.mxu0 %v9257
        %9824 = vmatmul.mubr.bf16.gmra.mrb[0].mxu0 %v9256
        %v9825 = vpop.f32.mrb[0].mxu0
        %v9826 = vadd.f32 %v9397, %v9825
        %v9827 = vpop.f32.mrb[0].mxu0
        %v9828 = vpop.f32.mrb[0].mxu0
        %v9829 = vadd.f32 %v9397, %v9828
        %v9830 = vpop.f32.mrb[0].mxu0
        %9831 = vdwg.mxu0
        %9832 = vmatprep.subr.bf16.mxu0 0
        %9833 = vmatpush1.bf16.msra.mxu0 %v9671
        %9834 = vmatprep.subr.bf16.mxu0 0
        %9835 = vmatpush1.bf16.msra.mxu0 %v9672
        %9836 = vmatprep.subr.bf16.mxu0 0
        %9837 = vmatpush1.bf16.msra.mxu0 %v9673
        %9838 = vmatprep.subr.bf16.mxu0 0
        %9839 = vmatpush1.bf16.msra.mxu0 %v9674
        %9840 = vmatprep.subr.bf16.mxu0 0
        %9841 = vmatpush1.bf16.msra.mxu0 %v9675
        %9842 = vmatprep.subr.bf16.mxu0 0
        %9843 = vmatpush1.bf16.msra.mxu0 %v9676
        %9844 = vmatprep.subr.bf16.mxu0 0
        %9845 = vmatpush1.bf16.msra.mxu0 %v9677
        %9846 = vmatprep.subr.bf16.mxu0 0
        %9847 = vmatpush1.bf16.msra.mxu0 %v9678
        %9848 = vmatprep.subr.bf16.mxu0 0
        %9849 = vmatpush1.bf16.msra.mxu0 %v9679
        %9850 = vmatprep.subr.bf16.mxu0 0
        %9851 = vmatpush1.bf16.msra.mxu0 %v9680
        %9852 = vmatprep.subr.bf16.mxu0 0
        %9853 = vmatpush1.bf16.msra.mxu0 %v9681
        %9854 = vmatprep.subr.bf16.mxu0 0
        %9855 = vmatpush1.bf16.msra.mxu0 %v9682
        %9856 = vmatprep.subr.bf16.mxu0 0
        %9857 = vmatpush1.bf16.msra.mxu0 %v9683
        %9858 = vmatprep.subr.bf16.mxu0 0
        %9859 = vmatpush1.bf16.msra.mxu0 %v9684
        %9860 = vmatprep.subr.bf16.mxu0 0
        %9861 = vmatpush1.bf16.msra.mxu0 %v9685
        %9862 = vmatprep.subr.bf16.mxu0 0
        %9863 = vmatpush1.bf16.msra.mxu0 %v9686
        %9864 = vmatprep.mubr.bf16.mxu0 %v9251
        %9865 = vmatmul.mubr.bf16.gmra.mrb[0].mxu0 %v9250
        %v9866 = vpop.f32.mrb[0].mxu0
        %v9867 = vadd.f32 %v9818, %v9866
        %v9868 = vpop.f32.mrb[0].mxu0
        %v9869 = vpop.f32.mrb[0].mxu0
        %v9870 = vadd.f32 %v9821, %v9869
        %v9871 = vpop.f32.mrb[0].mxu0
        %9872 = vmatprep.mubr.bf16.mxu0 %v9259
        %9873 = vmatmul.mubr.bf16.gmra.mrb[0].mxu0 %v9258
        %v9874 = vpop.f32.mrb[0].mxu0
        %v9875 = vadd.f32 %v9826, %v9874
        %v9876 = vpop.f32.mrb[0].mxu0
        %v9877 = vpop.f32.mrb[0].mxu0
        %v9878 = vadd.f32 %v9829, %v9877
        %v9879 = vpop.f32.mrb[0].mxu0
        %9880 = vdwg.mxu0
        %9881 = vmatprep.subr.bf16.mxu0 0
        %9882 = vmatpush1.bf16.msra.mxu0 %v9687
        %9883 = vmatprep.subr.bf16.mxu0 0
        %9884 = vmatpush1.bf16.msra.mxu0 %v9688
        %9885 = vmatprep.subr.bf16.mxu0 0
        %9886 = vmatpush1.bf16.msra.mxu0 %v9689
        %9887 = vmatprep.subr.bf16.mxu0 0
        %9888 = vmatpush1.bf16.msra.mxu0 %v9690
        %9889 = vmatprep.subr.bf16.mxu0 0
        %9890 = vmatpush1.bf16.msra.mxu0 %v9691
        %9891 = vmatprep.subr.bf16.mxu0 0
        %9892 = vmatpush1.bf16.msra.mxu0 %v9692
        %9893 = vmatprep.subr.bf16.mxu0 0
        %9894 = vmatpush1.bf16.msra.mxu0 %v9693
        %9895 = vmatprep.subr.bf16.mxu0 0
        %9896 = vmatpush1.bf16.msra.mxu0 %v9694
        %9897 = vmatprep.subr.bf16.mxu0 0
        %9898 = vmatpush1.bf16.msra.mxu0 %v9695
        %9899 = vmatprep.subr.bf16.mxu0 0
        %9900 = vmatpush1.bf16.msra.mxu0 %v9696
        %9901 = vmatprep.subr.bf16.mxu0 0
        %9902 = vmatpush1.bf16.msra.mxu0 %v9697
        %9903 = vmatprep.subr.bf16.mxu0 0
        %9904 = vmatpush1.bf16.msra.mxu0 %v9698
        %9905 = vmatprep.subr.bf16.mxu0 0
        %9906 = vmatpush1.bf16.msra.mxu0 %v9699
        %9907 = vmatprep.subr.bf16.mxu0 0
        %9908 = vmatpush1.bf16.msra.mxu0 %v9700
        %9909 = vmatprep.subr.bf16.mxu0 0
        %9910 = vmatpush1.bf16.msra.mxu0 %v9701
        %9911 = vmatprep.subr.bf16.mxu0 0
        %9912 = vmatpush1.bf16.msra.mxu0 %v9702
        %9913 = vmatprep.mubr.bf16.mxu0 %v9253
        %9914 = vmatmul.mubr.bf16.gmra.mrb[0].mxu0 %v9252
        %v9915 = vpop.f32.mrb[0].mxu0
        %v9916 = vadd.f32 %v9867, %v9915
        %v9917 = vpop.f32.mrb[0].mxu0
        %v9918 = vpop.f32.mrb[0].mxu0
        %v9919 = vadd.f32 %v9870, %v9918
        %v9920 = vpop.f32.mrb[0].mxu0
        %9921 = vmatprep.mubr.bf16.mxu0 %v9261
        %9922 = vmatmul.mubr.bf16.gmra.mrb[0].mxu0 %v9260
        %v9923 = vpop.f32.mrb[0].mxu0
        %v9924 = vadd.f32 %v9875, %v9923
        %v9925 = vpop.f32.mrb[0].mxu0
        %v9926 = vpop.f32.mrb[0].mxu0
        %v9927 = vadd.f32 %v9878, %v9926
        %v9928 = vpop.f32.mrb[0].mxu0
        %9929 = vdwg.mxu0
        %9930 = vmatprep.subr.bf16.mxu0 0
        %9931 = vmatpush1.bf16.msra.mxu0 %v9703
        %9932 = vmatprep.subr.bf16.mxu0 0
        %9933 = vmatpush1.bf16.msra.mxu0 %v9704
        %9934 = vmatprep.subr.bf16.mxu0 0
        %9935 = vmatpush1.bf16.msra.mxu0 %v9705
        %9936 = vmatprep.subr.bf16.mxu0 0
        %9937 = vmatpush1.bf16.msra.mxu0 %v9706
        %9938 = vmatprep.subr.bf16.mxu0 0
        %9939 = vmatpush1.bf16.msra.mxu0 %v9707
        %9940 = vmatprep.subr.bf16.mxu0 0
        %9941 = vmatpush1.bf16.msra.mxu0 %v9708
        %9942 = vmatprep.subr.bf16.mxu0 0
        %9943 = vmatpush1.bf16.msra.mxu0 %v9709
        %9944 = vmatprep.subr.bf16.mxu0 0
        %9945 = vmatpush1.bf16.msra.mxu0 %v9710
        %9946 = vmatprep.subr.bf16.mxu0 0
        %9947 = vmatpush1.bf16.msra.mxu0 %v9711
        %9948 = vmatprep.subr.bf16.mxu0 0
        %9949 = vmatpush1.bf16.msra.mxu0 %v9712
        %9950 = vmatprep.subr.bf16.mxu0 0
        %9951 = vmatpush1.bf16.msra.mxu0 %v9713
        %9952 = vmatprep.subr.bf16.mxu0 0
        %9953 = vmatpush1.bf16.msra.mxu0 %v9714
        %9954 = vmatprep.subr.bf16.mxu0 0
        %9955 = vmatpush1.bf16.msra.mxu0 %v9715
        %9956 = vmatprep.subr.bf16.mxu0 0
        %9957 = vmatpush1.bf16.msra.mxu0 %v9716
        %9958 = vmatprep.subr.bf16.mxu0 0
        %9959 = vmatpush1.bf16.msra.mxu0 %v9717
        %9960 = vmatprep.subr.bf16.mxu0 0
        %9961 = vmatpush1.bf16.msra.mxu0 %v9718
        %9962 = vmatprep.mubr.bf16.mxu0 %v9255
        %9963 = vmatmul.mubr.bf16.gmra.mrb[0].mxu0 %v9254
        %v9964 = vpop.f32.mrb[0].mxu0
        %v9965 = vadd.f32 %v9916, %v9964
        %v9966 = vpop.f32.mrb[0].mxu0
        %v9967 = vpop.f32.mrb[0].mxu0
        %v9968 = vadd.f32 %v9919, %v9967
        %v9969 = vpop.f32.mrb[0].mxu0
        %9970 = vmatprep.mubr.bf16.mxu0 %v9263
        %9971 = vmatmul.mubr.bf16.gmra.mrb[0].mxu0 %v9262
        %v9972 = vpop.f32.mrb[0].mxu0
        %v9973 = vadd.f32 %v9924, %v9972
        %v9974 = vpop.f32.mrb[0].mxu0
        %v9975 = vpop.f32.mrb[0].mxu0
        %v9976 = vadd.f32 %v9927, %v9975
        %v9977 = vpop.f32.mrb[0].mxu0
        %9978 = vdwg.mxu0
        %v9979 = vmul.f32 %v9965, 0.2
        %v9980 = vmul.f32 %v9968, 0.2
        %v9981 = vmul.f32 %v9973, 0.2
        %v9982 = vmul.f32 %v9976, 0.2
        %v9983 = vmax.f32 %v9965, %v9979
        %v9984 = vmax.f32 %v9968, %v9980
        %v9985 = vmax.f32 %v9973, %v9981
        %v9986 = vmax.f32 %v9976, %v9982
        %9987 = vst [vmem:[%s443] sm:$0xff] %v9983
        %9988 = vst [vmem:[%s443 + $0x8] sm:$0xff] %v9984
        %9989 = vst [vmem:[%s443 + $0x10] sm:$0xff] %v9985
        %9990 = vst [vmem:[%s443 + $0x18] sm:$0xff] %v9986
        %s9991 = smul.u32 4, %s25
        %p9992 = scmp.lt.s32.totalorder %s9991, 7
        %s9993 = scalar_select %p9992, %s9991, 7
        %s9994 = smul.addr %s9993, 8
        %s9995 = scalar_lea.vmem %s9, %s9994
        // Predicated region
        $region89: #{encoder_forward.1} parent=55 // pred_check
          %p9996 = pneg %p237
        $region90: #{encoder_forward.1} parent=55 // pred_check_branch
          %9998 = sbr.rel (%p9996) target = $region92
        $region91: #{encoder_forward.1} parent=55 // pred_region
          %s9999 = smul.u32 4, %s25
        $region92: #{encoder_forward.1} parent=55 // pred_fallthru
          _
      $region56: #{encoder_forward.1} parent=5 // pred_fallthru
        _
      %p10000 = scmp.le.s32.totalorder 2, %s20
      // Predicated region
      $region93: #{encoder_forward.1} parent=5 // pred_check
        %p10001 = pneg %p10000
      $region94: #{encoder_forward.1} parent=5 // pred_check_branch
        %10003 = sbr.rel (%p10001) target = $region96
      $region95: #{encoder_forward.1} parent=5 // pred_region
        %s10004 = ssub.s32 %s20, 2
        // Predicated region
        $region97: #{encoder_forward.1} parent=95 // pred_check
          %p10005 = pneg %p243
        $region98: #{encoder_forward.1} parent=95 // pred_check_branch
          %10007 = sbr.rel (%p10005) target = $region100
        $region99: #{encoder_forward.1} parent=95 // pred_region
          %s10008 = smul.u32 4, %s26
          %p10009 = scmp.lt.s32.totalorder %s10008, 7
          %s10010 = scalar_select %p10009, %s10008, 7
          %s10011 = smul.addr %s10010, 8
          %s10012 = scalar_lea.vmem %s9, %s10011
        $region100: #{encoder_forward.1} parent=95 // pred_fallthru
          _
      $region96: #{encoder_forward.1} parent=5 // pred_fallthru
        _
    $region6: #{encoder_forward.1} parent=1 // loop_footer
      %s24 = sadd.s32 1, %s20
    $region7: #{encoder_forward.1} parent=1 // loop_footer_branch
      %19 = sbr.rel target = $region3
    $region8: #{encoder_forward.1} parent=1 // loop_exit
      _
    %10013 = vsyncpa [#allocation3], 1
    %s10014 = scalar_lea.sflag [#allocation3], 1
    %10015 = vsyncpa %s10014, 1
    %10016 = vsyncpa [#allocation5], 1
    %10017 = vsyncpa [#allocation8], 1
    %10018 = vsyncpa [#allocation11], 1
    %10019 = vsyncpa [#allocation14], 1

</llo_original>
